<compile_context>
chip_gen: v7x
topology: tpu7x:2x2x1
jax: 0.10.0
libtpu: 0.0.40
codegen_flags: <defaults>
</compile_context>

<pallas_src>
import math
import functools

import jax
import jax.numpy as jnp
from jax.experimental import pallas as pl
from jax.experimental.pallas import tpu as pltpu


CP = 128                     # lane-padded output-channel width (lane-dense stores)
TM_MAX = 512                 # max row-tile for the M (parallel) grid axis
VMEM_LIMIT = 32 * 1024 * 1024  # explicit scoped-VMEM limit (v5e default is 16 MiB)


def _round_up(x, m):
    return (x + m - 1) // m * m


def _choose_tiles(M):
    """Padded row count Mp and row tile TM (multiple of 16 for bf16 tiling).

    Prefers >=2 grid steps so v7x's two TensorCores both get work, while
    keeping tiles as large as possible (<= TM_MAX)."""
    Mp = _round_up(M, 16)
    if Mp <= 16:
        return Mp, Mp
    tm = min(TM_MAX, _round_up(Mp // 2, 16))
    Mp = _round_up(Mp, tm)
    return Mp, tm


# ----------------------------- Pallas kernels -----------------------------

def _conv_mm_kernel(p_ref, w_ref, b_ref, o_ref, *, relu):
    # bf16 patches @ bf16 weights -> f32 acc; fused folded-BN bias (+ ReLU).
    acc = jnp.dot(p_ref[...], w_ref[...], preferred_element_type=jnp.float32)
    y = acc + b_ref[...]
    if relu:
        y = jnp.maximum(y, 0.0)
    o_ref[...] = y.astype(o_ref.dtype)


def _conv_mm_res_kernel(p_ref, w_ref, b_ref, r_ref, o_ref):
    # conv2 of a BasicBlock: matmul + BN bias + residual add + ReLU, all fused.
    acc = jnp.dot(p_ref[...], w_ref[...], preferred_element_type=jnp.float32)
    y = acc + b_ref[...] + r_ref[...].astype(jnp.float32)
    o_ref[...] = jnp.maximum(y, 0.0).astype(o_ref.dtype)


def _conv_mm_pack_kernel(p_ref, w_ref, b_ref, o_ref):
    # conv1 (ReLU) in lanes [:CP] and the 1x1 downsample (no ReLU) in lanes
    # [CP:], computed by a single N=2*CP matmul.
    acc = jnp.dot(p_ref[...], w_ref[...], preferred_element_type=jnp.float32)
    y = acc + b_ref[...]
    lane = jax.lax.broadcasted_iota(jnp.int32, y.shape, 1)
    y = jnp.where(lane < CP, jnp.maximum(y, 0.0), y)
    o_ref[...] = y.astype(o_ref.dtype)


def _maxpool9_kernel(*refs):
    # max over the 9 shifted views of a 3x3 max-pool window (pairwise VPU max).
    o_ref = refs[-1]
    m = refs[0][...]
    for r in refs[1:-1]:
        m = jnp.maximum(m, r[...])
    o_ref[...] = m.astype(o_ref.dtype)


# ----------------------------- Pallas wrappers -----------------------------

def _matmul_bias_act(patches, w, bias, residual, relu, packed=False):
    # patches [M, K] bf16, w [K, N] bf16, bias [1, N] f32,
    # residual [M, CP] bf16 or None  ->  [M, N] bf16
    M, K = patches.shape
    N = w.shape[1]
    Mp, TM = _choose_tiles(M)
    if Mp != M:
        patches = jnp.pad(patches, ((0, Mp - M), (0, 0)))
        if residual is not None:
            residual = jnp.pad(residual, ((0, Mp - M), (0, 0)))

    in_specs = [pl.BlockSpec((TM, K), lambda i: (i, 0)),
                pl.BlockSpec((K, N), lambda i: (0, 0)),
                pl.BlockSpec((1, N), lambda i: (0, 0))]
    args = [patches, w, bias]
    if residual is not None:
        in_specs.append(pl.BlockSpec((TM, CP), lambda i: (i, 0)))
        args.append(residual)
        kernel = _conv_mm_res_kernel
    elif packed:
        kernel = _conv_mm_pack_kernel
    else:
        kernel = functools.partial(_conv_mm_kernel, relu=relu)

    # Cost estimate from the real (unpadded-row) problem size.
    flops = 2 * M * K * N
    bytes_accessed = (M * K + K * N + M * N) * 2 + N * 4
    if residual is not None:
        bytes_accessed += M * CP * 2

    out = pl.pallas_call(
        kernel,
        out_shape=jax.ShapeDtypeStruct((Mp, N), jnp.bfloat16),
        grid=(Mp // TM,),
        in_specs=in_specs,
        out_specs=pl.BlockSpec((TM, N), lambda i: (i, 0)),
        compiler_params=pltpu.CompilerParams(
            dimension_semantics=("parallel",),
            vmem_limit_bytes=VMEM_LIMIT,
            # let XLA fuse the im2col producer into the patches operand
            allow_input_fusion=[True] + [False] * (len(args) - 1)),
        cost_estimate=pl.CostEstimate(flops=flops, transcendentals=0,
                                      bytes_accessed=bytes_accessed),
    )(*args)
    return out[:M] if Mp != M else out


# ----------------------------- conv / pool glue -----------------------------

def _im2col(x, cin, kh, kw, stride, pad, dil, k_pad):
    # x: [B, H, W, C>=cin] NHWC; only the first `cin` (real) channels are used.
    # -> patches [B*Ho*Wo, k_pad] bf16; column order (kh, kw, cin), zero-padded.
    B, H, W, _ = x.shape
    Ho = (H + 2 * pad - dil * (kh - 1) - 1) // stride + 1
    Wo = (W + 2 * pad - dil * (kw - 1) - 1) // stride + 1
    xp = jnp.pad(x[..., :cin], ((0, 0), (pad, pad), (pad, pad), (0, 0)))
    cols = []
    for i in range(kh):
        for j in range(kw):
            v = jax.lax.slice(
                xp,
                (0, i * dil, j * dil, 0),
                (B, i * dil + (Ho - 1) * stride + 1,
                 j * dil + (Wo - 1) * stride + 1, cin),
                (1, stride, stride, 1))
            cols.append(v)
    k_real = kh * kw * cin
    patches = jnp.concatenate(cols, axis=-1).reshape(B * Ho * Wo, k_real)
    if k_pad > k_real:
        patches = jnp.pad(patches, ((0, 0), (0, k_pad - k_real)))
    return patches, (B, Ho, Wo)


def conv_bn(x, lp, *, stride, pad, dil, relu, residual=None, packed=False):
    # lp: preprocessed {'w': [Kp, N] bf16 (BN scale folded), 'b': [1, N] f32,
    #                   'ksize': (kh, kw), 'cin': real input channels}
    kh, kw = lp['ksize']
    patches, (B, Ho, Wo) = _im2col(x, lp['cin'], kh, kw, stride, pad, dil,
                                   lp['w'].shape[0])
    out = _matmul_bias_act(patches, lp['w'], lp['b'], residual, relu, packed)
    return out.reshape(B, Ho, Wo, out.shape[-1])


def maxpool_3x3_s2_p1(x):
    B, H, W, C = x.shape
    Ho = (H + 2 - 3) // 2 + 1
    Wo = (W + 2 - 3) // 2 + 1
    neg = jnp.asarray(-jnp.inf, x.dtype)
    xp = jnp.pad(x, ((0, 0), (1, 1), (1, 1), (0, 0)), constant_values=neg)
    M = B * Ho * Wo
    views = []
    for i in range(3):
        for j in range(3):
            v = jax.lax.slice(
                xp, (0, i, j, 0),
                (B, i + (Ho - 1) * 2 + 1, j + (Wo - 1) * 2 + 1, C),
                (1, 2, 2, 1))
            views.append(v.reshape(M, C))
    Mp, TM = _choose_tiles(M)
    if Mp != M:
        views = [jnp.pad(v, ((0, Mp - M), (0, 0))) for v in views]
    out = pl.pallas_call(
        _maxpool9_kernel,
        out_shape=jax.ShapeDtypeStruct((Mp, C), x.dtype),
        grid=(Mp // TM,),
        in_specs=[pl.BlockSpec((TM, C), lambda i: (i, 0)) for _ in range(9)],
        out_specs=pl.BlockSpec((TM, C), lambda i: (i, 0)),
        compiler_params=pltpu.CompilerParams(
            dimension_semantics=("parallel",),
            vmem_limit_bytes=VMEM_LIMIT),
    )(*views)
    out = out[:M] if Mp != M else out
    return out.reshape(B, Ho, Wo, C)


# ----------------------------- model ---------------------------------------

def basic_block(x, p, cfg):
    # torchvision BasicBlock: conv3x3-bn-relu -> conv3x3-bn -> (+identity) -> relu
    if 'pack' in p:
        # conv1 and the 1x1 downsample co-computed in one N=256 matmul
        # (downsample weights live at the 3x3 center-tap K rows; same stride).
        y = conv_bn(x, p['pack'], stride=cfg['s1'], pad=cfg['p1'],
                    dil=cfg['d1'], relu=False, packed=True)
        out1 = y[..., :CP]
        identity = y[..., CP:]
    else:
        out1 = conv_bn(x, p['conv1'], stride=cfg['s1'], pad=cfg['p1'],
                       dil=cfg['d1'], relu=True)
        identity = x
    B, H, W, C = identity.shape
    # residual add + ReLU fused into conv2's matmul epilogue:
    out = conv_bn(out1, p['conv2'], stride=1, pad=cfg['p2'], dil=cfg['d2'],
                  relu=True, residual=identity.reshape(B * H * W, C))
    return out


# _nostride_dilate(dilate_scale=8) applied statically to layer3 / layer4 configs:
LAYER_CFG = {
    'layer1': dict(s1=1, d1=1, p1=1, d2=1, p2=1),                 # 8 -> 8
    'layer2': dict(s1=2, d1=1, p1=1, d2=1, p2=1, ds=2),           # 8 -> 16, stride 2
    'layer3': dict(s1=1, d1=1, p1=1, d2=2, p2=2, ds=1),           # 16 -> 32, dilate 2
    'layer4': dict(s1=1, d1=2, p1=2, d2=4, p2=4, ds=1),           # 32 -> 64, dilate 4
}


def resnet_dilated_forward(x_nchw, pp):
    x = jnp.transpose(x_nchw, (0, 2, 3, 1)).astype(jnp.bfloat16)    # NCHW -> NHWC bf16
    x = conv_bn(x, pp['conv1'], stride=2, pad=3, dil=1, relu=True)  # relu1(bn1(conv1))
    x = maxpool_3x3_s2_p1(x)                                        # maxpool
    x = basic_block(x, pp['layer1'], LAYER_CFG['layer1'])
    x = basic_block(x, pp['layer2'], LAYER_CFG['layer2'])
    x = basic_block(x, pp['layer3'], LAYER_CFG['layer3'])
    x = basic_block(x, pp['layer4'], LAYER_CFG['layer4'])
    x = x[..., :pp['out_channels']]                     # strip padded channel lanes
    return jnp.transpose(x, (0, 3, 1, 2)).astype(jnp.float32)   # NHWC -> NCHW


# ------------------------ parameter preprocessing ---------------------------
# Done ONCE (outside the forward / jit): fold BN scale into the weights, lay the
# weights out as [kh*kw*Cin_real (rounded to 128), N] bf16 matrices.  For blocks
# with a downsample, pack the 1x1 downsample into extra output columns (N=256).

def _fold_bn(bn, eps=1e-5):
    gamma, beta, mean, var = bn
    scale = gamma / jnp.sqrt(var + eps)
    bias = beta - mean * scale
    return scale, bias


def _prep_conv(conv_w, bn, down_w=None, down_bn=None):
    # conv_w: [Cout, Cin, kh, kw] (PyTorch layout)
    cout, cin, kh, kw = conv_w.shape
    scale, bias = _fold_bn(bn)
    w = jnp.transpose(conv_w, (2, 3, 1, 0)) * scale            # (kh, kw, cin, cout)
    k_real = kh * kw * cin
    k_pad = _round_up(k_real, 128)
    n = CP if down_w is None else 2 * CP
    w_full = jnp.zeros((k_pad, n), jnp.float32)
    w_full = w_full.at[:k_real, :cout].set(w.reshape(k_real, cout))
    b_full = jnp.zeros((1, n), jnp.float32).at[0, :cout].set(bias)
    if down_w is not None:
        dcout = down_w.shape[0]
        dscale, dbias = _fold_bn(down_bn)
        dw = jnp.transpose(down_w[:, :, 0, 0], (1, 0)) * dscale   # (cin, dcout)
        ctr = (kh // 2) * kw + (kw // 2)                          # center tap index
        w_full = w_full.at[ctr * cin:(ctr + 1) * cin, CP:CP + dcout].set(dw)
        b_full = b_full.at[0, CP:CP + dcout].set(dbias)
    return {'w': w_full.astype(jnp.bfloat16), 'b': b_full,
            'ksize': (kh, kw), 'cin': cin}


def preprocess_params(params):
    pp = {'conv1': _prep_conv(params['conv1_w'], params['bn1'])}
    for name in ('layer1', 'layer2', 'layer3', 'layer4'):
        blk = params[name]
        d = {'conv2': _prep_conv(blk['conv2_w'], blk['bn2'])}
        if 'down_w' in blk:
            d['pack'] = _prep_conv(blk['conv1_w'], blk['bn1'],
                                   down_w=blk['down_w'], down_bn=blk['down_bn'])
        else:
            d['conv1'] = _prep_conv(blk['conv1_w'], blk['bn1'])
        pp[name] = d
    pp['out_channels'] = int(params['layer4']['conv2_w'].shape[0])
    return pp


# ----------------------------- deterministic init ---------------------------

def _init_conv(key, cout, cin, kh, kw):
    fan_in = cin * kh * kw
    return jax.random.normal(key, (cout, cin, kh, kw), jnp.float32) / math.sqrt(fan_in)


def _init_bn(key, c):
    k1, k2, k3 = jax.random.split(key, 3)
    gamma = 1.0 + 0.1 * jax.random.normal(k1, (c,), jnp.float32)
    beta = 0.1 * jax.random.normal(k2, (c,), jnp.float32)
    mean = 0.1 * jax.random.normal(k3, (c,), jnp.float32)
    var = jnp.ones((c,), jnp.float32)
    return (gamma, beta, mean, var)


def _init_block(key, cin, cout, downsample):
    ks = jax.random.split(key, 6)
    p = {
        'conv1_w': _init_conv(ks[0], cout, cin, 3, 3),
        'bn1': _init_bn(ks[1], cout),
        'conv2_w': _init_conv(ks[2], cout, cout, 3, 3),
        'bn2': _init_bn(ks[3], cout),
    }
    if downsample:
        p['down_w'] = _init_conv(ks[4], cout, cin, 1, 1)
        p['down_bn'] = _init_bn(ks[5], cout)
    return p


def init_params(key):
    ks = jax.random.split(key, 6)
    return {
        'conv1_w': _init_conv(ks[0], 8, 3, 7, 7),
        'bn1': _init_bn(ks[1], 8),
        'layer1': _init_block(ks[2], 8, 8, downsample=False),
        'layer2': _init_block(ks[3], 8, 16, downsample=True),
        'layer3': _init_block(ks[4], 16, 32, downsample=True),
        'layer4': _init_block(ks[5], 32, 64, downsample=True),
    }


if __name__ == "__main__":
    key = jax.random.PRNGKey(0)
    k_params, k_x = jax.random.split(key)
    params = init_params(k_params)
    pp = preprocess_params(params)                         # BN fold / pack / bf16, once
    x = jax.random.normal(k_x, (2, 3, 32, 32), jnp.float32)   # NCHW, like PyTorch

    fwd = jax.jit(lambda inp: resnet_dilated_forward(inp, pp))
    out = jax.block_until_ready(fwd(x))
    assert out.shape == (2, 64, 4, 4), out.shape   # stride-8 backbone output
    assert bool(jnp.all(jnp.isfinite(out)))
    print("KERNEL_OK")
</pallas_src>

<mosaic_0001>
module attributes {stable_mosaic.version = 11 : i64} {
  func.func @_conv_mm_kernel(%arg0: i32, %arg1: memref<256x256xbf16, #tpu.memory_space<vmem>>, %arg2: memref<256x128xbf16, #tpu.memory_space<vmem>>, %arg3: memref<1x128xf32, #tpu.memory_space<vmem>>, %arg4: memref<256x128xbf16, #tpu.memory_space<vmem>>) attributes {dimension_semantics = [#tpu.dimension_semantics<parallel>], iteration_bounds = array<i64: 2>, scalar_prefetch = 0 : i64, scratch_operands = 0 : i64, tpu.core_type = #tpu.core_type<tc>, window_params = [{transform_indices = @transform_0, window_bounds = array<i64: 256, 256>}, {pipeline_mode = #tpu.pipeline_mode<synchronous>, transform_indices = @transform_1, window_bounds = array<i64: 256, 128>}, {pipeline_mode = #tpu.pipeline_mode<synchronous>, transform_indices = @transform_2, window_bounds = array<i64: 1, 128>}, {transform_indices = @transform_3, window_bounds = array<i64: 256, 128>}]} {
    %c0 = arith.constant 0 : index
    %c0_0 = arith.constant 0 : index
    %0 = vector.load %arg1[%c0, %c0_0] : memref<256x256xbf16, #tpu.memory_space<vmem>>, vector<256x256xbf16>
    %c0_1 = arith.constant 0 : index
    %c0_2 = arith.constant 0 : index
    %1 = vector.load %arg2[%c0_1, %c0_2] : memref<256x128xbf16, #tpu.memory_space<vmem>>, vector<256x128xbf16>
    %cst = arith.constant dense<0.000000e+00> : vector<256x128xf32>
    %2 = tpu.matmul %0, %1, %cst {dimension_numbers = #tpu.dot_dimension_numbers<[1], [0], [0], [1], [0, 0, 1, 1], [], []>} : vector<256x256xbf16>, vector<256x128xbf16>, vector<256x128xf32> -> vector<256x128xf32>
    %c0_3 = arith.constant 0 : index
    %c0_4 = arith.constant 0 : index
    %3 = vector.load %arg3[%c0_3, %c0_4] : memref<1x128xf32, #tpu.memory_space<vmem>>, vector<1x128xf32>
    %4 = vector.broadcast %3 : vector<1x128xf32> to vector<256x128xf32>
    %5 = arith.addf %2, %4 : vector<256x128xf32>
    %cst_5 = arith.constant 0.000000e+00 : f32
    %6 = vector.broadcast %cst_5 : f32 to vector<256x128xf32>
    %7 = arith.maximumf %5, %6 : vector<256x128xf32>
    %8 = arith.truncf %7 : vector<256x128xf32> to vector<256x128xbf16>
    %c0_6 = arith.constant 0 : index
    %c0_7 = arith.constant 0 : index
    %9 = vector.load %arg4[%c0_6, %c0_7] : memref<256x128xbf16, #tpu.memory_space<vmem>>, vector<256x128xbf16>
    tpu.vector_store %arg4[%c0_6, %c0_7], %8 {strides = array<i32>} : memref<256x128xbf16, #tpu.memory_space<vmem>>, vector<256x128xbf16>,
    return
  }
  func.func @transform_0(%arg0: i32) -> (i32, i32) {
    %c0_i32 = arith.constant 0 : i32
    %c0_i32_0 = arith.constant 0 : i32
    return %arg0, %c0_i32 : i32, i32
  }
  func.func @transform_1(%arg0: i32) -> (i32, i32) {
    %c0_i32 = arith.constant 0 : i32
    %c0_i32_0 = arith.constant 0 : i32
    %c0_i32_1 = arith.constant 0 : i32
    return %c0_i32, %c0_i32_0 : i32, i32
  }
  func.func @transform_2(%arg0: i32) -> (i32, i32) {
    %c0_i32 = arith.constant 0 : i32
    %c0_i32_0 = arith.constant 0 : i32
    %c0_i32_1 = arith.constant 0 : i32
    return %c0_i32, %c0_i32_0 : i32, i32
  }
  func.func @transform_3(%arg0: i32) -> (i32, i32) {
    %c0_i32 = arith.constant 0 : i32
    %c0_i32_0 = arith.constant 0 : i32
    return %arg0, %c0_i32 : i32, i32
  }
}

module attributes {stable_mosaic.version = 11 : i64} {
  func.func @_maxpool9_kernel(%arg0: i32, %arg1: memref<64x128xbf16, #tpu.memory_space<vmem>>, %arg2: memref<64x128xbf16, #tpu.memory_space<vmem>>, %arg3: memref<64x128xbf16, #tpu.memory_space<vmem>>, %arg4: memref<64x128xbf16, #tpu.memory_space<vmem>>, %arg5: memref<64x128xbf16, #tpu.memory_space<vmem>>, %arg6: memref<64x128xbf16, #tpu.memory_space<vmem>>, %arg7: memref<64x128xbf16, #tpu.memory_space<vmem>>, %arg8: memref<64x128xbf16, #tpu.memory_space<vmem>>, %arg9: memref<64x128xbf16, #tpu.memory_space<vmem>>, %arg10: memref<64x128xbf16, #tpu.memory_space<vmem>>) attributes {dimension_semantics = [#tpu.dimension_semantics<parallel>], iteration_bounds = array<i64: 2>, scalar_prefetch = 0 : i64, scratch_operands = 0 : i64, tpu.core_type = #tpu.core_type<tc>, window_params = [{transform_indices = @transform_0, window_bounds = array<i64: 64, 128>}, {transform_indices = @transform_1, window_bounds = array<i64: 64, 128>}, {transform_indices = @transform_2, window_bounds = array<i64: 64, 128>}, {transform_indices = @transform_3, window_bounds = array<i64: 64, 128>}, {transform_indices = @transform_4, window_bounds = array<i64: 64, 128>}, {transform_indices = @transform_5, window_bounds = array<i64: 64, 128>}, {transform_indices = @transform_6, window_bounds = array<i64: 64, 128>}, {transform_indices = @transform_7, window_bounds = array<i64: 64, 128>}, {transform_indices = @transform_8, window_bounds = array<i64: 64, 128>}, {transform_indices = @transform_9, window_bounds = array<i64: 64, 128>}]} {
    %c0 = arith.constant 0 : index
    %c0_0 = arith.constant 0 : index
    %0 = vector.load %arg1[%c0, %c0_0] : memref<64x128xbf16, #tpu.memory_space<vmem>>, vector<64x128xbf16>
    %c0_1 = arith.constant 0 : index
    %c0_2 = arith.constant 0 : index
    %1 = vector.load %arg2[%c0_1, %c0_2] : memref<64x128xbf16, #tpu.memory_space<vmem>>, vector<64x128xbf16>
    %2 = arith.maximumf %0, %1 : vector<64x128xbf16>
    %c0_3 = arith.constant 0 : index
    %c0_4 = arith.constant 0 : index
    %3 = vector.load %arg3[%c0_3, %c0_4] : memref<64x128xbf16, #tpu.memory_space<vmem>>, vector<64x128xbf16>
    %4 = arith.maximumf %2, %3 : vector<64x128xbf16>
    %c0_5 = arith.constant 0 : index
    %c0_6 = arith.constant 0 : index
    %5 = vector.load %arg4[%c0_5, %c0_6] : memref<64x128xbf16, #tpu.memory_space<vmem>>, vector<64x128xbf16>
    %6 = arith.maximumf %4, %5 : vector<64x128xbf16>
    %c0_7 = arith.constant 0 : index
    %c0_8 = arith.constant 0 : index
    %7 = vector.load %arg5[%c0_7, %c0_8] : memref<64x128xbf16, #tpu.memory_space<vmem>>, vector<64x128xbf16>
    %8 = arith.maximumf %6, %7 : vector<64x128xbf16>
    %c0_9 = arith.constant 0 : index
    %c0_10 = arith.constant 0 : index
    %9 = vector.load %arg6[%c0_9, %c0_10] : memref<64x128xbf16, #tpu.memory_space<vmem>>, vector<64x128xbf16>
    %10 = arith.maximumf %8, %9 : vector<64x128xbf16>
    %c0_11 = arith.constant 0 : index
    %c0_12 = arith.constant 0 : index
    %11 = vector.load %arg7[%c0_11, %c0_12] : memref<64x128xbf16, #tpu.memory_space<vmem>>, vector<64x128xbf16>
    %12 = arith.maximumf %10, %11 : vector<64x128xbf16>
    %c0_13 = arith.constant 0 : index
    %c0_14 = arith.constant 0 : index
    %13 = vector.load %arg8[%c0_13, %c0_14] : memref<64x128xbf16, #tpu.memory_space<vmem>>, vector<64x128xbf16>
    %14 = arith.maximumf %12, %13 : vector<64x128xbf16>
    %c0_15 = arith.constant 0 : index
    %c0_16 = arith.constant 0 : index
    %15 = vector.load %arg9[%c0_15, %c0_16] : memref<64x128xbf16, #tpu.memory_space<vmem>>, vector<64x128xbf16>
    %16 = arith.maximumf %14, %15 : vector<64x128xbf16>
    %c0_17 = arith.constant 0 : index
    %c0_18 = arith.constant 0 : index
    %17 = vector.load %arg10[%c0_17, %c0_18] : memref<64x128xbf16, #tpu.memory_space<vmem>>, vector<64x128xbf16>
    tpu.vector_store %arg10[%c0_17, %c0_18], %16 {strides = array<i32>} : memref<64x128xbf16, #tpu.memory_space<vmem>>, vector<64x128xbf16>,
    return
  }
  func.func @transform_0(%arg0: i32) -> (i32, i32) {
    %c0_i32 = arith.constant 0 : i32
    %c0_i32_0 = arith.constant 0 : i32
    return %arg0, %c0_i32 : i32, i32
  }
  func.func @transform_1(%arg0: i32) -> (i32, i32) {
    %c0_i32 = arith.constant 0 : i32
    %c0_i32_0 = arith.constant 0 : i32
    return %arg0, %c0_i32 : i32, i32
  }
  func.func @transform_2(%arg0: i32) -> (i32, i32) {
    %c0_i32 = arith.constant 0 : i32
    %c0_i32_0 = arith.constant 0 : i32
    return %arg0, %c0_i32 : i32, i32
  }
  func.func @transform_3(%arg0: i32) -> (i32, i32) {
    %c0_i32 = arith.constant 0 : i32
    %c0_i32_0 = arith.constant 0 : i32
    return %arg0, %c0_i32 : i32, i32
  }
  func.func @transform_4(%arg0: i32) -> (i32, i32) {
    %c0_i32 = arith.constant 0 : i32
    %c0_i32_0 = arith.constant 0 : i32
    return %arg0, %c0_i32 : i32, i32
  }
  func.func @transform_5(%arg0: i32) -> (i32, i32) {
    %c0_i32 = arith.constant 0 : i32
    %c0_i32_0 = arith.constant 0 : i32
    return %arg0, %c0_i32 : i32, i32
  }
  func.func @transform_6(%arg0: i32) -> (i32, i32) {
    %c0_i32 = arith.constant 0 : i32
    %c0_i32_0 = arith.constant 0 : i32
    return %arg0, %c0_i32 : i32, i32
  }
  func.func @transform_7(%arg0: i32) -> (i32, i32) {
    %c0_i32 = arith.constant 0 : i32
    %c0_i32_0 = arith.constant 0 : i32
    return %arg0, %c0_i32 : i32, i32
  }
  func.func @transform_8(%arg0: i32) -> (i32, i32) {
    %c0_i32 = arith.constant 0 : i32
    %c0_i32_0 = arith.constant 0 : i32
    return %arg0, %c0_i32 : i32, i32
  }
  func.func @transform_9(%arg0: i32) -> (i32, i32) {
    %c0_i32 = arith.constant 0 : i32
    %c0_i32_0 = arith.constant 0 : i32
    return %arg0, %c0_i32 : i32, i32
  }
}

module attributes {stable_mosaic.version = 11 : i64} {
  func.func @_conv_mm_kernel(%arg0: i32, %arg1: memref<64x128xbf16, #tpu.memory_space<vmem>>, %arg2: memref<128x128xbf16, #tpu.memory_space<vmem>>, %arg3: memref<1x128xf32, #tpu.memory_space<vmem>>, %arg4: memref<64x128xbf16, #tpu.memory_space<vmem>>) attributes {dimension_semantics = [#tpu.dimension_semantics<parallel>], iteration_bounds = array<i64: 2>, scalar_prefetch = 0 : i64, scratch_operands = 0 : i64, tpu.core_type = #tpu.core_type<tc>, window_params = [{transform_indices = @transform_0, window_bounds = array<i64: 64, 128>}, {pipeline_mode = #tpu.pipeline_mode<synchronous>, transform_indices = @transform_1, window_bounds = array<i64: 128, 128>}, {pipeline_mode = #tpu.pipeline_mode<synchronous>, transform_indices = @transform_2, window_bounds = array<i64: 1, 128>}, {transform_indices = @transform_3, window_bounds = array<i64: 64, 128>}]} {
    %c0 = arith.constant 0 : index
    %c0_0 = arith.constant 0 : index
    %0 = vector.load %arg1[%c0, %c0_0] : memref<64x128xbf16, #tpu.memory_space<vmem>>, vector<64x128xbf16>
    %c0_1 = arith.constant 0 : index
    %c0_2 = arith.constant 0 : index
    %1 = vector.load %arg2[%c0_1, %c0_2] : memref<128x128xbf16, #tpu.memory_space<vmem>>, vector<128x128xbf16>
    %cst = arith.constant dense<0.000000e+00> : vector<64x128xf32>
    %2 = tpu.matmul %0, %1, %cst {dimension_numbers = #tpu.dot_dimension_numbers<[1], [0], [0], [1], [0, 0, 1, 1], [], []>} : vector<64x128xbf16>, vector<128x128xbf16>, vector<64x128xf32> -> vector<64x128xf32>
    %c0_3 = arith.constant 0 : index
    %c0_4 = arith.constant 0 : index
    %3 = vector.load %arg3[%c0_3, %c0_4] : memref<1x128xf32, #tpu.memory_space<vmem>>, vector<1x128xf32>
    %4 = vector.broadcast %3 : vector<1x128xf32> to vector<64x128xf32>
    %5 = arith.addf %2, %4 : vector<64x128xf32>
    %cst_5 = arith.constant 0.000000e+00 : f32
    %6 = vector.broadcast %cst_5 : f32 to vector<64x128xf32>
    %7 = arith.maximumf %5, %6 : vector<64x128xf32>
    %8 = arith.truncf %7 : vector<64x128xf32> to vector<64x128xbf16>
    %c0_6 = arith.constant 0 : index
    %c0_7 = arith.constant 0 : index
    %9 = vector.load %arg4[%c0_6, %c0_7] : memref<64x128xbf16, #tpu.memory_space<vmem>>, vector<64x128xbf16>
    tpu.vector_store %arg4[%c0_6, %c0_7], %8 {strides = array<i32>} : memref<64x128xbf16, #tpu.memory_space<vmem>>, vector<64x128xbf16>,
    return
  }
  func.func @transform_0(%arg0: i32) -> (i32, i32) {
    %c0_i32 = arith.constant 0 : i32
    %c0_i32_0 = arith.constant 0 : i32
    return %arg0, %c0_i32 : i32, i32
  }
  func.func @transform_1(%arg0: i32) -> (i32, i32) {
    %c0_i32 = arith.constant 0 : i32
    %c0_i32_0 = arith.constant 0 : i32
    %c0_i32_1 = arith.constant 0 : i32
    return %c0_i32, %c0_i32_0 : i32, i32
  }
  func.func @transform_2(%arg0: i32) -> (i32, i32) {
    %c0_i32 = arith.constant 0 : i32
    %c0_i32_0 = arith.constant 0 : i32
    %c0_i32_1 = arith.constant 0 : i32
    return %c0_i32, %c0_i32_0 : i32, i32
  }
  func.func @transform_3(%arg0: i32) -> (i32, i32) {
    %c0_i32 = arith.constant 0 : i32
    %c0_i32_0 = arith.constant 0 : i32
    return %arg0, %c0_i32 : i32, i32
  }
}

module attributes {stable_mosaic.version = 11 : i64} {
  func.func @_conv_mm_res_kernel(%arg0: i32, %arg1: memref<64x128xbf16, #tpu.memory_space<vmem>>, %arg2: memref<128x128xbf16, #tpu.memory_space<vmem>>, %arg3: memref<1x128xf32, #tpu.memory_space<vmem>>, %arg4: memref<64x128xbf16, #tpu.memory_space<vmem>>, %arg5: memref<64x128xbf16, #tpu.memory_space<vmem>>) attributes {dimension_semantics = [#tpu.dimension_semantics<parallel>], iteration_bounds = array<i64: 2>, scalar_prefetch = 0 : i64, scratch_operands = 0 : i64, tpu.core_type = #tpu.core_type<tc>, window_params = [{transform_indices = @transform_0, window_bounds = array<i64: 64, 128>}, {pipeline_mode = #tpu.pipeline_mode<synchronous>, transform_indices = @transform_1, window_bounds = array<i64: 128, 128>}, {pipeline_mode = #tpu.pipeline_mode<synchronous>, transform_indices = @transform_2, window_bounds = array<i64: 1, 128>}, {transform_indices = @transform_3, window_bounds = array<i64: 64, 128>}, {transform_indices = @transform_4, window_bounds = array<i64: 64, 128>}]} {
    %c0 = arith.constant 0 : index
    %c0_0 = arith.constant 0 : index
    %0 = vector.load %arg1[%c0, %c0_0] : memref<64x128xbf16, #tpu.memory_space<vmem>>, vector<64x128xbf16>
    %c0_1 = arith.constant 0 : index
    %c0_2 = arith.constant 0 : index
    %1 = vector.load %arg2[%c0_1, %c0_2] : memref<128x128xbf16, #tpu.memory_space<vmem>>, vector<128x128xbf16>
    %cst = arith.constant dense<0.000000e+00> : vector<64x128xf32>
    %2 = tpu.matmul %0, %1, %cst {dimension_numbers = #tpu.dot_dimension_numbers<[1], [0], [0], [1], [0, 0, 1, 1], [], []>} : vector<64x128xbf16>, vector<128x128xbf16>, vector<64x128xf32> -> vector<64x128xf32>
    %c0_3 = arith.constant 0 : index
    %c0_4 = arith.constant 0 : index
    %3 = vector.load %arg3[%c0_3, %c0_4] : memref<1x128xf32, #tpu.memory_space<vmem>>, vector<1x128xf32>
    %4 = vector.broadcast %3 : vector<1x128xf32> to vector<64x128xf32>
    %5 = arith.addf %2, %4 : vector<64x128xf32>
    %c0_5 = arith.constant 0 : index
    %c0_6 = arith.constant 0 : index
    %6 = vector.load %arg4[%c0_5, %c0_6] : memref<64x128xbf16, #tpu.memory_space<vmem>>, vector<64x128xbf16>
    %7 = arith.extf %6 : vector<64x128xbf16> to vector<64x128xf32>
    %8 = arith.addf %5, %7 : vector<64x128xf32>
    %cst_7 = arith.constant 0.000000e+00 : f32
    %9 = vector.broadcast %cst_7 : f32 to vector<64x128xf32>
    %10 = arith.maximumf %8, %9 : vector<64x128xf32>
    %11 = arith.truncf %10 : vector<64x128xf32> to vector<64x128xbf16>
    %c0_8 = arith.constant 0 : index
    %c0_9 = arith.constant 0 : index
    %12 = vector.load %arg5[%c0_8, %c0_9] : memref<64x128xbf16, #tpu.memory_space<vmem>>, vector<64x128xbf16>
    tpu.vector_store %arg5[%c0_8, %c0_9], %11 {strides = array<i32>} : memref<64x128xbf16, #tpu.memory_space<vmem>>, vector<64x128xbf16>,
    return
  }
  func.func @transform_0(%arg0: i32) -> (i32, i32) {
    %c0_i32 = arith.constant 0 : i32
    %c0_i32_0 = arith.constant 0 : i32
    return %arg0, %c0_i32 : i32, i32
  }
  func.func @transform_1(%arg0: i32) -> (i32, i32) {
    %c0_i32 = arith.constant 0 : i32
    %c0_i32_0 = arith.constant 0 : i32
    %c0_i32_1 = arith.constant 0 : i32
    return %c0_i32, %c0_i32_0 : i32, i32
  }
  func.func @transform_2(%arg0: i32) -> (i32, i32) {
    %c0_i32 = arith.constant 0 : i32
    %c0_i32_0 = arith.constant 0 : i32
    %c0_i32_1 = arith.constant 0 : i32
    return %c0_i32, %c0_i32_0 : i32, i32
  }
  func.func @transform_3(%arg0: i32) -> (i32, i32) {
    %c0_i32 = arith.constant 0 : i32
    %c0_i32_0 = arith.constant 0 : i32
    return %arg0, %c0_i32 : i32, i32
  }
  func.func @transform_4(%arg0: i32) -> (i32, i32) {
    %c0_i32 = arith.constant 0 : i32
    %c0_i32_0 = arith.constant 0 : i32
    return %arg0, %c0_i32 : i32, i32
  }
}

module attributes {stable_mosaic.version = 11 : i64} {
  func.func @_conv_mm_pack_kernel(%arg0: i32, %arg1: memref<16x128xbf16, #tpu.memory_space<vmem>>, %arg2: memref<128x256xbf16, #tpu.memory_space<vmem>>, %arg3: memref<1x256xf32, #tpu.memory_space<vmem>>, %arg4: memref<16x256xbf16, #tpu.memory_space<vmem>>) attributes {dimension_semantics = [#tpu.dimension_semantics<parallel>], iteration_bounds = array<i64: 2>, scalar_prefetch = 0 : i64, scratch_operands = 0 : i64, tpu.core_type = #tpu.core_type<tc>, window_params = [{transform_indices = @transform_0, window_bounds = array<i64: 16, 128>}, {pipeline_mode = #tpu.pipeline_mode<synchronous>, transform_indices = @transform_1, window_bounds = array<i64: 128, 256>}, {pipeline_mode = #tpu.pipeline_mode<synchronous>, transform_indices = @transform_2, window_bounds = array<i64: 1, 256>}, {transform_indices = @transform_3, window_bounds = array<i64: 16, 256>}]} {
    %c0 = arith.constant 0 : index
    %c0_0 = arith.constant 0 : index
    %0 = vector.load %arg1[%c0, %c0_0] : memref<16x128xbf16, #tpu.memory_space<vmem>>, vector<16x128xbf16>
    %c0_1 = arith.constant 0 : index
    %c0_2 = arith.constant 0 : index
    %1 = vector.load %arg2[%c0_1, %c0_2] : memref<128x256xbf16, #tpu.memory_space<vmem>>, vector<128x256xbf16>
    %cst = arith.constant dense<0.000000e+00> : vector<16x256xf32>
    %2 = tpu.matmul %0, %1, %cst {dimension_numbers = #tpu.dot_dimension_numbers<[1], [0], [0], [1], [0, 0, 1, 1], [], []>} : vector<16x128xbf16>, vector<128x256xbf16>, vector<16x256xf32> -> vector<16x256xf32>
    %c0_3 = arith.constant 0 : index
    %c0_4 = arith.constant 0 : index
    %3 = vector.load %arg3[%c0_3, %c0_4] : memref<1x256xf32, #tpu.memory_space<vmem>>, vector<1x256xf32>
    %4 = vector.broadcast %3 : vector<1x256xf32> to vector<16x256xf32>
    %5 = arith.addf %2, %4 : vector<16x256xf32>
    %6 = tpu.iota {dimensions = array<i32: 1>} : vector<16x256xi32>
    %c128_i32 = arith.constant 128 : i32
    %7 = vector.broadcast %c128_i32 : i32 to vector<16x256xi32>
    %8 = arith.cmpi slt, %6, %7 : vector<16x256xi32>
    %cst_5 = arith.constant 0.000000e+00 : f32
    %9 = vector.broadcast %cst_5 : f32 to vector<16x256xf32>
    %10 = arith.maximumf %5, %9 : vector<16x256xf32>
    %11 = arith.select %8, %10, %5 : vector<16x256xi1>, vector<16x256xf32>
    %12 = arith.truncf %11 : vector<16x256xf32> to vector<16x256xbf16>
    %c0_6 = arith.constant 0 : index
    %c0_7 = arith.constant 0 : index
    %13 = vector.load %arg4[%c0_6, %c0_7] : memref<16x256xbf16, #tpu.memory_space<vmem>>, vector<16x256xbf16>
    tpu.vector_store %arg4[%c0_6, %c0_7], %12 {strides = array<i32>} : memref<16x256xbf16, #tpu.memory_space<vmem>>, vector<16x256xbf16>,
    return
  }
  func.func @transform_0(%arg0: i32) -> (i32, i32) {
    %c0_i32 = arith.constant 0 : i32
    %c0_i32_0 = arith.constant 0 : i32
    return %arg0, %c0_i32 : i32, i32
  }
  func.func @transform_1(%arg0: i32) -> (i32, i32) {
    %c0_i32 = arith.constant 0 : i32
    %c0_i32_0 = arith.constant 0 : i32
    %c0_i32_1 = arith.constant 0 : i32
    return %c0_i32, %c0_i32_0 : i32, i32
  }
  func.func @transform_2(%arg0: i32) -> (i32, i32) {
    %c0_i32 = arith.constant 0 : i32
    %c0_i32_0 = arith.constant 0 : i32
    %c0_i32_1 = arith.constant 0 : i32
    return %c0_i32, %c0_i32_0 : i32, i32
  }
  func.func @transform_3(%arg0: i32) -> (i32, i32) {
    %c0_i32 = arith.constant 0 : i32
    %c0_i32_0 = arith.constant 0 : i32
    return %arg0, %c0_i32 : i32, i32
  }
}

module attributes {stable_mosaic.version = 11 : i64} {
  func.func @_conv_mm_res_kernel(%arg0: i32, %arg1: memref<16x256xbf16, #tpu.memory_space<vmem>>, %arg2: memref<256x128xbf16, #tpu.memory_space<vmem>>, %arg3: memref<1x128xf32, #tpu.memory_space<vmem>>, %arg4: memref<16x128xbf16, #tpu.memory_space<vmem>>, %arg5: memref<16x128xbf16, #tpu.memory_space<vmem>>) attributes {dimension_semantics = [#tpu.dimension_semantics<parallel>], iteration_bounds = array<i64: 2>, scalar_prefetch = 0 : i64, scratch_operands = 0 : i64, tpu.core_type = #tpu.core_type<tc>, window_params = [{transform_indices = @transform_0, window_bounds = array<i64: 16, 256>}, {pipeline_mode = #tpu.pipeline_mode<synchronous>, transform_indices = @transform_1, window_bounds = array<i64: 256, 128>}, {pipeline_mode = #tpu.pipeline_mode<synchronous>, transform_indices = @transform_2, window_bounds = array<i64: 1, 128>}, {transform_indices = @transform_3, window_bounds = array<i64: 16, 128>}, {transform_indices = @transform_4, window_bounds = array<i64: 16, 128>}]} {
    %c0 = arith.constant 0 : index
    %c0_0 = arith.constant 0 : index
    %0 = vector.load %arg1[%c0, %c0_0] : memref<16x256xbf16, #tpu.memory_space<vmem>>, vector<16x256xbf16>
    %c0_1 = arith.constant 0 : index
    %c0_2 = arith.constant 0 : index
    %1 = vector.load %arg2[%c0_1, %c0_2] : memref<256x128xbf16, #tpu.memory_space<vmem>>, vector<256x128xbf16>
    %cst = arith.constant dense<0.000000e+00> : vector<16x128xf32>
    %2 = tpu.matmul %0, %1, %cst {dimension_numbers = #tpu.dot_dimension_numbers<[1], [0], [0], [1], [0, 0, 1, 1], [], []>} : vector<16x256xbf16>, vector<256x128xbf16>, vector<16x128xf32> -> vector<16x128xf32>
    %c0_3 = arith.constant 0 : index
    %c0_4 = arith.constant 0 : index
    %3 = vector.load %arg3[%c0_3, %c0_4] : memref<1x128xf32, #tpu.memory_space<vmem>>, vector<1x128xf32>
    %4 = vector.broadcast %3 : vector<1x128xf32> to vector<16x128xf32>
    %5 = arith.addf %2, %4 : vector<16x128xf32>
    %c0_5 = arith.constant 0 : index
    %c0_6 = arith.constant 0 : index
    %6 = vector.load %arg4[%c0_5, %c0_6] : memref<16x128xbf16, #tpu.memory_space<vmem>>, vector<16x128xbf16>
    %7 = arith.extf %6 : vector<16x128xbf16> to vector<16x128xf32>
    %8 = arith.addf %5, %7 : vector<16x128xf32>
    %cst_7 = arith.constant 0.000000e+00 : f32
    %9 = vector.broadcast %cst_7 : f32 to vector<16x128xf32>
    %10 = arith.maximumf %8, %9 : vector<16x128xf32>
    %11 = arith.truncf %10 : vector<16x128xf32> to vector<16x128xbf16>
    %c0_8 = arith.constant 0 : index
    %c0_9 = arith.constant 0 : index
    %12 = vector.load %arg5[%c0_8, %c0_9] : memref<16x128xbf16, #tpu.memory_space<vmem>>, vector<16x128xbf16>
    tpu.vector_store %arg5[%c0_8, %c0_9], %11 {strides = array<i32>} : memref<16x128xbf16, #tpu.memory_space<vmem>>, vector<16x128xbf16>,
    return
  }
  func.func @transform_0(%arg0: i32) -> (i32, i32) {
    %c0_i32 = arith.constant 0 : i32
    %c0_i32_0 = arith.constant 0 : i32
    return %arg0, %c0_i32 : i32, i32
  }
  func.func @transform_1(%arg0: i32) -> (i32, i32) {
    %c0_i32 = arith.constant 0 : i32
    %c0_i32_0 = arith.constant 0 : i32
    %c0_i32_1 = arith.constant 0 : i32
    return %c0_i32, %c0_i32_0 : i32, i32
  }
  func.func @transform_2(%arg0: i32) -> (i32, i32) {
    %c0_i32 = arith.constant 0 : i32
    %c0_i32_0 = arith.constant 0 : i32
    %c0_i32_1 = arith.constant 0 : i32
    return %c0_i32, %c0_i32_0 : i32, i32
  }
  func.func @transform_3(%arg0: i32) -> (i32, i32) {
    %c0_i32 = arith.constant 0 : i32
    %c0_i32_0 = arith.constant 0 : i32
    return %arg0, %c0_i32 : i32, i32
  }
  func.func @transform_4(%arg0: i32) -> (i32, i32) {
    %c0_i32 = arith.constant 0 : i32
    %c0_i32_0 = arith.constant 0 : i32
    return %arg0, %c0_i32 : i32, i32
  }
}

module attributes {stable_mosaic.version = 11 : i64} {
  func.func @_conv_mm_pack_kernel(%arg0: i32, %arg1: memref<16x256xbf16, #tpu.memory_space<vmem>>, %arg2: memref<256x256xbf16, #tpu.memory_space<vmem>>, %arg3: memref<1x256xf32, #tpu.memory_space<vmem>>, %arg4: memref<16x256xbf16, #tpu.memory_space<vmem>>) attributes {dimension_semantics = [#tpu.dimension_semantics<parallel>], iteration_bounds = array<i64: 2>, scalar_prefetch = 0 : i64, scratch_operands = 0 : i64, tpu.core_type = #tpu.core_type<tc>, window_params = [{transform_indices = @transform_0, window_bounds = array<i64: 16, 256>}, {pipeline_mode = #tpu.pipeline_mode<synchronous>, transform_indices = @transform_1, window_bounds = array<i64: 256, 256>}, {pipeline_mode = #tpu.pipeline_mode<synchronous>, transform_indices = @transform_2, window_bounds = array<i64: 1, 256>}, {transform_indices = @transform_3, window_bounds = array<i64: 16, 256>}]} {
    %c0 = arith.constant 0 : index
    %c0_0 = arith.constant 0 : index
    %0 = vector.load %arg1[%c0, %c0_0] : memref<16x256xbf16, #tpu.memory_space<vmem>>, vector<16x256xbf16>
    %c0_1 = arith.constant 0 : index
    %c0_2 = arith.constant 0 : index
    %1 = vector.load %arg2[%c0_1, %c0_2] : memref<256x256xbf16, #tpu.memory_space<vmem>>, vector<256x256xbf16>
    %cst = arith.constant dense<0.000000e+00> : vector<16x256xf32>
    %2 = tpu.matmul %0, %1, %cst {dimension_numbers = #tpu.dot_dimension_numbers<[1], [0], [0], [1], [0, 0, 1, 1], [], []>} : vector<16x256xbf16>, vector<256x256xbf16>, vector<16x256xf32> -> vector<16x256xf32>
    %c0_3 = arith.constant 0 : index
    %c0_4 = arith.constant 0 : index
    %3 = vector.load %arg3[%c0_3, %c0_4] : memref<1x256xf32, #tpu.memory_space<vmem>>, vector<1x256xf32>
    %4 = vector.broadcast %3 : vector<1x256xf32> to vector<16x256xf32>
    %5 = arith.addf %2, %4 : vector<16x256xf32>
    %6 = tpu.iota {dimensions = array<i32: 1>} : vector<16x256xi32>
    %c128_i32 = arith.constant 128 : i32
    %7 = vector.broadcast %c128_i32 : i32 to vector<16x256xi32>
    %8 = arith.cmpi slt, %6, %7 : vector<16x256xi32>
    %cst_5 = arith.constant 0.000000e+00 : f32
    %9 = vector.broadcast %cst_5 : f32 to vector<16x256xf32>
    %10 = arith.maximumf %5, %9 : vector<16x256xf32>
    %11 = arith.select %8, %10, %5 : vector<16x256xi1>, vector<16x256xf32>
    %12 = arith.truncf %11 : vector<16x256xf32> to vector<16x256xbf16>
    %c0_6 = arith.constant 0 : index
    %c0_7 = arith.constant 0 : index
    %13 = vector.load %arg4[%c0_6, %c0_7] : memref<16x256xbf16, #tpu.memory_space<vmem>>, vector<16x256xbf16>
    tpu.vector_store %arg4[%c0_6, %c0_7], %12 {strides = array<i32>} : memref<16x256xbf16, #tpu.memory_space<vmem>>, vector<16x256xbf16>,
    return
  }
  func.func @transform_0(%arg0: i32) -> (i32, i32) {
    %c0_i32 = arith.constant 0 : i32
    %c0_i32_0 = arith.constant 0 : i32
    return %arg0, %c0_i32 : i32, i32
  }
  func.func @transform_1(%arg0: i32) -> (i32, i32) {
    %c0_i32 = arith.constant 0 : i32
    %c0_i32_0 = arith.constant 0 : i32
    %c0_i32_1 = arith.constant 0 : i32
    return %c0_i32, %c0_i32_0 : i32, i32
  }
  func.func @transform_2(%arg0: i32) -> (i32, i32) {
    %c0_i32 = arith.constant 0 : i32
    %c0_i32_0 = arith.constant 0 : i32
    %c0_i32_1 = arith.constant 0 : i32
    return %c0_i32, %c0_i32_0 : i32, i32
  }
  func.func @transform_3(%arg0: i32) -> (i32, i32) {
    %c0_i32 = arith.constant 0 : i32
    %c0_i32_0 = arith.constant 0 : i32
    return %arg0, %c0_i32 : i32, i32
  }
}

module attributes {stable_mosaic.version = 11 : i64} {
  func.func @_conv_mm_res_kernel(%arg0: i32, %arg1: memref<16x384xbf16, #tpu.memory_space<vmem>>, %arg2: memref<384x128xbf16, #tpu.memory_space<vmem>>, %arg3: memref<1x128xf32, #tpu.memory_space<vmem>>, %arg4: memref<16x128xbf16, #tpu.memory_space<vmem>>, %arg5: memref<16x128xbf16, #tpu.memory_space<vmem>>) attributes {dimension_semantics = [#tpu.dimension_semantics<parallel>], iteration_bounds = array<i64: 2>, scalar_prefetch = 0 : i64, scratch_operands = 0 : i64, tpu.core_type = #tpu.core_type<tc>, window_params = [{transform_indices = @transform_0, window_bounds = array<i64: 16, 384>}, {pipeline_mode = #tpu.pipeline_mode<synchronous>, transform_indices = @transform_1, window_bounds = array<i64: 384, 128>}, {pipeline_mode = #tpu.pipeline_mode<synchronous>, transform_indices = @transform_2, window_bounds = array<i64: 1, 128>}, {transform_indices = @transform_3, window_bounds = array<i64: 16, 128>}, {transform_indices = @transform_4, window_bounds = array<i64: 16, 128>}]} {
    %c0 = arith.constant 0 : index
    %c0_0 = arith.constant 0 : index
    %0 = vector.load %arg1[%c0, %c0_0] : memref<16x384xbf16, #tpu.memory_space<vmem>>, vector<16x384xbf16>
    %c0_1 = arith.constant 0 : index
    %c0_2 = arith.constant 0 : index
    %1 = vector.load %arg2[%c0_1, %c0_2] : memref<384x128xbf16, #tpu.memory_space<vmem>>, vector<384x128xbf16>
    %cst = arith.constant dense<0.000000e+00> : vector<16x128xf32>
    %2 = tpu.matmul %0, %1, %cst {dimension_numbers = #tpu.dot_dimension_numbers<[1], [0], [0], [1], [0, 0, 1, 1], [], []>} : vector<16x384xbf16>, vector<384x128xbf16>, vector<16x128xf32> -> vector<16x128xf32>
    %c0_3 = arith.constant 0 : index
    %c0_4 = arith.constant 0 : index
    %3 = vector.load %arg3[%c0_3, %c0_4] : memref<1x128xf32, #tpu.memory_space<vmem>>, vector<1x128xf32>
    %4 = vector.broadcast %3 : vector<1x128xf32> to vector<16x128xf32>
    %5 = arith.addf %2, %4 : vector<16x128xf32>
    %c0_5 = arith.constant 0 : index
    %c0_6 = arith.constant 0 : index
    %6 = vector.load %arg4[%c0_5, %c0_6] : memref<16x128xbf16, #tpu.memory_space<vmem>>, vector<16x128xbf16>
    %7 = arith.extf %6 : vector<16x128xbf16> to vector<16x128xf32>
    %8 = arith.addf %5, %7 : vector<16x128xf32>
    %cst_7 = arith.constant 0.000000e+00 : f32
    %9 = vector.broadcast %cst_7 : f32 to vector<16x128xf32>
    %10 = arith.maximumf %8, %9 : vector<16x128xf32>
    %11 = arith.truncf %10 : vector<16x128xf32> to vector<16x128xbf16>
    %c0_8 = arith.constant 0 : index
    %c0_9 = arith.constant 0 : index
    %12 = vector.load %arg5[%c0_8, %c0_9] : memref<16x128xbf16, #tpu.memory_space<vmem>>, vector<16x128xbf16>
    tpu.vector_store %arg5[%c0_8, %c0_9], %11 {strides = array<i32>} : memref<16x128xbf16, #tpu.memory_space<vmem>>, vector<16x128xbf16>,
    return
  }
  func.func @transform_0(%arg0: i32) -> (i32, i32) {
    %c0_i32 = arith.constant 0 : i32
    %c0_i32_0 = arith.constant 0 : i32
    return %arg0, %c0_i32 : i32, i32
  }
  func.func @transform_1(%arg0: i32) -> (i32, i32) {
    %c0_i32 = arith.constant 0 : i32
    %c0_i32_0 = arith.constant 0 : i32
    %c0_i32_1 = arith.constant 0 : i32
    return %c0_i32, %c0_i32_0 : i32, i32
  }
  func.func @transform_2(%arg0: i32) -> (i32, i32) {
    %c0_i32 = arith.constant 0 : i32
    %c0_i32_0 = arith.constant 0 : i32
    %c0_i32_1 = arith.constant 0 : i32
    return %c0_i32, %c0_i32_0 : i32, i32
  }
  func.func @transform_3(%arg0: i32) -> (i32, i32) {
    %c0_i32 = arith.constant 0 : i32
    %c0_i32_0 = arith.constant 0 : i32
    return %arg0, %c0_i32 : i32, i32
  }
  func.func @transform_4(%arg0: i32) -> (i32, i32) {
    %c0_i32 = arith.constant 0 : i32
    %c0_i32_0 = arith.constant 0 : i32
    return %arg0, %c0_i32 : i32, i32
  }
}

module attributes {stable_mosaic.version = 11 : i64} {
  func.func @_conv_mm_pack_kernel(%arg0: i32, %arg1: memref<16x384xbf16, #tpu.memory_space<vmem>>, %arg2: memref<384x256xbf16, #tpu.memory_space<vmem>>, %arg3: memref<1x256xf32, #tpu.memory_space<vmem>>, %arg4: memref<16x256xbf16, #tpu.memory_space<vmem>>) attributes {dimension_semantics = [#tpu.dimension_semantics<parallel>], iteration_bounds = array<i64: 2>, scalar_prefetch = 0 : i64, scratch_operands = 0 : i64, tpu.core_type = #tpu.core_type<tc>, window_params = [{transform_indices = @transform_0, window_bounds = array<i64: 16, 384>}, {pipeline_mode = #tpu.pipeline_mode<synchronous>, transform_indices = @transform_1, window_bounds = array<i64: 384, 256>}, {pipeline_mode = #tpu.pipeline_mode<synchronous>, transform_indices = @transform_2, window_bounds = array<i64: 1, 256>}, {transform_indices = @transform_3, window_bounds = array<i64: 16, 256>}]} {
    %c0 = arith.constant 0 : index
    %c0_0 = arith.constant 0 : index
    %0 = vector.load %arg1[%c0, %c0_0] : memref<16x384xbf16, #tpu.memory_space<vmem>>, vector<16x384xbf16>
    %c0_1 = arith.constant 0 : index
    %c0_2 = arith.constant 0 : index
    %1 = vector.load %arg2[%c0_1, %c0_2] : memref<384x256xbf16, #tpu.memory_space<vmem>>, vector<384x256xbf16>
    %cst = arith.constant dense<0.000000e+00> : vector<16x256xf32>
    %2 = tpu.matmul %0, %1, %cst {dimension_numbers = #tpu.dot_dimension_numbers<[1], [0], [0], [1], [0, 0, 1, 1], [], []>} : vector<16x384xbf16>, vector<384x256xbf16>, vector<16x256xf32> -> vector<16x256xf32>
    %c0_3 = arith.constant 0 : index
    %c0_4 = arith.constant 0 : index
    %3 = vector.load %arg3[%c0_3, %c0_4] : memref<1x256xf32, #tpu.memory_space<vmem>>, vector<1x256xf32>
    %4 = vector.broadcast %3 : vector<1x256xf32> to vector<16x256xf32>
    %5 = arith.addf %2, %4 : vector<16x256xf32>
    %6 = tpu.iota {dimensions = array<i32: 1>} : vector<16x256xi32>
    %c128_i32 = arith.constant 128 : i32
    %7 = vector.broadcast %c128_i32 : i32 to vector<16x256xi32>
    %8 = arith.cmpi slt, %6, %7 : vector<16x256xi32>
    %cst_5 = arith.constant 0.000000e+00 : f32
    %9 = vector.broadcast %cst_5 : f32 to vector<16x256xf32>
    %10 = arith.maximumf %5, %9 : vector<16x256xf32>
    %11 = arith.select %8, %10, %5 : vector<16x256xi1>, vector<16x256xf32>
    %12 = arith.truncf %11 : vector<16x256xf32> to vector<16x256xbf16>
    %c0_6 = arith.constant 0 : index
    %c0_7 = arith.constant 0 : index
    %13 = vector.load %arg4[%c0_6, %c0_7] : memref<16x256xbf16, #tpu.memory_space<vmem>>, vector<16x256xbf16>
    tpu.vector_store %arg4[%c0_6, %c0_7], %12 {strides = array<i32>} : memref<16x256xbf16, #tpu.memory_space<vmem>>, vector<16x256xbf16>,
    return
  }
  func.func @transform_0(%arg0: i32) -> (i32, i32) {
    %c0_i32 = arith.constant 0 : i32
    %c0_i32_0 = arith.constant 0 : i32
    return %arg0, %c0_i32 : i32, i32
  }
  func.func @transform_1(%arg0: i32) -> (i32, i32) {
    %c0_i32 = arith.constant 0 : i32
    %c0_i32_0 = arith.constant 0 : i32
    %c0_i32_1 = arith.constant 0 : i32
    return %c0_i32, %c0_i32_0 : i32, i32
  }
  func.func @transform_2(%arg0: i32) -> (i32, i32) {
    %c0_i32 = arith.constant 0 : i32
    %c0_i32_0 = arith.constant 0 : i32
    %c0_i32_1 = arith.constant 0 : i32
    return %c0_i32, %c0_i32_0 : i32, i32
  }
  func.func @transform_3(%arg0: i32) -> (i32, i32) {
    %c0_i32 = arith.constant 0 : i32
    %c0_i32_0 = arith.constant 0 : i32
    return %arg0, %c0_i32 : i32, i32
  }
}

module attributes {stable_mosaic.version = 11 : i64} {
  func.func @_conv_mm_res_kernel(%arg0: i32, %arg1: memref<16x640xbf16, #tpu.memory_space<vmem>>, %arg2: memref<640x128xbf16, #tpu.memory_space<vmem>>, %arg3: memref<1x128xf32, #tpu.memory_space<vmem>>, %arg4: memref<16x128xbf16, #tpu.memory_space<vmem>>, %arg5: memref<16x128xbf16, #tpu.memory_space<vmem>>) attributes {dimension_semantics = [#tpu.dimension_semantics<parallel>], iteration_bounds = array<i64: 2>, scalar_prefetch = 0 : i64, scratch_operands = 0 : i64, tpu.core_type = #tpu.core_type<tc>, window_params = [{transform_indices = @transform_0, window_bounds = array<i64: 16, 640>}, {pipeline_mode = #tpu.pipeline_mode<synchronous>, transform_indices = @transform_1, window_bounds = array<i64: 640, 128>}, {pipeline_mode = #tpu.pipeline_mode<synchronous>, transform_indices = @transform_2, window_bounds = array<i64: 1, 128>}, {transform_indices = @transform_3, window_bounds = array<i64: 16, 128>}, {transform_indices = @transform_4, window_bounds = array<i64: 16, 128>}]} {
    %c0 = arith.constant 0 : index
    %c0_0 = arith.constant 0 : index
    %0 = vector.load %arg1[%c0, %c0_0] : memref<16x640xbf16, #tpu.memory_space<vmem>>, vector<16x640xbf16>
    %c0_1 = arith.constant 0 : index
    %c0_2 = arith.constant 0 : index
    %1 = vector.load %arg2[%c0_1, %c0_2] : memref<640x128xbf16, #tpu.memory_space<vmem>>, vector<640x128xbf16>
    %cst = arith.constant dense<0.000000e+00> : vector<16x128xf32>
    %2 = tpu.matmul %0, %1, %cst {dimension_numbers = #tpu.dot_dimension_numbers<[1], [0], [0], [1], [0, 0, 1, 1], [], []>} : vector<16x640xbf16>, vector<640x128xbf16>, vector<16x128xf32> -> vector<16x128xf32>
    %c0_3 = arith.constant 0 : index
    %c0_4 = arith.constant 0 : index
    %3 = vector.load %arg3[%c0_3, %c0_4] : memref<1x128xf32, #tpu.memory_space<vmem>>, vector<1x128xf32>
    %4 = vector.broadcast %3 : vector<1x128xf32> to vector<16x128xf32>
    %5 = arith.addf %2, %4 : vector<16x128xf32>
    %c0_5 = arith.constant 0 : index
    %c0_6 = arith.constant 0 : index
    %6 = vector.load %arg4[%c0_5, %c0_6] : memref<16x128xbf16, #tpu.memory_space<vmem>>, vector<16x128xbf16>
    %7 = arith.extf %6 : vector<16x128xbf16> to vector<16x128xf32>
    %8 = arith.addf %5, %7 : vector<16x128xf32>
    %cst_7 = arith.constant 0.000000e+00 : f32
    %9 = vector.broadcast %cst_7 : f32 to vector<16x128xf32>
    %10 = arith.maximumf %8, %9 : vector<16x128xf32>
    %11 = arith.truncf %10 : vector<16x128xf32> to vector<16x128xbf16>
    %c0_8 = arith.constant 0 : index
    %c0_9 = arith.constant 0 : index
    %12 = vector.load %arg5[%c0_8, %c0_9] : memref<16x128xbf16, #tpu.memory_space<vmem>>, vector<16x128xbf16>
    tpu.vector_store %arg5[%c0_8, %c0_9], %11 {strides = array<i32>} : memref<16x128xbf16, #tpu.memory_space<vmem>>, vector<16x128xbf16>,
    return
  }
  func.func @transform_0(%arg0: i32) -> (i32, i32) {
    %c0_i32 = arith.constant 0 : i32
    %c0_i32_0 = arith.constant 0 : i32
    return %arg0, %c0_i32 : i32, i32
  }
  func.func @transform_1(%arg0: i32) -> (i32, i32) {
    %c0_i32 = arith.constant 0 : i32
    %c0_i32_0 = arith.constant 0 : i32
    %c0_i32_1 = arith.constant 0 : i32
    return %c0_i32, %c0_i32_0 : i32, i32
  }
  func.func @transform_2(%arg0: i32) -> (i32, i32) {
    %c0_i32 = arith.constant 0 : i32
    %c0_i32_0 = arith.constant 0 : i32
    %c0_i32_1 = arith.constant 0 : i32
    return %c0_i32, %c0_i32_0 : i32, i32
  }
  func.func @transform_3(%arg0: i32) -> (i32, i32) {
    %c0_i32 = arith.constant 0 : i32
    %c0_i32_0 = arith.constant 0 : i32
    return %arg0, %c0_i32 : i32, i32
  }
  func.func @transform_4(%arg0: i32) -> (i32, i32) {
    %c0_i32 = arith.constant 0 : i32
    %c0_i32_0 = arith.constant 0 : i32
    return %arg0, %c0_i32 : i32, i32
  }
}

</mosaic_0001>

<llo_original>
// kernel: _lambda_.19
$region0: #{_lambda_.19}
  #allocation0 [shape = 'u32[]', space=smem, size = 0x4, offset = 0x4, fixed_abs, tag = 'smem constant byte address 0x4 - core index']
  #allocation1 [shape = 'u32[144,128]{1,0:T(1,128)}', space=vmem, size = 0x12000, scoped, tag = 'internal scratch']
  %s0 = inlined_call_operand.vmem [shape: bf16[128,128], index: 0, kind: input, shape index: {}]
  %s1 = inlined_call_operand.vmem [shape: bf16[128,128], index: 1, kind: input, shape index: {}]
  %s2 = inlined_call_operand.vmem [shape: bf16[128,128], index: 2, kind: input, shape index: {}]
  %s3 = inlined_call_operand.vmem [shape: bf16[128,128], index: 3, kind: input, shape index: {}]
  %s4 = inlined_call_operand.vmem [shape: bf16[128,128], index: 4, kind: input, shape index: {}]
  %s5 = inlined_call_operand.vmem [shape: bf16[128,128], index: 5, kind: input, shape index: {}]
  %s6 = inlined_call_operand.vmem [shape: bf16[128,128], index: 6, kind: input, shape index: {}]
  %s7 = inlined_call_operand.vmem [shape: bf16[128,128], index: 7, kind: input, shape index: {}]
  %s8 = inlined_call_operand.vmem [shape: bf16[128,128], index: 8, kind: input, shape index: {}]
  %s9 = inlined_call_operand.vmem [shape: bf16[128,128], index: 9, kind: output, shape index: {}]
  %s10 = sld [smem:[#allocation0]]
  $region69: #{_lambda_.19} parent=0
    _
  %s12 = ssub.s32 1, %s10
  %s13 = scalar_select 0, %s12, %s10
  loop: start=0, step=1, limit=4
  $region2: #{_lambda_.19} parent=0 // loop_pre_header
    _
  $region3: #{_lambda_.19} parent=0 // loop_header
    %s15 = sphi 0, %s19
    %p16 = scmp.ge.s32.totalorder %s15, 4
    %s25 = sphi 0, %s27
    %s28 = sphi 0, %s25
    %s29 = sphi 0, %s28
    %s45 = sphi 0, %s29
    %s51 = sphi 0, %s53
    %s54 = sphi 0, %s51
    %s55 = sphi 0, %s54
    %s71 = sphi 0, %s55
    %s77 = sphi 0, %s79
    %s80 = sphi 0, %s77
    %s81 = sphi 0, %s80
    %s97 = sphi 0, %s81
    %s103 = sphi 0, %s105
    %s106 = sphi 0, %s103
    %s107 = sphi 0, %s106
    %s123 = sphi 0, %s107
    %s129 = sphi 0, %s131
    %s132 = sphi 0, %s129
    %s133 = sphi 0, %s132
    %s149 = sphi 0, %s133
    %s155 = sphi 0, %s157
    %s158 = sphi 0, %s155
    %s159 = sphi 0, %s158
    %s175 = sphi 0, %s159
    %s181 = sphi 0, %s183
    %s184 = sphi 0, %s181
    %s185 = sphi 0, %s184
    %s201 = sphi 0, %s185
    %s207 = sphi 0, %s209
    %s210 = sphi 0, %s207
    %s211 = sphi 0, %s210
    %s227 = sphi 0, %s211
    %s233 = sphi 0, %s235
    %s236 = sphi 0, %s233
    %s237 = sphi 0, %s236
    %s253 = sphi 0, %s237
    %s259 = sphi 0, %s261
    %s262 = sphi 0, %s259
    %s263 = sphi 0, %s262
    %s279 = sphi 0, %s263
  $region4: #{_lambda_.19} parent=0 // loop_header_branch
    %18 = sbr.rel (%p16) target = $region8
  $region5: #{_lambda_.19} parent=0 // loop_body
    %s20 = ssub.s32 %s15, 1
    %s21 = ssub.s32 %s15, 2
    %s22 = sadd.s32 %s15, 1
    %s23 = ssub.s32 %s15, %s22
    %p24 = scmp.eq.s32.totalorder %s23, 0
    %s26 = sadd.s32 %s25, 1
    %s27 = scalar_select %p24, %s25, %s26
    %p30 = pneg %p24
    %p31 = scmp.eq.s32.totalorder %s15, 1
    %p32 = por %p30, %p31
    %p33 = scmp.ne.s32.totalorder %s25, %s28
    %p34 = scmp.eq.s32.totalorder %s15, 0
    %p35 = por %p33, %p34
    %p36 = scmp.ne.s32.totalorder %s25, %s28
    %p37 = scmp.eq.s32.totalorder %s20, 1
    %p38 = por %p36, %p37
    %p39 = scmp.ne.s32.totalorder %s28, %s29
    %p40 = scmp.eq.s32.totalorder %s20, 0
    %p41 = por %p39, %p40
    %p42 = scmp.ne.s32.totalorder %s28, %s29
    %p43 = scmp.eq.s32.totalorder %s21, 1
    %p44 = por %p42, %p43
    %p46 = scmp.ne.s32.totalorder %s29, %s45
    %p47 = scmp.eq.s32.totalorder %s21, 0
    %p48 = por %p46, %p47
    %s49 = ssub.s32 %s15, %s22
    %p50 = scmp.eq.s32.totalorder %s49, 0
    %s52 = sadd.s32 %s51, 1
    %s53 = scalar_select %p50, %s51, %s52
    %p56 = pneg %p50
    %p57 = scmp.eq.s32.totalorder %s15, 1
    %p58 = por %p56, %p57
    %p59 = scmp.ne.s32.totalorder %s51, %s54
    %p60 = scmp.eq.s32.totalorder %s15, 0
    %p61 = por %p59, %p60
    %p62 = scmp.ne.s32.totalorder %s51, %s54
    %p63 = scmp.eq.s32.totalorder %s20, 1
    %p64 = por %p62, %p63
    %p65 = scmp.ne.s32.totalorder %s54, %s55
    %p66 = scmp.eq.s32.totalorder %s20, 0
    %p67 = por %p65, %p66
    %p68 = scmp.ne.s32.totalorder %s54, %s55
    %p69 = scmp.eq.s32.totalorder %s21, 1
    %p70 = por %p68, %p69
    %p72 = scmp.ne.s32.totalorder %s55, %s71
    %p73 = scmp.eq.s32.totalorder %s21, 0
    %p74 = por %p72, %p73
    %s75 = ssub.s32 %s15, %s22
    %p76 = scmp.eq.s32.totalorder %s75, 0
    %s78 = sadd.s32 %s77, 1
    %s79 = scalar_select %p76, %s77, %s78
    %p82 = pneg %p76
    %p83 = scmp.eq.s32.totalorder %s15, 1
    %p84 = por %p82, %p83
    %p85 = scmp.ne.s32.totalorder %s77, %s80
    %p86 = scmp.eq.s32.totalorder %s15, 0
    %p87 = por %p85, %p86
    %p88 = scmp.ne.s32.totalorder %s77, %s80
    %p89 = scmp.eq.s32.totalorder %s20, 1
    %p90 = por %p88, %p89
    %p91 = scmp.ne.s32.totalorder %s80, %s81
    %p92 = scmp.eq.s32.totalorder %s20, 0
    %p93 = por %p91, %p92
    %p94 = scmp.ne.s32.totalorder %s80, %s81
    %p95 = scmp.eq.s32.totalorder %s21, 1
    %p96 = por %p94, %p95
    %p98 = scmp.ne.s32.totalorder %s81, %s97
    %p99 = scmp.eq.s32.totalorder %s21, 0
    %p100 = por %p98, %p99
    %s101 = ssub.s32 %s15, %s22
    %p102 = scmp.eq.s32.totalorder %s101, 0
    %s104 = sadd.s32 %s103, 1
    %s105 = scalar_select %p102, %s103, %s104
    %p108 = pneg %p102
    %p109 = scmp.eq.s32.totalorder %s15, 1
    %p110 = por %p108, %p109
    %p111 = scmp.ne.s32.totalorder %s103, %s106
    %p112 = scmp.eq.s32.totalorder %s15, 0
    %p113 = por %p111, %p112
    %p114 = scmp.ne.s32.totalorder %s103, %s106
    %p115 = scmp.eq.s32.totalorder %s20, 1
    %p116 = por %p114, %p115
    %p117 = scmp.ne.s32.totalorder %s106, %s107
    %p118 = scmp.eq.s32.totalorder %s20, 0
    %p119 = por %p117, %p118
    %p120 = scmp.ne.s32.totalorder %s106, %s107
    %p121 = scmp.eq.s32.totalorder %s21, 1
    %p122 = por %p120, %p121
    %p124 = scmp.ne.s32.totalorder %s107, %s123
    %p125 = scmp.eq.s32.totalorder %s21, 0
    %p126 = por %p124, %p125
    %s127 = ssub.s32 %s15, %s22
    %p128 = scmp.eq.s32.totalorder %s127, 0
    %s130 = sadd.s32 %s129, 1
    %s131 = scalar_select %p128, %s129, %s130
    %p134 = pneg %p128
    %p135 = scmp.eq.s32.totalorder %s15, 1
    %p136 = por %p134, %p135
    %p137 = scmp.ne.s32.totalorder %s129, %s132
    %p138 = scmp.eq.s32.totalorder %s15, 0
    %p139 = por %p137, %p138
    %p140 = scmp.ne.s32.totalorder %s129, %s132
    %p141 = scmp.eq.s32.totalorder %s20, 1
    %p142 = por %p140, %p141
    %p143 = scmp.ne.s32.totalorder %s132, %s133
    %p144 = scmp.eq.s32.totalorder %s20, 0
    %p145 = por %p143, %p144
    %p146 = scmp.ne.s32.totalorder %s132, %s133
    %p147 = scmp.eq.s32.totalorder %s21, 1
    %p148 = por %p146, %p147
    %p150 = scmp.ne.s32.totalorder %s133, %s149
    %p151 = scmp.eq.s32.totalorder %s21, 0
    %p152 = por %p150, %p151
    %s153 = ssub.s32 %s15, %s22
    %p154 = scmp.eq.s32.totalorder %s153, 0
    %s156 = sadd.s32 %s155, 1
    %s157 = scalar_select %p154, %s155, %s156
    %p160 = pneg %p154
    %p161 = scmp.eq.s32.totalorder %s15, 1
    %p162 = por %p160, %p161
    %p163 = scmp.ne.s32.totalorder %s155, %s158
    %p164 = scmp.eq.s32.totalorder %s15, 0
    %p165 = por %p163, %p164
    %p166 = scmp.ne.s32.totalorder %s155, %s158
    %p167 = scmp.eq.s32.totalorder %s20, 1
    %p168 = por %p166, %p167
    %p169 = scmp.ne.s32.totalorder %s158, %s159
    %p170 = scmp.eq.s32.totalorder %s20, 0
    %p171 = por %p169, %p170
    %p172 = scmp.ne.s32.totalorder %s158, %s159
    %p173 = scmp.eq.s32.totalorder %s21, 1
    %p174 = por %p172, %p173
    %p176 = scmp.ne.s32.totalorder %s159, %s175
    %p177 = scmp.eq.s32.totalorder %s21, 0
    %p178 = por %p176, %p177
    %s179 = ssub.s32 %s15, %s22
    %p180 = scmp.eq.s32.totalorder %s179, 0
    %s182 = sadd.s32 %s181, 1
    %s183 = scalar_select %p180, %s181, %s182
    %p186 = pneg %p180
    %p187 = scmp.eq.s32.totalorder %s15, 1
    %p188 = por %p186, %p187
    %p189 = scmp.ne.s32.totalorder %s181, %s184
    %p190 = scmp.eq.s32.totalorder %s15, 0
    %p191 = por %p189, %p190
    %p192 = scmp.ne.s32.totalorder %s181, %s184
    %p193 = scmp.eq.s32.totalorder %s20, 1
    %p194 = por %p192, %p193
    %p195 = scmp.ne.s32.totalorder %s184, %s185
    %p196 = scmp.eq.s32.totalorder %s20, 0
    %p197 = por %p195, %p196
    %p198 = scmp.ne.s32.totalorder %s184, %s185
    %p199 = scmp.eq.s32.totalorder %s21, 1
    %p200 = por %p198, %p199
    %p202 = scmp.ne.s32.totalorder %s185, %s201
    %p203 = scmp.eq.s32.totalorder %s21, 0
    %p204 = por %p202, %p203
    %s205 = ssub.s32 %s15, %s22
    %p206 = scmp.eq.s32.totalorder %s205, 0
    %s208 = sadd.s32 %s207, 1
    %s209 = scalar_select %p206, %s207, %s208
    %p212 = pneg %p206
    %p213 = scmp.eq.s32.totalorder %s15, 1
    %p214 = por %p212, %p213
    %p215 = scmp.ne.s32.totalorder %s207, %s210
    %p216 = scmp.eq.s32.totalorder %s15, 0
    %p217 = por %p215, %p216
    %p218 = scmp.ne.s32.totalorder %s207, %s210
    %p219 = scmp.eq.s32.totalorder %s20, 1
    %p220 = por %p218, %p219
    %p221 = scmp.ne.s32.totalorder %s210, %s211
    %p222 = scmp.eq.s32.totalorder %s20, 0
    %p223 = por %p221, %p222
    %p224 = scmp.ne.s32.totalorder %s210, %s211
    %p225 = scmp.eq.s32.totalorder %s21, 1
    %p226 = por %p224, %p225
    %p228 = scmp.ne.s32.totalorder %s211, %s227
    %p229 = scmp.eq.s32.totalorder %s21, 0
    %p230 = por %p228, %p229
    %s231 = ssub.s32 %s15, %s22
    %p232 = scmp.eq.s32.totalorder %s231, 0
    %s234 = sadd.s32 %s233, 1
    %s235 = scalar_select %p232, %s233, %s234
    %p238 = pneg %p232
    %p239 = scmp.eq.s32.totalorder %s15, 1
    %p240 = por %p238, %p239
    %p241 = scmp.ne.s32.totalorder %s233, %s236
    %p242 = scmp.eq.s32.totalorder %s15, 0
    %p243 = por %p241, %p242
    %p244 = scmp.ne.s32.totalorder %s233, %s236
    %p245 = scmp.eq.s32.totalorder %s20, 1
    %p246 = por %p244, %p245
    %p247 = scmp.ne.s32.totalorder %s236, %s237
    %p248 = scmp.eq.s32.totalorder %s20, 0
    %p249 = por %p247, %p248
    %p250 = scmp.ne.s32.totalorder %s236, %s237
    %p251 = scmp.eq.s32.totalorder %s21, 1
    %p252 = por %p250, %p251
    %p254 = scmp.ne.s32.totalorder %s237, %s253
    %p255 = scmp.eq.s32.totalorder %s21, 0
    %p256 = por %p254, %p255
    %s257 = ssub.s32 %s15, %s22
    %p258 = scmp.eq.s32.totalorder %s257, 0
    %s260 = sadd.s32 %s259, 1
    %s261 = scalar_select %p258, %s259, %s260
    %p264 = pneg %p258
    %p265 = scmp.eq.s32.totalorder %s15, 1
    %p266 = por %p264, %p265
    %p267 = scmp.ne.s32.totalorder %s259, %s262
    %p268 = scmp.eq.s32.totalorder %s15, 0
    %p269 = por %p267, %p268
    %p270 = scmp.ne.s32.totalorder %s259, %s262
    %p271 = scmp.eq.s32.totalorder %s20, 1
    %p272 = por %p270, %p271
    %p273 = scmp.ne.s32.totalorder %s262, %s263
    %p274 = scmp.eq.s32.totalorder %s20, 0
    %p275 = por %p273, %p274
    %p276 = scmp.ne.s32.totalorder %s262, %s263
    %p277 = scmp.eq.s32.totalorder %s21, 1
    %p278 = por %p276, %p277
    %p280 = scmp.ne.s32.totalorder %s263, %s279
    %p281 = scmp.eq.s32.totalorder %s21, 0
    %p282 = por %p280, %p281
    %p283 = scmp.le.s32.totalorder 1, %s15
    %p284 = scmp.lt.s32.totalorder %s15, 3
    %p285 = pnand %p283, %p284
    %p286 = pneg %p285
    // Predicated region
    $region9: #{_lambda_.19} parent=5 // pred_check
      _
    $region10: #{_lambda_.19} parent=5 // pred_check_branch
      %288 = sbr.rel (%p285) target = $region12
    $region11: #{_lambda_.19} parent=5 // pred_region
      %s289 = ssub.s32 %s15, 1
    $region12: #{_lambda_.19} parent=5 // pred_fallthru
      _
    %p290 = scmp.lt.s32.totalorder %s15, 2
    // Predicated region
    $region13: #{_lambda_.19} parent=5 // pred_check
      %p291 = pneg %p290
    $region14: #{_lambda_.19} parent=5 // pred_check_branch
      %293 = sbr.rel (%p291) target = $region16
    $region15: #{_lambda_.19} parent=5 // pred_region
      // Predicated region
      $region17: #{_lambda_.19} parent=15 // pred_check
        %p294 = pneg %p35
      $region18: #{_lambda_.19} parent=15 // pred_check_branch
        %296 = sbr.rel (%p294) target = $region20
      $region19: #{_lambda_.19} parent=15 // pred_region
        %s297 = smul.u32 8, %s15
        %p298 = scmp.lt.s32.totalorder %s297, 15
        %s299 = scalar_select %p298, %s297, 15
        %s300 = smul.addr %s299, 4
        %s301 = scalar_lea.vmem %s0, %s300
        %s302 = smul.u32 8, %s15
      $region20: #{_lambda_.19} parent=15 // pred_fallthru
        _
      // Predicated region
      $region21: #{_lambda_.19} parent=15 // pred_check
        %p303 = pneg %p61
      $region22: #{_lambda_.19} parent=15 // pred_check_branch
        %305 = sbr.rel (%p303) target = $region24
      $region23: #{_lambda_.19} parent=15 // pred_region
        %s306 = smul.u32 8, %s15
        %p307 = scmp.lt.s32.totalorder %s306, 15
        %s308 = scalar_select %p307, %s306, 15
        %s309 = smul.addr %s308, 4
        %s310 = scalar_lea.vmem %s1, %s309
        %s311 = smul.u32 8, %s15
      $region24: #{_lambda_.19} parent=15 // pred_fallthru
        _
      // Predicated region
      $region25: #{_lambda_.19} parent=15 // pred_check
        %p312 = pneg %p87
      $region26: #{_lambda_.19} parent=15 // pred_check_branch
        %314 = sbr.rel (%p312) target = $region28
      $region27: #{_lambda_.19} parent=15 // pred_region
        %s315 = smul.u32 8, %s15
        %p316 = scmp.lt.s32.totalorder %s315, 15
        %s317 = scalar_select %p316, %s315, 15
        %s318 = smul.addr %s317, 4
        %s319 = scalar_lea.vmem %s2, %s318
        %s320 = smul.u32 8, %s15
      $region28: #{_lambda_.19} parent=15 // pred_fallthru
        _
      // Predicated region
      $region29: #{_lambda_.19} parent=15 // pred_check
        %p321 = pneg %p113
      $region30: #{_lambda_.19} parent=15 // pred_check_branch
        %323 = sbr.rel (%p321) target = $region32
      $region31: #{_lambda_.19} parent=15 // pred_region
        %s324 = smul.u32 8, %s15
        %p325 = scmp.lt.s32.totalorder %s324, 15
        %s326 = scalar_select %p325, %s324, 15
        %s327 = smul.addr %s326, 4
        %s328 = scalar_lea.vmem %s3, %s327
        %s329 = smul.u32 8, %s15
      $region32: #{_lambda_.19} parent=15 // pred_fallthru
        _
      // Predicated region
      $region33: #{_lambda_.19} parent=15 // pred_check
        %p330 = pneg %p139
      $region34: #{_lambda_.19} parent=15 // pred_check_branch
        %332 = sbr.rel (%p330) target = $region36
      $region35: #{_lambda_.19} parent=15 // pred_region
        %s333 = smul.u32 8, %s15
        %p334 = scmp.lt.s32.totalorder %s333, 15
        %s335 = scalar_select %p334, %s333, 15
        %s336 = smul.addr %s335, 4
        %s337 = scalar_lea.vmem %s4, %s336
        %s338 = smul.u32 8, %s15
      $region36: #{_lambda_.19} parent=15 // pred_fallthru
        _
      // Predicated region
      $region37: #{_lambda_.19} parent=15 // pred_check
        %p339 = pneg %p165
      $region38: #{_lambda_.19} parent=15 // pred_check_branch
        %341 = sbr.rel (%p339) target = $region40
      $region39: #{_lambda_.19} parent=15 // pred_region
        %s342 = smul.u32 8, %s15
        %p343 = scmp.lt.s32.totalorder %s342, 15
        %s344 = scalar_select %p343, %s342, 15
        %s345 = smul.addr %s344, 4
        %s346 = scalar_lea.vmem %s5, %s345
        %s347 = smul.u32 8, %s15
      $region40: #{_lambda_.19} parent=15 // pred_fallthru
        _
      // Predicated region
      $region41: #{_lambda_.19} parent=15 // pred_check
        %p348 = pneg %p191
      $region42: #{_lambda_.19} parent=15 // pred_check_branch
        %350 = sbr.rel (%p348) target = $region44
      $region43: #{_lambda_.19} parent=15 // pred_region
        %s351 = smul.u32 8, %s15
        %p352 = scmp.lt.s32.totalorder %s351, 15
        %s353 = scalar_select %p352, %s351, 15
        %s354 = smul.addr %s353, 4
        %s355 = scalar_lea.vmem %s6, %s354
        %s356 = smul.u32 8, %s15
      $region44: #{_lambda_.19} parent=15 // pred_fallthru
        _
      // Predicated region
      $region45: #{_lambda_.19} parent=15 // pred_check
        %p357 = pneg %p217
      $region46: #{_lambda_.19} parent=15 // pred_check_branch
        %359 = sbr.rel (%p357) target = $region48
      $region47: #{_lambda_.19} parent=15 // pred_region
        %s360 = smul.u32 8, %s15
        %p361 = scmp.lt.s32.totalorder %s360, 15
        %s362 = scalar_select %p361, %s360, 15
        %s363 = smul.addr %s362, 4
        %s364 = scalar_lea.vmem %s7, %s363
        %s365 = smul.u32 8, %s15
      $region48: #{_lambda_.19} parent=15 // pred_fallthru
        _
      // Predicated region
      $region49: #{_lambda_.19} parent=15 // pred_check
        %p366 = pneg %p243
      $region50: #{_lambda_.19} parent=15 // pred_check_branch
        %368 = sbr.rel (%p366) target = $region52
      $region51: #{_lambda_.19} parent=15 // pred_region
        %s369 = smul.u32 8, %s15
        %p370 = scmp.lt.s32.totalorder %s369, 15
        %s371 = scalar_select %p370, %s369, 15
        %s372 = smul.addr %s371, 4
        %s373 = scalar_lea.vmem %s8, %s372
        %s374 = smul.u32 8, %s15
      $region52: #{_lambda_.19} parent=15 // pred_fallthru
        _
    $region16: #{_lambda_.19} parent=5 // pred_fallthru
      _
    %p375 = scmp.le.s32.totalorder 1, %s15
    %p376 = scmp.lt.s32.totalorder %s15, 3
    %p377 = pnand %p375, %p376
    %p378 = pneg %p377
    // Predicated region
    $region53: #{_lambda_.19} parent=5 // pred_check
      _
    $region54: #{_lambda_.19} parent=5 // pred_check_branch
      %380 = sbr.rel (%p377) target = $region56
    $region55: #{_lambda_.19} parent=5 // pred_region
      %s381 = ssub.s32 %s15, 1
      %s382 = smul.u32 8, %s20
      %p383 = scmp.lt.s32.totalorder %s382, 15
      %s384 = scalar_select %p383, %s382, 15
      %s385 = smul.addr %s384, 4
      %s386 = scalar_lea.vmem %s0, %s385
      %p387 = pneg %p41
      %p388 = pneg %p38
      %s389 = smul.u32 8, %s20
      %p390 = scmp.lt.s32.totalorder %s389, 15
      %s391 = scalar_select %p390, %s389, 15
      %s392 = smul.addr %s391, 4
      %s393 = scalar_lea.vmem %s1, %s392
      %p394 = pneg %p67
      %p395 = pneg %p64
      %s396 = smul.u32 8, %s20
      %p397 = scmp.lt.s32.totalorder %s396, 15
      %s398 = scalar_select %p397, %s396, 15
      %s399 = smul.addr %s398, 4
      %s400 = scalar_lea.vmem %s2, %s399
      %p401 = pneg %p93
      %p402 = pneg %p90
      %s403 = smul.u32 8, %s20
      %p404 = scmp.lt.s32.totalorder %s403, 15
      %s405 = scalar_select %p404, %s403, 15
      %s406 = smul.addr %s405, 4
      %s407 = scalar_lea.vmem %s3, %s406
      %p408 = pneg %p119
      %p409 = pneg %p116
      %s410 = smul.u32 8, %s20
      %p411 = scmp.lt.s32.totalorder %s410, 15
      %s412 = scalar_select %p411, %s410, 15
      %s413 = smul.addr %s412, 4
      %s414 = scalar_lea.vmem %s4, %s413
      %p415 = pneg %p145
      %p416 = pneg %p142
      %s417 = smul.u32 8, %s20
      %p418 = scmp.lt.s32.totalorder %s417, 15
      %s419 = scalar_select %p418, %s417, 15
      %s420 = smul.addr %s419, 4
      %s421 = scalar_lea.vmem %s5, %s420
      %p422 = pneg %p171
      %p423 = pneg %p168
      %s424 = smul.u32 8, %s20
      %p425 = scmp.lt.s32.totalorder %s424, 15
      %s426 = scalar_select %p425, %s424, 15
      %s427 = smul.addr %s426, 4
      %s428 = scalar_lea.vmem %s6, %s427
      %p429 = pneg %p197
      %p430 = pneg %p194
      %s431 = smul.u32 8, %s20
      %p432 = scmp.lt.s32.totalorder %s431, 15
      %s433 = scalar_select %p432, %s431, 15
      %s434 = smul.addr %s433, 4
      %s435 = scalar_lea.vmem %s7, %s434
      %p436 = pneg %p223
      %p437 = pneg %p220
      %s438 = smul.u32 8, %s20
      %p439 = scmp.lt.s32.totalorder %s438, 15
      %s440 = scalar_select %p439, %s438, 15
      %s441 = smul.addr %s440, 4
      %s442 = scalar_lea.vmem %s8, %s441
      %p443 = pneg %p249
      %p444 = pneg %p246
      %p445 = pneg %p275
      %p446 = pneg %p272
      %s447 = smul.u32 8, %s20
      %p448 = scmp.lt.s32.totalorder %s447, 15
      %s449 = scalar_select %p448, %s447, 15
      %s450 = smul.addr %s449, 4
      %s451 = scalar_lea.vmem %s9, %s450
      %s452 = smul.u32 8, %s20
      %p453 = scmp.lt.s32.totalorder %s452, 15
      %s454 = scalar_select %p453, %s452, 15
      %s455 = smul.addr %s454, 4
      %s456 = scalar_lea.vmem %s0, %s455
      %s457 = smul.u32 8, %s20
      %s458 = smul.u32 8, %s20
      %p459 = scmp.lt.s32.totalorder %s458, 15
      %s460 = scalar_select %p459, %s458, 15
      %s461 = smul.addr %s460, 4
      %s462 = scalar_lea.vmem %s1, %s461
      %s463 = smul.u32 8, %s20
      %s464 = smul.u32 8, %s20
      %p465 = scmp.lt.s32.totalorder %s464, 15
      %s466 = scalar_select %p465, %s464, 15
      %s467 = smul.addr %s466, 4
      %s468 = scalar_lea.vmem %s2, %s467
      %s469 = smul.u32 8, %s20
      %s470 = smul.u32 8, %s20
      %p471 = scmp.lt.s32.totalorder %s470, 15
      %s472 = scalar_select %p471, %s470, 15
      %s473 = smul.addr %s472, 4
      %s474 = scalar_lea.vmem %s3, %s473
      %s475 = smul.u32 8, %s20
      %s476 = smul.u32 8, %s20
      %p477 = scmp.lt.s32.totalorder %s476, 15
      %s478 = scalar_select %p477, %s476, 15
      %s479 = smul.addr %s478, 4
      %s480 = scalar_lea.vmem %s4, %s479
      %s481 = smul.u32 8, %s20
      %s482 = smul.u32 8, %s20
      %p483 = scmp.lt.s32.totalorder %s482, 15
      %s484 = scalar_select %p483, %s482, 15
      %s485 = smul.addr %s484, 4
      %s486 = scalar_lea.vmem %s5, %s485
      %s487 = smul.u32 8, %s20
      %s488 = smul.u32 8, %s20
      %p489 = scmp.lt.s32.totalorder %s488, 15
      %s490 = scalar_select %p489, %s488, 15
      %s491 = smul.addr %s490, 4
      %s492 = scalar_lea.vmem %s6, %s491
      %s493 = smul.u32 8, %s20
      %s494 = smul.u32 8, %s20
      %p495 = scmp.lt.s32.totalorder %s494, 15
      %s496 = scalar_select %p495, %s494, 15
      %s497 = smul.addr %s496, 4
      %s498 = scalar_lea.vmem %s7, %s497
      %s499 = smul.u32 8, %s20
      %s500 = smul.u32 8, %s20
      %p501 = scmp.lt.s32.totalorder %s500, 15
      %s502 = scalar_select %p501, %s500, 15
      %s503 = smul.addr %s502, 4
      %s504 = scalar_lea.vmem %s8, %s503
      %s505 = smul.u32 8, %s20
      %s506 = smul.u32 8, %s20
      %p507 = scmp.lt.s32.totalorder %s506, 15
      %s508 = scalar_select %p507, %s506, 15
      %s509 = smul.addr %s508, 4
      %s510 = scalar_lea.vmem %s9, %s509
      %s511 = smul.u32 8, %s20
      %v512 = vld [vmem:[%s456] sm:$0xf]
      %v513 = vld [vmem:[%s456 + $0x4] sm:$0xf]
      %v514 = vld [vmem:[%s456 + $0x8] sm:$0xf]
      %v515 = vld [vmem:[%s456 + $0xc] sm:$0xf]
      %v516 = vld [vmem:[%s456 + $0x10] sm:$0xf]
      %v517 = vld [vmem:[%s456 + $0x14] sm:$0xf]
      %v518 = vld [vmem:[%s456 + $0x18] sm:$0xf]
      %v519 = vld [vmem:[%s456 + $0x1c] sm:$0xf]
      %v520 = vld [vmem:[%s462] sm:$0xf]
      %v521 = vld [vmem:[%s462 + $0x4] sm:$0xf]
      %v522 = vld [vmem:[%s462 + $0x8] sm:$0xf]
      %v523 = vld [vmem:[%s462 + $0xc] sm:$0xf]
      %v524 = vld [vmem:[%s462 + $0x10] sm:$0xf]
      %v525 = vld [vmem:[%s462 + $0x14] sm:$0xf]
      %v526 = vld [vmem:[%s462 + $0x18] sm:$0xf]
      %v527 = vld [vmem:[%s462 + $0x1c] sm:$0xf]
      %v528 = vmax.bf16 %v512, %v520
      %v529 = vmax.bf16 %v513, %v521
      %v530 = vmax.bf16 %v514, %v522
      %v531 = vmax.bf16 %v515, %v523
      %v532 = vmax.bf16 %v516, %v524
      %v533 = vmax.bf16 %v517, %v525
      %v534 = vmax.bf16 %v518, %v526
      %v535 = vmax.bf16 %v519, %v527
      %v536 = vld [vmem:[%s468] sm:$0xf]
      %v537 = vld [vmem:[%s468 + $0x4] sm:$0xf]
      %v538 = vld [vmem:[%s468 + $0x8] sm:$0xf]
      %v539 = vld [vmem:[%s468 + $0xc] sm:$0xf]
      %v540 = vld [vmem:[%s468 + $0x10] sm:$0xf]
      %v541 = vld [vmem:[%s468 + $0x14] sm:$0xf]
      %v542 = vld [vmem:[%s468 + $0x18] sm:$0xf]
      %v543 = vld [vmem:[%s468 + $0x1c] sm:$0xf]
      %v544 = vmax.bf16 %v528, %v536
      %v545 = vmax.bf16 %v529, %v537
      %v546 = vmax.bf16 %v530, %v538
      %v547 = vmax.bf16 %v531, %v539
      %v548 = vmax.bf16 %v532, %v540
      %v549 = vmax.bf16 %v533, %v541
      %v550 = vmax.bf16 %v534, %v542
      %v551 = vmax.bf16 %v535, %v543
      %v552 = vld [vmem:[%s474] sm:$0xf]
      %v553 = vld [vmem:[%s474 + $0x4] sm:$0xf]
      %v554 = vld [vmem:[%s474 + $0x8] sm:$0xf]
      %v555 = vld [vmem:[%s474 + $0xc] sm:$0xf]
      %v556 = vld [vmem:[%s474 + $0x10] sm:$0xf]
      %v557 = vld [vmem:[%s474 + $0x14] sm:$0xf]
      %v558 = vld [vmem:[%s474 + $0x18] sm:$0xf]
      %v559 = vld [vmem:[%s474 + $0x1c] sm:$0xf]
      %v560 = vmax.bf16 %v544, %v552
      %v561 = vmax.bf16 %v545, %v553
      %v562 = vmax.bf16 %v546, %v554
      %v563 = vmax.bf16 %v547, %v555
      %v564 = vmax.bf16 %v548, %v556
      %v565 = vmax.bf16 %v549, %v557
      %v566 = vmax.bf16 %v550, %v558
      %v567 = vmax.bf16 %v551, %v559
      %v568 = vld [vmem:[%s480] sm:$0xf]
      %v569 = vld [vmem:[%s480 + $0x4] sm:$0xf]
      %v570 = vld [vmem:[%s480 + $0x8] sm:$0xf]
      %v571 = vld [vmem:[%s480 + $0xc] sm:$0xf]
      %v572 = vld [vmem:[%s480 + $0x10] sm:$0xf]
      %v573 = vld [vmem:[%s480 + $0x14] sm:$0xf]
      %v574 = vld [vmem:[%s480 + $0x18] sm:$0xf]
      %v575 = vld [vmem:[%s480 + $0x1c] sm:$0xf]
      %v576 = vmax.bf16 %v560, %v568
      %v577 = vmax.bf16 %v561, %v569
      %v578 = vmax.bf16 %v562, %v570
      %v579 = vmax.bf16 %v563, %v571
      %v580 = vmax.bf16 %v564, %v572
      %v581 = vmax.bf16 %v565, %v573
      %v582 = vmax.bf16 %v566, %v574
      %v583 = vmax.bf16 %v567, %v575
      %v584 = vld [vmem:[%s486] sm:$0xf]
      %v585 = vld [vmem:[%s486 + $0x4] sm:$0xf]
      %v586 = vld [vmem:[%s486 + $0x8] sm:$0xf]
      %v587 = vld [vmem:[%s486 + $0xc] sm:$0xf]
      %v588 = vld [vmem:[%s486 + $0x10] sm:$0xf]
      %v589 = vld [vmem:[%s486 + $0x14] sm:$0xf]
      %v590 = vld [vmem:[%s486 + $0x18] sm:$0xf]
      %v591 = vld [vmem:[%s486 + $0x1c] sm:$0xf]
      %v592 = vmax.bf16 %v576, %v584
      %v593 = vmax.bf16 %v577, %v585
      %v594 = vmax.bf16 %v578, %v586
      %v595 = vmax.bf16 %v579, %v587
      %v596 = vmax.bf16 %v580, %v588
      %v597 = vmax.bf16 %v581, %v589
      %v598 = vmax.bf16 %v582, %v590
      %v599 = vmax.bf16 %v583, %v591
      %v600 = vld [vmem:[%s492] sm:$0xf]
      %v601 = vld [vmem:[%s492 + $0x4] sm:$0xf]
      %v602 = vld [vmem:[%s492 + $0x8] sm:$0xf]
      %v603 = vld [vmem:[%s492 + $0xc] sm:$0xf]
      %v604 = vld [vmem:[%s492 + $0x10] sm:$0xf]
      %v605 = vld [vmem:[%s492 + $0x14] sm:$0xf]
      %v606 = vld [vmem:[%s492 + $0x18] sm:$0xf]
      %v607 = vld [vmem:[%s492 + $0x1c] sm:$0xf]
      %v608 = vmax.bf16 %v592, %v600
      %v609 = vmax.bf16 %v593, %v601
      %v610 = vmax.bf16 %v594, %v602
      %v611 = vmax.bf16 %v595, %v603
      %v612 = vmax.bf16 %v596, %v604
      %v613 = vmax.bf16 %v597, %v605
      %v614 = vmax.bf16 %v598, %v606
      %v615 = vmax.bf16 %v599, %v607
      %v616 = vld [vmem:[%s498] sm:$0xf]
      %v617 = vld [vmem:[%s498 + $0x4] sm:$0xf]
      %v618 = vld [vmem:[%s498 + $0x8] sm:$0xf]
      %v619 = vld [vmem:[%s498 + $0xc] sm:$0xf]
      %v620 = vld [vmem:[%s498 + $0x10] sm:$0xf]
      %v621 = vld [vmem:[%s498 + $0x14] sm:$0xf]
      %v622 = vld [vmem:[%s498 + $0x18] sm:$0xf]
      %v623 = vld [vmem:[%s498 + $0x1c] sm:$0xf]
      %v624 = vmax.bf16 %v608, %v616
      %v625 = vmax.bf16 %v609, %v617
      %v626 = vmax.bf16 %v610, %v618
      %v627 = vmax.bf16 %v611, %v619
      %v628 = vmax.bf16 %v612, %v620
      %v629 = vmax.bf16 %v613, %v621
      %v630 = vmax.bf16 %v614, %v622
      %v631 = vmax.bf16 %v615, %v623
      %v632 = vld [vmem:[%s504] sm:$0xf]
      %v633 = vld [vmem:[%s504 + $0x4] sm:$0xf]
      %v634 = vld [vmem:[%s504 + $0x8] sm:$0xf]
      %v635 = vld [vmem:[%s504 + $0xc] sm:$0xf]
      %v636 = vld [vmem:[%s504 + $0x10] sm:$0xf]
      %v637 = vld [vmem:[%s504 + $0x14] sm:$0xf]
      %v638 = vld [vmem:[%s504 + $0x18] sm:$0xf]
      %v639 = vld [vmem:[%s504 + $0x1c] sm:$0xf]
      %v640 = vmax.bf16 %v624, %v632
      %v641 = vmax.bf16 %v625, %v633
      %v642 = vmax.bf16 %v626, %v634
      %v643 = vmax.bf16 %v627, %v635
      %v644 = vmax.bf16 %v628, %v636
      %v645 = vmax.bf16 %v629, %v637
      %v646 = vmax.bf16 %v630, %v638
      %v647 = vmax.bf16 %v631, %v639
      %648 = vst [vmem:[%s510] sm:$0xf] %v640
      %649 = vst [vmem:[%s510 + $0x4] sm:$0xf] %v641
      %650 = vst [vmem:[%s510 + $0x8] sm:$0xf] %v642
      %651 = vst [vmem:[%s510 + $0xc] sm:$0xf] %v643
      %652 = vst [vmem:[%s510 + $0x10] sm:$0xf] %v644
      %653 = vst [vmem:[%s510 + $0x14] sm:$0xf] %v645
      %654 = vst [vmem:[%s510 + $0x18] sm:$0xf] %v646
      %655 = vst [vmem:[%s510 + $0x1c] sm:$0xf] %v647
      %s656 = smul.u32 8, %s20
      %p657 = scmp.lt.s32.totalorder %s656, 15
      %s658 = scalar_select %p657, %s656, 15
      %s659 = smul.addr %s658, 4
      %s660 = scalar_lea.vmem %s9, %s659
      // Predicated region
      $region57: #{_lambda_.19} parent=55 // pred_check
        %p661 = pneg %p272
      $region58: #{_lambda_.19} parent=55 // pred_check_branch
        %663 = sbr.rel (%p661) target = $region60
      $region59: #{_lambda_.19} parent=55 // pred_region
        %s664 = smul.u32 8, %s20
      $region60: #{_lambda_.19} parent=55 // pred_fallthru
        _
    $region56: #{_lambda_.19} parent=5 // pred_fallthru
      _
    %p665 = scmp.le.s32.totalorder 2, %s15
    // Predicated region
    $region61: #{_lambda_.19} parent=5 // pred_check
      %p666 = pneg %p665
    $region62: #{_lambda_.19} parent=5 // pred_check_branch
      %668 = sbr.rel (%p666) target = $region64
    $region63: #{_lambda_.19} parent=5 // pred_region
      %s669 = ssub.s32 %s15, 2
      // Predicated region
      $region65: #{_lambda_.19} parent=63 // pred_check
        %p670 = pneg %p278
      $region66: #{_lambda_.19} parent=63 // pred_check_branch
        %672 = sbr.rel (%p670) target = $region68
      $region67: #{_lambda_.19} parent=63 // pred_region
        %s673 = smul.u32 8, %s21
        %p674 = scmp.lt.s32.totalorder %s673, 15
        %s675 = scalar_select %p674, %s673, 15
        %s676 = smul.addr %s675, 4
        %s677 = scalar_lea.vmem %s9, %s676
      $region68: #{_lambda_.19} parent=63 // pred_fallthru
        _
    $region64: #{_lambda_.19} parent=5 // pred_fallthru
      _
  $region6: #{_lambda_.19} parent=0 // loop_footer
    %s19 = sadd.s32 1, %s15
  $region7: #{_lambda_.19} parent=0 // loop_footer_branch
    %14 = sbr.rel target = $region3
  $region8: #{_lambda_.19} parent=0 // loop_exit
    _

// kernel: _lambda_.20
$region0: #{_lambda_.20}
  #allocation0 [shape = 'u32[]', space=smem, size = 0x4, offset = 0x4, fixed_abs, tag = 'smem constant byte address 0x4 - core index']
  #allocation1 [shape = 'u32[144,128]{1,0:T(1,128)}', space=vmem, size = 0x12000, scoped, tag = 'internal scratch']
  #allocation2 [shape = 'u32[2048]{0}', space=vmem, size = 0x2000, scoped, tag = 'scoped memory for _lambda_.20']
  #allocation3 [shape = 'u32[2048]{0}', space=vmem, size = 0x2000, scoped, tag = 'scoped memory for _lambda_.20']
  #allocation4 [shape = 'u32[2048]{0}', space=vmem, size = 0x2000, scoped, tag = 'scoped memory for _lambda_.20']
  #allocation5 [shape = 'u32[2048]{0}', space=vmem, size = 0x2000, scoped, tag = 'scoped memory for _lambda_.20']
  #allocation6 [shape = 'u32[2048]{0}', space=vmem, size = 0x2000, scoped, tag = 'scoped memory for _lambda_.20']
  %s0 = inlined_call_operand.vmem [shape: bf16[256,128], index: 0, kind: input, shape index: {}]
  %s1 = inlined_call_operand.vmem [shape: f32[1,128], index: 1, kind: input, shape index: {}]
  %s2 = inlined_call_operand.vmem [shape: bf16[512,147], index: 2, kind: input, shape index: {}]
  %s3 = inlined_call_operand.<no memory space> [shape: bf16[], index: 3, kind: input, shape index: {}]
  %s4 = inlined_call_operand.vmem [shape: bf16[512,128], index: 4, kind: output, shape index: {}]
  %s5 = sld [smem:[#allocation0]]
  $region45: #{_lambda_.20} parent=0
    _
  %s7 = ssub.s32 1, %s5
  %s8 = scalar_select 0, %s7, %s5
  %v9 = vstv %s3
  %v10 = vunpack.i.l.bf16 %v9
  %v12 = vunpack.i.h.bf16 %v9
  loop: start=0, step=1, limit=4
  $region2: #{_lambda_.20} parent=0 // loop_pre_header
    _
  $region3: #{_lambda_.20} parent=0 // loop_header
    %s15 = sphi 0, %s19
    %p16 = scmp.ge.s32.totalorder %s15, 4
    %s25 = sphi 0, %s27
    %s28 = sphi 0, %s25
    %s29 = sphi 0, %s28
    %s45 = sphi 0, %s29
    %s49 = sphi 0, %s49
    %s51 = sphi 0, %s49
    %s52 = sphi 0, %s51
    %s66 = sphi 0, %s52
    %s70 = sphi 0, %s70
    %s72 = sphi 0, %s70
    %s73 = sphi 0, %s72
    %s87 = sphi 0, %s73
    %s93 = sphi 0, %s95
    %s96 = sphi 0, %s93
    %s97 = sphi 0, %s96
    %s113 = sphi 0, %s97
  $region4: #{_lambda_.20} parent=0 // loop_header_branch
    %18 = sbr.rel (%p16) target = $region8
  $region5: #{_lambda_.20} parent=0 // loop_body
    %s20 = ssub.s32 %s15, 1
    %s21 = ssub.s32 %s15, 2
    %s22 = sadd.s32 %s15, 1
    %s23 = ssub.s32 %s15, %s22
    %p24 = scmp.eq.s32.totalorder %s23, 0
    %s26 = sadd.s32 %s25, 1
    %s27 = scalar_select %p24, %s25, %s26
    %p30 = pneg %p24
    %p31 = scmp.eq.s32.totalorder %s15, 1
    %p32 = por %p30, %p31
    %p33 = scmp.ne.s32.totalorder %s25, %s28
    %p34 = scmp.eq.s32.totalorder %s15, 0
    %p35 = por %p33, %p34
    %p36 = scmp.ne.s32.totalorder %s25, %s28
    %p37 = scmp.eq.s32.totalorder %s20, 1
    %p38 = por %p36, %p37
    %p39 = scmp.ne.s32.totalorder %s28, %s29
    %p40 = scmp.eq.s32.totalorder %s20, 0
    %p41 = por %p39, %p40
    %p42 = scmp.ne.s32.totalorder %s28, %s29
    %p43 = scmp.eq.s32.totalorder %s21, 1
    %p44 = por %p42, %p43
    %p46 = scmp.ne.s32.totalorder %s29, %s45
    %p47 = scmp.eq.s32.totalorder %s21, 0
    %p48 = por %p46, %p47
    %s50 = sadd.s32 %s49, 1
    %p53 = scmp.eq.s32.totalorder %s15, 1
    %p54 = scmp.ne.s32.totalorder %s49, %s51
    %p55 = scmp.eq.s32.totalorder %s15, 0
    %p56 = por %p54, %p55
    %p57 = scmp.ne.s32.totalorder %s49, %s51
    %p58 = scmp.eq.s32.totalorder %s20, 1
    %p59 = por %p57, %p58
    %p60 = scmp.ne.s32.totalorder %s51, %s52
    %p61 = scmp.eq.s32.totalorder %s20, 0
    %p62 = por %p60, %p61
    %p63 = scmp.ne.s32.totalorder %s51, %s52
    %p64 = scmp.eq.s32.totalorder %s21, 1
    %p65 = por %p63, %p64
    %p67 = scmp.ne.s32.totalorder %s52, %s66
    %p68 = scmp.eq.s32.totalorder %s21, 0
    %p69 = por %p67, %p68
    %s71 = sadd.s32 %s70, 1
    %p74 = scmp.eq.s32.totalorder %s15, 1
    %p75 = scmp.ne.s32.totalorder %s70, %s72
    %p76 = scmp.eq.s32.totalorder %s15, 0
    %p77 = por %p75, %p76
    %p78 = scmp.ne.s32.totalorder %s70, %s72
    %p79 = scmp.eq.s32.totalorder %s20, 1
    %p80 = por %p78, %p79
    %p81 = scmp.ne.s32.totalorder %s72, %s73
    %p82 = scmp.eq.s32.totalorder %s20, 0
    %p83 = por %p81, %p82
    %p84 = scmp.ne.s32.totalorder %s72, %s73
    %p85 = scmp.eq.s32.totalorder %s21, 1
    %p86 = por %p84, %p85
    %p88 = scmp.ne.s32.totalorder %s73, %s87
    %p89 = scmp.eq.s32.totalorder %s21, 0
    %p90 = por %p88, %p89
    %s91 = ssub.s32 %s15, %s22
    %p92 = scmp.eq.s32.totalorder %s91, 0
    %s94 = sadd.s32 %s93, 1
    %s95 = scalar_select %p92, %s93, %s94
    %p98 = pneg %p92
    %p99 = scmp.eq.s32.totalorder %s15, 1
    %p100 = por %p98, %p99
    %p101 = scmp.ne.s32.totalorder %s93, %s96
    %p102 = scmp.eq.s32.totalorder %s15, 0
    %p103 = por %p101, %p102
    %p104 = scmp.ne.s32.totalorder %s93, %s96
    %p105 = scmp.eq.s32.totalorder %s20, 1
    %p106 = por %p104, %p105
    %p107 = scmp.ne.s32.totalorder %s96, %s97
    %p108 = scmp.eq.s32.totalorder %s20, 0
    %p109 = por %p107, %p108
    %p110 = scmp.ne.s32.totalorder %s96, %s97
    %p111 = scmp.eq.s32.totalorder %s21, 1
    %p112 = por %p110, %p111
    %p114 = scmp.ne.s32.totalorder %s97, %s113
    %p115 = scmp.eq.s32.totalorder %s21, 0
    %p116 = por %p114, %p115
    %p117 = scmp.le.s32.totalorder 1, %s15
    %p118 = scmp.lt.s32.totalorder %s15, 3
    %p119 = pnand %p117, %p118
    %p120 = pneg %p119
    // Predicated region
    $region9: #{_lambda_.20} parent=5 // pred_check
      _
    $region10: #{_lambda_.20} parent=5 // pred_check_branch
      %122 = sbr.rel (%p119) target = $region12
    $region11: #{_lambda_.20} parent=5 // pred_region
      %s123 = ssub.s32 %s15, 1
      // Predicated region
      $region13: #{_lambda_.20} parent=11 // pred_check
        %p124 = pneg %p62
      $region14: #{_lambda_.20} parent=11 // pred_check_branch
        %126 = sbr.rel (%p124) target = $region16
      $region15: #{_lambda_.20} parent=11 // pred_region
        _
      $region16: #{_lambda_.20} parent=11 // pred_fallthru
        _
      // Predicated region
      $region17: #{_lambda_.20} parent=11 // pred_check
        %p127 = pneg %p83
      $region18: #{_lambda_.20} parent=11 // pred_check_branch
        %129 = sbr.rel (%p127) target = $region20
      $region19: #{_lambda_.20} parent=11 // pred_region
        _
      $region20: #{_lambda_.20} parent=11 // pred_fallthru
        _
    $region12: #{_lambda_.20} parent=5 // pred_fallthru
      _
    %p130 = scmp.lt.s32.totalorder %s15, 2
    // Predicated region
    $region21: #{_lambda_.20} parent=5 // pred_check
      %p131 = pneg %p130
    $region22: #{_lambda_.20} parent=5 // pred_check_branch
      %133 = sbr.rel (%p131) target = $region24
    $region23: #{_lambda_.20} parent=5 // pred_region
      // Predicated region
      $region25: #{_lambda_.20} parent=23 // pred_check
        %p134 = pneg %p35
      $region26: #{_lambda_.20} parent=23 // pred_check_branch
        %136 = sbr.rel (%p134) target = $region28
      $region27: #{_lambda_.20} parent=23 // pred_region
        %s137 = smul.u32 32, %s15
        %p138 = scmp.lt.s32.totalorder %s137, 63
        %s139 = scalar_select %p138, %s137, 63
        %s140 = smul.addr %s139, 2
        %s141 = smul.addr %s140, 4
        %s142 = scalar_lea.vmem %s2, %s141
        %s143 = smul.u32 32, %s15
      $region28: #{_lambda_.20} parent=23 // pred_fallthru
        _
    $region24: #{_lambda_.20} parent=5 // pred_fallthru
      _
    %p144 = scmp.le.s32.totalorder 1, %s15
    %p145 = scmp.lt.s32.totalorder %s15, 3
    %p146 = pnand %p144, %p145
    %p147 = pneg %p146
    // Predicated region
    $region29: #{_lambda_.20} parent=5 // pred_check
      _
    $region30: #{_lambda_.20} parent=5 // pred_check_branch
      %149 = sbr.rel (%p146) target = $region32
    $region31: #{_lambda_.20} parent=5 // pred_region
      #allocation7 [shape = 'u8[131072]{0}', space=vmem, size = 0x20000, dematerialized = true, scoped, tag = 'FusionAdapter Buffer %fusion.1 = bf16[512,256]{1,0:T(8,128)(2,1)} fusion(%param_2.1, %param_3), kind=kLoop, calls=%fused_computation.1.clone, metadata={op_name="jit(<lambda>)/jit(_pad)/pad" stack_frame_id=17}']
      %s150 = ssub.s32 %s15, 1
      %s151 = smul.u32 32, %s20
      %p152 = scmp.lt.s32.totalorder %s151, 63
      %s153 = scalar_select %p152, %s151, 63
      %s154 = smul.addr %s153, 2
      %s155 = smul.addr %s154, 4
      %s156 = scalar_lea.vmem %s2, %s155
      %p157 = pneg %p41
      %p158 = pneg %p38
      %p159 = pneg %p62
      %p160 = pneg %p59
      %p161 = pneg %p83
      %p162 = pneg %p80
      %p163 = pneg %p109
      %p164 = pneg %p106
      %s165 = smul.u32 32, %s20
      %p166 = scmp.lt.s32.totalorder %s165, 63
      %s167 = scalar_select %p166, %s165, 63
      %s168 = smul.addr %s167, 4
      %s169 = scalar_lea.vmem %s4, %s168
      %s170 = smul.u32 32, %s20
      %p171 = scmp.lt.s32.totalorder %s170, 63
      %s172 = scalar_select %p171, %s170, 63
      %s173 = smul.addr %s172, 2
      %s174 = smul.addr %s173, 4
      %s175 = scalar_lea.vmem %s2, %s174
      %s176 = smul.u32 32, %s20
      %s177 = smul.u32 32, %s20
      %p178 = scmp.lt.s32.totalorder %s177, 63
      %s179 = scalar_select %p178, %s177, 63
      %s180 = smul.addr %s179, 4
      %s181 = scalar_lea.vmem %s4, %s180
      %s182 = smul.u32 32, %s20
      %v183 = vld [vmem:[%s175] sm:$0xf]
      %v184 = vunpack.c.l.bf16 %v183
      %v185 = vunpack.c.h.bf16 %v183
      %v186 = vlaneseq
      %v187 = vand.u32 %v186, 127
      %vm189 = vcmp.lt.s32.totalorder %v187, 147
      %v190 = vsel %vm189, %v184, %v10
      %v191 = vpack.c.bf16 0.0, %v190
      %193 = vst [vmem:[#allocation7] sm:$0xf] %v191
      %s194 = scalar_lea.vmem %s175, 4
      %s196 = sor.u32 255, 127
      %s197 = sand.u32 %s196, 85
      %s198 = sshrl.u32 %s197, 1
      %s199 = sor.u32 %s197, %s198
      %s200 = sand.u32 51, %s199
      %s201 = sshrl.u32 %s200, 2
      %s202 = sor.u32 %s200, %s201
      %s203 = sand.u32 15, %s202
      %v204 = vld [vmem:[%s194] sm:%s203]
      %v205 = vunpack.c.l.bf16 %v204
      %v206 = vunpack.c.h.bf16 %v204
      %v207 = vlaneseq
      %v208 = vand.u32 %v207, 127
      %v209 = vadd.s32 %v208, 128
      %vm210 = vcmp.lt.s32.totalorder %v209, 147
      %v211 = vsel %vm210, %v205, %v10
      %s212 = scalar_lea.vmem [#allocation7], 4
      %v213 = vpack.c.bf16 0.0, %v211
      %215 = vst [vmem:[%s212] sm:$0xf] %v213
      %s216 = scalar_lea.vmem %s175, 8
      %v217 = vld [vmem:[%s216] sm:$0xf]
      %v218 = vunpack.c.l.bf16 %v217
      %v219 = vunpack.c.h.bf16 %v217
      %v220 = vlaneseq
      %v221 = vand.u32 %v220, 127
      %vm223 = vcmp.lt.s32.totalorder %v221, 147
      %v224 = vsel %vm223, %v218, %v10
      %s225 = scalar_lea.vmem [#allocation7], 8
      %v226 = vpack.c.bf16 0.0, %v224
      %228 = vst [vmem:[%s225] sm:$0xf] %v226
      %s229 = scalar_lea.vmem %s175, 12
      %s231 = sor.u32 255, 127
      %s232 = sand.u32 %s231, 85
      %s233 = sshrl.u32 %s232, 1
      %s234 = sor.u32 %s232, %s233
      %s235 = sand.u32 51, %s234
      %s236 = sshrl.u32 %s235, 2
      %s237 = sor.u32 %s235, %s236
      %s238 = sand.u32 15, %s237
      %v239 = vld [vmem:[%s229] sm:%s238]
      %v240 = vunpack.c.l.bf16 %v239
      %v241 = vunpack.c.h.bf16 %v239
      %v242 = vlaneseq
      %v243 = vand.u32 %v242, 127
      %v244 = vadd.s32 %v243, 128
      %vm245 = vcmp.lt.s32.totalorder %v244, 147
      %v246 = vsel %vm245, %v240, %v10
      %s247 = scalar_lea.vmem [#allocation7], 12
      %v248 = vpack.c.bf16 0.0, %v246
      %250 = vst [vmem:[%s247] sm:$0xf] %v248
      %s251 = scalar_lea.vmem %s175, 16
      %v252 = vld [vmem:[%s251] sm:$0xf]
      %v253 = vunpack.c.l.bf16 %v252
      %v254 = vunpack.c.h.bf16 %v252
      %v255 = vlaneseq
      %v256 = vand.u32 %v255, 127
      %vm258 = vcmp.lt.s32.totalorder %v256, 147
      %v259 = vsel %vm258, %v253, %v10
      %s260 = scalar_lea.vmem [#allocation7], 16
      %v261 = vpack.c.bf16 0.0, %v259
      %263 = vst [vmem:[%s260] sm:$0xf] %v261
      %s264 = scalar_lea.vmem %s175, 20
      %s266 = sor.u32 255, 127
      %s267 = sand.u32 %s266, 85
      %s268 = sshrl.u32 %s267, 1
      %s269 = sor.u32 %s267, %s268
      %s270 = sand.u32 51, %s269
      %s271 = sshrl.u32 %s270, 2
      %s272 = sor.u32 %s270, %s271
      %s273 = sand.u32 15, %s272
      %v274 = vld [vmem:[%s264] sm:%s273]
      %v275 = vunpack.c.l.bf16 %v274
      %v276 = vunpack.c.h.bf16 %v274
      %v277 = vlaneseq
      %v278 = vand.u32 %v277, 127
      %v279 = vadd.s32 %v278, 128
      %vm280 = vcmp.lt.s32.totalorder %v279, 147
      %v281 = vsel %vm280, %v275, %v10
      %s282 = scalar_lea.vmem [#allocation7], 20
      %v283 = vpack.c.bf16 0.0, %v281
      %285 = vst [vmem:[%s282] sm:$0xf] %v283
      %s286 = scalar_lea.vmem %s175, 24
      %v287 = vld [vmem:[%s286] sm:$0xf]
      %v288 = vunpack.c.l.bf16 %v287
      %v289 = vunpack.c.h.bf16 %v287
      %v290 = vlaneseq
      %v291 = vand.u32 %v290, 127
      %vm293 = vcmp.lt.s32.totalorder %v291, 147
      %v294 = vsel %vm293, %v288, %v10
      %s295 = scalar_lea.vmem [#allocation7], 24
      %v296 = vpack.c.bf16 0.0, %v294
      %298 = vst [vmem:[%s295] sm:$0xf] %v296
      %s299 = scalar_lea.vmem %s175, 28
      %s301 = sor.u32 255, 127
      %s302 = sand.u32 %s301, 85
      %s303 = sshrl.u32 %s302, 1
      %s304 = sor.u32 %s302, %s303
      %s305 = sand.u32 51, %s304
      %s306 = sshrl.u32 %s305, 2
      %s307 = sor.u32 %s305, %s306
      %s308 = sand.u32 15, %s307
      %v309 = vld [vmem:[%s299] sm:%s308]
      %v310 = vunpack.c.l.bf16 %v309
      %v311 = vunpack.c.h.bf16 %v309
      %v312 = vlaneseq
      %v313 = vand.u32 %v312, 127
      %v314 = vadd.s32 %v313, 128
      %vm315 = vcmp.lt.s32.totalorder %v314, 147
      %v316 = vsel %vm315, %v310, %v10
      %s317 = scalar_lea.vmem [#allocation7], 28
      %v318 = vpack.c.bf16 0.0, %v316
      %320 = vst [vmem:[%s317] sm:$0xf] %v318
      %s321 = scalar_lea.vmem %s175, 32
      %v322 = vld [vmem:[%s321] sm:$0xf]
      %v323 = vunpack.c.l.bf16 %v322
      %v324 = vunpack.c.h.bf16 %v322
      %v325 = vlaneseq
      %v326 = vand.u32 %v325, 127
      %vm328 = vcmp.lt.s32.totalorder %v326, 147
      %v329 = vsel %vm328, %v323, %v10
      %s330 = scalar_lea.vmem [#allocation7], 32
      %v331 = vpack.c.bf16 0.0, %v329
      %333 = vst [vmem:[%s330] sm:$0xf] %v331
      %s334 = scalar_lea.vmem %s175, 36
      %s336 = sor.u32 255, 127
      %s337 = sand.u32 %s336, 85
      %s338 = sshrl.u32 %s337, 1
      %s339 = sor.u32 %s337, %s338
      %s340 = sand.u32 51, %s339
      %s341 = sshrl.u32 %s340, 2
      %s342 = sor.u32 %s340, %s341
      %s343 = sand.u32 15, %s342
      %v344 = vld [vmem:[%s334] sm:%s343]
      %v345 = vunpack.c.l.bf16 %v344
      %v346 = vunpack.c.h.bf16 %v344
      %v347 = vlaneseq
      %v348 = vand.u32 %v347, 127
      %v349 = vadd.s32 %v348, 128
      %vm350 = vcmp.lt.s32.totalorder %v349, 147
      %v351 = vsel %vm350, %v345, %v10
      %s352 = scalar_lea.vmem [#allocation7], 36
      %v353 = vpack.c.bf16 0.0, %v351
      %355 = vst [vmem:[%s352] sm:$0xf] %v353
      %s356 = scalar_lea.vmem %s175, 40
      %v357 = vld [vmem:[%s356] sm:$0xf]
      %v358 = vunpack.c.l.bf16 %v357
      %v359 = vunpack.c.h.bf16 %v357
      %v360 = vlaneseq
      %v361 = vand.u32 %v360, 127
      %vm363 = vcmp.lt.s32.totalorder %v361, 147
      %v364 = vsel %vm363, %v358, %v10
      %s365 = scalar_lea.vmem [#allocation7], 40
      %v366 = vpack.c.bf16 0.0, %v364
      %368 = vst [vmem:[%s365] sm:$0xf] %v366
      %s369 = scalar_lea.vmem %s175, 44
      %s371 = sor.u32 255, 127
      %s372 = sand.u32 %s371, 85
      %s373 = sshrl.u32 %s372, 1
      %s374 = sor.u32 %s372, %s373
      %s375 = sand.u32 51, %s374
      %s376 = sshrl.u32 %s375, 2
      %s377 = sor.u32 %s375, %s376
      %s378 = sand.u32 15, %s377
      %v379 = vld [vmem:[%s369] sm:%s378]
      %v380 = vunpack.c.l.bf16 %v379
      %v381 = vunpack.c.h.bf16 %v379
      %v382 = vlaneseq
      %v383 = vand.u32 %v382, 127
      %v384 = vadd.s32 %v383, 128
      %vm385 = vcmp.lt.s32.totalorder %v384, 147
      %v386 = vsel %vm385, %v380, %v10
      %s387 = scalar_lea.vmem [#allocation7], 44
      %v388 = vpack.c.bf16 0.0, %v386
      %390 = vst [vmem:[%s387] sm:$0xf] %v388
      %s391 = scalar_lea.vmem %s175, 48
      %v392 = vld [vmem:[%s391] sm:$0xf]
      %v393 = vunpack.c.l.bf16 %v392
      %v394 = vunpack.c.h.bf16 %v392
      %v395 = vlaneseq
      %v396 = vand.u32 %v395, 127
      %vm398 = vcmp.lt.s32.totalorder %v396, 147
      %v399 = vsel %vm398, %v393, %v10
      %s400 = scalar_lea.vmem [#allocation7], 48
      %v401 = vpack.c.bf16 0.0, %v399
      %403 = vst [vmem:[%s400] sm:$0xf] %v401
      %s404 = scalar_lea.vmem %s175, 52
      %s406 = sor.u32 255, 127
      %s407 = sand.u32 %s406, 85
      %s408 = sshrl.u32 %s407, 1
      %s409 = sor.u32 %s407, %s408
      %s410 = sand.u32 51, %s409
      %s411 = sshrl.u32 %s410, 2
      %s412 = sor.u32 %s410, %s411
      %s413 = sand.u32 15, %s412
      %v414 = vld [vmem:[%s404] sm:%s413]
      %v415 = vunpack.c.l.bf16 %v414
      %v416 = vunpack.c.h.bf16 %v414
      %v417 = vlaneseq
      %v418 = vand.u32 %v417, 127
      %v419 = vadd.s32 %v418, 128
      %vm420 = vcmp.lt.s32.totalorder %v419, 147
      %v421 = vsel %vm420, %v415, %v10
      %s422 = scalar_lea.vmem [#allocation7], 52
      %v423 = vpack.c.bf16 0.0, %v421
      %425 = vst [vmem:[%s422] sm:$0xf] %v423
      %s426 = scalar_lea.vmem %s175, 56
      %v427 = vld [vmem:[%s426] sm:$0xf]
      %v428 = vunpack.c.l.bf16 %v427
      %v429 = vunpack.c.h.bf16 %v427
      %v430 = vlaneseq
      %v431 = vand.u32 %v430, 127
      %vm433 = vcmp.lt.s32.totalorder %v431, 147
      %v434 = vsel %vm433, %v428, %v10
      %s435 = scalar_lea.vmem [#allocation7], 56
      %v436 = vpack.c.bf16 0.0, %v434
      %438 = vst [vmem:[%s435] sm:$0xf] %v436
      %s439 = scalar_lea.vmem %s175, 60
      %s441 = sor.u32 255, 127
      %s442 = sand.u32 %s441, 85
      %s443 = sshrl.u32 %s442, 1
      %s444 = sor.u32 %s442, %s443
      %s445 = sand.u32 51, %s444
      %s446 = sshrl.u32 %s445, 2
      %s447 = sor.u32 %s445, %s446
      %s448 = sand.u32 15, %s447
      %v449 = vld [vmem:[%s439] sm:%s448]
      %v450 = vunpack.c.l.bf16 %v449
      %v451 = vunpack.c.h.bf16 %v449
      %v452 = vlaneseq
      %v453 = vand.u32 %v452, 127
      %v454 = vadd.s32 %v453, 128
      %vm455 = vcmp.lt.s32.totalorder %v454, 147
      %v456 = vsel %vm455, %v450, %v10
      %s457 = scalar_lea.vmem [#allocation7], 60
      %v458 = vpack.c.bf16 0.0, %v456
      %460 = vst [vmem:[%s457] sm:$0xf] %v458
      %s461 = scalar_lea.vmem %s175, 64
      %v462 = vld [vmem:[%s461] sm:$0xf]
      %v463 = vunpack.c.l.bf16 %v462
      %v464 = vunpack.c.h.bf16 %v462
      %v465 = vlaneseq
      %v466 = vand.u32 %v465, 127
      %vm468 = vcmp.lt.s32.totalorder %v466, 147
      %v469 = vsel %vm468, %v463, %v10
      %s470 = scalar_lea.vmem [#allocation7], 64
      %v471 = vpack.c.bf16 0.0, %v469
      %473 = vst [vmem:[%s470] sm:$0xf] %v471
      %s474 = scalar_lea.vmem %s175, 68
      %s476 = sor.u32 255, 127
      %s477 = sand.u32 %s476, 85
      %s478 = sshrl.u32 %s477, 1
      %s479 = sor.u32 %s477, %s478
      %s480 = sand.u32 51, %s479
      %s481 = sshrl.u32 %s480, 2
      %s482 = sor.u32 %s480, %s481
      %s483 = sand.u32 15, %s482
      %v484 = vld [vmem:[%s474] sm:%s483]
      %v485 = vunpack.c.l.bf16 %v484
      %v486 = vunpack.c.h.bf16 %v484
      %v487 = vlaneseq
      %v488 = vand.u32 %v487, 127
      %v489 = vadd.s32 %v488, 128
      %vm490 = vcmp.lt.s32.totalorder %v489, 147
      %v491 = vsel %vm490, %v485, %v10
      %s492 = scalar_lea.vmem [#allocation7], 68
      %v493 = vpack.c.bf16 0.0, %v491
      %495 = vst [vmem:[%s492] sm:$0xf] %v493
      %s496 = scalar_lea.vmem %s175, 72
      %v497 = vld [vmem:[%s496] sm:$0xf]
      %v498 = vunpack.c.l.bf16 %v497
      %v499 = vunpack.c.h.bf16 %v497
      %v500 = vlaneseq
      %v501 = vand.u32 %v500, 127
      %vm503 = vcmp.lt.s32.totalorder %v501, 147
      %v504 = vsel %vm503, %v498, %v10
      %s505 = scalar_lea.vmem [#allocation7], 72
      %v506 = vpack.c.bf16 0.0, %v504
      %508 = vst [vmem:[%s505] sm:$0xf] %v506
      %s509 = scalar_lea.vmem %s175, 76
      %s511 = sor.u32 255, 127
      %s512 = sand.u32 %s511, 85
      %s513 = sshrl.u32 %s512, 1
      %s514 = sor.u32 %s512, %s513
      %s515 = sand.u32 51, %s514
      %s516 = sshrl.u32 %s515, 2
      %s517 = sor.u32 %s515, %s516
      %s518 = sand.u32 15, %s517
      %v519 = vld [vmem:[%s509] sm:%s518]
      %v520 = vunpack.c.l.bf16 %v519
      %v521 = vunpack.c.h.bf16 %v519
      %v522 = vlaneseq
      %v523 = vand.u32 %v522, 127
      %v524 = vadd.s32 %v523, 128
      %vm525 = vcmp.lt.s32.totalorder %v524, 147
      %v526 = vsel %vm525, %v520, %v10
      %s527 = scalar_lea.vmem [#allocation7], 76
      %v528 = vpack.c.bf16 0.0, %v526
      %530 = vst [vmem:[%s527] sm:$0xf] %v528
      %s531 = scalar_lea.vmem %s175, 80
      %v532 = vld [vmem:[%s531] sm:$0xf]
      %v533 = vunpack.c.l.bf16 %v532
      %v534 = vunpack.c.h.bf16 %v532
      %v535 = vlaneseq
      %v536 = vand.u32 %v535, 127
      %vm538 = vcmp.lt.s32.totalorder %v536, 147
      %v539 = vsel %vm538, %v533, %v10
      %s540 = scalar_lea.vmem [#allocation7], 80
      %v541 = vpack.c.bf16 0.0, %v539
      %543 = vst [vmem:[%s540] sm:$0xf] %v541
      %s544 = scalar_lea.vmem %s175, 84
      %s546 = sor.u32 255, 127
      %s547 = sand.u32 %s546, 85
      %s548 = sshrl.u32 %s547, 1
      %s549 = sor.u32 %s547, %s548
      %s550 = sand.u32 51, %s549
      %s551 = sshrl.u32 %s550, 2
      %s552 = sor.u32 %s550, %s551
      %s553 = sand.u32 15, %s552
      %v554 = vld [vmem:[%s544] sm:%s553]
      %v555 = vunpack.c.l.bf16 %v554
      %v556 = vunpack.c.h.bf16 %v554
      %v557 = vlaneseq
      %v558 = vand.u32 %v557, 127
      %v559 = vadd.s32 %v558, 128
      %vm560 = vcmp.lt.s32.totalorder %v559, 147
      %v561 = vsel %vm560, %v555, %v10
      %s562 = scalar_lea.vmem [#allocation7], 84
      %v563 = vpack.c.bf16 0.0, %v561
      %565 = vst [vmem:[%s562] sm:$0xf] %v563
      %s566 = scalar_lea.vmem %s175, 88
      %v567 = vld [vmem:[%s566] sm:$0xf]
      %v568 = vunpack.c.l.bf16 %v567
      %v569 = vunpack.c.h.bf16 %v567
      %v570 = vlaneseq
      %v571 = vand.u32 %v570, 127
      %vm573 = vcmp.lt.s32.totalorder %v571, 147
      %v574 = vsel %vm573, %v568, %v10
      %s575 = scalar_lea.vmem [#allocation7], 88
      %v576 = vpack.c.bf16 0.0, %v574
      %578 = vst [vmem:[%s575] sm:$0xf] %v576
      %s579 = scalar_lea.vmem %s175, 92
      %s581 = sor.u32 255, 127
      %s582 = sand.u32 %s581, 85
      %s583 = sshrl.u32 %s582, 1
      %s584 = sor.u32 %s582, %s583
      %s585 = sand.u32 51, %s584
      %s586 = sshrl.u32 %s585, 2
      %s587 = sor.u32 %s585, %s586
      %s588 = sand.u32 15, %s587
      %v589 = vld [vmem:[%s579] sm:%s588]
      %v590 = vunpack.c.l.bf16 %v589
      %v591 = vunpack.c.h.bf16 %v589
      %v592 = vlaneseq
      %v593 = vand.u32 %v592, 127
      %v594 = vadd.s32 %v593, 128
      %vm595 = vcmp.lt.s32.totalorder %v594, 147
      %v596 = vsel %vm595, %v590, %v10
      %s597 = scalar_lea.vmem [#allocation7], 92
      %v598 = vpack.c.bf16 0.0, %v596
      %600 = vst [vmem:[%s597] sm:$0xf] %v598
      %s601 = scalar_lea.vmem %s175, 96
      %v602 = vld [vmem:[%s601] sm:$0xf]
      %v603 = vunpack.c.l.bf16 %v602
      %v604 = vunpack.c.h.bf16 %v602
      %v605 = vlaneseq
      %v606 = vand.u32 %v605, 127
      %vm608 = vcmp.lt.s32.totalorder %v606, 147
      %v609 = vsel %vm608, %v603, %v10
      %s610 = scalar_lea.vmem [#allocation7], 96
      %v611 = vpack.c.bf16 0.0, %v609
      %613 = vst [vmem:[%s610] sm:$0xf] %v611
      %s614 = scalar_lea.vmem %s175, 100
      %s616 = sor.u32 255, 127
      %s617 = sand.u32 %s616, 85
      %s618 = sshrl.u32 %s617, 1
      %s619 = sor.u32 %s617, %s618
      %s620 = sand.u32 51, %s619
      %s621 = sshrl.u32 %s620, 2
      %s622 = sor.u32 %s620, %s621
      %s623 = sand.u32 15, %s622
      %v624 = vld [vmem:[%s614] sm:%s623]
      %v625 = vunpack.c.l.bf16 %v624
      %v626 = vunpack.c.h.bf16 %v624
      %v627 = vlaneseq
      %v628 = vand.u32 %v627, 127
      %v629 = vadd.s32 %v628, 128
      %vm630 = vcmp.lt.s32.totalorder %v629, 147
      %v631 = vsel %vm630, %v625, %v10
      %s632 = scalar_lea.vmem [#allocation7], 100
      %v633 = vpack.c.bf16 0.0, %v631
      %635 = vst [vmem:[%s632] sm:$0xf] %v633
      %s636 = scalar_lea.vmem %s175, 104
      %v637 = vld [vmem:[%s636] sm:$0xf]
      %v638 = vunpack.c.l.bf16 %v637
      %v639 = vunpack.c.h.bf16 %v637
      %v640 = vlaneseq
      %v641 = vand.u32 %v640, 127
      %vm643 = vcmp.lt.s32.totalorder %v641, 147
      %v644 = vsel %vm643, %v638, %v10
      %s645 = scalar_lea.vmem [#allocation7], 104
      %v646 = vpack.c.bf16 0.0, %v644
      %648 = vst [vmem:[%s645] sm:$0xf] %v646
      %s649 = scalar_lea.vmem %s175, 108
      %s651 = sor.u32 255, 127
      %s652 = sand.u32 %s651, 85
      %s653 = sshrl.u32 %s652, 1
      %s654 = sor.u32 %s652, %s653
      %s655 = sand.u32 51, %s654
      %s656 = sshrl.u32 %s655, 2
      %s657 = sor.u32 %s655, %s656
      %s658 = sand.u32 15, %s657
      %v659 = vld [vmem:[%s649] sm:%s658]
      %v660 = vunpack.c.l.bf16 %v659
      %v661 = vunpack.c.h.bf16 %v659
      %v662 = vlaneseq
      %v663 = vand.u32 %v662, 127
      %v664 = vadd.s32 %v663, 128
      %vm665 = vcmp.lt.s32.totalorder %v664, 147
      %v666 = vsel %vm665, %v660, %v10
      %s667 = scalar_lea.vmem [#allocation7], 108
      %v668 = vpack.c.bf16 0.0, %v666
      %670 = vst [vmem:[%s667] sm:$0xf] %v668
      %s671 = scalar_lea.vmem %s175, 112
      %v672 = vld [vmem:[%s671] sm:$0xf]
      %v673 = vunpack.c.l.bf16 %v672
      %v674 = vunpack.c.h.bf16 %v672
      %v675 = vlaneseq
      %v676 = vand.u32 %v675, 127
      %vm678 = vcmp.lt.s32.totalorder %v676, 147
      %v679 = vsel %vm678, %v673, %v10
      %s680 = scalar_lea.vmem [#allocation7], 112
      %v681 = vpack.c.bf16 0.0, %v679
      %683 = vst [vmem:[%s680] sm:$0xf] %v681
      %s684 = scalar_lea.vmem %s175, 116
      %s686 = sor.u32 255, 127
      %s687 = sand.u32 %s686, 85
      %s688 = sshrl.u32 %s687, 1
      %s689 = sor.u32 %s687, %s688
      %s690 = sand.u32 51, %s689
      %s691 = sshrl.u32 %s690, 2
      %s692 = sor.u32 %s690, %s691
      %s693 = sand.u32 15, %s692
      %v694 = vld [vmem:[%s684] sm:%s693]
      %v695 = vunpack.c.l.bf16 %v694
      %v696 = vunpack.c.h.bf16 %v694
      %v697 = vlaneseq
      %v698 = vand.u32 %v697, 127
      %v699 = vadd.s32 %v698, 128
      %vm700 = vcmp.lt.s32.totalorder %v699, 147
      %v701 = vsel %vm700, %v695, %v10
      %s702 = scalar_lea.vmem [#allocation7], 116
      %v703 = vpack.c.bf16 0.0, %v701
      %705 = vst [vmem:[%s702] sm:$0xf] %v703
      %s706 = scalar_lea.vmem %s175, 120
      %v707 = vld [vmem:[%s706] sm:$0xf]
      %v708 = vunpack.c.l.bf16 %v707
      %v709 = vunpack.c.h.bf16 %v707
      %v710 = vlaneseq
      %v711 = vand.u32 %v710, 127
      %vm713 = vcmp.lt.s32.totalorder %v711, 147
      %v714 = vsel %vm713, %v708, %v10
      %s715 = scalar_lea.vmem [#allocation7], 120
      %v716 = vpack.c.bf16 0.0, %v714
      %718 = vst [vmem:[%s715] sm:$0xf] %v716
      %s719 = scalar_lea.vmem %s175, 124
      %s721 = sor.u32 255, 127
      %s722 = sand.u32 %s721, 85
      %s723 = sshrl.u32 %s722, 1
      %s724 = sor.u32 %s722, %s723
      %s725 = sand.u32 51, %s724
      %s726 = sshrl.u32 %s725, 2
      %s727 = sor.u32 %s725, %s726
      %s728 = sand.u32 15, %s727
      %v729 = vld [vmem:[%s719] sm:%s728]
      %v730 = vunpack.c.l.bf16 %v729
      %v731 = vunpack.c.h.bf16 %v729
      %v732 = vlaneseq
      %v733 = vand.u32 %v732, 127
      %v734 = vadd.s32 %v733, 128
      %vm735 = vcmp.lt.s32.totalorder %v734, 147
      %v736 = vsel %vm735, %v730, %v10
      %s737 = scalar_lea.vmem [#allocation7], 124
      %v738 = vpack.c.bf16 0.0, %v736
      %740 = vst [vmem:[%s737] sm:$0xf] %v738
      %s741 = scalar_lea.vmem %s175, 128
      %v742 = vld [vmem:[%s741] sm:$0xf]
      %v743 = vunpack.c.l.bf16 %v742
      %v744 = vunpack.c.h.bf16 %v742
      %v745 = vlaneseq
      %v746 = vand.u32 %v745, 127
      %vm748 = vcmp.lt.s32.totalorder %v746, 147
      %v749 = vsel %vm748, %v743, %v10
      %s750 = scalar_lea.vmem [#allocation7], 128
      %v751 = vpack.c.bf16 0.0, %v749
      %753 = vst [vmem:[%s750] sm:$0xf] %v751
      %s754 = scalar_lea.vmem %s175, 132
      %s756 = sor.u32 255, 127
      %s757 = sand.u32 %s756, 85
      %s758 = sshrl.u32 %s757, 1
      %s759 = sor.u32 %s757, %s758
      %s760 = sand.u32 51, %s759
      %s761 = sshrl.u32 %s760, 2
      %s762 = sor.u32 %s760, %s761
      %s763 = sand.u32 15, %s762
      %v764 = vld [vmem:[%s754] sm:%s763]
      %v765 = vunpack.c.l.bf16 %v764
      %v766 = vunpack.c.h.bf16 %v764
      %v767 = vlaneseq
      %v768 = vand.u32 %v767, 127
      %v769 = vadd.s32 %v768, 128
      %vm770 = vcmp.lt.s32.totalorder %v769, 147
      %v771 = vsel %vm770, %v765, %v10
      %s772 = scalar_lea.vmem [#allocation7], 132
      %v773 = vpack.c.bf16 0.0, %v771
      %775 = vst [vmem:[%s772] sm:$0xf] %v773
      %s776 = scalar_lea.vmem %s175, 136
      %v777 = vld [vmem:[%s776] sm:$0xf]
      %v778 = vunpack.c.l.bf16 %v777
      %v779 = vunpack.c.h.bf16 %v777
      %v780 = vlaneseq
      %v781 = vand.u32 %v780, 127
      %vm783 = vcmp.lt.s32.totalorder %v781, 147
      %v784 = vsel %vm783, %v778, %v10
      %s785 = scalar_lea.vmem [#allocation7], 136
      %v786 = vpack.c.bf16 0.0, %v784
      %788 = vst [vmem:[%s785] sm:$0xf] %v786
      %s789 = scalar_lea.vmem %s175, 140
      %s791 = sor.u32 255, 127
      %s792 = sand.u32 %s791, 85
      %s793 = sshrl.u32 %s792, 1
      %s794 = sor.u32 %s792, %s793
      %s795 = sand.u32 51, %s794
      %s796 = sshrl.u32 %s795, 2
      %s797 = sor.u32 %s795, %s796
      %s798 = sand.u32 15, %s797
      %v799 = vld [vmem:[%s789] sm:%s798]
      %v800 = vunpack.c.l.bf16 %v799
      %v801 = vunpack.c.h.bf16 %v799
      %v802 = vlaneseq
      %v803 = vand.u32 %v802, 127
      %v804 = vadd.s32 %v803, 128
      %vm805 = vcmp.lt.s32.totalorder %v804, 147
      %v806 = vsel %vm805, %v800, %v10
      %s807 = scalar_lea.vmem [#allocation7], 140
      %v808 = vpack.c.bf16 0.0, %v806
      %810 = vst [vmem:[%s807] sm:$0xf] %v808
      %s811 = scalar_lea.vmem %s175, 144
      %v812 = vld [vmem:[%s811] sm:$0xf]
      %v813 = vunpack.c.l.bf16 %v812
      %v814 = vunpack.c.h.bf16 %v812
      %v815 = vlaneseq
      %v816 = vand.u32 %v815, 127
      %vm818 = vcmp.lt.s32.totalorder %v816, 147
      %v819 = vsel %vm818, %v813, %v10
      %s820 = scalar_lea.vmem [#allocation7], 144
      %v821 = vpack.c.bf16 0.0, %v819
      %823 = vst [vmem:[%s820] sm:$0xf] %v821
      %s824 = scalar_lea.vmem %s175, 148
      %s826 = sor.u32 255, 127
      %s827 = sand.u32 %s826, 85
      %s828 = sshrl.u32 %s827, 1
      %s829 = sor.u32 %s827, %s828
      %s830 = sand.u32 51, %s829
      %s831 = sshrl.u32 %s830, 2
      %s832 = sor.u32 %s830, %s831
      %s833 = sand.u32 15, %s832
      %v834 = vld [vmem:[%s824] sm:%s833]
      %v835 = vunpack.c.l.bf16 %v834
      %v836 = vunpack.c.h.bf16 %v834
      %v837 = vlaneseq
      %v838 = vand.u32 %v837, 127
      %v839 = vadd.s32 %v838, 128
      %vm840 = vcmp.lt.s32.totalorder %v839, 147
      %v841 = vsel %vm840, %v835, %v10
      %s842 = scalar_lea.vmem [#allocation7], 148
      %v843 = vpack.c.bf16 0.0, %v841
      %845 = vst [vmem:[%s842] sm:$0xf] %v843
      %s846 = scalar_lea.vmem %s175, 152
      %v847 = vld [vmem:[%s846] sm:$0xf]
      %v848 = vunpack.c.l.bf16 %v847
      %v849 = vunpack.c.h.bf16 %v847
      %v850 = vlaneseq
      %v851 = vand.u32 %v850, 127
      %vm853 = vcmp.lt.s32.totalorder %v851, 147
      %v854 = vsel %vm853, %v848, %v10
      %s855 = scalar_lea.vmem [#allocation7], 152
      %v856 = vpack.c.bf16 0.0, %v854
      %858 = vst [vmem:[%s855] sm:$0xf] %v856
      %s859 = scalar_lea.vmem %s175, 156
      %s861 = sor.u32 255, 127
      %s862 = sand.u32 %s861, 85
      %s863 = sshrl.u32 %s862, 1
      %s864 = sor.u32 %s862, %s863
      %s865 = sand.u32 51, %s864
      %s866 = sshrl.u32 %s865, 2
      %s867 = sor.u32 %s865, %s866
      %s868 = sand.u32 15, %s867
      %v869 = vld [vmem:[%s859] sm:%s868]
      %v870 = vunpack.c.l.bf16 %v869
      %v871 = vunpack.c.h.bf16 %v869
      %v872 = vlaneseq
      %v873 = vand.u32 %v872, 127
      %v874 = vadd.s32 %v873, 128
      %vm875 = vcmp.lt.s32.totalorder %v874, 147
      %v876 = vsel %vm875, %v870, %v10
      %s877 = scalar_lea.vmem [#allocation7], 156
      %v878 = vpack.c.bf16 0.0, %v876
      %880 = vst [vmem:[%s877] sm:$0xf] %v878
      %s881 = scalar_lea.vmem %s175, 160
      %v882 = vld [vmem:[%s881] sm:$0xf]
      %v883 = vunpack.c.l.bf16 %v882
      %v884 = vunpack.c.h.bf16 %v882
      %v885 = vlaneseq
      %v886 = vand.u32 %v885, 127
      %vm888 = vcmp.lt.s32.totalorder %v886, 147
      %v889 = vsel %vm888, %v883, %v10
      %s890 = scalar_lea.vmem [#allocation7], 160
      %v891 = vpack.c.bf16 0.0, %v889
      %893 = vst [vmem:[%s890] sm:$0xf] %v891
      %s894 = scalar_lea.vmem %s175, 164
      %s896 = sor.u32 255, 127
      %s897 = sand.u32 %s896, 85
      %s898 = sshrl.u32 %s897, 1
      %s899 = sor.u32 %s897, %s898
      %s900 = sand.u32 51, %s899
      %s901 = sshrl.u32 %s900, 2
      %s902 = sor.u32 %s900, %s901
      %s903 = sand.u32 15, %s902
      %v904 = vld [vmem:[%s894] sm:%s903]
      %v905 = vunpack.c.l.bf16 %v904
      %v906 = vunpack.c.h.bf16 %v904
      %v907 = vlaneseq
      %v908 = vand.u32 %v907, 127
      %v909 = vadd.s32 %v908, 128
      %vm910 = vcmp.lt.s32.totalorder %v909, 147
      %v911 = vsel %vm910, %v905, %v10
      %s912 = scalar_lea.vmem [#allocation7], 164
      %v913 = vpack.c.bf16 0.0, %v911
      %915 = vst [vmem:[%s912] sm:$0xf] %v913
      %s916 = scalar_lea.vmem %s175, 168
      %v917 = vld [vmem:[%s916] sm:$0xf]
      %v918 = vunpack.c.l.bf16 %v917
      %v919 = vunpack.c.h.bf16 %v917
      %v920 = vlaneseq
      %v921 = vand.u32 %v920, 127
      %vm923 = vcmp.lt.s32.totalorder %v921, 147
      %v924 = vsel %vm923, %v918, %v10
      %s925 = scalar_lea.vmem [#allocation7], 168
      %v926 = vpack.c.bf16 0.0, %v924
      %928 = vst [vmem:[%s925] sm:$0xf] %v926
      %s929 = scalar_lea.vmem %s175, 172
      %s931 = sor.u32 255, 127
      %s932 = sand.u32 %s931, 85
      %s933 = sshrl.u32 %s932, 1
      %s934 = sor.u32 %s932, %s933
      %s935 = sand.u32 51, %s934
      %s936 = sshrl.u32 %s935, 2
      %s937 = sor.u32 %s935, %s936
      %s938 = sand.u32 15, %s937
      %v939 = vld [vmem:[%s929] sm:%s938]
      %v940 = vunpack.c.l.bf16 %v939
      %v941 = vunpack.c.h.bf16 %v939
      %v942 = vlaneseq
      %v943 = vand.u32 %v942, 127
      %v944 = vadd.s32 %v943, 128
      %vm945 = vcmp.lt.s32.totalorder %v944, 147
      %v946 = vsel %vm945, %v940, %v10
      %s947 = scalar_lea.vmem [#allocation7], 172
      %v948 = vpack.c.bf16 0.0, %v946
      %950 = vst [vmem:[%s947] sm:$0xf] %v948
      %s951 = scalar_lea.vmem %s175, 176
      %v952 = vld [vmem:[%s951] sm:$0xf]
      %v953 = vunpack.c.l.bf16 %v952
      %v954 = vunpack.c.h.bf16 %v952
      %v955 = vlaneseq
      %v956 = vand.u32 %v955, 127
      %vm958 = vcmp.lt.s32.totalorder %v956, 147
      %v959 = vsel %vm958, %v953, %v10
      %s960 = scalar_lea.vmem [#allocation7], 176
      %v961 = vpack.c.bf16 0.0, %v959
      %963 = vst [vmem:[%s960] sm:$0xf] %v961
      %s964 = scalar_lea.vmem %s175, 180
      %s966 = sor.u32 255, 127
      %s967 = sand.u32 %s966, 85
      %s968 = sshrl.u32 %s967, 1
      %s969 = sor.u32 %s967, %s968
      %s970 = sand.u32 51, %s969
      %s971 = sshrl.u32 %s970, 2
      %s972 = sor.u32 %s970, %s971
      %s973 = sand.u32 15, %s972
      %v974 = vld [vmem:[%s964] sm:%s973]
      %v975 = vunpack.c.l.bf16 %v974
      %v976 = vunpack.c.h.bf16 %v974
      %v977 = vlaneseq
      %v978 = vand.u32 %v977, 127
      %v979 = vadd.s32 %v978, 128
      %vm980 = vcmp.lt.s32.totalorder %v979, 147
      %v981 = vsel %vm980, %v975, %v10
      %s982 = scalar_lea.vmem [#allocation7], 180
      %v983 = vpack.c.bf16 0.0, %v981
      %985 = vst [vmem:[%s982] sm:$0xf] %v983
      %s986 = scalar_lea.vmem %s175, 184
      %v987 = vld [vmem:[%s986] sm:$0xf]
      %v988 = vunpack.c.l.bf16 %v987
      %v989 = vunpack.c.h.bf16 %v987
      %v990 = vlaneseq
      %v991 = vand.u32 %v990, 127
      %vm993 = vcmp.lt.s32.totalorder %v991, 147
      %v994 = vsel %vm993, %v988, %v10
      %s995 = scalar_lea.vmem [#allocation7], 184
      %v996 = vpack.c.bf16 0.0, %v994
      %998 = vst [vmem:[%s995] sm:$0xf] %v996
      %s999 = scalar_lea.vmem %s175, 188
      %s1001 = sor.u32 255, 127
      %s1002 = sand.u32 %s1001, 85
      %s1003 = sshrl.u32 %s1002, 1
      %s1004 = sor.u32 %s1002, %s1003
      %s1005 = sand.u32 51, %s1004
      %s1006 = sshrl.u32 %s1005, 2
      %s1007 = sor.u32 %s1005, %s1006
      %s1008 = sand.u32 15, %s1007
      %v1009 = vld [vmem:[%s999] sm:%s1008]
      %v1010 = vunpack.c.l.bf16 %v1009
      %v1011 = vunpack.c.h.bf16 %v1009
      %v1012 = vlaneseq
      %v1013 = vand.u32 %v1012, 127
      %v1014 = vadd.s32 %v1013, 128
      %vm1015 = vcmp.lt.s32.totalorder %v1014, 147
      %v1016 = vsel %vm1015, %v1010, %v10
      %s1017 = scalar_lea.vmem [#allocation7], 188
      %v1018 = vpack.c.bf16 0.0, %v1016
      %1020 = vst [vmem:[%s1017] sm:$0xf] %v1018
      %s1021 = scalar_lea.vmem %s175, 192
      %v1022 = vld [vmem:[%s1021] sm:$0xf]
      %v1023 = vunpack.c.l.bf16 %v1022
      %v1024 = vunpack.c.h.bf16 %v1022
      %v1025 = vlaneseq
      %v1026 = vand.u32 %v1025, 127
      %vm1028 = vcmp.lt.s32.totalorder %v1026, 147
      %v1029 = vsel %vm1028, %v1023, %v10
      %s1030 = scalar_lea.vmem [#allocation7], 192
      %v1031 = vpack.c.bf16 0.0, %v1029
      %1033 = vst [vmem:[%s1030] sm:$0xf] %v1031
      %s1034 = scalar_lea.vmem %s175, 196
      %s1036 = sor.u32 255, 127
      %s1037 = sand.u32 %s1036, 85
      %s1038 = sshrl.u32 %s1037, 1
      %s1039 = sor.u32 %s1037, %s1038
      %s1040 = sand.u32 51, %s1039
      %s1041 = sshrl.u32 %s1040, 2
      %s1042 = sor.u32 %s1040, %s1041
      %s1043 = sand.u32 15, %s1042
      %v1044 = vld [vmem:[%s1034] sm:%s1043]
      %v1045 = vunpack.c.l.bf16 %v1044
      %v1046 = vunpack.c.h.bf16 %v1044
      %v1047 = vlaneseq
      %v1048 = vand.u32 %v1047, 127
      %v1049 = vadd.s32 %v1048, 128
      %vm1050 = vcmp.lt.s32.totalorder %v1049, 147
      %v1051 = vsel %vm1050, %v1045, %v10
      %s1052 = scalar_lea.vmem [#allocation7], 196
      %v1053 = vpack.c.bf16 0.0, %v1051
      %1055 = vst [vmem:[%s1052] sm:$0xf] %v1053
      %s1056 = scalar_lea.vmem %s175, 200
      %v1057 = vld [vmem:[%s1056] sm:$0xf]
      %v1058 = vunpack.c.l.bf16 %v1057
      %v1059 = vunpack.c.h.bf16 %v1057
      %v1060 = vlaneseq
      %v1061 = vand.u32 %v1060, 127
      %vm1063 = vcmp.lt.s32.totalorder %v1061, 147
      %v1064 = vsel %vm1063, %v1058, %v10
      %s1065 = scalar_lea.vmem [#allocation7], 200
      %v1066 = vpack.c.bf16 0.0, %v1064
      %1068 = vst [vmem:[%s1065] sm:$0xf] %v1066
      %s1069 = scalar_lea.vmem %s175, 204
      %s1071 = sor.u32 255, 127
      %s1072 = sand.u32 %s1071, 85
      %s1073 = sshrl.u32 %s1072, 1
      %s1074 = sor.u32 %s1072, %s1073
      %s1075 = sand.u32 51, %s1074
      %s1076 = sshrl.u32 %s1075, 2
      %s1077 = sor.u32 %s1075, %s1076
      %s1078 = sand.u32 15, %s1077
      %v1079 = vld [vmem:[%s1069] sm:%s1078]
      %v1080 = vunpack.c.l.bf16 %v1079
      %v1081 = vunpack.c.h.bf16 %v1079
      %v1082 = vlaneseq
      %v1083 = vand.u32 %v1082, 127
      %v1084 = vadd.s32 %v1083, 128
      %vm1085 = vcmp.lt.s32.totalorder %v1084, 147
      %v1086 = vsel %vm1085, %v1080, %v10
      %s1087 = scalar_lea.vmem [#allocation7], 204
      %v1088 = vpack.c.bf16 0.0, %v1086
      %1090 = vst [vmem:[%s1087] sm:$0xf] %v1088
      %s1091 = scalar_lea.vmem %s175, 208
      %v1092 = vld [vmem:[%s1091] sm:$0xf]
      %v1093 = vunpack.c.l.bf16 %v1092
      %v1094 = vunpack.c.h.bf16 %v1092
      %v1095 = vlaneseq
      %v1096 = vand.u32 %v1095, 127
      %vm1098 = vcmp.lt.s32.totalorder %v1096, 147
      %v1099 = vsel %vm1098, %v1093, %v10
      %s1100 = scalar_lea.vmem [#allocation7], 208
      %v1101 = vpack.c.bf16 0.0, %v1099
      %1103 = vst [vmem:[%s1100] sm:$0xf] %v1101
      %s1104 = scalar_lea.vmem %s175, 212
      %s1106 = sor.u32 255, 127
      %s1107 = sand.u32 %s1106, 85
      %s1108 = sshrl.u32 %s1107, 1
      %s1109 = sor.u32 %s1107, %s1108
      %s1110 = sand.u32 51, %s1109
      %s1111 = sshrl.u32 %s1110, 2
      %s1112 = sor.u32 %s1110, %s1111
      %s1113 = sand.u32 15, %s1112
      %v1114 = vld [vmem:[%s1104] sm:%s1113]
      %v1115 = vunpack.c.l.bf16 %v1114
      %v1116 = vunpack.c.h.bf16 %v1114
      %v1117 = vlaneseq
      %v1118 = vand.u32 %v1117, 127
      %v1119 = vadd.s32 %v1118, 128
      %vm1120 = vcmp.lt.s32.totalorder %v1119, 147
      %v1121 = vsel %vm1120, %v1115, %v10
      %s1122 = scalar_lea.vmem [#allocation7], 212
      %v1123 = vpack.c.bf16 0.0, %v1121
      %1125 = vst [vmem:[%s1122] sm:$0xf] %v1123
      %s1126 = scalar_lea.vmem %s175, 216
      %v1127 = vld [vmem:[%s1126] sm:$0xf]
      %v1128 = vunpack.c.l.bf16 %v1127
      %v1129 = vunpack.c.h.bf16 %v1127
      %v1130 = vlaneseq
      %v1131 = vand.u32 %v1130, 127
      %vm1133 = vcmp.lt.s32.totalorder %v1131, 147
      %v1134 = vsel %vm1133, %v1128, %v10
      %s1135 = scalar_lea.vmem [#allocation7], 216
      %v1136 = vpack.c.bf16 0.0, %v1134
      %1138 = vst [vmem:[%s1135] sm:$0xf] %v1136
      %s1139 = scalar_lea.vmem %s175, 220
      %s1141 = sor.u32 255, 127
      %s1142 = sand.u32 %s1141, 85
      %s1143 = sshrl.u32 %s1142, 1
      %s1144 = sor.u32 %s1142, %s1143
      %s1145 = sand.u32 51, %s1144
      %s1146 = sshrl.u32 %s1145, 2
      %s1147 = sor.u32 %s1145, %s1146
      %s1148 = sand.u32 15, %s1147
      %v1149 = vld [vmem:[%s1139] sm:%s1148]
      %v1150 = vunpack.c.l.bf16 %v1149
      %v1151 = vunpack.c.h.bf16 %v1149
      %v1152 = vlaneseq
      %v1153 = vand.u32 %v1152, 127
      %v1154 = vadd.s32 %v1153, 128
      %vm1155 = vcmp.lt.s32.totalorder %v1154, 147
      %v1156 = vsel %vm1155, %v1150, %v10
      %s1157 = scalar_lea.vmem [#allocation7], 220
      %v1158 = vpack.c.bf16 0.0, %v1156
      %1160 = vst [vmem:[%s1157] sm:$0xf] %v1158
      %s1161 = scalar_lea.vmem %s175, 224
      %v1162 = vld [vmem:[%s1161] sm:$0xf]
      %v1163 = vunpack.c.l.bf16 %v1162
      %v1164 = vunpack.c.h.bf16 %v1162
      %v1165 = vlaneseq
      %v1166 = vand.u32 %v1165, 127
      %vm1168 = vcmp.lt.s32.totalorder %v1166, 147
      %v1169 = vsel %vm1168, %v1163, %v10
      %s1170 = scalar_lea.vmem [#allocation7], 224
      %v1171 = vpack.c.bf16 0.0, %v1169
      %1173 = vst [vmem:[%s1170] sm:$0xf] %v1171
      %s1174 = scalar_lea.vmem %s175, 228
      %s1176 = sor.u32 255, 127
      %s1177 = sand.u32 %s1176, 85
      %s1178 = sshrl.u32 %s1177, 1
      %s1179 = sor.u32 %s1177, %s1178
      %s1180 = sand.u32 51, %s1179
      %s1181 = sshrl.u32 %s1180, 2
      %s1182 = sor.u32 %s1180, %s1181
      %s1183 = sand.u32 15, %s1182
      %v1184 = vld [vmem:[%s1174] sm:%s1183]
      %v1185 = vunpack.c.l.bf16 %v1184
      %v1186 = vunpack.c.h.bf16 %v1184
      %v1187 = vlaneseq
      %v1188 = vand.u32 %v1187, 127
      %v1189 = vadd.s32 %v1188, 128
      %vm1190 = vcmp.lt.s32.totalorder %v1189, 147
      %v1191 = vsel %vm1190, %v1185, %v10
      %s1192 = scalar_lea.vmem [#allocation7], 228
      %v1193 = vpack.c.bf16 0.0, %v1191
      %1195 = vst [vmem:[%s1192] sm:$0xf] %v1193
      %s1196 = scalar_lea.vmem %s175, 232
      %v1197 = vld [vmem:[%s1196] sm:$0xf]
      %v1198 = vunpack.c.l.bf16 %v1197
      %v1199 = vunpack.c.h.bf16 %v1197
      %v1200 = vlaneseq
      %v1201 = vand.u32 %v1200, 127
      %vm1203 = vcmp.lt.s32.totalorder %v1201, 147
      %v1204 = vsel %vm1203, %v1198, %v10
      %s1205 = scalar_lea.vmem [#allocation7], 232
      %v1206 = vpack.c.bf16 0.0, %v1204
      %1208 = vst [vmem:[%s1205] sm:$0xf] %v1206
      %s1209 = scalar_lea.vmem %s175, 236
      %s1211 = sor.u32 255, 127
      %s1212 = sand.u32 %s1211, 85
      %s1213 = sshrl.u32 %s1212, 1
      %s1214 = sor.u32 %s1212, %s1213
      %s1215 = sand.u32 51, %s1214
      %s1216 = sshrl.u32 %s1215, 2
      %s1217 = sor.u32 %s1215, %s1216
      %s1218 = sand.u32 15, %s1217
      %v1219 = vld [vmem:[%s1209] sm:%s1218]
      %v1220 = vunpack.c.l.bf16 %v1219
      %v1221 = vunpack.c.h.bf16 %v1219
      %v1222 = vlaneseq
      %v1223 = vand.u32 %v1222, 127
      %v1224 = vadd.s32 %v1223, 128
      %vm1225 = vcmp.lt.s32.totalorder %v1224, 147
      %v1226 = vsel %vm1225, %v1220, %v10
      %s1227 = scalar_lea.vmem [#allocation7], 236
      %v1228 = vpack.c.bf16 0.0, %v1226
      %1230 = vst [vmem:[%s1227] sm:$0xf] %v1228
      %s1231 = scalar_lea.vmem %s175, 240
      %v1232 = vld [vmem:[%s1231] sm:$0xf]
      %v1233 = vunpack.c.l.bf16 %v1232
      %v1234 = vunpack.c.h.bf16 %v1232
      %v1235 = vlaneseq
      %v1236 = vand.u32 %v1235, 127
      %vm1238 = vcmp.lt.s32.totalorder %v1236, 147
      %v1239 = vsel %vm1238, %v1233, %v10
      %s1240 = scalar_lea.vmem [#allocation7], 240
      %v1241 = vpack.c.bf16 0.0, %v1239
      %1243 = vst [vmem:[%s1240] sm:$0xf] %v1241
      %s1244 = scalar_lea.vmem %s175, 244
      %s1246 = sor.u32 255, 127
      %s1247 = sand.u32 %s1246, 85
      %s1248 = sshrl.u32 %s1247, 1
      %s1249 = sor.u32 %s1247, %s1248
      %s1250 = sand.u32 51, %s1249
      %s1251 = sshrl.u32 %s1250, 2
      %s1252 = sor.u32 %s1250, %s1251
      %s1253 = sand.u32 15, %s1252
      %v1254 = vld [vmem:[%s1244] sm:%s1253]
      %v1255 = vunpack.c.l.bf16 %v1254
      %v1256 = vunpack.c.h.bf16 %v1254
      %v1257 = vlaneseq
      %v1258 = vand.u32 %v1257, 127
      %v1259 = vadd.s32 %v1258, 128
      %vm1260 = vcmp.lt.s32.totalorder %v1259, 147
      %v1261 = vsel %vm1260, %v1255, %v10
      %s1262 = scalar_lea.vmem [#allocation7], 244
      %v1263 = vpack.c.bf16 0.0, %v1261
      %1265 = vst [vmem:[%s1262] sm:$0xf] %v1263
      %s1266 = scalar_lea.vmem %s175, 248
      %v1267 = vld [vmem:[%s1266] sm:$0xf]
      %v1268 = vunpack.c.l.bf16 %v1267
      %v1269 = vunpack.c.h.bf16 %v1267
      %v1270 = vlaneseq
      %v1271 = vand.u32 %v1270, 127
      %vm1273 = vcmp.lt.s32.totalorder %v1271, 147
      %v1274 = vsel %vm1273, %v1268, %v10
      %s1275 = scalar_lea.vmem [#allocation7], 248
      %v1276 = vpack.c.bf16 0.0, %v1274
      %1278 = vst [vmem:[%s1275] sm:$0xf] %v1276
      %s1279 = scalar_lea.vmem %s175, 252
      %s1281 = sor.u32 255, 127
      %s1282 = sand.u32 %s1281, 85
      %s1283 = sshrl.u32 %s1282, 1
      %s1284 = sor.u32 %s1282, %s1283
      %s1285 = sand.u32 51, %s1284
      %s1286 = sshrl.u32 %s1285, 2
      %s1287 = sor.u32 %s1285, %s1286
      %s1288 = sand.u32 15, %s1287
      %v1289 = vld [vmem:[%s1279] sm:%s1288]
      %v1290 = vunpack.c.l.bf16 %v1289
      %v1291 = vunpack.c.h.bf16 %v1289
      %v1292 = vlaneseq
      %v1293 = vand.u32 %v1292, 127
      %v1294 = vadd.s32 %v1293, 128
      %vm1295 = vcmp.lt.s32.totalorder %v1294, 147
      %v1296 = vsel %vm1295, %v1290, %v10
      %s1297 = scalar_lea.vmem [#allocation7], 252
      %v1298 = vpack.c.bf16 0.0, %v1296
      %1300 = vst [vmem:[%s1297] sm:$0xf] %v1298
      %v1302 = vld [vmem:[#allocation7] sm:$0xff]
      %v1303 = vld [vmem:[#allocation7 + $0x8] sm:$0xff]
      %v1304 = vld [vmem:[#allocation7 + $0x10] sm:$0xff]
      %v1305 = vld [vmem:[#allocation7 + $0x18] sm:$0xff]
      %v1306 = vld [vmem:[#allocation7 + $0x20] sm:$0xff]
      %v1307 = vld [vmem:[#allocation7 + $0x28] sm:$0xff]
      %v1308 = vld [vmem:[#allocation7 + $0x30] sm:$0xff]
      %v1309 = vld [vmem:[#allocation7 + $0x38] sm:$0xff]
      %v1310 = vld [vmem:[#allocation7 + $0x40] sm:$0xff]
      %v1311 = vld [vmem:[#allocation7 + $0x48] sm:$0xff]
      %v1312 = vld [vmem:[#allocation7 + $0x50] sm:$0xff]
      %v1313 = vld [vmem:[#allocation7 + $0x58] sm:$0xff]
      %v1314 = vld [vmem:[#allocation7 + $0x60] sm:$0xff]
      %v1315 = vld [vmem:[#allocation7 + $0x68] sm:$0xff]
      %v1316 = vld [vmem:[#allocation7 + $0x70] sm:$0xff]
      %v1317 = vld [vmem:[#allocation7 + $0x78] sm:$0xff]
      %v1318 = vld [vmem:[#allocation7 + $0x80] sm:$0xff]
      %v1319 = vld [vmem:[#allocation7 + $0x88] sm:$0xff]
      %v1320 = vld [vmem:[#allocation7 + $0x90] sm:$0xff]
      %v1321 = vld [vmem:[#allocation7 + $0x98] sm:$0xff]
      %v1322 = vld [vmem:[#allocation7 + $0xa0] sm:$0xff]
      %v1323 = vld [vmem:[#allocation7 + $0xa8] sm:$0xff]
      %v1324 = vld [vmem:[#allocation7 + $0xb0] sm:$0xff]
      %v1325 = vld [vmem:[#allocation7 + $0xb8] sm:$0xff]
      %v1326 = vld [vmem:[#allocation7 + $0xc0] sm:$0xff]
      %v1327 = vld [vmem:[#allocation7 + $0xc8] sm:$0xff]
      %v1328 = vld [vmem:[#allocation7 + $0xd0] sm:$0xff]
      %v1329 = vld [vmem:[#allocation7 + $0xd8] sm:$0xff]
      %v1330 = vld [vmem:[#allocation7 + $0xe0] sm:$0xff]
      %v1331 = vld [vmem:[#allocation7 + $0xe8] sm:$0xff]
      %v1332 = vld [vmem:[#allocation7 + $0xf0] sm:$0xff]
      %v1333 = vld [vmem:[#allocation7 + $0xf8] sm:$0xff]
      %v1334 = vld [vmem:[%s0] sm:$0xff]
      %v1335 = vld [vmem:[%s0 + $0x8] sm:$0xff]
      %v1336 = vld [vmem:[%s0 + $0x10] sm:$0xff]
      %v1337 = vld [vmem:[%s0 + $0x18] sm:$0xff]
      %v1338 = vld [vmem:[%s0 + $0x20] sm:$0xff]
      %v1339 = vld [vmem:[%s0 + $0x28] sm:$0xff]
      %v1340 = vld [vmem:[%s0 + $0x30] sm:$0xff]
      %v1341 = vld [vmem:[%s0 + $0x38] sm:$0xff]
      %v1342 = vld [vmem:[%s0 + $0x40] sm:$0xff]
      %v1343 = vld [vmem:[%s0 + $0x48] sm:$0xff]
      %v1344 = vld [vmem:[%s0 + $0x50] sm:$0xff]
      %v1345 = vld [vmem:[%s0 + $0x58] sm:$0xff]
      %v1346 = vld [vmem:[%s0 + $0x60] sm:$0xff]
      %v1347 = vld [vmem:[%s0 + $0x68] sm:$0xff]
      %v1348 = vld [vmem:[%s0 + $0x70] sm:$0xff]
      %v1349 = vld [vmem:[%s0 + $0x78] sm:$0xff]
      %v1350 = vld [vmem:[%s1] sm:$0x1]
      %v1352 = vlaneseq
      %v1353 = vshrl.u32 %v1352, 7
      %v1354 = vsub.s32 0, %v1353
      %v1355 = vrot.slane %v1350, %v1354
      %v1389 = vunpack.c.l.b16 %v1302
      %v1390 = vunpack.c.h.b16 %v1302
      %v1391 = vunpack.c.l.b16 %v1303
      %v1392 = vunpack.c.h.b16 %v1303
      %v1393 = vunpack.c.l.b16 %v1304
      %v1394 = vunpack.c.h.b16 %v1304
      %v1395 = vunpack.c.l.b16 %v1305
      %v1396 = vunpack.c.h.b16 %v1305
      %v1397 = vunpack.c.l.b16 %v1306
      %v1398 = vunpack.c.h.b16 %v1306
      %v1399 = vunpack.c.l.b16 %v1307
      %v1400 = vunpack.c.h.b16 %v1307
      %v1401 = vunpack.c.l.b16 %v1308
      %v1402 = vunpack.c.h.b16 %v1308
      %v1403 = vunpack.c.l.b16 %v1309
      %v1404 = vunpack.c.h.b16 %v1309
      %v1405 = vunpack.c.l.b16 %v1310
      %v1406 = vunpack.c.h.b16 %v1310
      %v1407 = vunpack.c.l.b16 %v1311
      %v1408 = vunpack.c.h.b16 %v1311
      %v1409 = vunpack.c.l.b16 %v1312
      %v1410 = vunpack.c.h.b16 %v1312
      %v1411 = vunpack.c.l.b16 %v1313
      %v1412 = vunpack.c.h.b16 %v1313
      %v1413 = vunpack.c.l.b16 %v1314
      %v1414 = vunpack.c.h.b16 %v1314
      %v1415 = vunpack.c.l.b16 %v1315
      %v1416 = vunpack.c.h.b16 %v1315
      %v1417 = vunpack.c.l.b16 %v1316
      %v1418 = vunpack.c.h.b16 %v1316
      %v1419 = vunpack.c.l.b16 %v1317
      %v1420 = vunpack.c.h.b16 %v1317
      %v1421 = vunpack.c.l.b16 %v1318
      %v1422 = vunpack.c.h.b16 %v1318
      %v1423 = vunpack.c.l.b16 %v1319
      %v1424 = vunpack.c.h.b16 %v1319
      %v1425 = vunpack.c.l.b16 %v1320
      %v1426 = vunpack.c.h.b16 %v1320
      %v1427 = vunpack.c.l.b16 %v1321
      %v1428 = vunpack.c.h.b16 %v1321
      %v1429 = vunpack.c.l.b16 %v1322
      %v1430 = vunpack.c.h.b16 %v1322
      %v1431 = vunpack.c.l.b16 %v1323
      %v1432 = vunpack.c.h.b16 %v1323
      %v1433 = vunpack.c.l.b16 %v1324
      %v1434 = vunpack.c.h.b16 %v1324
      %v1435 = vunpack.c.l.b16 %v1325
      %v1436 = vunpack.c.h.b16 %v1325
      %v1437 = vunpack.c.l.b16 %v1326
      %v1438 = vunpack.c.h.b16 %v1326
      %v1439 = vunpack.c.l.b16 %v1327
      %v1440 = vunpack.c.h.b16 %v1327
      %v1441 = vunpack.c.l.b16 %v1328
      %v1442 = vunpack.c.h.b16 %v1328
      %v1443 = vunpack.c.l.b16 %v1329
      %v1444 = vunpack.c.h.b16 %v1329
      %v1445 = vunpack.c.l.b16 %v1330
      %v1446 = vunpack.c.h.b16 %v1330
      %v1447 = vunpack.c.l.b16 %v1331
      %v1448 = vunpack.c.h.b16 %v1331
      %v1449 = vunpack.c.l.b16 %v1332
      %v1450 = vunpack.c.h.b16 %v1332
      %v1451 = vunpack.c.l.b16 %v1333
      %v1452 = vunpack.c.h.b16 %v1333
      %v1453 = vpack.c.b16 %v1391, %v1389
      %v1454 = vpack.c.b16 %v1392, %v1390
      %v1455 = vpack.c.b16 %v1395, %v1393
      %v1456 = vpack.c.b16 %v1396, %v1394
      %v1457 = vpack.c.b16 %v1399, %v1397
      %v1458 = vpack.c.b16 %v1400, %v1398
      %v1459 = vpack.c.b16 %v1403, %v1401
      %v1460 = vpack.c.b16 %v1404, %v1402
      %v1461 = vpack.c.b16 %v1407, %v1405
      %v1462 = vpack.c.b16 %v1408, %v1406
      %v1463 = vpack.c.b16 %v1411, %v1409
      %v1464 = vpack.c.b16 %v1412, %v1410
      %v1465 = vpack.c.b16 %v1415, %v1413
      %v1466 = vpack.c.b16 %v1416, %v1414
      %v1467 = vpack.c.b16 %v1419, %v1417
      %v1468 = vpack.c.b16 %v1420, %v1418
      %v1469 = vpack.c.b16 %v1423, %v1421
      %v1470 = vpack.c.b16 %v1424, %v1422
      %v1471 = vpack.c.b16 %v1427, %v1425
      %v1472 = vpack.c.b16 %v1428, %v1426
      %v1473 = vpack.c.b16 %v1431, %v1429
      %v1474 = vpack.c.b16 %v1432, %v1430
      %v1475 = vpack.c.b16 %v1435, %v1433
      %v1476 = vpack.c.b16 %v1436, %v1434
      %v1477 = vpack.c.b16 %v1439, %v1437
      %v1478 = vpack.c.b16 %v1440, %v1438
      %v1479 = vpack.c.b16 %v1443, %v1441
      %v1480 = vpack.c.b16 %v1444, %v1442
      %v1481 = vpack.c.b16 %v1447, %v1445
      %v1482 = vpack.c.b16 %v1448, %v1446
      %v1483 = vpack.c.b16 %v1451, %v1449
      %v1484 = vpack.c.b16 %v1452, %v1450
      %1517 = vmatprep.subr.bf16.mxu0 0
      %1518 = vmatpush1.bf16.msra.mxu0 %v1334
      %1519 = vmatprep.subr.bf16.mxu0 0
      %1520 = vmatpush1.bf16.msra.mxu0 %v1335
      %1521 = vmatprep.subr.bf16.mxu0 0
      %1522 = vmatpush1.bf16.msra.mxu0 %v1336
      %1523 = vmatprep.subr.bf16.mxu0 0
      %1524 = vmatpush1.bf16.msra.mxu0 %v1337
      %1525 = vmatprep.subr.bf16.mxu0 0
      %1526 = vmatpush1.bf16.msra.mxu0 %v1338
      %1527 = vmatprep.subr.bf16.mxu0 0
      %1528 = vmatpush1.bf16.msra.mxu0 %v1339
      %1529 = vmatprep.subr.bf16.mxu0 0
      %1530 = vmatpush1.bf16.msra.mxu0 %v1340
      %1531 = vmatprep.subr.bf16.mxu0 0
      %1532 = vmatpush1.bf16.msra.mxu0 %v1341
      %1533 = vmatprep.subr.bf16.mxu0 0
      %1534 = vmatpush1.bf16.msra.mxu0 %v1342
      %1535 = vmatprep.subr.bf16.mxu0 0
      %1536 = vmatpush1.bf16.msra.mxu0 %v1343
      %1537 = vmatprep.subr.bf16.mxu0 0
      %1538 = vmatpush1.bf16.msra.mxu0 %v1344
      %1539 = vmatprep.subr.bf16.mxu0 0
      %1540 = vmatpush1.bf16.msra.mxu0 %v1345
      %1541 = vmatprep.subr.bf16.mxu0 0
      %1542 = vmatpush1.bf16.msra.mxu0 %v1346
      %1543 = vmatprep.subr.bf16.mxu0 0
      %1544 = vmatpush1.bf16.msra.mxu0 %v1347
      %1545 = vmatprep.subr.bf16.mxu0 0
      %1546 = vmatpush1.bf16.msra.mxu0 %v1348
      %1547 = vmatprep.subr.bf16.mxu0 0
      %1548 = vmatpush1.bf16.msra.mxu0 %v1349
      %1549 = vmatprep.mubr.bf16.mxu0 %v1454
      %1550 = vmatmul.mubr.bf16.gmra.mrb[0].mxu0 %v1453
      %v1551 = vpop.f32.mrb[0].mxu0
      %v1552 = vadd.f32 %v1355, %v1551
      %v1553 = vpop.f32.mrb[0].mxu0
      %v1554 = vpop.f32.mrb[0].mxu0
      %v1555 = vadd.f32 %v1355, %v1554
      %v1556 = vpop.f32.mrb[0].mxu0
      %1557 = vmatprep.mubr.bf16.mxu0 %v1456
      %1558 = vmatmul.mubr.bf16.gmra.mrb[0].mxu0 %v1455
      %v1559 = vpop.f32.mrb[0].mxu0
      %v1560 = vadd.f32 %v1355, %v1559
      %v1561 = vpop.f32.mrb[0].mxu0
      %v1562 = vpop.f32.mrb[0].mxu0
      %v1563 = vadd.f32 %v1355, %v1562
      %v1564 = vpop.f32.mrb[0].mxu0
      %1565 = vmatprep.mubr.bf16.mxu0 %v1458
      %1566 = vmatmul.mubr.bf16.gmra.mrb[0].mxu0 %v1457
      %v1567 = vpop.f32.mrb[0].mxu0
      %v1568 = vadd.f32 %v1355, %v1567
      %v1569 = vpop.f32.mrb[0].mxu0
      %v1570 = vpop.f32.mrb[0].mxu0
      %v1571 = vadd.f32 %v1355, %v1570
      %v1572 = vpop.f32.mrb[0].mxu0
      %1573 = vmatprep.mubr.bf16.mxu0 %v1460
      %1574 = vmatmul.mubr.bf16.gmra.mrb[0].mxu0 %v1459
      %v1575 = vpop.f32.mrb[0].mxu0
      %v1576 = vadd.f32 %v1355, %v1575
      %v1577 = vpop.f32.mrb[0].mxu0
      %v1578 = vpop.f32.mrb[0].mxu0
      %v1579 = vadd.f32 %v1355, %v1578
      %v1580 = vpop.f32.mrb[0].mxu0
      %1581 = vmatprep.mubr.bf16.mxu0 %v1462
      %1582 = vmatmul.mubr.bf16.gmra.mrb[0].mxu0 %v1461
      %v1583 = vpop.f32.mrb[0].mxu0
      %v1584 = vadd.f32 %v1355, %v1583
      %v1585 = vpop.f32.mrb[0].mxu0
      %v1586 = vpop.f32.mrb[0].mxu0
      %v1587 = vadd.f32 %v1355, %v1586
      %v1588 = vpop.f32.mrb[0].mxu0
      %1589 = vmatprep.mubr.bf16.mxu0 %v1464
      %1590 = vmatmul.mubr.bf16.gmra.mrb[0].mxu0 %v1463
      %v1591 = vpop.f32.mrb[0].mxu0
      %v1592 = vadd.f32 %v1355, %v1591
      %v1593 = vpop.f32.mrb[0].mxu0
      %v1594 = vpop.f32.mrb[0].mxu0
      %v1595 = vadd.f32 %v1355, %v1594
      %v1596 = vpop.f32.mrb[0].mxu0
      %1597 = vmatprep.mubr.bf16.mxu0 %v1466
      %1598 = vmatmul.mubr.bf16.gmra.mrb[0].mxu0 %v1465
      %v1599 = vpop.f32.mrb[0].mxu0
      %v1600 = vadd.f32 %v1355, %v1599
      %v1601 = vpop.f32.mrb[0].mxu0
      %v1602 = vpop.f32.mrb[0].mxu0
      %v1603 = vadd.f32 %v1355, %v1602
      %v1604 = vpop.f32.mrb[0].mxu0
      %1605 = vmatprep.mubr.bf16.mxu0 %v1468
      %1606 = vmatmul.mubr.bf16.gmra.mrb[0].mxu0 %v1467
      %v1607 = vpop.f32.mrb[0].mxu0
      %v1608 = vadd.f32 %v1355, %v1607
      %v1609 = vpop.f32.mrb[0].mxu0
      %v1610 = vpop.f32.mrb[0].mxu0
      %v1611 = vadd.f32 %v1355, %v1610
      %v1612 = vpop.f32.mrb[0].mxu0
      %1613 = vmatprep.mubr.bf16.mxu0 %v1470
      %1614 = vmatmul.mubr.bf16.gmra.mrb[0].mxu0 %v1469
      %v1615 = vpop.f32.mrb[0].mxu0
      %v1616 = vadd.f32 %v1355, %v1615
      %v1617 = vpop.f32.mrb[0].mxu0
      %v1618 = vpop.f32.mrb[0].mxu0
      %v1619 = vadd.f32 %v1355, %v1618
      %v1620 = vpop.f32.mrb[0].mxu0
      %1621 = vmatprep.mubr.bf16.mxu0 %v1472
      %1622 = vmatmul.mubr.bf16.gmra.mrb[0].mxu0 %v1471
      %v1623 = vpop.f32.mrb[0].mxu0
      %v1624 = vadd.f32 %v1355, %v1623
      %v1625 = vpop.f32.mrb[0].mxu0
      %v1626 = vpop.f32.mrb[0].mxu0
      %v1627 = vadd.f32 %v1355, %v1626
      %v1628 = vpop.f32.mrb[0].mxu0
      %1629 = vmatprep.mubr.bf16.mxu0 %v1474
      %1630 = vmatmul.mubr.bf16.gmra.mrb[0].mxu0 %v1473
      %v1631 = vpop.f32.mrb[0].mxu0
      %v1632 = vadd.f32 %v1355, %v1631
      %v1633 = vpop.f32.mrb[0].mxu0
      %v1634 = vpop.f32.mrb[0].mxu0
      %v1635 = vadd.f32 %v1355, %v1634
      %v1636 = vpop.f32.mrb[0].mxu0
      %1637 = vmatprep.mubr.bf16.mxu0 %v1476
      %1638 = vmatmul.mubr.bf16.gmra.mrb[0].mxu0 %v1475
      %v1639 = vpop.f32.mrb[0].mxu0
      %v1640 = vadd.f32 %v1355, %v1639
      %v1641 = vpop.f32.mrb[0].mxu0
      %v1642 = vpop.f32.mrb[0].mxu0
      %v1643 = vadd.f32 %v1355, %v1642
      %v1644 = vpop.f32.mrb[0].mxu0
      %1645 = vmatprep.mubr.bf16.mxu0 %v1478
      %1646 = vmatmul.mubr.bf16.gmra.mrb[0].mxu0 %v1477
      %v1647 = vpop.f32.mrb[0].mxu0
      %v1648 = vadd.f32 %v1355, %v1647
      %v1649 = vpop.f32.mrb[0].mxu0
      %v1650 = vpop.f32.mrb[0].mxu0
      %v1651 = vadd.f32 %v1355, %v1650
      %v1652 = vpop.f32.mrb[0].mxu0
      %1653 = vmatprep.mubr.bf16.mxu0 %v1480
      %1654 = vmatmul.mubr.bf16.gmra.mrb[0].mxu0 %v1479
      %v1655 = vpop.f32.mrb[0].mxu0
      %v1656 = vadd.f32 %v1355, %v1655
      %v1657 = vpop.f32.mrb[0].mxu0
      %v1658 = vpop.f32.mrb[0].mxu0
      %v1659 = vadd.f32 %v1355, %v1658
      %v1660 = vpop.f32.mrb[0].mxu0
      %1661 = vmatprep.mubr.bf16.mxu0 %v1482
      %1662 = vmatmul.mubr.bf16.gmra.mrb[0].mxu0 %v1481
      %v1663 = vpop.f32.mrb[0].mxu0
      %v1664 = vadd.f32 %v1355, %v1663
      %v1665 = vpop.f32.mrb[0].mxu0
      %v1666 = vpop.f32.mrb[0].mxu0
      %v1667 = vadd.f32 %v1355, %v1666
      %v1668 = vpop.f32.mrb[0].mxu0
      %1669 = vmatprep.mubr.bf16.mxu0 %v1484
      %1670 = vmatmul.mubr.bf16.gmra.mrb[0].mxu0 %v1483
      %v1671 = vpop.f32.mrb[0].mxu0
      %v1672 = vadd.f32 %v1355, %v1671
      %v1673 = vpop.f32.mrb[0].mxu0
      %v1674 = vpop.f32.mrb[0].mxu0
      %v1675 = vadd.f32 %v1355, %v1674
      %v1676 = vpop.f32.mrb[0].mxu0
      %1677 = vdwg.mxu0
      %v1678 = vmax.f32 %v1552, 0.0
      %v1679 = vmax.f32 %v1555, 0.0
      %v1680 = vmax.f32 %v1560, 0.0
      %v1681 = vmax.f32 %v1563, 0.0
      %v1682 = vmax.f32 %v1568, 0.0
      %v1683 = vmax.f32 %v1571, 0.0
      %v1684 = vmax.f32 %v1576, 0.0
      %v1685 = vmax.f32 %v1579, 0.0
      %v1686 = vmax.f32 %v1584, 0.0
      %v1687 = vmax.f32 %v1587, 0.0
      %v1688 = vmax.f32 %v1592, 0.0
      %v1689 = vmax.f32 %v1595, 0.0
      %v1690 = vmax.f32 %v1600, 0.0
      %v1691 = vmax.f32 %v1603, 0.0
      %v1692 = vmax.f32 %v1608, 0.0
      %v1693 = vmax.f32 %v1611, 0.0
      %v1694 = vmax.f32 %v1616, 0.0
      %v1695 = vmax.f32 %v1619, 0.0
      %v1696 = vmax.f32 %v1624, 0.0
      %v1697 = vmax.f32 %v1627, 0.0
      %v1698 = vmax.f32 %v1632, 0.0
      %v1699 = vmax.f32 %v1635, 0.0
      %v1700 = vmax.f32 %v1640, 0.0
      %v1701 = vmax.f32 %v1643, 0.0
      %v1702 = vmax.f32 %v1648, 0.0
      %v1703 = vmax.f32 %v1651, 0.0
      %v1704 = vmax.f32 %v1656, 0.0
      %v1705 = vmax.f32 %v1659, 0.0
      %v1706 = vmax.f32 %v1664, 0.0
      %v1707 = vmax.f32 %v1667, 0.0
      %v1708 = vmax.f32 %v1672, 0.0
      %v1709 = vmax.f32 %v1675, 0.0
      %v1710 = vpack.c.bf16 %v1679, %v1678
      %v1711 = vpack.c.bf16 %v1681, %v1680
      %v1712 = vpack.c.bf16 %v1683, %v1682
      %v1713 = vpack.c.bf16 %v1685, %v1684
      %v1714 = vpack.c.bf16 %v1687, %v1686
      %v1715 = vpack.c.bf16 %v1689, %v1688
      %v1716 = vpack.c.bf16 %v1691, %v1690
      %v1717 = vpack.c.bf16 %v1693, %v1692
      %v1718 = vpack.c.bf16 %v1695, %v1694
      %v1719 = vpack.c.bf16 %v1697, %v1696
      %v1720 = vpack.c.bf16 %v1699, %v1698
      %v1721 = vpack.c.bf16 %v1701, %v1700
      %v1722 = vpack.c.bf16 %v1703, %v1702
      %v1723 = vpack.c.bf16 %v1705, %v1704
      %v1724 = vpack.c.bf16 %v1707, %v1706
      %v1725 = vpack.c.bf16 %v1709, %v1708
      %v1742 = vunpack.c.l.b16 %v1710
      %v1743 = vunpack.c.h.b16 %v1710
      %v1744 = vunpack.c.l.b16 %v1711
      %v1745 = vunpack.c.h.b16 %v1711
      %v1746 = vunpack.c.l.b16 %v1712
      %v1747 = vunpack.c.h.b16 %v1712
      %v1748 = vunpack.c.l.b16 %v1713
      %v1749 = vunpack.c.h.b16 %v1713
      %v1750 = vunpack.c.l.b16 %v1714
      %v1751 = vunpack.c.h.b16 %v1714
      %v1752 = vunpack.c.l.b16 %v1715
      %v1753 = vunpack.c.h.b16 %v1715
      %v1754 = vunpack.c.l.b16 %v1716
      %v1755 = vunpack.c.h.b16 %v1716
      %v1756 = vunpack.c.l.b16 %v1717
      %v1757 = vunpack.c.h.b16 %v1717
      %v1758 = vunpack.c.l.b16 %v1718
      %v1759 = vunpack.c.h.b16 %v1718
      %v1760 = vunpack.c.l.b16 %v1719
      %v1761 = vunpack.c.h.b16 %v1719
      %v1762 = vunpack.c.l.b16 %v1720
      %v1763 = vunpack.c.h.b16 %v1720
      %v1764 = vunpack.c.l.b16 %v1721
      %v1765 = vunpack.c.h.b16 %v1721
      %v1766 = vunpack.c.l.b16 %v1722
      %v1767 = vunpack.c.h.b16 %v1722
      %v1768 = vunpack.c.l.b16 %v1723
      %v1769 = vunpack.c.h.b16 %v1723
      %v1770 = vunpack.c.l.b16 %v1724
      %v1771 = vunpack.c.h.b16 %v1724
      %v1772 = vunpack.c.l.b16 %v1725
      %v1773 = vunpack.c.h.b16 %v1725
      %v1774 = vpack.c.b16 %v1742, %v1742
      %v1775 = vpack.c.b16 %v1743, %v1743
      %v1776 = vpack.c.b16 %v1744, %v1744
      %v1777 = vpack.c.b16 %v1745, %v1745
      %v1778 = vpack.c.b16 %v1746, %v1746
      %v1779 = vpack.c.b16 %v1747, %v1747
      %v1780 = vpack.c.b16 %v1748, %v1748
      %v1781 = vpack.c.b16 %v1749, %v1749
      %v1782 = vpack.c.b16 %v1750, %v1750
      %v1783 = vpack.c.b16 %v1751, %v1751
      %v1784 = vpack.c.b16 %v1752, %v1752
      %v1785 = vpack.c.b16 %v1753, %v1753
      %v1786 = vpack.c.b16 %v1754, %v1754
      %v1787 = vpack.c.b16 %v1755, %v1755
      %v1788 = vpack.c.b16 %v1756, %v1756
      %v1789 = vpack.c.b16 %v1757, %v1757
      %v1790 = vpack.c.b16 %v1758, %v1758
      %v1791 = vpack.c.b16 %v1759, %v1759
      %v1792 = vpack.c.b16 %v1760, %v1760
      %v1793 = vpack.c.b16 %v1761, %v1761
      %v1794 = vpack.c.b16 %v1762, %v1762
      %v1795 = vpack.c.b16 %v1763, %v1763
      %v1796 = vpack.c.b16 %v1764, %v1764
      %v1797 = vpack.c.b16 %v1765, %v1765
      %v1798 = vpack.c.b16 %v1766, %v1766
      %v1799 = vpack.c.b16 %v1767, %v1767
      %v1800 = vpack.c.b16 %v1768, %v1768
      %v1801 = vpack.c.b16 %v1769, %v1769
      %v1802 = vpack.c.b16 %v1770, %v1770
      %v1803 = vpack.c.b16 %v1771, %v1771
      %v1804 = vpack.c.b16 %v1772, %v1772
      %v1805 = vpack.c.b16 %v1773, %v1773
      %1838 = vst [vmem:[%s181] sm:$0xf] %v1774
      %1839 = vst [vmem:[%s181 + $0x4] sm:$0xf] %v1775
      %1840 = vst [vmem:[%s181 + $0x8] sm:$0xf] %v1776
      %1841 = vst [vmem:[%s181 + $0xc] sm:$0xf] %v1777
      %1842 = vst [vmem:[%s181 + $0x10] sm:$0xf] %v1778
      %1843 = vst [vmem:[%s181 + $0x14] sm:$0xf] %v1779
      %1844 = vst [vmem:[%s181 + $0x18] sm:$0xf] %v1780
      %1845 = vst [vmem:[%s181 + $0x1c] sm:$0xf] %v1781
      %1846 = vst [vmem:[%s181 + $0x20] sm:$0xf] %v1782
      %1847 = vst [vmem:[%s181 + $0x24] sm:$0xf] %v1783
      %1848 = vst [vmem:[%s181 + $0x28] sm:$0xf] %v1784
      %1849 = vst [vmem:[%s181 + $0x2c] sm:$0xf] %v1785
      %1850 = vst [vmem:[%s181 + $0x30] sm:$0xf] %v1786
      %1851 = vst [vmem:[%s181 + $0x34] sm:$0xf] %v1787
      %1852 = vst [vmem:[%s181 + $0x38] sm:$0xf] %v1788
      %1853 = vst [vmem:[%s181 + $0x3c] sm:$0xf] %v1789
      %1854 = vst [vmem:[%s181 + $0x40] sm:$0xf] %v1790
      %1855 = vst [vmem:[%s181 + $0x44] sm:$0xf] %v1791
      %1856 = vst [vmem:[%s181 + $0x48] sm:$0xf] %v1792
      %1857 = vst [vmem:[%s181 + $0x4c] sm:$0xf] %v1793
      %1858 = vst [vmem:[%s181 + $0x50] sm:$0xf] %v1794
      %1859 = vst [vmem:[%s181 + $0x54] sm:$0xf] %v1795
      %1860 = vst [vmem:[%s181 + $0x58] sm:$0xf] %v1796
      %1861 = vst [vmem:[%s181 + $0x5c] sm:$0xf] %v1797
      %1862 = vst [vmem:[%s181 + $0x60] sm:$0xf] %v1798
      %1863 = vst [vmem:[%s181 + $0x64] sm:$0xf] %v1799
      %1864 = vst [vmem:[%s181 + $0x68] sm:$0xf] %v1800
      %1865 = vst [vmem:[%s181 + $0x6c] sm:$0xf] %v1801
      %1866 = vst [vmem:[%s181 + $0x70] sm:$0xf] %v1802
      %1867 = vst [vmem:[%s181 + $0x74] sm:$0xf] %v1803
      %1868 = vst [vmem:[%s181 + $0x78] sm:$0xf] %v1804
      %1869 = vst [vmem:[%s181 + $0x7c] sm:$0xf] %v1805
      %s1870 = smul.u32 32, %s20
      %p1871 = scmp.lt.s32.totalorder %s1870, 63
      %s1872 = scalar_select %p1871, %s1870, 63
      %s1873 = smul.addr %s1872, 4
      %s1874 = scalar_lea.vmem %s4, %s1873
      // Predicated region
      $region33: #{_lambda_.20} parent=31 // pred_check
        %p1875 = pneg %p106
      $region34: #{_lambda_.20} parent=31 // pred_check_branch
        %1877 = sbr.rel (%p1875) target = $region36
      $region35: #{_lambda_.20} parent=31 // pred_region
        %s1878 = smul.u32 32, %s20
      $region36: #{_lambda_.20} parent=31 // pred_fallthru
        _
    $region32: #{_lambda_.20} parent=5 // pred_fallthru
      _
    %p1879 = scmp.le.s32.totalorder 2, %s15
    // Predicated region
    $region37: #{_lambda_.20} parent=5 // pred_check
      %p1880 = pneg %p1879
    $region38: #{_lambda_.20} parent=5 // pred_check_branch
      %1882 = sbr.rel (%p1880) target = $region40
    $region39: #{_lambda_.20} parent=5 // pred_region
      %s1883 = ssub.s32 %s15, 2
      // Predicated region
      $region41: #{_lambda_.20} parent=39 // pred_check
        %p1884 = pneg %p112
      $region42: #{_lambda_.20} parent=39 // pred_check_branch
        %1886 = sbr.rel (%p1884) target = $region44
      $region43: #{_lambda_.20} parent=39 // pred_region
        %s1887 = smul.u32 32, %s21
        %p1888 = scmp.lt.s32.totalorder %s1887, 63
        %s1889 = scalar_select %p1888, %s1887, 63
        %s1890 = smul.addr %s1889, 4
        %s1891 = scalar_lea.vmem %s4, %s1890
      $region44: #{_lambda_.20} parent=39 // pred_fallthru
        _
    $region40: #{_lambda_.20} parent=5 // pred_fallthru
      _
  $region6: #{_lambda_.20} parent=0 // loop_footer
    %s19 = sadd.s32 1, %s15
  $region7: #{_lambda_.20} parent=0 // loop_footer_branch
    %14 = sbr.rel target = $region3
  $region8: #{_lambda_.20} parent=0 // loop_exit
    _

// kernel: _lambda_.23
$region0: #{_lambda_.23}
  #allocation0 [shape = 'u32[]', space=smem, size = 0x4, offset = 0x4, fixed_abs, tag = 'smem constant byte address 0x4 - core index']
  #allocation1 [shape = 'u32[144,128]{1,0:T(1,128)}', space=vmem, size = 0x12000, scoped, tag = 'internal scratch']
  #allocation2 [shape = 'u32[2048]{0}', space=vmem, size = 0x2000, scoped, tag = 'scoped memory for _lambda_.23']
  #allocation3 [shape = 'u32[2048]{0}', space=vmem, size = 0x2000, scoped, tag = 'scoped memory for _lambda_.23']
  #allocation4 [shape = 'u32[2048]{0}', space=vmem, size = 0x2000, scoped, tag = 'scoped memory for _lambda_.23']
  #allocation5 [shape = 'u32[2048]{0}', space=vmem, size = 0x2000, scoped, tag = 'scoped memory for _lambda_.23']
  #allocation6 [shape = 'u32[2048]{0}', space=vmem, size = 0x2000, scoped, tag = 'scoped memory for _lambda_.23']
  %s0 = inlined_call_operand.vmem [shape: bf16[128,128], index: 0, kind: input, shape index: {}]
  %s1 = inlined_call_operand.vmem [shape: f32[1,128], index: 1, kind: input, shape index: {}]
  %s2 = inlined_call_operand.vmem [shape: bf16[128,72], index: 2, kind: input, shape index: {}]
  %s3 = inlined_call_operand.<no memory space> [shape: bf16[], index: 3, kind: input, shape index: {}]
  %s4 = inlined_call_operand.vmem [shape: bf16[128,128], index: 4, kind: output, shape index: {}]
  %s5 = sld [smem:[#allocation0]]
  $region45: #{_lambda_.23} parent=0
    _
  %s7 = ssub.s32 1, %s5
  %s8 = scalar_select 0, %s7, %s5
  %v9 = vstv %s3
  %v10 = vunpack.i.l.bf16 %v9
  %v12 = vunpack.i.h.bf16 %v9
  loop: start=0, step=1, limit=4
  $region2: #{_lambda_.23} parent=0 // loop_pre_header
    _
  $region3: #{_lambda_.23} parent=0 // loop_header
    %s15 = sphi 0, %s19
    %p16 = scmp.ge.s32.totalorder %s15, 4
    %s25 = sphi 0, %s27
    %s28 = sphi 0, %s25
    %s29 = sphi 0, %s28
    %s45 = sphi 0, %s29
    %s49 = sphi 0, %s49
    %s51 = sphi 0, %s49
    %s52 = sphi 0, %s51
    %s66 = sphi 0, %s52
    %s70 = sphi 0, %s70
    %s72 = sphi 0, %s70
    %s73 = sphi 0, %s72
    %s87 = sphi 0, %s73
    %s93 = sphi 0, %s95
    %s96 = sphi 0, %s93
    %s97 = sphi 0, %s96
    %s113 = sphi 0, %s97
  $region4: #{_lambda_.23} parent=0 // loop_header_branch
    %18 = sbr.rel (%p16) target = $region8
  $region5: #{_lambda_.23} parent=0 // loop_body
    %s20 = ssub.s32 %s15, 1
    %s21 = ssub.s32 %s15, 2
    %s22 = sadd.s32 %s15, 1
    %s23 = ssub.s32 %s15, %s22
    %p24 = scmp.eq.s32.totalorder %s23, 0
    %s26 = sadd.s32 %s25, 1
    %s27 = scalar_select %p24, %s25, %s26
    %p30 = pneg %p24
    %p31 = scmp.eq.s32.totalorder %s15, 1
    %p32 = por %p30, %p31
    %p33 = scmp.ne.s32.totalorder %s25, %s28
    %p34 = scmp.eq.s32.totalorder %s15, 0
    %p35 = por %p33, %p34
    %p36 = scmp.ne.s32.totalorder %s25, %s28
    %p37 = scmp.eq.s32.totalorder %s20, 1
    %p38 = por %p36, %p37
    %p39 = scmp.ne.s32.totalorder %s28, %s29
    %p40 = scmp.eq.s32.totalorder %s20, 0
    %p41 = por %p39, %p40
    %p42 = scmp.ne.s32.totalorder %s28, %s29
    %p43 = scmp.eq.s32.totalorder %s21, 1
    %p44 = por %p42, %p43
    %p46 = scmp.ne.s32.totalorder %s29, %s45
    %p47 = scmp.eq.s32.totalorder %s21, 0
    %p48 = por %p46, %p47
    %s50 = sadd.s32 %s49, 1
    %p53 = scmp.eq.s32.totalorder %s15, 1
    %p54 = scmp.ne.s32.totalorder %s49, %s51
    %p55 = scmp.eq.s32.totalorder %s15, 0
    %p56 = por %p54, %p55
    %p57 = scmp.ne.s32.totalorder %s49, %s51
    %p58 = scmp.eq.s32.totalorder %s20, 1
    %p59 = por %p57, %p58
    %p60 = scmp.ne.s32.totalorder %s51, %s52
    %p61 = scmp.eq.s32.totalorder %s20, 0
    %p62 = por %p60, %p61
    %p63 = scmp.ne.s32.totalorder %s51, %s52
    %p64 = scmp.eq.s32.totalorder %s21, 1
    %p65 = por %p63, %p64
    %p67 = scmp.ne.s32.totalorder %s52, %s66
    %p68 = scmp.eq.s32.totalorder %s21, 0
    %p69 = por %p67, %p68
    %s71 = sadd.s32 %s70, 1
    %p74 = scmp.eq.s32.totalorder %s15, 1
    %p75 = scmp.ne.s32.totalorder %s70, %s72
    %p76 = scmp.eq.s32.totalorder %s15, 0
    %p77 = por %p75, %p76
    %p78 = scmp.ne.s32.totalorder %s70, %s72
    %p79 = scmp.eq.s32.totalorder %s20, 1
    %p80 = por %p78, %p79
    %p81 = scmp.ne.s32.totalorder %s72, %s73
    %p82 = scmp.eq.s32.totalorder %s20, 0
    %p83 = por %p81, %p82
    %p84 = scmp.ne.s32.totalorder %s72, %s73
    %p85 = scmp.eq.s32.totalorder %s21, 1
    %p86 = por %p84, %p85
    %p88 = scmp.ne.s32.totalorder %s73, %s87
    %p89 = scmp.eq.s32.totalorder %s21, 0
    %p90 = por %p88, %p89
    %s91 = ssub.s32 %s15, %s22
    %p92 = scmp.eq.s32.totalorder %s91, 0
    %s94 = sadd.s32 %s93, 1
    %s95 = scalar_select %p92, %s93, %s94
    %p98 = pneg %p92
    %p99 = scmp.eq.s32.totalorder %s15, 1
    %p100 = por %p98, %p99
    %p101 = scmp.ne.s32.totalorder %s93, %s96
    %p102 = scmp.eq.s32.totalorder %s15, 0
    %p103 = por %p101, %p102
    %p104 = scmp.ne.s32.totalorder %s93, %s96
    %p105 = scmp.eq.s32.totalorder %s20, 1
    %p106 = por %p104, %p105
    %p107 = scmp.ne.s32.totalorder %s96, %s97
    %p108 = scmp.eq.s32.totalorder %s20, 0
    %p109 = por %p107, %p108
    %p110 = scmp.ne.s32.totalorder %s96, %s97
    %p111 = scmp.eq.s32.totalorder %s21, 1
    %p112 = por %p110, %p111
    %p114 = scmp.ne.s32.totalorder %s97, %s113
    %p115 = scmp.eq.s32.totalorder %s21, 0
    %p116 = por %p114, %p115
    %p117 = scmp.le.s32.totalorder 1, %s15
    %p118 = scmp.lt.s32.totalorder %s15, 3
    %p119 = pnand %p117, %p118
    %p120 = pneg %p119
    // Predicated region
    $region9: #{_lambda_.23} parent=5 // pred_check
      _
    $region10: #{_lambda_.23} parent=5 // pred_check_branch
      %122 = sbr.rel (%p119) target = $region12
    $region11: #{_lambda_.23} parent=5 // pred_region
      %s123 = ssub.s32 %s15, 1
      // Predicated region
      $region13: #{_lambda_.23} parent=11 // pred_check
        %p124 = pneg %p62
      $region14: #{_lambda_.23} parent=11 // pred_check_branch
        %126 = sbr.rel (%p124) target = $region16
      $region15: #{_lambda_.23} parent=11 // pred_region
        _
      $region16: #{_lambda_.23} parent=11 // pred_fallthru
        _
      // Predicated region
      $region17: #{_lambda_.23} parent=11 // pred_check
        %p127 = pneg %p83
      $region18: #{_lambda_.23} parent=11 // pred_check_branch
        %129 = sbr.rel (%p127) target = $region20
      $region19: #{_lambda_.23} parent=11 // pred_region
        _
      $region20: #{_lambda_.23} parent=11 // pred_fallthru
        _
    $region12: #{_lambda_.23} parent=5 // pred_fallthru
      _
    %p130 = scmp.lt.s32.totalorder %s15, 2
    // Predicated region
    $region21: #{_lambda_.23} parent=5 // pred_check
      %p131 = pneg %p130
    $region22: #{_lambda_.23} parent=5 // pred_check_branch
      %133 = sbr.rel (%p131) target = $region24
    $region23: #{_lambda_.23} parent=5 // pred_region
      // Predicated region
      $region25: #{_lambda_.23} parent=23 // pred_check
        %p134 = pneg %p35
      $region26: #{_lambda_.23} parent=23 // pred_check_branch
        %136 = sbr.rel (%p134) target = $region28
      $region27: #{_lambda_.23} parent=23 // pred_region
        %s137 = smul.u32 8, %s15
        %p138 = scmp.lt.s32.totalorder %s137, 15
        %s139 = scalar_select %p138, %s137, 15
        %s140 = smul.addr %s139, 4
        %s141 = scalar_lea.vmem %s2, %s140
        %s142 = smul.u32 8, %s15
      $region28: #{_lambda_.23} parent=23 // pred_fallthru
        _
    $region24: #{_lambda_.23} parent=5 // pred_fallthru
      _
    %p143 = scmp.le.s32.totalorder 1, %s15
    %p144 = scmp.lt.s32.totalorder %s15, 3
    %p145 = pnand %p143, %p144
    %p146 = pneg %p145
    // Predicated region
    $region29: #{_lambda_.23} parent=5 // pred_check
      _
    $region30: #{_lambda_.23} parent=5 // pred_check_branch
      %148 = sbr.rel (%p145) target = $region32
    $region31: #{_lambda_.23} parent=5 // pred_region
      #allocation7 [shape = 'u8[16384]{0}', space=vmem, size = 0x4000, dematerialized = true, scoped, tag = 'FusionAdapter Buffer %fusion.7 = bf16[128,128]{1,0:T(8,128)(2,1)} fusion(%param_2.7, %param_3.5), kind=kLoop, calls=%fused_computation.55.clone, metadata={op_name="jit(<lambda>)/jit(_pad)/pad" stack_frame_id=47}']
      %s149 = ssub.s32 %s15, 1
      %s150 = smul.u32 8, %s20
      %p151 = scmp.lt.s32.totalorder %s150, 15
      %s152 = scalar_select %p151, %s150, 15
      %s153 = smul.addr %s152, 4
      %s154 = scalar_lea.vmem %s2, %s153
      %p155 = pneg %p41
      %p156 = pneg %p38
      %p157 = pneg %p62
      %p158 = pneg %p59
      %p159 = pneg %p83
      %p160 = pneg %p80
      %p161 = pneg %p109
      %p162 = pneg %p106
      %s163 = smul.u32 8, %s20
      %p164 = scmp.lt.s32.totalorder %s163, 15
      %s165 = scalar_select %p164, %s163, 15
      %s166 = smul.addr %s165, 4
      %s167 = scalar_lea.vmem %s4, %s166
      %s168 = smul.u32 8, %s20
      %p169 = scmp.lt.s32.totalorder %s168, 15
      %s170 = scalar_select %p169, %s168, 15
      %s171 = smul.addr %s170, 4
      %s172 = scalar_lea.vmem %s2, %s171
      %s173 = smul.u32 8, %s20
      %s174 = smul.u32 8, %s20
      %p175 = scmp.lt.s32.totalorder %s174, 15
      %s176 = scalar_select %p175, %s174, 15
      %s177 = smul.addr %s176, 4
      %s178 = scalar_lea.vmem %s4, %s177
      %s179 = smul.u32 8, %s20
      %s181 = sor.u32 255, 127
      %s182 = sand.u32 %s181, 85
      %s183 = sshrl.u32 %s182, 1
      %s184 = sor.u32 %s182, %s183
      %s185 = sand.u32 51, %s184
      %s186 = sshrl.u32 %s185, 2
      %s187 = sor.u32 %s185, %s186
      %s188 = sand.u32 15, %s187
      %v189 = vld [vmem:[%s172] sm:%s188]
      %v190 = vunpack.c.l.bf16 %v189
      %v191 = vunpack.c.h.bf16 %v189
      %v192 = vlaneseq
      %v193 = vand.u32 %v192, 127
      %vm195 = vcmp.lt.s32.totalorder %v193, 72
      %v196 = vsel %vm195, %v190, %v10
      %v197 = vpack.c.bf16 0.0, %v196
      %199 = vst [vmem:[#allocation7] sm:$0xf] %v197
      %s200 = scalar_lea.vmem %s172, 4
      %s202 = sor.u32 255, 127
      %s203 = sand.u32 %s202, 85
      %s204 = sshrl.u32 %s203, 1
      %s205 = sor.u32 %s203, %s204
      %s206 = sand.u32 51, %s205
      %s207 = sshrl.u32 %s206, 2
      %s208 = sor.u32 %s206, %s207
      %s209 = sand.u32 15, %s208
      %v210 = vld [vmem:[%s200] sm:%s209]
      %v211 = vunpack.c.l.bf16 %v210
      %v212 = vunpack.c.h.bf16 %v210
      %v213 = vlaneseq
      %v214 = vand.u32 %v213, 127
      %vm216 = vcmp.lt.s32.totalorder %v214, 72
      %v217 = vsel %vm216, %v211, %v10
      %s218 = scalar_lea.vmem [#allocation7], 4
      %v219 = vpack.c.bf16 0.0, %v217
      %221 = vst [vmem:[%s218] sm:$0xf] %v219
      %s222 = scalar_lea.vmem %s172, 8
      %s224 = sor.u32 255, 127
      %s225 = sand.u32 %s224, 85
      %s226 = sshrl.u32 %s225, 1
      %s227 = sor.u32 %s225, %s226
      %s228 = sand.u32 51, %s227
      %s229 = sshrl.u32 %s228, 2
      %s230 = sor.u32 %s228, %s229
      %s231 = sand.u32 15, %s230
      %v232 = vld [vmem:[%s222] sm:%s231]
      %v233 = vunpack.c.l.bf16 %v232
      %v234 = vunpack.c.h.bf16 %v232
      %v235 = vlaneseq
      %v236 = vand.u32 %v235, 127
      %vm238 = vcmp.lt.s32.totalorder %v236, 72
      %v239 = vsel %vm238, %v233, %v10
      %s240 = scalar_lea.vmem [#allocation7], 8
      %v241 = vpack.c.bf16 0.0, %v239
      %243 = vst [vmem:[%s240] sm:$0xf] %v241
      %s244 = scalar_lea.vmem %s172, 12
      %s246 = sor.u32 255, 127
      %s247 = sand.u32 %s246, 85
      %s248 = sshrl.u32 %s247, 1
      %s249 = sor.u32 %s247, %s248
      %s250 = sand.u32 51, %s249
      %s251 = sshrl.u32 %s250, 2
      %s252 = sor.u32 %s250, %s251
      %s253 = sand.u32 15, %s252
      %v254 = vld [vmem:[%s244] sm:%s253]
      %v255 = vunpack.c.l.bf16 %v254
      %v256 = vunpack.c.h.bf16 %v254
      %v257 = vlaneseq
      %v258 = vand.u32 %v257, 127
      %vm260 = vcmp.lt.s32.totalorder %v258, 72
      %v261 = vsel %vm260, %v255, %v10
      %s262 = scalar_lea.vmem [#allocation7], 12
      %v263 = vpack.c.bf16 0.0, %v261
      %265 = vst [vmem:[%s262] sm:$0xf] %v263
      %s266 = scalar_lea.vmem %s172, 16
      %s268 = sor.u32 255, 127
      %s269 = sand.u32 %s268, 85
      %s270 = sshrl.u32 %s269, 1
      %s271 = sor.u32 %s269, %s270
      %s272 = sand.u32 51, %s271
      %s273 = sshrl.u32 %s272, 2
      %s274 = sor.u32 %s272, %s273
      %s275 = sand.u32 15, %s274
      %v276 = vld [vmem:[%s266] sm:%s275]
      %v277 = vunpack.c.l.bf16 %v276
      %v278 = vunpack.c.h.bf16 %v276
      %v279 = vlaneseq
      %v280 = vand.u32 %v279, 127
      %vm282 = vcmp.lt.s32.totalorder %v280, 72
      %v283 = vsel %vm282, %v277, %v10
      %s284 = scalar_lea.vmem [#allocation7], 16
      %v285 = vpack.c.bf16 0.0, %v283
      %287 = vst [vmem:[%s284] sm:$0xf] %v285
      %s288 = scalar_lea.vmem %s172, 20
      %s290 = sor.u32 255, 127
      %s291 = sand.u32 %s290, 85
      %s292 = sshrl.u32 %s291, 1
      %s293 = sor.u32 %s291, %s292
      %s294 = sand.u32 51, %s293
      %s295 = sshrl.u32 %s294, 2
      %s296 = sor.u32 %s294, %s295
      %s297 = sand.u32 15, %s296
      %v298 = vld [vmem:[%s288] sm:%s297]
      %v299 = vunpack.c.l.bf16 %v298
      %v300 = vunpack.c.h.bf16 %v298
      %v301 = vlaneseq
      %v302 = vand.u32 %v301, 127
      %vm304 = vcmp.lt.s32.totalorder %v302, 72
      %v305 = vsel %vm304, %v299, %v10
      %s306 = scalar_lea.vmem [#allocation7], 20
      %v307 = vpack.c.bf16 0.0, %v305
      %309 = vst [vmem:[%s306] sm:$0xf] %v307
      %s310 = scalar_lea.vmem %s172, 24
      %s312 = sor.u32 255, 127
      %s313 = sand.u32 %s312, 85
      %s314 = sshrl.u32 %s313, 1
      %s315 = sor.u32 %s313, %s314
      %s316 = sand.u32 51, %s315
      %s317 = sshrl.u32 %s316, 2
      %s318 = sor.u32 %s316, %s317
      %s319 = sand.u32 15, %s318
      %v320 = vld [vmem:[%s310] sm:%s319]
      %v321 = vunpack.c.l.bf16 %v320
      %v322 = vunpack.c.h.bf16 %v320
      %v323 = vlaneseq
      %v324 = vand.u32 %v323, 127
      %vm326 = vcmp.lt.s32.totalorder %v324, 72
      %v327 = vsel %vm326, %v321, %v10
      %s328 = scalar_lea.vmem [#allocation7], 24
      %v329 = vpack.c.bf16 0.0, %v327
      %331 = vst [vmem:[%s328] sm:$0xf] %v329
      %s332 = scalar_lea.vmem %s172, 28
      %s334 = sor.u32 255, 127
      %s335 = sand.u32 %s334, 85
      %s336 = sshrl.u32 %s335, 1
      %s337 = sor.u32 %s335, %s336
      %s338 = sand.u32 51, %s337
      %s339 = sshrl.u32 %s338, 2
      %s340 = sor.u32 %s338, %s339
      %s341 = sand.u32 15, %s340
      %v342 = vld [vmem:[%s332] sm:%s341]
      %v343 = vunpack.c.l.bf16 %v342
      %v344 = vunpack.c.h.bf16 %v342
      %v345 = vlaneseq
      %v346 = vand.u32 %v345, 127
      %vm348 = vcmp.lt.s32.totalorder %v346, 72
      %v349 = vsel %vm348, %v343, %v10
      %s350 = scalar_lea.vmem [#allocation7], 28
      %v351 = vpack.c.bf16 0.0, %v349
      %353 = vst [vmem:[%s350] sm:$0xf] %v351
      %v355 = vld [vmem:[#allocation7] sm:$0xf]
      %v356 = vld [vmem:[#allocation7 + $0x4] sm:$0xf]
      %v357 = vld [vmem:[#allocation7 + $0x8] sm:$0xf]
      %v358 = vld [vmem:[#allocation7 + $0xc] sm:$0xf]
      %v359 = vld [vmem:[#allocation7 + $0x10] sm:$0xf]
      %v360 = vld [vmem:[#allocation7 + $0x14] sm:$0xf]
      %v361 = vld [vmem:[#allocation7 + $0x18] sm:$0xf]
      %v362 = vld [vmem:[#allocation7 + $0x1c] sm:$0xf]
      %v363 = vld [vmem:[%s0] sm:$0xff]
      %v364 = vld [vmem:[%s0 + $0x8] sm:$0xff]
      %v365 = vld [vmem:[%s0 + $0x10] sm:$0xff]
      %v366 = vld [vmem:[%s0 + $0x18] sm:$0xff]
      %v367 = vld [vmem:[%s0 + $0x20] sm:$0xff]
      %v368 = vld [vmem:[%s0 + $0x28] sm:$0xff]
      %v369 = vld [vmem:[%s0 + $0x30] sm:$0xff]
      %v370 = vld [vmem:[%s0 + $0x38] sm:$0xff]
      %v371 = vld [vmem:[%s1] sm:$0x1]
      %v373 = vlaneseq
      %v374 = vshrl.u32 %v373, 7
      %v375 = vsub.s32 0, %v374
      %v376 = vrot.slane %v371, %v375
      %v386 = vunpack.c.l.b16 %v355
      %v387 = vunpack.c.l.b16 %v356
      %v388 = vunpack.c.l.b16 %v357
      %v389 = vunpack.c.l.b16 %v358
      %v390 = vunpack.c.l.b16 %v359
      %v391 = vunpack.c.l.b16 %v360
      %v392 = vunpack.c.l.b16 %v361
      %v393 = vunpack.c.l.b16 %v362
      %v394 = vpack.c.b16 %v387, %v386
      %v395 = vpack.c.b16 %v389, %v388
      %v396 = vpack.c.b16 %v391, %v390
      %v397 = vpack.c.b16 %v393, %v392
      %402 = vmatprep.subr.bf16.mxu0 0
      %403 = vmatpush1.bf16.msra.mxu0 %v363
      %404 = vmatprep.subr.bf16.mxu0 0
      %405 = vmatpush1.bf16.msra.mxu0 %v364
      %406 = vmatprep.subr.bf16.mxu0 0
      %407 = vmatpush1.bf16.msra.mxu0 %v365
      %408 = vmatprep.subr.bf16.mxu0 0
      %409 = vmatpush1.bf16.msra.mxu0 %v366
      %410 = vmatprep.subr.bf16.mxu0 0
      %411 = vmatpush1.bf16.msra.mxu0 %v367
      %412 = vmatprep.subr.bf16.mxu0 0
      %413 = vmatpush1.bf16.msra.mxu0 %v368
      %414 = vmatprep.subr.bf16.mxu0 0
      %415 = vmatpush1.bf16.msra.mxu0 %v369
      %416 = vmatprep.subr.bf16.mxu0 0
      %417 = vmatpush1.bf16.msra.mxu0 %v370
      %418 = vmatprep.subr.bf16.mxu0 0
      %419 = vmatpush1.bf16.msra.mxu0 0
      %420 = vmatprep.subr.bf16.mxu0 0
      %421 = vmatpush1.bf16.msra.mxu0 0
      %422 = vmatprep.subr.bf16.mxu0 0
      %423 = vmatpush1.bf16.msra.mxu0 0
      %424 = vmatprep.subr.bf16.mxu0 0
      %425 = vmatpush1.bf16.msra.mxu0 0
      %426 = vmatprep.subr.bf16.mxu0 0
      %427 = vmatpush1.bf16.msra.mxu0 0
      %428 = vmatprep.subr.bf16.mxu0 0
      %429 = vmatpush1.bf16.msra.mxu0 0
      %430 = vmatprep.subr.bf16.mxu0 0
      %431 = vmatpush1.bf16.msra.mxu0 0
      %432 = vmatprep.subr.bf16.mxu0 0
      %433 = vmatpush1.bf16.msra.mxu0 0
      %434 = vmatprep.mubr.bf16.mxu0 0
      %435 = vmatmul.mubr.bf16.gmra.mrb[0].mxu0 %v394
      %v436 = vpop.f32.mrb[0].mxu0
      %v437 = vadd.f32 %v376, %v436
      %v438 = vpop.f32.mrb[0].mxu0
      %v439 = vpop.f32.mrb[0].mxu0
      %v440 = vadd.f32 %v376, %v439
      %v441 = vpop.f32.mrb[0].mxu0
      %442 = vmatprep.mubr.bf16.mxu0 0
      %443 = vmatmul.mubr.bf16.gmra.mrb[0].mxu0 %v395
      %v444 = vpop.f32.mrb[0].mxu0
      %v445 = vadd.f32 %v376, %v444
      %v446 = vpop.f32.mrb[0].mxu0
      %v447 = vpop.f32.mrb[0].mxu0
      %v448 = vadd.f32 %v376, %v447
      %v449 = vpop.f32.mrb[0].mxu0
      %450 = vmatprep.mubr.bf16.mxu0 0
      %451 = vmatmul.mubr.bf16.gmra.mrb[0].mxu0 %v396
      %v452 = vpop.f32.mrb[0].mxu0
      %v453 = vadd.f32 %v376, %v452
      %v454 = vpop.f32.mrb[0].mxu0
      %v455 = vpop.f32.mrb[0].mxu0
      %v456 = vadd.f32 %v376, %v455
      %v457 = vpop.f32.mrb[0].mxu0
      %458 = vmatprep.mubr.bf16.mxu0 0
      %459 = vmatmul.mubr.bf16.gmra.mrb[0].mxu0 %v397
      %v460 = vpop.f32.mrb[0].mxu0
      %v461 = vadd.f32 %v376, %v460
      %v462 = vpop.f32.mrb[0].mxu0
      %v463 = vpop.f32.mrb[0].mxu0
      %v464 = vadd.f32 %v376, %v463
      %v465 = vpop.f32.mrb[0].mxu0
      %466 = vdwg.mxu0
      %v467 = vmax.f32 %v437, 0.0
      %v468 = vmax.f32 %v440, 0.0
      %v469 = vmax.f32 %v445, 0.0
      %v470 = vmax.f32 %v448, 0.0
      %v471 = vmax.f32 %v453, 0.0
      %v472 = vmax.f32 %v456, 0.0
      %v473 = vmax.f32 %v461, 0.0
      %v474 = vmax.f32 %v464, 0.0
      %v475 = vpack.c.bf16 %v468, %v467
      %v476 = vpack.c.bf16 %v470, %v469
      %v477 = vpack.c.bf16 %v472, %v471
      %v478 = vpack.c.bf16 %v474, %v473
      %v483 = vunpack.c.l.b16 %v475
      %v484 = vunpack.c.h.b16 %v475
      %v485 = vunpack.c.l.b16 %v476
      %v486 = vunpack.c.h.b16 %v476
      %v487 = vunpack.c.l.b16 %v477
      %v488 = vunpack.c.h.b16 %v477
      %v489 = vunpack.c.l.b16 %v478
      %v490 = vunpack.c.h.b16 %v478
      %v491 = vpack.c.b16 %v483, %v483
      %v492 = vpack.c.b16 %v484, %v484
      %v493 = vpack.c.b16 %v485, %v485
      %v494 = vpack.c.b16 %v486, %v486
      %v495 = vpack.c.b16 %v487, %v487
      %v496 = vpack.c.b16 %v488, %v488
      %v497 = vpack.c.b16 %v489, %v489
      %v498 = vpack.c.b16 %v490, %v490
      %507 = vst [vmem:[%s178] sm:$0xf] %v491
      %508 = vst [vmem:[%s178 + $0x4] sm:$0xf] %v492
      %509 = vst [vmem:[%s178 + $0x8] sm:$0xf] %v493
      %510 = vst [vmem:[%s178 + $0xc] sm:$0xf] %v494
      %511 = vst [vmem:[%s178 + $0x10] sm:$0xf] %v495
      %512 = vst [vmem:[%s178 + $0x14] sm:$0xf] %v496
      %513 = vst [vmem:[%s178 + $0x18] sm:$0xf] %v497
      %514 = vst [vmem:[%s178 + $0x1c] sm:$0xf] %v498
      %s515 = smul.u32 8, %s20
      %p516 = scmp.lt.s32.totalorder %s515, 15
      %s517 = scalar_select %p516, %s515, 15
      %s518 = smul.addr %s517, 4
      %s519 = scalar_lea.vmem %s4, %s518
      // Predicated region
      $region33: #{_lambda_.23} parent=31 // pred_check
        %p520 = pneg %p106
      $region34: #{_lambda_.23} parent=31 // pred_check_branch
        %522 = sbr.rel (%p520) target = $region36
      $region35: #{_lambda_.23} parent=31 // pred_region
        %s523 = smul.u32 8, %s20
      $region36: #{_lambda_.23} parent=31 // pred_fallthru
        _
    $region32: #{_lambda_.23} parent=5 // pred_fallthru
      _
    %p524 = scmp.le.s32.totalorder 2, %s15
    // Predicated region
    $region37: #{_lambda_.23} parent=5 // pred_check
      %p525 = pneg %p524
    $region38: #{_lambda_.23} parent=5 // pred_check_branch
      %527 = sbr.rel (%p525) target = $region40
    $region39: #{_lambda_.23} parent=5 // pred_region
      %s528 = ssub.s32 %s15, 2
      // Predicated region
      $region41: #{_lambda_.23} parent=39 // pred_check
        %p529 = pneg %p112
      $region42: #{_lambda_.23} parent=39 // pred_check_branch
        %531 = sbr.rel (%p529) target = $region44
      $region43: #{_lambda_.23} parent=39 // pred_region
        %s532 = smul.u32 8, %s21
        %p533 = scmp.lt.s32.totalorder %s532, 15
        %s534 = scalar_select %p533, %s532, 15
        %s535 = smul.addr %s534, 4
        %s536 = scalar_lea.vmem %s4, %s535
      $region44: #{_lambda_.23} parent=39 // pred_fallthru
        _
    $region40: #{_lambda_.23} parent=5 // pred_fallthru
      _
  $region6: #{_lambda_.23} parent=0 // loop_footer
    %s19 = sadd.s32 1, %s15
  $region7: #{_lambda_.23} parent=0 // loop_footer_branch
    %14 = sbr.rel target = $region3
  $region8: #{_lambda_.23} parent=0 // loop_exit
    _

// kernel: _lambda_.22
$region0: #{_lambda_.22}
  #allocation0 [shape = 'u32[]', space=smem, size = 0x4, offset = 0x4, fixed_abs, tag = 'smem constant byte address 0x4 - core index']
  #allocation1 [shape = 'u32[144,128]{1,0:T(1,128)}', space=vmem, size = 0x12000, scoped, tag = 'internal scratch']
  #allocation2 [shape = 'u32[2048]{0}', space=vmem, size = 0x2000, scoped, tag = 'scoped memory for _lambda_.22']
  #allocation3 [shape = 'u32[2048]{0}', space=vmem, size = 0x2000, scoped, tag = 'scoped memory for _lambda_.22']
  #allocation4 [shape = 'u32[2048]{0}', space=vmem, size = 0x2000, scoped, tag = 'scoped memory for _lambda_.22']
  #allocation5 [shape = 'u32[2048]{0}', space=vmem, size = 0x2000, scoped, tag = 'scoped memory for _lambda_.22']
  #allocation6 [shape = 'u32[2048]{0}', space=vmem, size = 0x2000, scoped, tag = 'scoped memory for _lambda_.22']
  %s0 = inlined_call_operand.vmem [shape: bf16[128,128], index: 0, kind: input, shape index: {}]
  %s1 = inlined_call_operand.vmem [shape: f32[1,128], index: 1, kind: input, shape index: {}]
  %s2 = inlined_call_operand.vmem [shape: bf16[128,128], index: 2, kind: input, shape index: {}]
  %s3 = inlined_call_operand.vmem [shape: bf16[128,72], index: 3, kind: input, shape index: {}]
  %s4 = inlined_call_operand.<no memory space> [shape: bf16[], index: 4, kind: input, shape index: {}]
  %s5 = inlined_call_operand.vmem [shape: bf16[128,128], index: 5, kind: output, shape index: {}]
  %s6 = sld [smem:[#allocation0]]
  $region49: #{_lambda_.22} parent=0
    _
  %s8 = ssub.s32 1, %s6
  %s9 = scalar_select 0, %s8, %s6
  %v10 = vstv %s4
  %v11 = vunpack.i.l.bf16 %v10
  %v13 = vunpack.i.h.bf16 %v10
  loop: start=0, step=1, limit=4
  $region2: #{_lambda_.22} parent=0 // loop_pre_header
    _
  $region3: #{_lambda_.22} parent=0 // loop_header
    %s16 = sphi 0, %s20
    %p17 = scmp.ge.s32.totalorder %s16, 4
    %s26 = sphi 0, %s28
    %s29 = sphi 0, %s26
    %s30 = sphi 0, %s29
    %s46 = sphi 0, %s30
    %s50 = sphi 0, %s50
    %s52 = sphi 0, %s50
    %s53 = sphi 0, %s52
    %s67 = sphi 0, %s53
    %s71 = sphi 0, %s71
    %s73 = sphi 0, %s71
    %s74 = sphi 0, %s73
    %s88 = sphi 0, %s74
    %s94 = sphi 0, %s96
    %s97 = sphi 0, %s94
    %s98 = sphi 0, %s97
    %s114 = sphi 0, %s98
    %s120 = sphi 0, %s122
    %s123 = sphi 0, %s120
    %s124 = sphi 0, %s123
    %s140 = sphi 0, %s124
  $region4: #{_lambda_.22} parent=0 // loop_header_branch
    %19 = sbr.rel (%p17) target = $region8
  $region5: #{_lambda_.22} parent=0 // loop_body
    %s21 = ssub.s32 %s16, 1
    %s22 = ssub.s32 %s16, 2
    %s23 = sadd.s32 %s16, 1
    %s24 = ssub.s32 %s16, %s23
    %p25 = scmp.eq.s32.totalorder %s24, 0
    %s27 = sadd.s32 %s26, 1
    %s28 = scalar_select %p25, %s26, %s27
    %p31 = pneg %p25
    %p32 = scmp.eq.s32.totalorder %s16, 1
    %p33 = por %p31, %p32
    %p34 = scmp.ne.s32.totalorder %s26, %s29
    %p35 = scmp.eq.s32.totalorder %s16, 0
    %p36 = por %p34, %p35
    %p37 = scmp.ne.s32.totalorder %s26, %s29
    %p38 = scmp.eq.s32.totalorder %s21, 1
    %p39 = por %p37, %p38
    %p40 = scmp.ne.s32.totalorder %s29, %s30
    %p41 = scmp.eq.s32.totalorder %s21, 0
    %p42 = por %p40, %p41
    %p43 = scmp.ne.s32.totalorder %s29, %s30
    %p44 = scmp.eq.s32.totalorder %s22, 1
    %p45 = por %p43, %p44
    %p47 = scmp.ne.s32.totalorder %s30, %s46
    %p48 = scmp.eq.s32.totalorder %s22, 0
    %p49 = por %p47, %p48
    %s51 = sadd.s32 %s50, 1
    %p54 = scmp.eq.s32.totalorder %s16, 1
    %p55 = scmp.ne.s32.totalorder %s50, %s52
    %p56 = scmp.eq.s32.totalorder %s16, 0
    %p57 = por %p55, %p56
    %p58 = scmp.ne.s32.totalorder %s50, %s52
    %p59 = scmp.eq.s32.totalorder %s21, 1
    %p60 = por %p58, %p59
    %p61 = scmp.ne.s32.totalorder %s52, %s53
    %p62 = scmp.eq.s32.totalorder %s21, 0
    %p63 = por %p61, %p62
    %p64 = scmp.ne.s32.totalorder %s52, %s53
    %p65 = scmp.eq.s32.totalorder %s22, 1
    %p66 = por %p64, %p65
    %p68 = scmp.ne.s32.totalorder %s53, %s67
    %p69 = scmp.eq.s32.totalorder %s22, 0
    %p70 = por %p68, %p69
    %s72 = sadd.s32 %s71, 1
    %p75 = scmp.eq.s32.totalorder %s16, 1
    %p76 = scmp.ne.s32.totalorder %s71, %s73
    %p77 = scmp.eq.s32.totalorder %s16, 0
    %p78 = por %p76, %p77
    %p79 = scmp.ne.s32.totalorder %s71, %s73
    %p80 = scmp.eq.s32.totalorder %s21, 1
    %p81 = por %p79, %p80
    %p82 = scmp.ne.s32.totalorder %s73, %s74
    %p83 = scmp.eq.s32.totalorder %s21, 0
    %p84 = por %p82, %p83
    %p85 = scmp.ne.s32.totalorder %s73, %s74
    %p86 = scmp.eq.s32.totalorder %s22, 1
    %p87 = por %p85, %p86
    %p89 = scmp.ne.s32.totalorder %s74, %s88
    %p90 = scmp.eq.s32.totalorder %s22, 0
    %p91 = por %p89, %p90
    %s92 = ssub.s32 %s16, %s23
    %p93 = scmp.eq.s32.totalorder %s92, 0
    %s95 = sadd.s32 %s94, 1
    %s96 = scalar_select %p93, %s94, %s95
    %p99 = pneg %p93
    %p100 = scmp.eq.s32.totalorder %s16, 1
    %p101 = por %p99, %p100
    %p102 = scmp.ne.s32.totalorder %s94, %s97
    %p103 = scmp.eq.s32.totalorder %s16, 0
    %p104 = por %p102, %p103
    %p105 = scmp.ne.s32.totalorder %s94, %s97
    %p106 = scmp.eq.s32.totalorder %s21, 1
    %p107 = por %p105, %p106
    %p108 = scmp.ne.s32.totalorder %s97, %s98
    %p109 = scmp.eq.s32.totalorder %s21, 0
    %p110 = por %p108, %p109
    %p111 = scmp.ne.s32.totalorder %s97, %s98
    %p112 = scmp.eq.s32.totalorder %s22, 1
    %p113 = por %p111, %p112
    %p115 = scmp.ne.s32.totalorder %s98, %s114
    %p116 = scmp.eq.s32.totalorder %s22, 0
    %p117 = por %p115, %p116
    %s118 = ssub.s32 %s16, %s23
    %p119 = scmp.eq.s32.totalorder %s118, 0
    %s121 = sadd.s32 %s120, 1
    %s122 = scalar_select %p119, %s120, %s121
    %p125 = pneg %p119
    %p126 = scmp.eq.s32.totalorder %s16, 1
    %p127 = por %p125, %p126
    %p128 = scmp.ne.s32.totalorder %s120, %s123
    %p129 = scmp.eq.s32.totalorder %s16, 0
    %p130 = por %p128, %p129
    %p131 = scmp.ne.s32.totalorder %s120, %s123
    %p132 = scmp.eq.s32.totalorder %s21, 1
    %p133 = por %p131, %p132
    %p134 = scmp.ne.s32.totalorder %s123, %s124
    %p135 = scmp.eq.s32.totalorder %s21, 0
    %p136 = por %p134, %p135
    %p137 = scmp.ne.s32.totalorder %s123, %s124
    %p138 = scmp.eq.s32.totalorder %s22, 1
    %p139 = por %p137, %p138
    %p141 = scmp.ne.s32.totalorder %s124, %s140
    %p142 = scmp.eq.s32.totalorder %s22, 0
    %p143 = por %p141, %p142
    %p144 = scmp.le.s32.totalorder 1, %s16
    %p145 = scmp.lt.s32.totalorder %s16, 3
    %p146 = pnand %p144, %p145
    %p147 = pneg %p146
    // Predicated region
    $region9: #{_lambda_.22} parent=5 // pred_check
      _
    $region10: #{_lambda_.22} parent=5 // pred_check_branch
      %149 = sbr.rel (%p146) target = $region12
    $region11: #{_lambda_.22} parent=5 // pred_region
      %s150 = ssub.s32 %s16, 1
      // Predicated region
      $region13: #{_lambda_.22} parent=11 // pred_check
        %p151 = pneg %p63
      $region14: #{_lambda_.22} parent=11 // pred_check_branch
        %153 = sbr.rel (%p151) target = $region16
      $region15: #{_lambda_.22} parent=11 // pred_region
        _
      $region16: #{_lambda_.22} parent=11 // pred_fallthru
        _
      // Predicated region
      $region17: #{_lambda_.22} parent=11 // pred_check
        %p154 = pneg %p84
      $region18: #{_lambda_.22} parent=11 // pred_check_branch
        %156 = sbr.rel (%p154) target = $region20
      $region19: #{_lambda_.22} parent=11 // pred_region
        _
      $region20: #{_lambda_.22} parent=11 // pred_fallthru
        _
    $region12: #{_lambda_.22} parent=5 // pred_fallthru
      _
    %p157 = scmp.lt.s32.totalorder %s16, 2
    // Predicated region
    $region21: #{_lambda_.22} parent=5 // pred_check
      %p158 = pneg %p157
    $region22: #{_lambda_.22} parent=5 // pred_check_branch
      %160 = sbr.rel (%p158) target = $region24
    $region23: #{_lambda_.22} parent=5 // pred_region
      // Predicated region
      $region25: #{_lambda_.22} parent=23 // pred_check
        %p161 = pneg %p36
      $region26: #{_lambda_.22} parent=23 // pred_check_branch
        %163 = sbr.rel (%p161) target = $region28
      $region27: #{_lambda_.22} parent=23 // pred_region
        %s164 = smul.u32 8, %s16
        %p165 = scmp.lt.s32.totalorder %s164, 15
        %s166 = scalar_select %p165, %s164, 15
        %s167 = smul.addr %s166, 4
        %s168 = scalar_lea.vmem %s3, %s167
        %s169 = smul.u32 8, %s16
      $region28: #{_lambda_.22} parent=23 // pred_fallthru
        _
      // Predicated region
      $region29: #{_lambda_.22} parent=23 // pred_check
        %p170 = pneg %p104
      $region30: #{_lambda_.22} parent=23 // pred_check_branch
        %172 = sbr.rel (%p170) target = $region32
      $region31: #{_lambda_.22} parent=23 // pred_region
        %s173 = smul.u32 8, %s16
        %p174 = scmp.lt.s32.totalorder %s173, 15
        %s175 = scalar_select %p174, %s173, 15
        %s176 = smul.addr %s175, 4
        %s177 = scalar_lea.vmem %s2, %s176
        %s178 = smul.u32 8, %s16
      $region32: #{_lambda_.22} parent=23 // pred_fallthru
        _
    $region24: #{_lambda_.22} parent=5 // pred_fallthru
      _
    %p179 = scmp.le.s32.totalorder 1, %s16
    %p180 = scmp.lt.s32.totalorder %s16, 3
    %p181 = pnand %p179, %p180
    %p182 = pneg %p181
    // Predicated region
    $region33: #{_lambda_.22} parent=5 // pred_check
      _
    $region34: #{_lambda_.22} parent=5 // pred_check_branch
      %184 = sbr.rel (%p181) target = $region36
    $region35: #{_lambda_.22} parent=5 // pred_region
      #allocation7 [shape = 'u8[16384]{0}', space=vmem, size = 0x4000, dematerialized = true, scoped, tag = 'FusionAdapter Buffer %fusion.5 = bf16[128,128]{1,0:T(8,128)(2,1)} fusion(%param_3.4, %param_4.1), kind=kLoop, calls=%fused_computation.53.clone, metadata={op_name="jit(<lambda>)/jit(_pad)/pad" stack_frame_id=69}']
      %s185 = ssub.s32 %s16, 1
      %s186 = smul.u32 8, %s21
      %p187 = scmp.lt.s32.totalorder %s186, 15
      %s188 = scalar_select %p187, %s186, 15
      %s189 = smul.addr %s188, 4
      %s190 = scalar_lea.vmem %s3, %s189
      %p191 = pneg %p42
      %p192 = pneg %p39
      %p193 = pneg %p63
      %p194 = pneg %p60
      %p195 = pneg %p84
      %p196 = pneg %p81
      %s197 = smul.u32 8, %s21
      %p198 = scmp.lt.s32.totalorder %s197, 15
      %s199 = scalar_select %p198, %s197, 15
      %s200 = smul.addr %s199, 4
      %s201 = scalar_lea.vmem %s2, %s200
      %p202 = pneg %p110
      %p203 = pneg %p107
      %p204 = pneg %p136
      %p205 = pneg %p133
      %s206 = smul.u32 8, %s21
      %p207 = scmp.lt.s32.totalorder %s206, 15
      %s208 = scalar_select %p207, %s206, 15
      %s209 = smul.addr %s208, 4
      %s210 = scalar_lea.vmem %s5, %s209
      %s211 = smul.u32 8, %s21
      %p212 = scmp.lt.s32.totalorder %s211, 15
      %s213 = scalar_select %p212, %s211, 15
      %s214 = smul.addr %s213, 4
      %s215 = scalar_lea.vmem %s3, %s214
      %s216 = smul.u32 8, %s21
      %s217 = smul.u32 8, %s21
      %p218 = scmp.lt.s32.totalorder %s217, 15
      %s219 = scalar_select %p218, %s217, 15
      %s220 = smul.addr %s219, 4
      %s221 = scalar_lea.vmem %s2, %s220
      %s222 = smul.u32 8, %s21
      %s223 = smul.u32 8, %s21
      %p224 = scmp.lt.s32.totalorder %s223, 15
      %s225 = scalar_select %p224, %s223, 15
      %s226 = smul.addr %s225, 4
      %s227 = scalar_lea.vmem %s5, %s226
      %s228 = smul.u32 8, %s21
      %s230 = sor.u32 255, 127
      %s231 = sand.u32 %s230, 85
      %s232 = sshrl.u32 %s231, 1
      %s233 = sor.u32 %s231, %s232
      %s234 = sand.u32 51, %s233
      %s235 = sshrl.u32 %s234, 2
      %s236 = sor.u32 %s234, %s235
      %s237 = sand.u32 15, %s236
      %v238 = vld [vmem:[%s215] sm:%s237]
      %v239 = vunpack.c.l.bf16 %v238
      %v240 = vunpack.c.h.bf16 %v238
      %v241 = vlaneseq
      %v242 = vand.u32 %v241, 127
      %vm244 = vcmp.lt.s32.totalorder %v242, 72
      %v245 = vsel %vm244, %v239, %v11
      %v246 = vpack.c.bf16 0.0, %v245
      %248 = vst [vmem:[#allocation7] sm:$0xf] %v246
      %s249 = scalar_lea.vmem %s215, 4
      %s251 = sor.u32 255, 127
      %s252 = sand.u32 %s251, 85
      %s253 = sshrl.u32 %s252, 1
      %s254 = sor.u32 %s252, %s253
      %s255 = sand.u32 51, %s254
      %s256 = sshrl.u32 %s255, 2
      %s257 = sor.u32 %s255, %s256
      %s258 = sand.u32 15, %s257
      %v259 = vld [vmem:[%s249] sm:%s258]
      %v260 = vunpack.c.l.bf16 %v259
      %v261 = vunpack.c.h.bf16 %v259
      %v262 = vlaneseq
      %v263 = vand.u32 %v262, 127
      %vm265 = vcmp.lt.s32.totalorder %v263, 72
      %v266 = vsel %vm265, %v260, %v11
      %s267 = scalar_lea.vmem [#allocation7], 4
      %v268 = vpack.c.bf16 0.0, %v266
      %270 = vst [vmem:[%s267] sm:$0xf] %v268
      %s271 = scalar_lea.vmem %s215, 8
      %s273 = sor.u32 255, 127
      %s274 = sand.u32 %s273, 85
      %s275 = sshrl.u32 %s274, 1
      %s276 = sor.u32 %s274, %s275
      %s277 = sand.u32 51, %s276
      %s278 = sshrl.u32 %s277, 2
      %s279 = sor.u32 %s277, %s278
      %s280 = sand.u32 15, %s279
      %v281 = vld [vmem:[%s271] sm:%s280]
      %v282 = vunpack.c.l.bf16 %v281
      %v283 = vunpack.c.h.bf16 %v281
      %v284 = vlaneseq
      %v285 = vand.u32 %v284, 127
      %vm287 = vcmp.lt.s32.totalorder %v285, 72
      %v288 = vsel %vm287, %v282, %v11
      %s289 = scalar_lea.vmem [#allocation7], 8
      %v290 = vpack.c.bf16 0.0, %v288
      %292 = vst [vmem:[%s289] sm:$0xf] %v290
      %s293 = scalar_lea.vmem %s215, 12
      %s295 = sor.u32 255, 127
      %s296 = sand.u32 %s295, 85
      %s297 = sshrl.u32 %s296, 1
      %s298 = sor.u32 %s296, %s297
      %s299 = sand.u32 51, %s298
      %s300 = sshrl.u32 %s299, 2
      %s301 = sor.u32 %s299, %s300
      %s302 = sand.u32 15, %s301
      %v303 = vld [vmem:[%s293] sm:%s302]
      %v304 = vunpack.c.l.bf16 %v303
      %v305 = vunpack.c.h.bf16 %v303
      %v306 = vlaneseq
      %v307 = vand.u32 %v306, 127
      %vm309 = vcmp.lt.s32.totalorder %v307, 72
      %v310 = vsel %vm309, %v304, %v11
      %s311 = scalar_lea.vmem [#allocation7], 12
      %v312 = vpack.c.bf16 0.0, %v310
      %314 = vst [vmem:[%s311] sm:$0xf] %v312
      %s315 = scalar_lea.vmem %s215, 16
      %s317 = sor.u32 255, 127
      %s318 = sand.u32 %s317, 85
      %s319 = sshrl.u32 %s318, 1
      %s320 = sor.u32 %s318, %s319
      %s321 = sand.u32 51, %s320
      %s322 = sshrl.u32 %s321, 2
      %s323 = sor.u32 %s321, %s322
      %s324 = sand.u32 15, %s323
      %v325 = vld [vmem:[%s315] sm:%s324]
      %v326 = vunpack.c.l.bf16 %v325
      %v327 = vunpack.c.h.bf16 %v325
      %v328 = vlaneseq
      %v329 = vand.u32 %v328, 127
      %vm331 = vcmp.lt.s32.totalorder %v329, 72
      %v332 = vsel %vm331, %v326, %v11
      %s333 = scalar_lea.vmem [#allocation7], 16
      %v334 = vpack.c.bf16 0.0, %v332
      %336 = vst [vmem:[%s333] sm:$0xf] %v334
      %s337 = scalar_lea.vmem %s215, 20
      %s339 = sor.u32 255, 127
      %s340 = sand.u32 %s339, 85
      %s341 = sshrl.u32 %s340, 1
      %s342 = sor.u32 %s340, %s341
      %s343 = sand.u32 51, %s342
      %s344 = sshrl.u32 %s343, 2
      %s345 = sor.u32 %s343, %s344
      %s346 = sand.u32 15, %s345
      %v347 = vld [vmem:[%s337] sm:%s346]
      %v348 = vunpack.c.l.bf16 %v347
      %v349 = vunpack.c.h.bf16 %v347
      %v350 = vlaneseq
      %v351 = vand.u32 %v350, 127
      %vm353 = vcmp.lt.s32.totalorder %v351, 72
      %v354 = vsel %vm353, %v348, %v11
      %s355 = scalar_lea.vmem [#allocation7], 20
      %v356 = vpack.c.bf16 0.0, %v354
      %358 = vst [vmem:[%s355] sm:$0xf] %v356
      %s359 = scalar_lea.vmem %s215, 24
      %s361 = sor.u32 255, 127
      %s362 = sand.u32 %s361, 85
      %s363 = sshrl.u32 %s362, 1
      %s364 = sor.u32 %s362, %s363
      %s365 = sand.u32 51, %s364
      %s366 = sshrl.u32 %s365, 2
      %s367 = sor.u32 %s365, %s366
      %s368 = sand.u32 15, %s367
      %v369 = vld [vmem:[%s359] sm:%s368]
      %v370 = vunpack.c.l.bf16 %v369
      %v371 = vunpack.c.h.bf16 %v369
      %v372 = vlaneseq
      %v373 = vand.u32 %v372, 127
      %vm375 = vcmp.lt.s32.totalorder %v373, 72
      %v376 = vsel %vm375, %v370, %v11
      %s377 = scalar_lea.vmem [#allocation7], 24
      %v378 = vpack.c.bf16 0.0, %v376
      %380 = vst [vmem:[%s377] sm:$0xf] %v378
      %s381 = scalar_lea.vmem %s215, 28
      %s383 = sor.u32 255, 127
      %s384 = sand.u32 %s383, 85
      %s385 = sshrl.u32 %s384, 1
      %s386 = sor.u32 %s384, %s385
      %s387 = sand.u32 51, %s386
      %s388 = sshrl.u32 %s387, 2
      %s389 = sor.u32 %s387, %s388
      %s390 = sand.u32 15, %s389
      %v391 = vld [vmem:[%s381] sm:%s390]
      %v392 = vunpack.c.l.bf16 %v391
      %v393 = vunpack.c.h.bf16 %v391
      %v394 = vlaneseq
      %v395 = vand.u32 %v394, 127
      %vm397 = vcmp.lt.s32.totalorder %v395, 72
      %v398 = vsel %vm397, %v392, %v11
      %s399 = scalar_lea.vmem [#allocation7], 28
      %v400 = vpack.c.bf16 0.0, %v398
      %402 = vst [vmem:[%s399] sm:$0xf] %v400
      %v404 = vld [vmem:[#allocation7] sm:$0xf]
      %v405 = vld [vmem:[#allocation7 + $0x4] sm:$0xf]
      %v406 = vld [vmem:[#allocation7 + $0x8] sm:$0xf]
      %v407 = vld [vmem:[#allocation7 + $0xc] sm:$0xf]
      %v408 = vld [vmem:[#allocation7 + $0x10] sm:$0xf]
      %v409 = vld [vmem:[#allocation7 + $0x14] sm:$0xf]
      %v410 = vld [vmem:[#allocation7 + $0x18] sm:$0xf]
      %v411 = vld [vmem:[#allocation7 + $0x1c] sm:$0xf]
      %v412 = vld [vmem:[%s0] sm:$0xff]
      %v413 = vld [vmem:[%s0 + $0x8] sm:$0xff]
      %v414 = vld [vmem:[%s0 + $0x10] sm:$0xff]
      %v415 = vld [vmem:[%s0 + $0x18] sm:$0xff]
      %v416 = vld [vmem:[%s0 + $0x20] sm:$0xff]
      %v417 = vld [vmem:[%s0 + $0x28] sm:$0xff]
      %v418 = vld [vmem:[%s0 + $0x30] sm:$0xff]
      %v419 = vld [vmem:[%s0 + $0x38] sm:$0xff]
      %v420 = vld [vmem:[%s1] sm:$0x1]
      %v422 = vlaneseq
      %v423 = vshrl.u32 %v422, 7
      %v424 = vsub.s32 0, %v423
      %v425 = vrot.slane %v420, %v424
      %v435 = vunpack.c.l.b16 %v404
      %v436 = vunpack.c.l.b16 %v405
      %v437 = vunpack.c.l.b16 %v406
      %v438 = vunpack.c.l.b16 %v407
      %v439 = vunpack.c.l.b16 %v408
      %v440 = vunpack.c.l.b16 %v409
      %v441 = vunpack.c.l.b16 %v410
      %v442 = vunpack.c.l.b16 %v411
      %v443 = vpack.c.b16 %v436, %v435
      %v444 = vpack.c.b16 %v438, %v437
      %v445 = vpack.c.b16 %v440, %v439
      %v446 = vpack.c.b16 %v442, %v441
      %451 = vmatprep.subr.bf16.mxu0 0
      %452 = vmatpush1.bf16.msra.mxu0 %v412
      %453 = vmatprep.subr.bf16.mxu0 0
      %454 = vmatpush1.bf16.msra.mxu0 %v413
      %455 = vmatprep.subr.bf16.mxu0 0
      %456 = vmatpush1.bf16.msra.mxu0 %v414
      %457 = vmatprep.subr.bf16.mxu0 0
      %458 = vmatpush1.bf16.msra.mxu0 %v415
      %459 = vmatprep.subr.bf16.mxu0 0
      %460 = vmatpush1.bf16.msra.mxu0 %v416
      %461 = vmatprep.subr.bf16.mxu0 0
      %462 = vmatpush1.bf16.msra.mxu0 %v417
      %463 = vmatprep.subr.bf16.mxu0 0
      %464 = vmatpush1.bf16.msra.mxu0 %v418
      %465 = vmatprep.subr.bf16.mxu0 0
      %466 = vmatpush1.bf16.msra.mxu0 %v419
      %467 = vmatprep.subr.bf16.mxu0 0
      %468 = vmatpush1.bf16.msra.mxu0 0
      %469 = vmatprep.subr.bf16.mxu0 0
      %470 = vmatpush1.bf16.msra.mxu0 0
      %471 = vmatprep.subr.bf16.mxu0 0
      %472 = vmatpush1.bf16.msra.mxu0 0
      %473 = vmatprep.subr.bf16.mxu0 0
      %474 = vmatpush1.bf16.msra.mxu0 0
      %475 = vmatprep.subr.bf16.mxu0 0
      %476 = vmatpush1.bf16.msra.mxu0 0
      %477 = vmatprep.subr.bf16.mxu0 0
      %478 = vmatpush1.bf16.msra.mxu0 0
      %479 = vmatprep.subr.bf16.mxu0 0
      %480 = vmatpush1.bf16.msra.mxu0 0
      %481 = vmatprep.subr.bf16.mxu0 0
      %482 = vmatpush1.bf16.msra.mxu0 0
      %483 = vmatprep.mubr.bf16.mxu0 0
      %484 = vmatmul.mubr.bf16.gmra.mrb[0].mxu0 %v443
      %v485 = vpop.f32.mrb[0].mxu0
      %v486 = vadd.f32 %v425, %v485
      %v487 = vpop.f32.mrb[0].mxu0
      %v488 = vpop.f32.mrb[0].mxu0
      %v489 = vadd.f32 %v425, %v488
      %v490 = vpop.f32.mrb[0].mxu0
      %491 = vmatprep.mubr.bf16.mxu0 0
      %492 = vmatmul.mubr.bf16.gmra.mrb[0].mxu0 %v444
      %v493 = vpop.f32.mrb[0].mxu0
      %v494 = vadd.f32 %v425, %v493
      %v495 = vpop.f32.mrb[0].mxu0
      %v496 = vpop.f32.mrb[0].mxu0
      %v497 = vadd.f32 %v425, %v496
      %v498 = vpop.f32.mrb[0].mxu0
      %499 = vmatprep.mubr.bf16.mxu0 0
      %500 = vmatmul.mubr.bf16.gmra.mrb[0].mxu0 %v445
      %v501 = vpop.f32.mrb[0].mxu0
      %v502 = vadd.f32 %v425, %v501
      %v503 = vpop.f32.mrb[0].mxu0
      %v504 = vpop.f32.mrb[0].mxu0
      %v505 = vadd.f32 %v425, %v504
      %v506 = vpop.f32.mrb[0].mxu0
      %507 = vmatprep.mubr.bf16.mxu0 0
      %508 = vmatmul.mubr.bf16.gmra.mrb[0].mxu0 %v446
      %v509 = vpop.f32.mrb[0].mxu0
      %v510 = vadd.f32 %v425, %v509
      %v511 = vpop.f32.mrb[0].mxu0
      %v512 = vpop.f32.mrb[0].mxu0
      %v513 = vadd.f32 %v425, %v512
      %v514 = vpop.f32.mrb[0].mxu0
      %515 = vdwg.mxu0
      %v516 = vld [vmem:[%s221] sm:$0xf]
      %v517 = vld [vmem:[%s221 + $0x4] sm:$0xf]
      %v518 = vld [vmem:[%s221 + $0x8] sm:$0xf]
      %v519 = vld [vmem:[%s221 + $0xc] sm:$0xf]
      %v520 = vld [vmem:[%s221 + $0x10] sm:$0xf]
      %v521 = vld [vmem:[%s221 + $0x14] sm:$0xf]
      %v522 = vld [vmem:[%s221 + $0x18] sm:$0xf]
      %v523 = vld [vmem:[%s221 + $0x1c] sm:$0xf]
      %v524 = vunpack.c.l.bf16 %v516
      %v525 = vunpack.c.l.bf16 %v517
      %v526 = vunpack.c.l.bf16 %v518
      %v527 = vunpack.c.l.bf16 %v519
      %v528 = vunpack.c.l.bf16 %v520
      %v529 = vunpack.c.l.bf16 %v521
      %v530 = vunpack.c.l.bf16 %v522
      %v531 = vunpack.c.l.bf16 %v523
      %v532 = vadd.f32 %v486, %v524
      %v533 = vadd.f32 %v489, %v525
      %v534 = vadd.f32 %v494, %v526
      %v535 = vadd.f32 %v497, %v527
      %v536 = vadd.f32 %v502, %v528
      %v537 = vadd.f32 %v505, %v529
      %v538 = vadd.f32 %v510, %v530
      %v539 = vadd.f32 %v513, %v531
      %v540 = vmax.f32 %v532, 0.0
      %v541 = vmax.f32 %v533, 0.0
      %v542 = vmax.f32 %v534, 0.0
      %v543 = vmax.f32 %v535, 0.0
      %v544 = vmax.f32 %v536, 0.0
      %v545 = vmax.f32 %v537, 0.0
      %v546 = vmax.f32 %v538, 0.0
      %v547 = vmax.f32 %v539, 0.0
      %v548 = vpack.c.bf16 %v541, %v540
      %v549 = vpack.c.bf16 %v543, %v542
      %v550 = vpack.c.bf16 %v545, %v544
      %v551 = vpack.c.bf16 %v547, %v546
      %v556 = vunpack.c.l.b16 %v548
      %v557 = vunpack.c.h.b16 %v548
      %v558 = vunpack.c.l.b16 %v549
      %v559 = vunpack.c.h.b16 %v549
      %v560 = vunpack.c.l.b16 %v550
      %v561 = vunpack.c.h.b16 %v550
      %v562 = vunpack.c.l.b16 %v551
      %v563 = vunpack.c.h.b16 %v551
      %v564 = vpack.c.b16 %v556, %v556
      %v565 = vpack.c.b16 %v557, %v557
      %v566 = vpack.c.b16 %v558, %v558
      %v567 = vpack.c.b16 %v559, %v559
      %v568 = vpack.c.b16 %v560, %v560
      %v569 = vpack.c.b16 %v561, %v561
      %v570 = vpack.c.b16 %v562, %v562
      %v571 = vpack.c.b16 %v563, %v563
      %580 = vst [vmem:[%s227] sm:$0xf] %v564
      %581 = vst [vmem:[%s227 + $0x4] sm:$0xf] %v565
      %582 = vst [vmem:[%s227 + $0x8] sm:$0xf] %v566
      %583 = vst [vmem:[%s227 + $0xc] sm:$0xf] %v567
      %584 = vst [vmem:[%s227 + $0x10] sm:$0xf] %v568
      %585 = vst [vmem:[%s227 + $0x14] sm:$0xf] %v569
      %586 = vst [vmem:[%s227 + $0x18] sm:$0xf] %v570
      %587 = vst [vmem:[%s227 + $0x1c] sm:$0xf] %v571
      %s588 = smul.u32 8, %s21
      %p589 = scmp.lt.s32.totalorder %s588, 15
      %s590 = scalar_select %p589, %s588, 15
      %s591 = smul.addr %s590, 4
      %s592 = scalar_lea.vmem %s5, %s591
      // Predicated region
      $region37: #{_lambda_.22} parent=35 // pred_check
        %p593 = pneg %p133
      $region38: #{_lambda_.22} parent=35 // pred_check_branch
        %595 = sbr.rel (%p593) target = $region40
      $region39: #{_lambda_.22} parent=35 // pred_region
        %s596 = smul.u32 8, %s21
      $region40: #{_lambda_.22} parent=35 // pred_fallthru
        _
    $region36: #{_lambda_.22} parent=5 // pred_fallthru
      _
    %p597 = scmp.le.s32.totalorder 2, %s16
    // Predicated region
    $region41: #{_lambda_.22} parent=5 // pred_check
      %p598 = pneg %p597
    $region42: #{_lambda_.22} parent=5 // pred_check_branch
      %600 = sbr.rel (%p598) target = $region44
    $region43: #{_lambda_.22} parent=5 // pred_region
      %s601 = ssub.s32 %s16, 2
      // Predicated region
      $region45: #{_lambda_.22} parent=43 // pred_check
        %p602 = pneg %p139
      $region46: #{_lambda_.22} parent=43 // pred_check_branch
        %604 = sbr.rel (%p602) target = $region48
      $region47: #{_lambda_.22} parent=43 // pred_region
        %s605 = smul.u32 8, %s22
        %p606 = scmp.lt.s32.totalorder %s605, 15
        %s607 = scalar_select %p606, %s605, 15
        %s608 = smul.addr %s607, 4
        %s609 = scalar_lea.vmem %s5, %s608
      $region48: #{_lambda_.22} parent=43 // pred_fallthru
        _
    $region44: #{_lambda_.22} parent=5 // pred_fallthru
      _
  $region6: #{_lambda_.22} parent=0 // loop_footer
    %s20 = sadd.s32 1, %s16
  $region7: #{_lambda_.22} parent=0 // loop_footer_branch
    %15 = sbr.rel target = $region3
  $region8: #{_lambda_.22} parent=0 // loop_exit
    _

// kernel: _lambda_.28
$region0: #{_lambda_.28}
  #allocation0 [shape = 'u32[]', space=smem, size = 0x4, offset = 0x4, fixed_abs, tag = 'smem constant byte address 0x4 - core index']
  #allocation1 [shape = 'u32[144,128]{1,0:T(1,128)}', space=vmem, size = 0x12000, scoped, tag = 'internal scratch']
  #allocation2 [shape = 'u32[2048]{0}', space=vmem, size = 0x2000, scoped, tag = 'scoped memory for _lambda_.28']
  #allocation3 [shape = 'u32[2048]{0}', space=vmem, size = 0x2000, scoped, tag = 'scoped memory for _lambda_.28']
  #allocation4 [shape = 'u32[2048]{0}', space=vmem, size = 0x2000, scoped, tag = 'scoped memory for _lambda_.28']
  #allocation5 [shape = 'u32[2048]{0}', space=vmem, size = 0x2000, scoped, tag = 'scoped memory for _lambda_.28']
  #allocation6 [shape = 'u32[2048]{0}', space=vmem, size = 0x2000, scoped, tag = 'scoped memory for _lambda_.28']
  %s0 = inlined_call_operand.vmem [shape: bf16[128,256], index: 0, kind: input, shape index: {}]
  %s1 = inlined_call_operand.vmem [shape: f32[1,256], index: 1, kind: input, shape index: {}]
  %s2 = inlined_call_operand.vmem [shape: bf16[32,72], index: 2, kind: input, shape index: {}]
  %s3 = inlined_call_operand.<no memory space> [shape: bf16[], index: 3, kind: input, shape index: {}]
  %s4 = inlined_call_operand.vmem [shape: bf16[32,256], index: 4, kind: output, shape index: {}]
  %s5 = sld [smem:[#allocation0]]
  $region45: #{_lambda_.28} parent=0
    _
  %s7 = ssub.s32 1, %s5
  %s8 = scalar_select 0, %s7, %s5
  %v9 = vstv %s3
  %v10 = vunpack.i.l.bf16 %v9
  %v12 = vunpack.i.h.bf16 %v9
  loop: start=0, step=1, limit=4
  $region2: #{_lambda_.28} parent=0 // loop_pre_header
    _
  $region3: #{_lambda_.28} parent=0 // loop_header
    %s15 = sphi 0, %s19
    %p16 = scmp.ge.s32.totalorder %s15, 4
    %s25 = sphi 0, %s27
    %s28 = sphi 0, %s25
    %s29 = sphi 0, %s28
    %s45 = sphi 0, %s29
    %s49 = sphi 0, %s49
    %s51 = sphi 0, %s49
    %s52 = sphi 0, %s51
    %s66 = sphi 0, %s52
    %s70 = sphi 0, %s70
    %s72 = sphi 0, %s70
    %s73 = sphi 0, %s72
    %s87 = sphi 0, %s73
    %s93 = sphi 0, %s95
    %s96 = sphi 0, %s93
    %s97 = sphi 0, %s96
    %s113 = sphi 0, %s97
  $region4: #{_lambda_.28} parent=0 // loop_header_branch
    %18 = sbr.rel (%p16) target = $region8
  $region5: #{_lambda_.28} parent=0 // loop_body
    %s20 = ssub.s32 %s15, 1
    %s21 = ssub.s32 %s15, 2
    %s22 = sadd.s32 %s15, 1
    %s23 = ssub.s32 %s15, %s22
    %p24 = scmp.eq.s32.totalorder %s23, 0
    %s26 = sadd.s32 %s25, 1
    %s27 = scalar_select %p24, %s25, %s26
    %p30 = pneg %p24
    %p31 = scmp.eq.s32.totalorder %s15, 1
    %p32 = por %p30, %p31
    %p33 = scmp.ne.s32.totalorder %s25, %s28
    %p34 = scmp.eq.s32.totalorder %s15, 0
    %p35 = por %p33, %p34
    %p36 = scmp.ne.s32.totalorder %s25, %s28
    %p37 = scmp.eq.s32.totalorder %s20, 1
    %p38 = por %p36, %p37
    %p39 = scmp.ne.s32.totalorder %s28, %s29
    %p40 = scmp.eq.s32.totalorder %s20, 0
    %p41 = por %p39, %p40
    %p42 = scmp.ne.s32.totalorder %s28, %s29
    %p43 = scmp.eq.s32.totalorder %s21, 1
    %p44 = por %p42, %p43
    %p46 = scmp.ne.s32.totalorder %s29, %s45
    %p47 = scmp.eq.s32.totalorder %s21, 0
    %p48 = por %p46, %p47
    %s50 = sadd.s32 %s49, 1
    %p53 = scmp.eq.s32.totalorder %s15, 1
    %p54 = scmp.ne.s32.totalorder %s49, %s51
    %p55 = scmp.eq.s32.totalorder %s15, 0
    %p56 = por %p54, %p55
    %p57 = scmp.ne.s32.totalorder %s49, %s51
    %p58 = scmp.eq.s32.totalorder %s20, 1
    %p59 = por %p57, %p58
    %p60 = scmp.ne.s32.totalorder %s51, %s52
    %p61 = scmp.eq.s32.totalorder %s20, 0
    %p62 = por %p60, %p61
    %p63 = scmp.ne.s32.totalorder %s51, %s52
    %p64 = scmp.eq.s32.totalorder %s21, 1
    %p65 = por %p63, %p64
    %p67 = scmp.ne.s32.totalorder %s52, %s66
    %p68 = scmp.eq.s32.totalorder %s21, 0
    %p69 = por %p67, %p68
    %s71 = sadd.s32 %s70, 1
    %p74 = scmp.eq.s32.totalorder %s15, 1
    %p75 = scmp.ne.s32.totalorder %s70, %s72
    %p76 = scmp.eq.s32.totalorder %s15, 0
    %p77 = por %p75, %p76
    %p78 = scmp.ne.s32.totalorder %s70, %s72
    %p79 = scmp.eq.s32.totalorder %s20, 1
    %p80 = por %p78, %p79
    %p81 = scmp.ne.s32.totalorder %s72, %s73
    %p82 = scmp.eq.s32.totalorder %s20, 0
    %p83 = por %p81, %p82
    %p84 = scmp.ne.s32.totalorder %s72, %s73
    %p85 = scmp.eq.s32.totalorder %s21, 1
    %p86 = por %p84, %p85
    %p88 = scmp.ne.s32.totalorder %s73, %s87
    %p89 = scmp.eq.s32.totalorder %s21, 0
    %p90 = por %p88, %p89
    %s91 = ssub.s32 %s15, %s22
    %p92 = scmp.eq.s32.totalorder %s91, 0
    %s94 = sadd.s32 %s93, 1
    %s95 = scalar_select %p92, %s93, %s94
    %p98 = pneg %p92
    %p99 = scmp.eq.s32.totalorder %s15, 1
    %p100 = por %p98, %p99
    %p101 = scmp.ne.s32.totalorder %s93, %s96
    %p102 = scmp.eq.s32.totalorder %s15, 0
    %p103 = por %p101, %p102
    %p104 = scmp.ne.s32.totalorder %s93, %s96
    %p105 = scmp.eq.s32.totalorder %s20, 1
    %p106 = por %p104, %p105
    %p107 = scmp.ne.s32.totalorder %s96, %s97
    %p108 = scmp.eq.s32.totalorder %s20, 0
    %p109 = por %p107, %p108
    %p110 = scmp.ne.s32.totalorder %s96, %s97
    %p111 = scmp.eq.s32.totalorder %s21, 1
    %p112 = por %p110, %p111
    %p114 = scmp.ne.s32.totalorder %s97, %s113
    %p115 = scmp.eq.s32.totalorder %s21, 0
    %p116 = por %p114, %p115
    %p117 = scmp.le.s32.totalorder 1, %s15
    %p118 = scmp.lt.s32.totalorder %s15, 3
    %p119 = pnand %p117, %p118
    %p120 = pneg %p119
    // Predicated region
    $region9: #{_lambda_.28} parent=5 // pred_check
      _
    $region10: #{_lambda_.28} parent=5 // pred_check_branch
      %122 = sbr.rel (%p119) target = $region12
    $region11: #{_lambda_.28} parent=5 // pred_region
      %s123 = ssub.s32 %s15, 1
      // Predicated region
      $region13: #{_lambda_.28} parent=11 // pred_check
        %p124 = pneg %p62
      $region14: #{_lambda_.28} parent=11 // pred_check_branch
        %126 = sbr.rel (%p124) target = $region16
      $region15: #{_lambda_.28} parent=11 // pred_region
        _
      $region16: #{_lambda_.28} parent=11 // pred_fallthru
        _
      // Predicated region
      $region17: #{_lambda_.28} parent=11 // pred_check
        %p127 = pneg %p83
      $region18: #{_lambda_.28} parent=11 // pred_check_branch
        %129 = sbr.rel (%p127) target = $region20
      $region19: #{_lambda_.28} parent=11 // pred_region
        _
      $region20: #{_lambda_.28} parent=11 // pred_fallthru
        _
    $region12: #{_lambda_.28} parent=5 // pred_fallthru
      _
    %p130 = scmp.lt.s32.totalorder %s15, 2
    // Predicated region
    $region21: #{_lambda_.28} parent=5 // pred_check
      %p131 = pneg %p130
    $region22: #{_lambda_.28} parent=5 // pred_check_branch
      %133 = sbr.rel (%p131) target = $region24
    $region23: #{_lambda_.28} parent=5 // pred_region
      // Predicated region
      $region25: #{_lambda_.28} parent=23 // pred_check
        %p134 = pneg %p35
      $region26: #{_lambda_.28} parent=23 // pred_check_branch
        %136 = sbr.rel (%p134) target = $region28
      $region27: #{_lambda_.28} parent=23 // pred_region
        %s137 = smul.u32 2, %s15
        %p138 = scmp.lt.s32.totalorder %s137, 3
        %s139 = scalar_select %p138, %s137, 3
        %s140 = smul.addr %s139, 4
        %s141 = scalar_lea.vmem %s2, %s140
        %s142 = smul.u32 2, %s15
      $region28: #{_lambda_.28} parent=23 // pred_fallthru
        _
    $region24: #{_lambda_.28} parent=5 // pred_fallthru
      _
    %p143 = scmp.le.s32.totalorder 1, %s15
    %p144 = scmp.lt.s32.totalorder %s15, 3
    %p145 = pnand %p143, %p144
    %p146 = pneg %p145
    // Predicated region
    $region29: #{_lambda_.28} parent=5 // pred_check
      _
    $region30: #{_lambda_.28} parent=5 // pred_check_branch
      %148 = sbr.rel (%p145) target = $region32
    $region31: #{_lambda_.28} parent=5 // pred_region
      #allocation7 [shape = 'u8[4096]{0}', space=vmem, size = 0x1000, dematerialized = true, scoped, tag = 'FusionAdapter Buffer %fusion.17 = bf16[32,128]{1,0:T(8,128)(2,1)} fusion(%param_2.17, %param_3.12), kind=kLoop, calls=%fused_computation.66.clone, metadata={op_name="jit(<lambda>)/jit(_pad)/pad" stack_frame_id=86}']
      %s149 = ssub.s32 %s15, 1
      %s150 = smul.u32 2, %s20
      %p151 = scmp.lt.s32.totalorder %s150, 3
      %s152 = scalar_select %p151, %s150, 3
      %s153 = smul.addr %s152, 4
      %s154 = scalar_lea.vmem %s2, %s153
      %p155 = pneg %p41
      %p156 = pneg %p38
      %p157 = pneg %p62
      %p158 = pneg %p59
      %p159 = pneg %p83
      %p160 = pneg %p80
      %p161 = pneg %p109
      %p162 = pneg %p106
      %s163 = smul.u32 2, %s20
      %p164 = scmp.lt.s32.totalorder %s163, 3
      %s165 = scalar_select %p164, %s163, 3
      %s166 = smul.addr %s165, 2
      %s167 = smul.addr %s166, 4
      %s168 = scalar_lea.vmem %s4, %s167
      %s169 = smul.u32 2, %s20
      %p170 = scmp.lt.s32.totalorder %s169, 3
      %s171 = scalar_select %p170, %s169, 3
      %s172 = smul.addr %s171, 4
      %s173 = scalar_lea.vmem %s2, %s172
      %s174 = smul.u32 2, %s20
      %s175 = smul.u32 2, %s20
      %p176 = scmp.lt.s32.totalorder %s175, 3
      %s177 = scalar_select %p176, %s175, 3
      %s178 = smul.addr %s177, 2
      %s179 = smul.addr %s178, 4
      %s180 = scalar_lea.vmem %s4, %s179
      %s181 = smul.u32 2, %s20
      %s183 = sor.u32 255, 127
      %s184 = sand.u32 %s183, 85
      %s185 = sshrl.u32 %s184, 1
      %s186 = sor.u32 %s184, %s185
      %s187 = sand.u32 51, %s186
      %s188 = sshrl.u32 %s187, 2
      %s189 = sor.u32 %s187, %s188
      %s190 = sand.u32 15, %s189
      %v191 = vld [vmem:[%s173] sm:%s190]
      %v192 = vunpack.c.l.bf16 %v191
      %v193 = vunpack.c.h.bf16 %v191
      %v194 = vlaneseq
      %v195 = vand.u32 %v194, 127
      %vm197 = vcmp.lt.s32.totalorder %v195, 72
      %v198 = vsel %vm197, %v192, %v10
      %v199 = vpack.c.bf16 0.0, %v198
      %201 = vst [vmem:[#allocation7] sm:$0xf] %v199
      %s202 = scalar_lea.vmem %s173, 4
      %s204 = sor.u32 255, 127
      %s205 = sand.u32 %s204, 85
      %s206 = sshrl.u32 %s205, 1
      %s207 = sor.u32 %s205, %s206
      %s208 = sand.u32 51, %s207
      %s209 = sshrl.u32 %s208, 2
      %s210 = sor.u32 %s208, %s209
      %s211 = sand.u32 15, %s210
      %v212 = vld [vmem:[%s202] sm:%s211]
      %v213 = vunpack.c.l.bf16 %v212
      %v214 = vunpack.c.h.bf16 %v212
      %v215 = vlaneseq
      %v216 = vand.u32 %v215, 127
      %vm218 = vcmp.lt.s32.totalorder %v216, 72
      %v219 = vsel %vm218, %v213, %v10
      %s220 = scalar_lea.vmem [#allocation7], 4
      %v221 = vpack.c.bf16 0.0, %v219
      %223 = vst [vmem:[%s220] sm:$0xf] %v221
      %v225 = vld [vmem:[#allocation7] sm:$0xf]
      %v226 = vld [vmem:[#allocation7 + $0x4] sm:$0xf]
      %v227 = vld [vmem:[%s0] sm:$0xff]
      %v228 = vld [vmem:[%s0 + $0x8] sm:$0xff]
      %v229 = vld [vmem:[%s0 + $0x10] sm:$0xff]
      %v230 = vld [vmem:[%s0 + $0x18] sm:$0xff]
      %v231 = vld [vmem:[%s0 + $0x20] sm:$0xff]
      %v232 = vld [vmem:[%s0 + $0x28] sm:$0xff]
      %v233 = vld [vmem:[%s0 + $0x30] sm:$0xff]
      %v234 = vld [vmem:[%s0 + $0x38] sm:$0xff]
      %v235 = vld [vmem:[%s0 + $0x40] sm:$0xff]
      %v236 = vld [vmem:[%s0 + $0x48] sm:$0xff]
      %v237 = vld [vmem:[%s0 + $0x50] sm:$0xff]
      %v238 = vld [vmem:[%s0 + $0x58] sm:$0xff]
      %v239 = vld [vmem:[%s0 + $0x60] sm:$0xff]
      %v240 = vld [vmem:[%s0 + $0x68] sm:$0xff]
      %v241 = vld [vmem:[%s0 + $0x70] sm:$0xff]
      %v242 = vld [vmem:[%s0 + $0x78] sm:$0xff]
      %v243 = vld [vmem:[%s1] sm:$0x3]
      %v245 = vlaneseq
      %v246 = vshrl.u32 %v245, 7
      %v247 = vsub.s32 0, %v246
      %v248 = vrot.slane %v243, %v247
      %v249 = vlaneseq
      %v250 = vshrl.u32 %v249, 7
      %v251 = vsub.s32 1, %v250
      %v252 = vrot.slane %v243, %v251
      %v257 = vunpack.c.l.b16 %v225
      %v258 = vunpack.c.l.b16 %v226
      %v259 = vpack.c.b16 %v258, %v257
      %261 = vmatprep.subr.bf16.mxu0 %v228
      %262 = vmatpush1.bf16.msra.mxu0 %v227
      %263 = vmatprep.subr.bf16.mxu0 %v230
      %264 = vmatpush1.bf16.msra.mxu0 %v229
      %265 = vmatprep.subr.bf16.mxu0 %v232
      %266 = vmatpush1.bf16.msra.mxu0 %v231
      %267 = vmatprep.subr.bf16.mxu0 %v234
      %268 = vmatpush1.bf16.msra.mxu0 %v233
      %269 = vmatprep.subr.bf16.mxu0 %v236
      %270 = vmatpush1.bf16.msra.mxu0 %v235
      %271 = vmatprep.subr.bf16.mxu0 %v238
      %272 = vmatpush1.bf16.msra.mxu0 %v237
      %273 = vmatprep.subr.bf16.mxu0 %v240
      %274 = vmatpush1.bf16.msra.mxu0 %v239
      %275 = vmatprep.subr.bf16.mxu0 %v242
      %276 = vmatpush1.bf16.msra.mxu0 %v241
      %277 = vmatprep.subr.bf16.mxu0 0
      %278 = vmatpush1.bf16.msra.mxu0 0
      %279 = vmatprep.subr.bf16.mxu0 0
      %280 = vmatpush1.bf16.msra.mxu0 0
      %281 = vmatprep.subr.bf16.mxu0 0
      %282 = vmatpush1.bf16.msra.mxu0 0
      %283 = vmatprep.subr.bf16.mxu0 0
      %284 = vmatpush1.bf16.msra.mxu0 0
      %285 = vmatprep.subr.bf16.mxu0 0
      %286 = vmatpush1.bf16.msra.mxu0 0
      %287 = vmatprep.subr.bf16.mxu0 0
      %288 = vmatpush1.bf16.msra.mxu0 0
      %289 = vmatprep.subr.bf16.mxu0 0
      %290 = vmatpush1.bf16.msra.mxu0 0
      %291 = vmatprep.subr.bf16.mxu0 0
      %292 = vmatpush1.bf16.msra.mxu0 0
      %293 = vmatprep.mubr.bf16.mxu0 0
      %294 = vmatmul.mubr.bf16.gmra.mrb[0].mxu0 %v259
      %v295 = vpop.f32.mrb[0].mxu0
      %v296 = vadd.f32 %v248, %v295
      %v297 = vpop.f32.mrb[0].mxu0
      %v298 = vadd.f32 %v252, %v297
      %v299 = vpop.f32.mrb[0].mxu0
      %v300 = vadd.f32 %v248, %v299
      %v301 = vpop.f32.mrb[0].mxu0
      %v302 = vadd.f32 %v252, %v301
      %303 = vdwg.mxu0
      %v304 = vlaneseq
      %v305 = vand.u32 %v304, 127
      %v306 = vadd.s32 %v305, 128
      %vm307 = vcmp.lt.s32.totalorder %v305, 128
      %vm308 = vcmp.lt.s32.totalorder %v306, 128
      %v309 = vmax.f32 %v296, 0.0
      %v310 = vmax.f32 %v298, 0.0
      %v311 = vmax.f32 %v300, 0.0
      %v312 = vmax.f32 %v302, 0.0
      %v313 = vsel %vm307, %v309, %v296
      %v314 = vsel %vm308, %v310, %v298
      %v315 = vsel %vm307, %v311, %v300
      %v316 = vsel %vm308, %v312, %v302
      %v317 = vpack.c.bf16 %v315, %v313
      %v318 = vpack.c.bf16 %v316, %v314
      %v321 = vunpack.c.l.b16 %v317
      %v322 = vunpack.c.l.b16 %v318
      %v323 = vunpack.c.h.b16 %v317
      %v324 = vunpack.c.h.b16 %v318
      %v325 = vpack.c.b16 %v322, %v321
      %v326 = vpack.c.b16 %v324, %v323
      %329 = vst [vmem:[%s180] sm:$0xff] %v325
      %330 = vst [vmem:[%s180 + $0x8] sm:$0xff] %v326
      %s331 = smul.u32 2, %s20
      %p332 = scmp.lt.s32.totalorder %s331, 3
      %s333 = scalar_select %p332, %s331, 3
      %s334 = smul.addr %s333, 2
      %s335 = smul.addr %s334, 4
      %s336 = scalar_lea.vmem %s4, %s335
      // Predicated region
      $region33: #{_lambda_.28} parent=31 // pred_check
        %p337 = pneg %p106
      $region34: #{_lambda_.28} parent=31 // pred_check_branch
        %339 = sbr.rel (%p337) target = $region36
      $region35: #{_lambda_.28} parent=31 // pred_region
        %s340 = smul.u32 2, %s20
      $region36: #{_lambda_.28} parent=31 // pred_fallthru
        _
    $region32: #{_lambda_.28} parent=5 // pred_fallthru
      _
    %p341 = scmp.le.s32.totalorder 2, %s15
    // Predicated region
    $region37: #{_lambda_.28} parent=5 // pred_check
      %p342 = pneg %p341
    $region38: #{_lambda_.28} parent=5 // pred_check_branch
      %344 = sbr.rel (%p342) target = $region40
    $region39: #{_lambda_.28} parent=5 // pred_region
      %s345 = ssub.s32 %s15, 2
      // Predicated region
      $region41: #{_lambda_.28} parent=39 // pred_check
        %p346 = pneg %p112
      $region42: #{_lambda_.28} parent=39 // pred_check_branch
        %348 = sbr.rel (%p346) target = $region44
      $region43: #{_lambda_.28} parent=39 // pred_region
        %s349 = smul.u32 2, %s21
        %p350 = scmp.lt.s32.totalorder %s349, 3
        %s351 = scalar_select %p350, %s349, 3
        %s352 = smul.addr %s351, 2
        %s353 = smul.addr %s352, 4
        %s354 = scalar_lea.vmem %s4, %s353
      $region44: #{_lambda_.28} parent=39 // pred_fallthru
        _
    $region40: #{_lambda_.28} parent=5 // pred_fallthru
      _
  $region6: #{_lambda_.28} parent=0 // loop_footer
    %s19 = sadd.s32 1, %s15
  $region7: #{_lambda_.28} parent=0 // loop_footer_branch
    %14 = sbr.rel target = $region3
  $region8: #{_lambda_.28} parent=0 // loop_exit
    _

// kernel: _lambda_.27
$region0: #{_lambda_.27}
  #allocation0 [shape = 'u32[]', space=smem, size = 0x4, offset = 0x4, fixed_abs, tag = 'smem constant byte address 0x4 - core index']
  #allocation1 [shape = 'u32[144,128]{1,0:T(1,128)}', space=vmem, size = 0x12000, scoped, tag = 'internal scratch']
  #allocation2 [shape = 'u32[2048]{0}', space=vmem, size = 0x2000, scoped, tag = 'scoped memory for _lambda_.27']
  #allocation3 [shape = 'u32[2048]{0}', space=vmem, size = 0x2000, scoped, tag = 'scoped memory for _lambda_.27']
  #allocation4 [shape = 'u32[2048]{0}', space=vmem, size = 0x2000, scoped, tag = 'scoped memory for _lambda_.27']
  #allocation5 [shape = 'u32[2048]{0}', space=vmem, size = 0x2000, scoped, tag = 'scoped memory for _lambda_.27']
  #allocation6 [shape = 'u32[2048]{0}', space=vmem, size = 0x2000, scoped, tag = 'scoped memory for _lambda_.27']
  %s0 = inlined_call_operand.vmem [shape: bf16[256,128], index: 0, kind: input, shape index: {}]
  %s1 = inlined_call_operand.vmem [shape: f32[1,128], index: 1, kind: input, shape index: {}]
  %s2 = inlined_call_operand.vmem [shape: bf16[32,128], index: 2, kind: input, shape index: {}]
  %s3 = inlined_call_operand.vmem [shape: bf16[32,144], index: 3, kind: input, shape index: {}]
  %s4 = inlined_call_operand.<no memory space> [shape: bf16[], index: 4, kind: input, shape index: {}]
  %s5 = inlined_call_operand.vmem [shape: bf16[32,128], index: 5, kind: output, shape index: {}]
  %s6 = sld [smem:[#allocation0]]
  $region49: #{_lambda_.27} parent=0
    _
  %s8 = ssub.s32 1, %s6
  %s9 = scalar_select 0, %s8, %s6
  %v10 = vstv %s4
  %v11 = vunpack.i.l.bf16 %v10
  %v13 = vunpack.i.h.bf16 %v10
  loop: start=0, step=1, limit=4
  $region2: #{_lambda_.27} parent=0 // loop_pre_header
    _
  $region3: #{_lambda_.27} parent=0 // loop_header
    %s16 = sphi 0, %s20
    %p17 = scmp.ge.s32.totalorder %s16, 4
    %s26 = sphi 0, %s28
    %s29 = sphi 0, %s26
    %s30 = sphi 0, %s29
    %s46 = sphi 0, %s30
    %s50 = sphi 0, %s50
    %s52 = sphi 0, %s50
    %s53 = sphi 0, %s52
    %s67 = sphi 0, %s53
    %s71 = sphi 0, %s71
    %s73 = sphi 0, %s71
    %s74 = sphi 0, %s73
    %s88 = sphi 0, %s74
    %s94 = sphi 0, %s96
    %s97 = sphi 0, %s94
    %s98 = sphi 0, %s97
    %s114 = sphi 0, %s98
    %s120 = sphi 0, %s122
    %s123 = sphi 0, %s120
    %s124 = sphi 0, %s123
    %s140 = sphi 0, %s124
  $region4: #{_lambda_.27} parent=0 // loop_header_branch
    %19 = sbr.rel (%p17) target = $region8
  $region5: #{_lambda_.27} parent=0 // loop_body
    %s21 = ssub.s32 %s16, 1
    %s22 = ssub.s32 %s16, 2
    %s23 = sadd.s32 %s16, 1
    %s24 = ssub.s32 %s16, %s23
    %p25 = scmp.eq.s32.totalorder %s24, 0
    %s27 = sadd.s32 %s26, 1
    %s28 = scalar_select %p25, %s26, %s27
    %p31 = pneg %p25
    %p32 = scmp.eq.s32.totalorder %s16, 1
    %p33 = por %p31, %p32
    %p34 = scmp.ne.s32.totalorder %s26, %s29
    %p35 = scmp.eq.s32.totalorder %s16, 0
    %p36 = por %p34, %p35
    %p37 = scmp.ne.s32.totalorder %s26, %s29
    %p38 = scmp.eq.s32.totalorder %s21, 1
    %p39 = por %p37, %p38
    %p40 = scmp.ne.s32.totalorder %s29, %s30
    %p41 = scmp.eq.s32.totalorder %s21, 0
    %p42 = por %p40, %p41
    %p43 = scmp.ne.s32.totalorder %s29, %s30
    %p44 = scmp.eq.s32.totalorder %s22, 1
    %p45 = por %p43, %p44
    %p47 = scmp.ne.s32.totalorder %s30, %s46
    %p48 = scmp.eq.s32.totalorder %s22, 0
    %p49 = por %p47, %p48
    %s51 = sadd.s32 %s50, 1
    %p54 = scmp.eq.s32.totalorder %s16, 1
    %p55 = scmp.ne.s32.totalorder %s50, %s52
    %p56 = scmp.eq.s32.totalorder %s16, 0
    %p57 = por %p55, %p56
    %p58 = scmp.ne.s32.totalorder %s50, %s52
    %p59 = scmp.eq.s32.totalorder %s21, 1
    %p60 = por %p58, %p59
    %p61 = scmp.ne.s32.totalorder %s52, %s53
    %p62 = scmp.eq.s32.totalorder %s21, 0
    %p63 = por %p61, %p62
    %p64 = scmp.ne.s32.totalorder %s52, %s53
    %p65 = scmp.eq.s32.totalorder %s22, 1
    %p66 = por %p64, %p65
    %p68 = scmp.ne.s32.totalorder %s53, %s67
    %p69 = scmp.eq.s32.totalorder %s22, 0
    %p70 = por %p68, %p69
    %s72 = sadd.s32 %s71, 1
    %p75 = scmp.eq.s32.totalorder %s16, 1
    %p76 = scmp.ne.s32.totalorder %s71, %s73
    %p77 = scmp.eq.s32.totalorder %s16, 0
    %p78 = por %p76, %p77
    %p79 = scmp.ne.s32.totalorder %s71, %s73
    %p80 = scmp.eq.s32.totalorder %s21, 1
    %p81 = por %p79, %p80
    %p82 = scmp.ne.s32.totalorder %s73, %s74
    %p83 = scmp.eq.s32.totalorder %s21, 0
    %p84 = por %p82, %p83
    %p85 = scmp.ne.s32.totalorder %s73, %s74
    %p86 = scmp.eq.s32.totalorder %s22, 1
    %p87 = por %p85, %p86
    %p89 = scmp.ne.s32.totalorder %s74, %s88
    %p90 = scmp.eq.s32.totalorder %s22, 0
    %p91 = por %p89, %p90
    %s92 = ssub.s32 %s16, %s23
    %p93 = scmp.eq.s32.totalorder %s92, 0
    %s95 = sadd.s32 %s94, 1
    %s96 = scalar_select %p93, %s94, %s95
    %p99 = pneg %p93
    %p100 = scmp.eq.s32.totalorder %s16, 1
    %p101 = por %p99, %p100
    %p102 = scmp.ne.s32.totalorder %s94, %s97
    %p103 = scmp.eq.s32.totalorder %s16, 0
    %p104 = por %p102, %p103
    %p105 = scmp.ne.s32.totalorder %s94, %s97
    %p106 = scmp.eq.s32.totalorder %s21, 1
    %p107 = por %p105, %p106
    %p108 = scmp.ne.s32.totalorder %s97, %s98
    %p109 = scmp.eq.s32.totalorder %s21, 0
    %p110 = por %p108, %p109
    %p111 = scmp.ne.s32.totalorder %s97, %s98
    %p112 = scmp.eq.s32.totalorder %s22, 1
    %p113 = por %p111, %p112
    %p115 = scmp.ne.s32.totalorder %s98, %s114
    %p116 = scmp.eq.s32.totalorder %s22, 0
    %p117 = por %p115, %p116
    %s118 = ssub.s32 %s16, %s23
    %p119 = scmp.eq.s32.totalorder %s118, 0
    %s121 = sadd.s32 %s120, 1
    %s122 = scalar_select %p119, %s120, %s121
    %p125 = pneg %p119
    %p126 = scmp.eq.s32.totalorder %s16, 1
    %p127 = por %p125, %p126
    %p128 = scmp.ne.s32.totalorder %s120, %s123
    %p129 = scmp.eq.s32.totalorder %s16, 0
    %p130 = por %p128, %p129
    %p131 = scmp.ne.s32.totalorder %s120, %s123
    %p132 = scmp.eq.s32.totalorder %s21, 1
    %p133 = por %p131, %p132
    %p134 = scmp.ne.s32.totalorder %s123, %s124
    %p135 = scmp.eq.s32.totalorder %s21, 0
    %p136 = por %p134, %p135
    %p137 = scmp.ne.s32.totalorder %s123, %s124
    %p138 = scmp.eq.s32.totalorder %s22, 1
    %p139 = por %p137, %p138
    %p141 = scmp.ne.s32.totalorder %s124, %s140
    %p142 = scmp.eq.s32.totalorder %s22, 0
    %p143 = por %p141, %p142
    %p144 = scmp.le.s32.totalorder 1, %s16
    %p145 = scmp.lt.s32.totalorder %s16, 3
    %p146 = pnand %p144, %p145
    %p147 = pneg %p146
    // Predicated region
    $region9: #{_lambda_.27} parent=5 // pred_check
      _
    $region10: #{_lambda_.27} parent=5 // pred_check_branch
      %149 = sbr.rel (%p146) target = $region12
    $region11: #{_lambda_.27} parent=5 // pred_region
      %s150 = ssub.s32 %s16, 1
      // Predicated region
      $region13: #{_lambda_.27} parent=11 // pred_check
        %p151 = pneg %p63
      $region14: #{_lambda_.27} parent=11 // pred_check_branch
        %153 = sbr.rel (%p151) target = $region16
      $region15: #{_lambda_.27} parent=11 // pred_region
        _
      $region16: #{_lambda_.27} parent=11 // pred_fallthru
        _
      // Predicated region
      $region17: #{_lambda_.27} parent=11 // pred_check
        %p154 = pneg %p84
      $region18: #{_lambda_.27} parent=11 // pred_check_branch
        %156 = sbr.rel (%p154) target = $region20
      $region19: #{_lambda_.27} parent=11 // pred_region
        _
      $region20: #{_lambda_.27} parent=11 // pred_fallthru
        _
    $region12: #{_lambda_.27} parent=5 // pred_fallthru
      _
    %p157 = scmp.lt.s32.totalorder %s16, 2
    // Predicated region
    $region21: #{_lambda_.27} parent=5 // pred_check
      %p158 = pneg %p157
    $region22: #{_lambda_.27} parent=5 // pred_check_branch
      %160 = sbr.rel (%p158) target = $region24
    $region23: #{_lambda_.27} parent=5 // pred_region
      // Predicated region
      $region25: #{_lambda_.27} parent=23 // pred_check
        %p161 = pneg %p36
      $region26: #{_lambda_.27} parent=23 // pred_check_branch
        %163 = sbr.rel (%p161) target = $region28
      $region27: #{_lambda_.27} parent=23 // pred_region
        %s164 = smul.u32 2, %s16
        %p165 = scmp.lt.s32.totalorder %s164, 3
        %s166 = scalar_select %p165, %s164, 3
        %s167 = smul.addr %s166, 2
        %s168 = smul.addr %s167, 4
        %s169 = scalar_lea.vmem %s3, %s168
        %s170 = smul.u32 2, %s16
      $region28: #{_lambda_.27} parent=23 // pred_fallthru
        _
      // Predicated region
      $region29: #{_lambda_.27} parent=23 // pred_check
        %p171 = pneg %p104
      $region30: #{_lambda_.27} parent=23 // pred_check_branch
        %173 = sbr.rel (%p171) target = $region32
      $region31: #{_lambda_.27} parent=23 // pred_region
        %s174 = smul.u32 2, %s16
        %p175 = scmp.lt.s32.totalorder %s174, 3
        %s176 = scalar_select %p175, %s174, 3
        %s177 = smul.addr %s176, 4
        %s178 = scalar_lea.vmem %s2, %s177
        %s179 = smul.u32 2, %s16
      $region32: #{_lambda_.27} parent=23 // pred_fallthru
        _
    $region24: #{_lambda_.27} parent=5 // pred_fallthru
      _
    %p180 = scmp.le.s32.totalorder 1, %s16
    %p181 = scmp.lt.s32.totalorder %s16, 3
    %p182 = pnand %p180, %p181
    %p183 = pneg %p182
    // Predicated region
    $region33: #{_lambda_.27} parent=5 // pred_check
      _
    $region34: #{_lambda_.27} parent=5 // pred_check_branch
      %185 = sbr.rel (%p182) target = $region36
    $region35: #{_lambda_.27} parent=5 // pred_region
      #allocation7 [shape = 'u8[8192]{0}', space=vmem, size = 0x2000, dematerialized = true, scoped, tag = 'FusionAdapter Buffer %fusion.15 = bf16[32,256]{1,0:T(8,128)(2,1)} fusion(%param_3.11, %param_4.3), kind=kLoop, calls=%fused_computation.64.clone, metadata={op_name="jit(<lambda>)/jit(_pad)/pad" stack_frame_id=106}']
      %s186 = ssub.s32 %s16, 1
      %s187 = smul.u32 2, %s21
      %p188 = scmp.lt.s32.totalorder %s187, 3
      %s189 = scalar_select %p188, %s187, 3
      %s190 = smul.addr %s189, 2
      %s191 = smul.addr %s190, 4
      %s192 = scalar_lea.vmem %s3, %s191
      %p193 = pneg %p42
      %p194 = pneg %p39
      %p195 = pneg %p63
      %p196 = pneg %p60
      %p197 = pneg %p84
      %p198 = pneg %p81
      %s199 = smul.u32 2, %s21
      %p200 = scmp.lt.s32.totalorder %s199, 3
      %s201 = scalar_select %p200, %s199, 3
      %s202 = smul.addr %s201, 4
      %s203 = scalar_lea.vmem %s2, %s202
      %p204 = pneg %p110
      %p205 = pneg %p107
      %p206 = pneg %p136
      %p207 = pneg %p133
      %s208 = smul.u32 2, %s21
      %p209 = scmp.lt.s32.totalorder %s208, 3
      %s210 = scalar_select %p209, %s208, 3
      %s211 = smul.addr %s210, 4
      %s212 = scalar_lea.vmem %s5, %s211
      %s213 = smul.u32 2, %s21
      %p214 = scmp.lt.s32.totalorder %s213, 3
      %s215 = scalar_select %p214, %s213, 3
      %s216 = smul.addr %s215, 2
      %s217 = smul.addr %s216, 4
      %s218 = scalar_lea.vmem %s3, %s217
      %s219 = smul.u32 2, %s21
      %s220 = smul.u32 2, %s21
      %p221 = scmp.lt.s32.totalorder %s220, 3
      %s222 = scalar_select %p221, %s220, 3
      %s223 = smul.addr %s222, 4
      %s224 = scalar_lea.vmem %s2, %s223
      %s225 = smul.u32 2, %s21
      %s226 = smul.u32 2, %s21
      %p227 = scmp.lt.s32.totalorder %s226, 3
      %s228 = scalar_select %p227, %s226, 3
      %s229 = smul.addr %s228, 4
      %s230 = scalar_lea.vmem %s5, %s229
      %s231 = smul.u32 2, %s21
      %v232 = vld [vmem:[%s218] sm:$0xf]
      %v233 = vunpack.c.l.bf16 %v232
      %v234 = vunpack.c.h.bf16 %v232
      %v235 = vlaneseq
      %v236 = vand.u32 %v235, 127
      %vm238 = vcmp.lt.s32.totalorder %v236, 144
      %v239 = vsel %vm238, %v233, %v11
      %v240 = vpack.c.bf16 0.0, %v239
      %242 = vst [vmem:[#allocation7] sm:$0xf] %v240
      %s243 = scalar_lea.vmem %s218, 4
      %s245 = sor.u32 255, 127
      %s246 = sand.u32 %s245, 85
      %s247 = sshrl.u32 %s246, 1
      %s248 = sor.u32 %s246, %s247
      %s249 = sand.u32 51, %s248
      %s250 = sshrl.u32 %s249, 2
      %s251 = sor.u32 %s249, %s250
      %s252 = sand.u32 15, %s251
      %v253 = vld [vmem:[%s243] sm:%s252]
      %v254 = vunpack.c.l.bf16 %v253
      %v255 = vunpack.c.h.bf16 %v253
      %v256 = vlaneseq
      %v257 = vand.u32 %v256, 127
      %v258 = vadd.s32 %v257, 128
      %vm259 = vcmp.lt.s32.totalorder %v258, 144
      %v260 = vsel %vm259, %v254, %v11
      %s261 = scalar_lea.vmem [#allocation7], 4
      %v262 = vpack.c.bf16 0.0, %v260
      %264 = vst [vmem:[%s261] sm:$0xf] %v262
      %s265 = scalar_lea.vmem %s218, 8
      %v266 = vld [vmem:[%s265] sm:$0xf]
      %v267 = vunpack.c.l.bf16 %v266
      %v268 = vunpack.c.h.bf16 %v266
      %v269 = vlaneseq
      %v270 = vand.u32 %v269, 127
      %vm272 = vcmp.lt.s32.totalorder %v270, 144
      %v273 = vsel %vm272, %v267, %v11
      %s274 = scalar_lea.vmem [#allocation7], 8
      %v275 = vpack.c.bf16 0.0, %v273
      %277 = vst [vmem:[%s274] sm:$0xf] %v275
      %s278 = scalar_lea.vmem %s218, 12
      %s280 = sor.u32 255, 127
      %s281 = sand.u32 %s280, 85
      %s282 = sshrl.u32 %s281, 1
      %s283 = sor.u32 %s281, %s282
      %s284 = sand.u32 51, %s283
      %s285 = sshrl.u32 %s284, 2
      %s286 = sor.u32 %s284, %s285
      %s287 = sand.u32 15, %s286
      %v288 = vld [vmem:[%s278] sm:%s287]
      %v289 = vunpack.c.l.bf16 %v288
      %v290 = vunpack.c.h.bf16 %v288
      %v291 = vlaneseq
      %v292 = vand.u32 %v291, 127
      %v293 = vadd.s32 %v292, 128
      %vm294 = vcmp.lt.s32.totalorder %v293, 144
      %v295 = vsel %vm294, %v289, %v11
      %s296 = scalar_lea.vmem [#allocation7], 12
      %v297 = vpack.c.bf16 0.0, %v295
      %299 = vst [vmem:[%s296] sm:$0xf] %v297
      %v301 = vld [vmem:[#allocation7] sm:$0xff]
      %v302 = vld [vmem:[#allocation7 + $0x8] sm:$0xff]
      %v303 = vld [vmem:[%s0] sm:$0xff]
      %v304 = vld [vmem:[%s0 + $0x8] sm:$0xff]
      %v305 = vld [vmem:[%s0 + $0x10] sm:$0xff]
      %v306 = vld [vmem:[%s0 + $0x18] sm:$0xff]
      %v307 = vld [vmem:[%s0 + $0x20] sm:$0xff]
      %v308 = vld [vmem:[%s0 + $0x28] sm:$0xff]
      %v309 = vld [vmem:[%s0 + $0x30] sm:$0xff]
      %v310 = vld [vmem:[%s0 + $0x38] sm:$0xff]
      %v311 = vld [vmem:[%s0 + $0x40] sm:$0xff]
      %v312 = vld [vmem:[%s0 + $0x48] sm:$0xff]
      %v313 = vld [vmem:[%s0 + $0x50] sm:$0xff]
      %v314 = vld [vmem:[%s0 + $0x58] sm:$0xff]
      %v315 = vld [vmem:[%s0 + $0x60] sm:$0xff]
      %v316 = vld [vmem:[%s0 + $0x68] sm:$0xff]
      %v317 = vld [vmem:[%s0 + $0x70] sm:$0xff]
      %v318 = vld [vmem:[%s0 + $0x78] sm:$0xff]
      %v319 = vld [vmem:[%s1] sm:$0x1]
      %v321 = vlaneseq
      %v322 = vshrl.u32 %v321, 7
      %v323 = vsub.s32 0, %v322
      %v324 = vrot.slane %v319, %v323
      %v328 = vunpack.c.l.b16 %v301
      %v329 = vunpack.c.h.b16 %v301
      %v330 = vunpack.c.l.b16 %v302
      %v331 = vunpack.c.h.b16 %v302
      %v332 = vpack.c.b16 %v330, %v328
      %v333 = vpack.c.b16 %v331, %v329
      %336 = vmatprep.subr.bf16.mxu0 0
      %337 = vmatpush1.bf16.msra.mxu0 %v303
      %338 = vmatprep.subr.bf16.mxu0 0
      %339 = vmatpush1.bf16.msra.mxu0 %v304
      %340 = vmatprep.subr.bf16.mxu0 0
      %341 = vmatpush1.bf16.msra.mxu0 %v305
      %342 = vmatprep.subr.bf16.mxu0 0
      %343 = vmatpush1.bf16.msra.mxu0 %v306
      %344 = vmatprep.subr.bf16.mxu0 0
      %345 = vmatpush1.bf16.msra.mxu0 %v307
      %346 = vmatprep.subr.bf16.mxu0 0
      %347 = vmatpush1.bf16.msra.mxu0 %v308
      %348 = vmatprep.subr.bf16.mxu0 0
      %349 = vmatpush1.bf16.msra.mxu0 %v309
      %350 = vmatprep.subr.bf16.mxu0 0
      %351 = vmatpush1.bf16.msra.mxu0 %v310
      %352 = vmatprep.subr.bf16.mxu0 0
      %353 = vmatpush1.bf16.msra.mxu0 %v311
      %354 = vmatprep.subr.bf16.mxu0 0
      %355 = vmatpush1.bf16.msra.mxu0 %v312
      %356 = vmatprep.subr.bf16.mxu0 0
      %357 = vmatpush1.bf16.msra.mxu0 %v313
      %358 = vmatprep.subr.bf16.mxu0 0
      %359 = vmatpush1.bf16.msra.mxu0 %v314
      %360 = vmatprep.subr.bf16.mxu0 0
      %361 = vmatpush1.bf16.msra.mxu0 %v315
      %362 = vmatprep.subr.bf16.mxu0 0
      %363 = vmatpush1.bf16.msra.mxu0 %v316
      %364 = vmatprep.subr.bf16.mxu0 0
      %365 = vmatpush1.bf16.msra.mxu0 %v317
      %366 = vmatprep.subr.bf16.mxu0 0
      %367 = vmatpush1.bf16.msra.mxu0 %v318
      %368 = vmatprep.mubr.bf16.mxu0 %v333
      %369 = vmatmul.mubr.bf16.gmra.mrb[0].mxu0 %v332
      %v370 = vpop.f32.mrb[0].mxu0
      %v371 = vadd.f32 %v324, %v370
      %v372 = vpop.f32.mrb[0].mxu0
      %v373 = vpop.f32.mrb[0].mxu0
      %v374 = vadd.f32 %v324, %v373
      %v375 = vpop.f32.mrb[0].mxu0
      %376 = vdwg.mxu0
      %v377 = vld [vmem:[%s224] sm:$0xf]
      %v378 = vld [vmem:[%s224 + $0x4] sm:$0xf]
      %v379 = vunpack.c.l.bf16 %v377
      %v380 = vunpack.c.l.bf16 %v378
      %v381 = vadd.f32 %v371, %v379
      %v382 = vadd.f32 %v374, %v380
      %v383 = vmax.f32 %v381, 0.0
      %v384 = vmax.f32 %v382, 0.0
      %v385 = vpack.c.bf16 %v384, %v383
      %v387 = vunpack.c.l.b16 %v385
      %v388 = vunpack.c.h.b16 %v385
      %v389 = vpack.c.b16 %v387, %v387
      %v390 = vpack.c.b16 %v388, %v388
      %393 = vst [vmem:[%s230] sm:$0xf] %v389
      %394 = vst [vmem:[%s230 + $0x4] sm:$0xf] %v390
      %s395 = smul.u32 2, %s21
      %p396 = scmp.lt.s32.totalorder %s395, 3
      %s397 = scalar_select %p396, %s395, 3
      %s398 = smul.addr %s397, 4
      %s399 = scalar_lea.vmem %s5, %s398
      // Predicated region
      $region37: #{_lambda_.27} parent=35 // pred_check
        %p400 = pneg %p133
      $region38: #{_lambda_.27} parent=35 // pred_check_branch
        %402 = sbr.rel (%p400) target = $region40
      $region39: #{_lambda_.27} parent=35 // pred_region
        %s403 = smul.u32 2, %s21
      $region40: #{_lambda_.27} parent=35 // pred_fallthru
        _
    $region36: #{_lambda_.27} parent=5 // pred_fallthru
      _
    %p404 = scmp.le.s32.totalorder 2, %s16
    // Predicated region
    $region41: #{_lambda_.27} parent=5 // pred_check
      %p405 = pneg %p404
    $region42: #{_lambda_.27} parent=5 // pred_check_branch
      %407 = sbr.rel (%p405) target = $region44
    $region43: #{_lambda_.27} parent=5 // pred_region
      %s408 = ssub.s32 %s16, 2
      // Predicated region
      $region45: #{_lambda_.27} parent=43 // pred_check
        %p409 = pneg %p139
      $region46: #{_lambda_.27} parent=43 // pred_check_branch
        %411 = sbr.rel (%p409) target = $region48
      $region47: #{_lambda_.27} parent=43 // pred_region
        %s412 = smul.u32 2, %s22
        %p413 = scmp.lt.s32.totalorder %s412, 3
        %s414 = scalar_select %p413, %s412, 3
        %s415 = smul.addr %s414, 4
        %s416 = scalar_lea.vmem %s5, %s415
      $region48: #{_lambda_.27} parent=43 // pred_fallthru
        _
    $region44: #{_lambda_.27} parent=5 // pred_fallthru
      _
  $region6: #{_lambda_.27} parent=0 // loop_footer
    %s20 = sadd.s32 1, %s16
  $region7: #{_lambda_.27} parent=0 // loop_footer_branch
    %15 = sbr.rel target = $region3
  $region8: #{_lambda_.27} parent=0 // loop_exit
    _

// kernel: _lambda_.26
$region0: #{_lambda_.26}
  #allocation0 [shape = 'u32[]', space=smem, size = 0x4, offset = 0x4, fixed_abs, tag = 'smem constant byte address 0x4 - core index']
  #allocation1 [shape = 'u32[144,128]{1,0:T(1,128)}', space=vmem, size = 0x12000, scoped, tag = 'internal scratch']
  #allocation2 [shape = 'u32[2048]{0}', space=vmem, size = 0x2000, scoped, tag = 'scoped memory for _lambda_.26']
  #allocation3 [shape = 'u32[2048]{0}', space=vmem, size = 0x2000, scoped, tag = 'scoped memory for _lambda_.26']
  #allocation4 [shape = 'u32[2048]{0}', space=vmem, size = 0x2000, scoped, tag = 'scoped memory for _lambda_.26']
  #allocation5 [shape = 'u32[2048]{0}', space=vmem, size = 0x2000, scoped, tag = 'scoped memory for _lambda_.26']
  #allocation6 [shape = 'u32[2048]{0}', space=vmem, size = 0x2000, scoped, tag = 'scoped memory for _lambda_.26']
  %s0 = inlined_call_operand.vmem [shape: bf16[256,256], index: 0, kind: input, shape index: {}]
  %s1 = inlined_call_operand.vmem [shape: f32[1,256], index: 1, kind: input, shape index: {}]
  %s2 = inlined_call_operand.vmem [shape: bf16[32,144], index: 2, kind: input, shape index: {}]
  %s3 = inlined_call_operand.<no memory space> [shape: bf16[], index: 3, kind: input, shape index: {}]
  %s4 = inlined_call_operand.vmem [shape: bf16[32,256], index: 4, kind: output, shape index: {}]
  %s5 = sld [smem:[#allocation0]]
  $region45: #{_lambda_.26} parent=0
    _
  %s7 = ssub.s32 1, %s5
  %s8 = scalar_select 0, %s7, %s5
  %v9 = vstv %s3
  %v10 = vunpack.i.l.bf16 %v9
  %v12 = vunpack.i.h.bf16 %v9
  loop: start=0, step=1, limit=4
  $region2: #{_lambda_.26} parent=0 // loop_pre_header
    _
  $region3: #{_lambda_.26} parent=0 // loop_header
    %s15 = sphi 0, %s19
    %p16 = scmp.ge.s32.totalorder %s15, 4
    %s25 = sphi 0, %s27
    %s28 = sphi 0, %s25
    %s29 = sphi 0, %s28
    %s45 = sphi 0, %s29
    %s49 = sphi 0, %s49
    %s51 = sphi 0, %s49
    %s52 = sphi 0, %s51
    %s66 = sphi 0, %s52
    %s70 = sphi 0, %s70
    %s72 = sphi 0, %s70
    %s73 = sphi 0, %s72
    %s87 = sphi 0, %s73
    %s93 = sphi 0, %s95
    %s96 = sphi 0, %s93
    %s97 = sphi 0, %s96
    %s113 = sphi 0, %s97
  $region4: #{_lambda_.26} parent=0 // loop_header_branch
    %18 = sbr.rel (%p16) target = $region8
  $region5: #{_lambda_.26} parent=0 // loop_body
    %s20 = ssub.s32 %s15, 1
    %s21 = ssub.s32 %s15, 2
    %s22 = sadd.s32 %s15, 1
    %s23 = ssub.s32 %s15, %s22
    %p24 = scmp.eq.s32.totalorder %s23, 0
    %s26 = sadd.s32 %s25, 1
    %s27 = scalar_select %p24, %s25, %s26
    %p30 = pneg %p24
    %p31 = scmp.eq.s32.totalorder %s15, 1
    %p32 = por %p30, %p31
    %p33 = scmp.ne.s32.totalorder %s25, %s28
    %p34 = scmp.eq.s32.totalorder %s15, 0
    %p35 = por %p33, %p34
    %p36 = scmp.ne.s32.totalorder %s25, %s28
    %p37 = scmp.eq.s32.totalorder %s20, 1
    %p38 = por %p36, %p37
    %p39 = scmp.ne.s32.totalorder %s28, %s29
    %p40 = scmp.eq.s32.totalorder %s20, 0
    %p41 = por %p39, %p40
    %p42 = scmp.ne.s32.totalorder %s28, %s29
    %p43 = scmp.eq.s32.totalorder %s21, 1
    %p44 = por %p42, %p43
    %p46 = scmp.ne.s32.totalorder %s29, %s45
    %p47 = scmp.eq.s32.totalorder %s21, 0
    %p48 = por %p46, %p47
    %s50 = sadd.s32 %s49, 1
    %p53 = scmp.eq.s32.totalorder %s15, 1
    %p54 = scmp.ne.s32.totalorder %s49, %s51
    %p55 = scmp.eq.s32.totalorder %s15, 0
    %p56 = por %p54, %p55
    %p57 = scmp.ne.s32.totalorder %s49, %s51
    %p58 = scmp.eq.s32.totalorder %s20, 1
    %p59 = por %p57, %p58
    %p60 = scmp.ne.s32.totalorder %s51, %s52
    %p61 = scmp.eq.s32.totalorder %s20, 0
    %p62 = por %p60, %p61
    %p63 = scmp.ne.s32.totalorder %s51, %s52
    %p64 = scmp.eq.s32.totalorder %s21, 1
    %p65 = por %p63, %p64
    %p67 = scmp.ne.s32.totalorder %s52, %s66
    %p68 = scmp.eq.s32.totalorder %s21, 0
    %p69 = por %p67, %p68
    %s71 = sadd.s32 %s70, 1
    %p74 = scmp.eq.s32.totalorder %s15, 1
    %p75 = scmp.ne.s32.totalorder %s70, %s72
    %p76 = scmp.eq.s32.totalorder %s15, 0
    %p77 = por %p75, %p76
    %p78 = scmp.ne.s32.totalorder %s70, %s72
    %p79 = scmp.eq.s32.totalorder %s20, 1
    %p80 = por %p78, %p79
    %p81 = scmp.ne.s32.totalorder %s72, %s73
    %p82 = scmp.eq.s32.totalorder %s20, 0
    %p83 = por %p81, %p82
    %p84 = scmp.ne.s32.totalorder %s72, %s73
    %p85 = scmp.eq.s32.totalorder %s21, 1
    %p86 = por %p84, %p85
    %p88 = scmp.ne.s32.totalorder %s73, %s87
    %p89 = scmp.eq.s32.totalorder %s21, 0
    %p90 = por %p88, %p89
    %s91 = ssub.s32 %s15, %s22
    %p92 = scmp.eq.s32.totalorder %s91, 0
    %s94 = sadd.s32 %s93, 1
    %s95 = scalar_select %p92, %s93, %s94
    %p98 = pneg %p92
    %p99 = scmp.eq.s32.totalorder %s15, 1
    %p100 = por %p98, %p99
    %p101 = scmp.ne.s32.totalorder %s93, %s96
    %p102 = scmp.eq.s32.totalorder %s15, 0
    %p103 = por %p101, %p102
    %p104 = scmp.ne.s32.totalorder %s93, %s96
    %p105 = scmp.eq.s32.totalorder %s20, 1
    %p106 = por %p104, %p105
    %p107 = scmp.ne.s32.totalorder %s96, %s97
    %p108 = scmp.eq.s32.totalorder %s20, 0
    %p109 = por %p107, %p108
    %p110 = scmp.ne.s32.totalorder %s96, %s97
    %p111 = scmp.eq.s32.totalorder %s21, 1
    %p112 = por %p110, %p111
    %p114 = scmp.ne.s32.totalorder %s97, %s113
    %p115 = scmp.eq.s32.totalorder %s21, 0
    %p116 = por %p114, %p115
    %p117 = scmp.le.s32.totalorder 1, %s15
    %p118 = scmp.lt.s32.totalorder %s15, 3
    %p119 = pnand %p117, %p118
    %p120 = pneg %p119
    // Predicated region
    $region9: #{_lambda_.26} parent=5 // pred_check
      _
    $region10: #{_lambda_.26} parent=5 // pred_check_branch
      %122 = sbr.rel (%p119) target = $region12
    $region11: #{_lambda_.26} parent=5 // pred_region
      %s123 = ssub.s32 %s15, 1
      // Predicated region
      $region13: #{_lambda_.26} parent=11 // pred_check
        %p124 = pneg %p62
      $region14: #{_lambda_.26} parent=11 // pred_check_branch
        %126 = sbr.rel (%p124) target = $region16
      $region15: #{_lambda_.26} parent=11 // pred_region
        _
      $region16: #{_lambda_.26} parent=11 // pred_fallthru
        _
      // Predicated region
      $region17: #{_lambda_.26} parent=11 // pred_check
        %p127 = pneg %p83
      $region18: #{_lambda_.26} parent=11 // pred_check_branch
        %129 = sbr.rel (%p127) target = $region20
      $region19: #{_lambda_.26} parent=11 // pred_region
        _
      $region20: #{_lambda_.26} parent=11 // pred_fallthru
        _
    $region12: #{_lambda_.26} parent=5 // pred_fallthru
      _
    %p130 = scmp.lt.s32.totalorder %s15, 2
    // Predicated region
    $region21: #{_lambda_.26} parent=5 // pred_check
      %p131 = pneg %p130
    $region22: #{_lambda_.26} parent=5 // pred_check_branch
      %133 = sbr.rel (%p131) target = $region24
    $region23: #{_lambda_.26} parent=5 // pred_region
      // Predicated region
      $region25: #{_lambda_.26} parent=23 // pred_check
        %p134 = pneg %p35
      $region26: #{_lambda_.26} parent=23 // pred_check_branch
        %136 = sbr.rel (%p134) target = $region28
      $region27: #{_lambda_.26} parent=23 // pred_region
        %s137 = smul.u32 2, %s15
        %p138 = scmp.lt.s32.totalorder %s137, 3
        %s139 = scalar_select %p138, %s137, 3
        %s140 = smul.addr %s139, 2
        %s141 = smul.addr %s140, 4
        %s142 = scalar_lea.vmem %s2, %s141
        %s143 = smul.u32 2, %s15
      $region28: #{_lambda_.26} parent=23 // pred_fallthru
        _
    $region24: #{_lambda_.26} parent=5 // pred_fallthru
      _
    %p144 = scmp.le.s32.totalorder 1, %s15
    %p145 = scmp.lt.s32.totalorder %s15, 3
    %p146 = pnand %p144, %p145
    %p147 = pneg %p146
    // Predicated region
    $region29: #{_lambda_.26} parent=5 // pred_check
      _
    $region30: #{_lambda_.26} parent=5 // pred_check_branch
      %149 = sbr.rel (%p146) target = $region32
    $region31: #{_lambda_.26} parent=5 // pred_region
      #allocation7 [shape = 'u8[8192]{0}', space=vmem, size = 0x2000, dematerialized = true, scoped, tag = 'FusionAdapter Buffer %fusion.13 = bf16[32,256]{1,0:T(8,128)(2,1)} fusion(%param_2.13, %param_3.9), kind=kLoop, calls=%fused_computation.62.clone, metadata={op_name="jit(<lambda>)/jit(_pad)/pad" stack_frame_id=123}']
      %s150 = ssub.s32 %s15, 1
      %s151 = smul.u32 2, %s20
      %p152 = scmp.lt.s32.totalorder %s151, 3
      %s153 = scalar_select %p152, %s151, 3
      %s154 = smul.addr %s153, 2
      %s155 = smul.addr %s154, 4
      %s156 = scalar_lea.vmem %s2, %s155
      %p157 = pneg %p41
      %p158 = pneg %p38
      %p159 = pneg %p62
      %p160 = pneg %p59
      %p161 = pneg %p83
      %p162 = pneg %p80
      %p163 = pneg %p109
      %p164 = pneg %p106
      %s165 = smul.u32 2, %s20
      %p166 = scmp.lt.s32.totalorder %s165, 3
      %s167 = scalar_select %p166, %s165, 3
      %s168 = smul.addr %s167, 2
      %s169 = smul.addr %s168, 4
      %s170 = scalar_lea.vmem %s4, %s169
      %s171 = smul.u32 2, %s20
      %p172 = scmp.lt.s32.totalorder %s171, 3
      %s173 = scalar_select %p172, %s171, 3
      %s174 = smul.addr %s173, 2
      %s175 = smul.addr %s174, 4
      %s176 = scalar_lea.vmem %s2, %s175
      %s177 = smul.u32 2, %s20
      %s178 = smul.u32 2, %s20
      %p179 = scmp.lt.s32.totalorder %s178, 3
      %s180 = scalar_select %p179, %s178, 3
      %s181 = smul.addr %s180, 2
      %s182 = smul.addr %s181, 4
      %s183 = scalar_lea.vmem %s4, %s182
      %s184 = smul.u32 2, %s20
      %v185 = vld [vmem:[%s176] sm:$0xf]
      %v186 = vunpack.c.l.bf16 %v185
      %v187 = vunpack.c.h.bf16 %v185
      %v188 = vlaneseq
      %v189 = vand.u32 %v188, 127
      %vm191 = vcmp.lt.s32.totalorder %v189, 144
      %v192 = vsel %vm191, %v186, %v10
      %v193 = vpack.c.bf16 0.0, %v192
      %195 = vst [vmem:[#allocation7] sm:$0xf] %v193
      %s196 = scalar_lea.vmem %s176, 4
      %s198 = sor.u32 255, 127
      %s199 = sand.u32 %s198, 85
      %s200 = sshrl.u32 %s199, 1
      %s201 = sor.u32 %s199, %s200
      %s202 = sand.u32 51, %s201
      %s203 = sshrl.u32 %s202, 2
      %s204 = sor.u32 %s202, %s203
      %s205 = sand.u32 15, %s204
      %v206 = vld [vmem:[%s196] sm:%s205]
      %v207 = vunpack.c.l.bf16 %v206
      %v208 = vunpack.c.h.bf16 %v206
      %v209 = vlaneseq
      %v210 = vand.u32 %v209, 127
      %v211 = vadd.s32 %v210, 128
      %vm212 = vcmp.lt.s32.totalorder %v211, 144
      %v213 = vsel %vm212, %v207, %v10
      %s214 = scalar_lea.vmem [#allocation7], 4
      %v215 = vpack.c.bf16 0.0, %v213
      %217 = vst [vmem:[%s214] sm:$0xf] %v215
      %s218 = scalar_lea.vmem %s176, 8
      %v219 = vld [vmem:[%s218] sm:$0xf]
      %v220 = vunpack.c.l.bf16 %v219
      %v221 = vunpack.c.h.bf16 %v219
      %v222 = vlaneseq
      %v223 = vand.u32 %v222, 127
      %vm225 = vcmp.lt.s32.totalorder %v223, 144
      %v226 = vsel %vm225, %v220, %v10
      %s227 = scalar_lea.vmem [#allocation7], 8
      %v228 = vpack.c.bf16 0.0, %v226
      %230 = vst [vmem:[%s227] sm:$0xf] %v228
      %s231 = scalar_lea.vmem %s176, 12
      %s233 = sor.u32 255, 127
      %s234 = sand.u32 %s233, 85
      %s235 = sshrl.u32 %s234, 1
      %s236 = sor.u32 %s234, %s235
      %s237 = sand.u32 51, %s236
      %s238 = sshrl.u32 %s237, 2
      %s239 = sor.u32 %s237, %s238
      %s240 = sand.u32 15, %s239
      %v241 = vld [vmem:[%s231] sm:%s240]
      %v242 = vunpack.c.l.bf16 %v241
      %v243 = vunpack.c.h.bf16 %v241
      %v244 = vlaneseq
      %v245 = vand.u32 %v244, 127
      %v246 = vadd.s32 %v245, 128
      %vm247 = vcmp.lt.s32.totalorder %v246, 144
      %v248 = vsel %vm247, %v242, %v10
      %s249 = scalar_lea.vmem [#allocation7], 12
      %v250 = vpack.c.bf16 0.0, %v248
      %252 = vst [vmem:[%s249] sm:$0xf] %v250
      %v253 = vld [vmem:[#allocation7] sm:$0xff]
      %v254 = vld [vmem:[#allocation7 + $0x8] sm:$0xff]
      %v255 = vld [vmem:[%s0] sm:$0xff]
      %v256 = vld [vmem:[%s0 + $0x8] sm:$0xff]
      %v257 = vld [vmem:[%s0 + $0x10] sm:$0xff]
      %v258 = vld [vmem:[%s0 + $0x18] sm:$0xff]
      %v259 = vld [vmem:[%s0 + $0x20] sm:$0xff]
      %v260 = vld [vmem:[%s0 + $0x28] sm:$0xff]
      %v261 = vld [vmem:[%s0 + $0x30] sm:$0xff]
      %v262 = vld [vmem:[%s0 + $0x38] sm:$0xff]
      %v263 = vld [vmem:[%s0 + $0x40] sm:$0xff]
      %v264 = vld [vmem:[%s0 + $0x48] sm:$0xff]
      %v265 = vld [vmem:[%s0 + $0x50] sm:$0xff]
      %v266 = vld [vmem:[%s0 + $0x58] sm:$0xff]
      %v267 = vld [vmem:[%s0 + $0x60] sm:$0xff]
      %v268 = vld [vmem:[%s0 + $0x68] sm:$0xff]
      %v269 = vld [vmem:[%s0 + $0x70] sm:$0xff]
      %v270 = vld [vmem:[%s0 + $0x78] sm:$0xff]
      %v271 = vld [vmem:[%s0 + $0x80] sm:$0xff]
      %v272 = vld [vmem:[%s0 + $0x88] sm:$0xff]
      %v273 = vld [vmem:[%s0 + $0x90] sm:$0xff]
      %v274 = vld [vmem:[%s0 + $0x98] sm:$0xff]
      %v275 = vld [vmem:[%s0 + $0xa0] sm:$0xff]
      %v276 = vld [vmem:[%s0 + $0xa8] sm:$0xff]
      %v277 = vld [vmem:[%s0 + $0xb0] sm:$0xff]
      %v278 = vld [vmem:[%s0 + $0xb8] sm:$0xff]
      %v279 = vld [vmem:[%s0 + $0xc0] sm:$0xff]
      %v280 = vld [vmem:[%s0 + $0xc8] sm:$0xff]
      %v281 = vld [vmem:[%s0 + $0xd0] sm:$0xff]
      %v282 = vld [vmem:[%s0 + $0xd8] sm:$0xff]
      %v283 = vld [vmem:[%s0 + $0xe0] sm:$0xff]
      %v284 = vld [vmem:[%s0 + $0xe8] sm:$0xff]
      %v285 = vld [vmem:[%s0 + $0xf0] sm:$0xff]
      %v286 = vld [vmem:[%s0 + $0xf8] sm:$0xff]
      %v287 = vld [vmem:[%s1] sm:$0x3]
      %v289 = vlaneseq
      %v290 = vshrl.u32 %v289, 7
      %v291 = vsub.s32 0, %v290
      %v292 = vrot.slane %v287, %v291
      %v293 = vlaneseq
      %v294 = vshrl.u32 %v293, 7
      %v295 = vsub.s32 1, %v294
      %v296 = vrot.slane %v287, %v295
      %v301 = vunpack.c.l.b16 %v253
      %v302 = vunpack.c.h.b16 %v253
      %v303 = vunpack.c.l.b16 %v254
      %v304 = vunpack.c.h.b16 %v254
      %v305 = vpack.c.b16 %v303, %v301
      %v306 = vpack.c.b16 %v304, %v302
      %309 = vmatprep.subr.bf16.mxu0 %v256
      %310 = vmatpush1.bf16.msra.mxu0 %v255
      %311 = vmatprep.subr.bf16.mxu0 %v258
      %312 = vmatpush1.bf16.msra.mxu0 %v257
      %313 = vmatprep.subr.bf16.mxu0 %v260
      %314 = vmatpush1.bf16.msra.mxu0 %v259
      %315 = vmatprep.subr.bf16.mxu0 %v262
      %316 = vmatpush1.bf16.msra.mxu0 %v261
      %317 = vmatprep.subr.bf16.mxu0 %v264
      %318 = vmatpush1.bf16.msra.mxu0 %v263
      %319 = vmatprep.subr.bf16.mxu0 %v266
      %320 = vmatpush1.bf16.msra.mxu0 %v265
      %321 = vmatprep.subr.bf16.mxu0 %v268
      %322 = vmatpush1.bf16.msra.mxu0 %v267
      %323 = vmatprep.subr.bf16.mxu0 %v270
      %324 = vmatpush1.bf16.msra.mxu0 %v269
      %325 = vmatprep.subr.bf16.mxu0 %v272
      %326 = vmatpush1.bf16.msra.mxu0 %v271
      %327 = vmatprep.subr.bf16.mxu0 %v274
      %328 = vmatpush1.bf16.msra.mxu0 %v273
      %329 = vmatprep.subr.bf16.mxu0 %v276
      %330 = vmatpush1.bf16.msra.mxu0 %v275
      %331 = vmatprep.subr.bf16.mxu0 %v278
      %332 = vmatpush1.bf16.msra.mxu0 %v277
      %333 = vmatprep.subr.bf16.mxu0 %v280
      %334 = vmatpush1.bf16.msra.mxu0 %v279
      %335 = vmatprep.subr.bf16.mxu0 %v282
      %336 = vmatpush1.bf16.msra.mxu0 %v281
      %337 = vmatprep.subr.bf16.mxu0 %v284
      %338 = vmatpush1.bf16.msra.mxu0 %v283
      %339 = vmatprep.subr.bf16.mxu0 %v286
      %340 = vmatpush1.bf16.msra.mxu0 %v285
      %341 = vmatprep.mubr.bf16.mxu0 %v306
      %342 = vmatmul.mubr.bf16.gmra.mrb[0].mxu0 %v305
      %v343 = vpop.f32.mrb[0].mxu0
      %v344 = vadd.f32 %v292, %v343
      %v345 = vpop.f32.mrb[0].mxu0
      %v346 = vadd.f32 %v296, %v345
      %v347 = vpop.f32.mrb[0].mxu0
      %v348 = vadd.f32 %v292, %v347
      %v349 = vpop.f32.mrb[0].mxu0
      %v350 = vadd.f32 %v296, %v349
      %351 = vdwg.mxu0
      %v352 = vlaneseq
      %v353 = vand.u32 %v352, 127
      %v354 = vadd.s32 %v353, 128
      %vm355 = vcmp.lt.s32.totalorder %v353, 128
      %vm356 = vcmp.lt.s32.totalorder %v354, 128
      %v357 = vmax.f32 %v344, 0.0
      %v358 = vmax.f32 %v346, 0.0
      %v359 = vmax.f32 %v348, 0.0
      %v360 = vmax.f32 %v350, 0.0
      %v361 = vsel %vm355, %v357, %v344
      %v362 = vsel %vm356, %v358, %v346
      %v363 = vsel %vm355, %v359, %v348
      %v364 = vsel %vm356, %v360, %v350
      %v365 = vpack.c.bf16 %v363, %v361
      %v366 = vpack.c.bf16 %v364, %v362
      %v369 = vunpack.c.l.b16 %v365
      %v370 = vunpack.c.l.b16 %v366
      %v371 = vunpack.c.h.b16 %v365
      %v372 = vunpack.c.h.b16 %v366
      %v373 = vpack.c.b16 %v370, %v369
      %v374 = vpack.c.b16 %v372, %v371
      %377 = vst [vmem:[%s183] sm:$0xff] %v373
      %378 = vst [vmem:[%s183 + $0x8] sm:$0xff] %v374
      %s379 = smul.u32 2, %s20
      %p380 = scmp.lt.s32.totalorder %s379, 3
      %s381 = scalar_select %p380, %s379, 3
      %s382 = smul.addr %s381, 2
      %s383 = smul.addr %s382, 4
      %s384 = scalar_lea.vmem %s4, %s383
      // Predicated region
      $region33: #{_lambda_.26} parent=31 // pred_check
        %p385 = pneg %p106
      $region34: #{_lambda_.26} parent=31 // pred_check_branch
        %387 = sbr.rel (%p385) target = $region36
      $region35: #{_lambda_.26} parent=31 // pred_region
        %s388 = smul.u32 2, %s20
      $region36: #{_lambda_.26} parent=31 // pred_fallthru
        _
    $region32: #{_lambda_.26} parent=5 // pred_fallthru
      _
    %p389 = scmp.le.s32.totalorder 2, %s15
    // Predicated region
    $region37: #{_lambda_.26} parent=5 // pred_check
      %p390 = pneg %p389
    $region38: #{_lambda_.26} parent=5 // pred_check_branch
      %392 = sbr.rel (%p390) target = $region40
    $region39: #{_lambda_.26} parent=5 // pred_region
      %s393 = ssub.s32 %s15, 2
      // Predicated region
      $region41: #{_lambda_.26} parent=39 // pred_check
        %p394 = pneg %p112
      $region42: #{_lambda_.26} parent=39 // pred_check_branch
        %396 = sbr.rel (%p394) target = $region44
      $region43: #{_lambda_.26} parent=39 // pred_region
        %s397 = smul.u32 2, %s21
        %p398 = scmp.lt.s32.totalorder %s397, 3
        %s399 = scalar_select %p398, %s397, 3
        %s400 = smul.addr %s399, 2
        %s401 = smul.addr %s400, 4
        %s402 = scalar_lea.vmem %s4, %s401
      $region44: #{_lambda_.26} parent=39 // pred_fallthru
        _
    $region40: #{_lambda_.26} parent=5 // pred_fallthru
      _
  $region6: #{_lambda_.26} parent=0 // loop_footer
    %s19 = sadd.s32 1, %s15
  $region7: #{_lambda_.26} parent=0 // loop_footer_branch
    %14 = sbr.rel target = $region3
  $region8: #{_lambda_.26} parent=0 // loop_exit
    _

// kernel: _lambda_.25
$region0: #{_lambda_.25}
  #allocation0 [shape = 'u32[]', space=smem, size = 0x4, offset = 0x4, fixed_abs, tag = 'smem constant byte address 0x4 - core index']
  #allocation1 [shape = 'u32[144,128]{1,0:T(1,128)}', space=vmem, size = 0x12000, scoped, tag = 'internal scratch']
  #allocation2 [shape = 'u32[2048]{0}', space=vmem, size = 0x2000, scoped, tag = 'scoped memory for _lambda_.25']
  #allocation3 [shape = 'u32[2048]{0}', space=vmem, size = 0x2000, scoped, tag = 'scoped memory for _lambda_.25']
  #allocation4 [shape = 'u32[2048]{0}', space=vmem, size = 0x2000, scoped, tag = 'scoped memory for _lambda_.25']
  #allocation5 [shape = 'u32[2048]{0}', space=vmem, size = 0x2000, scoped, tag = 'scoped memory for _lambda_.25']
  #allocation6 [shape = 'u32[2048]{0}', space=vmem, size = 0x2000, scoped, tag = 'scoped memory for _lambda_.25']
  %s0 = inlined_call_operand.vmem [shape: bf16[384,128], index: 0, kind: input, shape index: {}]
  %s1 = inlined_call_operand.vmem [shape: f32[1,128], index: 1, kind: input, shape index: {}]
  %s2 = inlined_call_operand.vmem [shape: bf16[32,128], index: 2, kind: input, shape index: {}]
  %s3 = inlined_call_operand.vmem [shape: bf16[32,288], index: 3, kind: input, shape index: {}]
  %s4 = inlined_call_operand.<no memory space> [shape: bf16[], index: 4, kind: input, shape index: {}]
  %s5 = inlined_call_operand.vmem [shape: bf16[32,128], index: 5, kind: output, shape index: {}]
  %s6 = sld [smem:[#allocation0]]
  $region49: #{_lambda_.25} parent=0
    _
  %s8 = ssub.s32 1, %s6
  %s9 = scalar_select 0, %s8, %s6
  %v10 = vstv %s4
  %v11 = vunpack.i.l.bf16 %v10
  %v13 = vunpack.i.h.bf16 %v10
  loop: start=0, step=1, limit=4
  $region2: #{_lambda_.25} parent=0 // loop_pre_header
    _
  $region3: #{_lambda_.25} parent=0 // loop_header
    %s16 = sphi 0, %s20
    %p17 = scmp.ge.s32.totalorder %s16, 4
    %s26 = sphi 0, %s28
    %s29 = sphi 0, %s26
    %s30 = sphi 0, %s29
    %s46 = sphi 0, %s30
    %s50 = sphi 0, %s50
    %s52 = sphi 0, %s50
    %s53 = sphi 0, %s52
    %s67 = sphi 0, %s53
    %s71 = sphi 0, %s71
    %s73 = sphi 0, %s71
    %s74 = sphi 0, %s73
    %s88 = sphi 0, %s74
    %s94 = sphi 0, %s96
    %s97 = sphi 0, %s94
    %s98 = sphi 0, %s97
    %s114 = sphi 0, %s98
    %s120 = sphi 0, %s122
    %s123 = sphi 0, %s120
    %s124 = sphi 0, %s123
    %s140 = sphi 0, %s124
  $region4: #{_lambda_.25} parent=0 // loop_header_branch
    %19 = sbr.rel (%p17) target = $region8
  $region5: #{_lambda_.25} parent=0 // loop_body
    %s21 = ssub.s32 %s16, 1
    %s22 = ssub.s32 %s16, 2
    %s23 = sadd.s32 %s16, 1
    %s24 = ssub.s32 %s16, %s23
    %p25 = scmp.eq.s32.totalorder %s24, 0
    %s27 = sadd.s32 %s26, 1
    %s28 = scalar_select %p25, %s26, %s27
    %p31 = pneg %p25
    %p32 = scmp.eq.s32.totalorder %s16, 1
    %p33 = por %p31, %p32
    %p34 = scmp.ne.s32.totalorder %s26, %s29
    %p35 = scmp.eq.s32.totalorder %s16, 0
    %p36 = por %p34, %p35
    %p37 = scmp.ne.s32.totalorder %s26, %s29
    %p38 = scmp.eq.s32.totalorder %s21, 1
    %p39 = por %p37, %p38
    %p40 = scmp.ne.s32.totalorder %s29, %s30
    %p41 = scmp.eq.s32.totalorder %s21, 0
    %p42 = por %p40, %p41
    %p43 = scmp.ne.s32.totalorder %s29, %s30
    %p44 = scmp.eq.s32.totalorder %s22, 1
    %p45 = por %p43, %p44
    %p47 = scmp.ne.s32.totalorder %s30, %s46
    %p48 = scmp.eq.s32.totalorder %s22, 0
    %p49 = por %p47, %p48
    %s51 = sadd.s32 %s50, 1
    %p54 = scmp.eq.s32.totalorder %s16, 1
    %p55 = scmp.ne.s32.totalorder %s50, %s52
    %p56 = scmp.eq.s32.totalorder %s16, 0
    %p57 = por %p55, %p56
    %p58 = scmp.ne.s32.totalorder %s50, %s52
    %p59 = scmp.eq.s32.totalorder %s21, 1
    %p60 = por %p58, %p59
    %p61 = scmp.ne.s32.totalorder %s52, %s53
    %p62 = scmp.eq.s32.totalorder %s21, 0
    %p63 = por %p61, %p62
    %p64 = scmp.ne.s32.totalorder %s52, %s53
    %p65 = scmp.eq.s32.totalorder %s22, 1
    %p66 = por %p64, %p65
    %p68 = scmp.ne.s32.totalorder %s53, %s67
    %p69 = scmp.eq.s32.totalorder %s22, 0
    %p70 = por %p68, %p69
    %s72 = sadd.s32 %s71, 1
    %p75 = scmp.eq.s32.totalorder %s16, 1
    %p76 = scmp.ne.s32.totalorder %s71, %s73
    %p77 = scmp.eq.s32.totalorder %s16, 0
    %p78 = por %p76, %p77
    %p79 = scmp.ne.s32.totalorder %s71, %s73
    %p80 = scmp.eq.s32.totalorder %s21, 1
    %p81 = por %p79, %p80
    %p82 = scmp.ne.s32.totalorder %s73, %s74
    %p83 = scmp.eq.s32.totalorder %s21, 0
    %p84 = por %p82, %p83
    %p85 = scmp.ne.s32.totalorder %s73, %s74
    %p86 = scmp.eq.s32.totalorder %s22, 1
    %p87 = por %p85, %p86
    %p89 = scmp.ne.s32.totalorder %s74, %s88
    %p90 = scmp.eq.s32.totalorder %s22, 0
    %p91 = por %p89, %p90
    %s92 = ssub.s32 %s16, %s23
    %p93 = scmp.eq.s32.totalorder %s92, 0
    %s95 = sadd.s32 %s94, 1
    %s96 = scalar_select %p93, %s94, %s95
    %p99 = pneg %p93
    %p100 = scmp.eq.s32.totalorder %s16, 1
    %p101 = por %p99, %p100
    %p102 = scmp.ne.s32.totalorder %s94, %s97
    %p103 = scmp.eq.s32.totalorder %s16, 0
    %p104 = por %p102, %p103
    %p105 = scmp.ne.s32.totalorder %s94, %s97
    %p106 = scmp.eq.s32.totalorder %s21, 1
    %p107 = por %p105, %p106
    %p108 = scmp.ne.s32.totalorder %s97, %s98
    %p109 = scmp.eq.s32.totalorder %s21, 0
    %p110 = por %p108, %p109
    %p111 = scmp.ne.s32.totalorder %s97, %s98
    %p112 = scmp.eq.s32.totalorder %s22, 1
    %p113 = por %p111, %p112
    %p115 = scmp.ne.s32.totalorder %s98, %s114
    %p116 = scmp.eq.s32.totalorder %s22, 0
    %p117 = por %p115, %p116
    %s118 = ssub.s32 %s16, %s23
    %p119 = scmp.eq.s32.totalorder %s118, 0
    %s121 = sadd.s32 %s120, 1
    %s122 = scalar_select %p119, %s120, %s121
    %p125 = pneg %p119
    %p126 = scmp.eq.s32.totalorder %s16, 1
    %p127 = por %p125, %p126
    %p128 = scmp.ne.s32.totalorder %s120, %s123
    %p129 = scmp.eq.s32.totalorder %s16, 0
    %p130 = por %p128, %p129
    %p131 = scmp.ne.s32.totalorder %s120, %s123
    %p132 = scmp.eq.s32.totalorder %s21, 1
    %p133 = por %p131, %p132
    %p134 = scmp.ne.s32.totalorder %s123, %s124
    %p135 = scmp.eq.s32.totalorder %s21, 0
    %p136 = por %p134, %p135
    %p137 = scmp.ne.s32.totalorder %s123, %s124
    %p138 = scmp.eq.s32.totalorder %s22, 1
    %p139 = por %p137, %p138
    %p141 = scmp.ne.s32.totalorder %s124, %s140
    %p142 = scmp.eq.s32.totalorder %s22, 0
    %p143 = por %p141, %p142
    %p144 = scmp.le.s32.totalorder 1, %s16
    %p145 = scmp.lt.s32.totalorder %s16, 3
    %p146 = pnand %p144, %p145
    %p147 = pneg %p146
    // Predicated region
    $region9: #{_lambda_.25} parent=5 // pred_check
      _
    $region10: #{_lambda_.25} parent=5 // pred_check_branch
      %149 = sbr.rel (%p146) target = $region12
    $region11: #{_lambda_.25} parent=5 // pred_region
      %s150 = ssub.s32 %s16, 1
      // Predicated region
      $region13: #{_lambda_.25} parent=11 // pred_check
        %p151 = pneg %p63
      $region14: #{_lambda_.25} parent=11 // pred_check_branch
        %153 = sbr.rel (%p151) target = $region16
      $region15: #{_lambda_.25} parent=11 // pred_region
        _
      $region16: #{_lambda_.25} parent=11 // pred_fallthru
        _
      // Predicated region
      $region17: #{_lambda_.25} parent=11 // pred_check
        %p154 = pneg %p84
      $region18: #{_lambda_.25} parent=11 // pred_check_branch
        %156 = sbr.rel (%p154) target = $region20
      $region19: #{_lambda_.25} parent=11 // pred_region
        _
      $region20: #{_lambda_.25} parent=11 // pred_fallthru
        _
    $region12: #{_lambda_.25} parent=5 // pred_fallthru
      _
    %p157 = scmp.lt.s32.totalorder %s16, 2
    // Predicated region
    $region21: #{_lambda_.25} parent=5 // pred_check
      %p158 = pneg %p157
    $region22: #{_lambda_.25} parent=5 // pred_check_branch
      %160 = sbr.rel (%p158) target = $region24
    $region23: #{_lambda_.25} parent=5 // pred_region
      // Predicated region
      $region25: #{_lambda_.25} parent=23 // pred_check
        %p161 = pneg %p36
      $region26: #{_lambda_.25} parent=23 // pred_check_branch
        %163 = sbr.rel (%p161) target = $region28
      $region27: #{_lambda_.25} parent=23 // pred_region
        %s164 = smul.u32 2, %s16
        %p165 = scmp.lt.s32.totalorder %s164, 3
        %s166 = scalar_select %p165, %s164, 3
        %s167 = smul.addr %s166, 3
        %s168 = smul.addr %s167, 4
        %s169 = scalar_lea.vmem %s3, %s168
        %s170 = smul.u32 2, %s16
      $region28: #{_lambda_.25} parent=23 // pred_fallthru
        _
      // Predicated region
      $region29: #{_lambda_.25} parent=23 // pred_check
        %p171 = pneg %p104
      $region30: #{_lambda_.25} parent=23 // pred_check_branch
        %173 = sbr.rel (%p171) target = $region32
      $region31: #{_lambda_.25} parent=23 // pred_region
        %s174 = smul.u32 2, %s16
        %p175 = scmp.lt.s32.totalorder %s174, 3
        %s176 = scalar_select %p175, %s174, 3
        %s177 = smul.addr %s176, 4
        %s178 = scalar_lea.vmem %s2, %s177
        %s179 = smul.u32 2, %s16
      $region32: #{_lambda_.25} parent=23 // pred_fallthru
        _
    $region24: #{_lambda_.25} parent=5 // pred_fallthru
      _
    %p180 = scmp.le.s32.totalorder 1, %s16
    %p181 = scmp.lt.s32.totalorder %s16, 3
    %p182 = pnand %p180, %p181
    %p183 = pneg %p182
    // Predicated region
    $region33: #{_lambda_.25} parent=5 // pred_check
      _
    $region34: #{_lambda_.25} parent=5 // pred_check_branch
      %185 = sbr.rel (%p182) target = $region36
    $region35: #{_lambda_.25} parent=5 // pred_region
      #allocation7 [shape = 'u8[12288]{0}', space=vmem, size = 0x3000, dematerialized = true, scoped, tag = 'FusionAdapter Buffer %fusion.11 = bf16[32,384]{1,0:T(8,128)(2,1)} fusion(%param_3.8, %param_4.2), kind=kLoop, calls=%fused_computation.59.clone, metadata={op_name="jit(<lambda>)/jit(_pad)/pad" stack_frame_id=143}']
      %s186 = ssub.s32 %s16, 1
      %s187 = smul.u32 2, %s21
      %p188 = scmp.lt.s32.totalorder %s187, 3
      %s189 = scalar_select %p188, %s187, 3
      %s190 = smul.addr %s189, 3
      %s191 = smul.addr %s190, 4
      %s192 = scalar_lea.vmem %s3, %s191
      %p193 = pneg %p42
      %p194 = pneg %p39
      %p195 = pneg %p63
      %p196 = pneg %p60
      %p197 = pneg %p84
      %p198 = pneg %p81
      %s199 = smul.u32 2, %s21
      %p200 = scmp.lt.s32.totalorder %s199, 3
      %s201 = scalar_select %p200, %s199, 3
      %s202 = smul.addr %s201, 4
      %s203 = scalar_lea.vmem %s2, %s202
      %p204 = pneg %p110
      %p205 = pneg %p107
      %p206 = pneg %p136
      %p207 = pneg %p133
      %s208 = smul.u32 2, %s21
      %p209 = scmp.lt.s32.totalorder %s208, 3
      %s210 = scalar_select %p209, %s208, 3
      %s211 = smul.addr %s210, 4
      %s212 = scalar_lea.vmem %s5, %s211
      %s213 = smul.u32 2, %s21
      %p214 = scmp.lt.s32.totalorder %s213, 3
      %s215 = scalar_select %p214, %s213, 3
      %s216 = smul.addr %s215, 3
      %s217 = smul.addr %s216, 4
      %s218 = scalar_lea.vmem %s3, %s217
      %s219 = smul.u32 2, %s21
      %s220 = smul.u32 2, %s21
      %p221 = scmp.lt.s32.totalorder %s220, 3
      %s222 = scalar_select %p221, %s220, 3
      %s223 = smul.addr %s222, 4
      %s224 = scalar_lea.vmem %s2, %s223
      %s225 = smul.u32 2, %s21
      %s226 = smul.u32 2, %s21
      %p227 = scmp.lt.s32.totalorder %s226, 3
      %s228 = scalar_select %p227, %s226, 3
      %s229 = smul.addr %s228, 4
      %s230 = scalar_lea.vmem %s5, %s229
      %s231 = smul.u32 2, %s21
      %v232 = vld [vmem:[%s218] sm:$0xf]
      %v233 = vunpack.c.l.bf16 %v232
      %v234 = vunpack.c.h.bf16 %v232
      %v235 = vlaneseq
      %v236 = vand.u32 %v235, 127
      %vm238 = vcmp.lt.s32.totalorder %v236, 288
      %v239 = vsel %vm238, %v233, %v11
      %v240 = vpack.c.bf16 0.0, %v239
      %242 = vst [vmem:[#allocation7] sm:$0xf] %v240
      %s243 = scalar_lea.vmem %s218, 4
      %v244 = vld [vmem:[%s243] sm:$0xf]
      %v245 = vunpack.c.l.bf16 %v244
      %v246 = vunpack.c.h.bf16 %v244
      %v247 = vlaneseq
      %v248 = vand.u32 %v247, 127
      %v249 = vadd.s32 %v248, 128
      %vm250 = vcmp.lt.s32.totalorder %v249, 288
      %v251 = vsel %vm250, %v245, %v11
      %s252 = scalar_lea.vmem [#allocation7], 4
      %v253 = vpack.c.bf16 0.0, %v251
      %255 = vst [vmem:[%s252] sm:$0xf] %v253
      %s256 = scalar_lea.vmem %s218, 8
      %s258 = sor.u32 255, 127
      %s259 = sand.u32 %s258, 85
      %s260 = sshrl.u32 %s259, 1
      %s261 = sor.u32 %s259, %s260
      %s262 = sand.u32 51, %s261
      %s263 = sshrl.u32 %s262, 2
      %s264 = sor.u32 %s262, %s263
      %s265 = sand.u32 15, %s264
      %v266 = vld [vmem:[%s256] sm:%s265]
      %v267 = vunpack.c.l.bf16 %v266
      %v268 = vunpack.c.h.bf16 %v266
      %v269 = vlaneseq
      %v270 = vand.u32 %v269, 127
      %v271 = vadd.s32 %v270, 256
      %vm272 = vcmp.lt.s32.totalorder %v271, 288
      %v273 = vsel %vm272, %v267, %v11
      %s274 = scalar_lea.vmem [#allocation7], 8
      %v275 = vpack.c.bf16 0.0, %v273
      %277 = vst [vmem:[%s274] sm:$0xf] %v275
      %s278 = scalar_lea.vmem %s218, 12
      %v279 = vld [vmem:[%s278] sm:$0xf]
      %v280 = vunpack.c.l.bf16 %v279
      %v281 = vunpack.c.h.bf16 %v279
      %v282 = vlaneseq
      %v283 = vand.u32 %v282, 127
      %vm285 = vcmp.lt.s32.totalorder %v283, 288
      %v286 = vsel %vm285, %v280, %v11
      %s287 = scalar_lea.vmem [#allocation7], 12
      %v288 = vpack.c.bf16 0.0, %v286
      %290 = vst [vmem:[%s287] sm:$0xf] %v288
      %s291 = scalar_lea.vmem %s218, 16
      %v292 = vld [vmem:[%s291] sm:$0xf]
      %v293 = vunpack.c.l.bf16 %v292
      %v294 = vunpack.c.h.bf16 %v292
      %v295 = vlaneseq
      %v296 = vand.u32 %v295, 127
      %v297 = vadd.s32 %v296, 128
      %vm298 = vcmp.lt.s32.totalorder %v297, 288
      %v299 = vsel %vm298, %v293, %v11
      %s300 = scalar_lea.vmem [#allocation7], 16
      %v301 = vpack.c.bf16 0.0, %v299
      %303 = vst [vmem:[%s300] sm:$0xf] %v301
      %s304 = scalar_lea.vmem %s218, 20
      %s306 = sor.u32 255, 127
      %s307 = sand.u32 %s306, 85
      %s308 = sshrl.u32 %s307, 1
      %s309 = sor.u32 %s307, %s308
      %s310 = sand.u32 51, %s309
      %s311 = sshrl.u32 %s310, 2
      %s312 = sor.u32 %s310, %s311
      %s313 = sand.u32 15, %s312
      %v314 = vld [vmem:[%s304] sm:%s313]
      %v315 = vunpack.c.l.bf16 %v314
      %v316 = vunpack.c.h.bf16 %v314
      %v317 = vlaneseq
      %v318 = vand.u32 %v317, 127
      %v319 = vadd.s32 %v318, 256
      %vm320 = vcmp.lt.s32.totalorder %v319, 288
      %v321 = vsel %vm320, %v315, %v11
      %s322 = scalar_lea.vmem [#allocation7], 20
      %v323 = vpack.c.bf16 0.0, %v321
      %325 = vst [vmem:[%s322] sm:$0xf] %v323
      %v327 = vld [vmem:[#allocation7] sm:$0xff]
      %v328 = vld [vmem:[#allocation7 + $0x8] sm:$0xf]
      %v329 = vld [vmem:[#allocation7 + $0xc] sm:$0xff]
      %v330 = vld [vmem:[#allocation7 + $0x14] sm:$0xf]
      %v331 = vld [vmem:[%s0] sm:$0xff]
      %v332 = vld [vmem:[%s0 + $0x8] sm:$0xff]
      %v333 = vld [vmem:[%s0 + $0x10] sm:$0xff]
      %v334 = vld [vmem:[%s0 + $0x18] sm:$0xff]
      %v335 = vld [vmem:[%s0 + $0x20] sm:$0xff]
      %v336 = vld [vmem:[%s0 + $0x28] sm:$0xff]
      %v337 = vld [vmem:[%s0 + $0x30] sm:$0xff]
      %v338 = vld [vmem:[%s0 + $0x38] sm:$0xff]
      %v339 = vld [vmem:[%s0 + $0x40] sm:$0xff]
      %v340 = vld [vmem:[%s0 + $0x48] sm:$0xff]
      %v341 = vld [vmem:[%s0 + $0x50] sm:$0xff]
      %v342 = vld [vmem:[%s0 + $0x58] sm:$0xff]
      %v343 = vld [vmem:[%s0 + $0x60] sm:$0xff]
      %v344 = vld [vmem:[%s0 + $0x68] sm:$0xff]
      %v345 = vld [vmem:[%s0 + $0x70] sm:$0xff]
      %v346 = vld [vmem:[%s0 + $0x78] sm:$0xff]
      %v347 = vld [vmem:[%s0 + $0x80] sm:$0xff]
      %v348 = vld [vmem:[%s0 + $0x88] sm:$0xff]
      %v349 = vld [vmem:[%s0 + $0x90] sm:$0xff]
      %v350 = vld [vmem:[%s0 + $0x98] sm:$0xff]
      %v351 = vld [vmem:[%s0 + $0xa0] sm:$0xff]
      %v352 = vld [vmem:[%s0 + $0xa8] sm:$0xff]
      %v353 = vld [vmem:[%s0 + $0xb0] sm:$0xff]
      %v354 = vld [vmem:[%s0 + $0xb8] sm:$0xff]
      %v355 = vld [vmem:[%s1] sm:$0x1]
      %v357 = vlaneseq
      %v358 = vshrl.u32 %v357, 7
      %v359 = vsub.s32 0, %v358
      %v360 = vrot.slane %v355, %v359
      %v366 = vunpack.c.l.b16 %v327
      %v367 = vunpack.c.h.b16 %v327
      %v368 = vunpack.c.l.b16 %v328
      %v369 = vunpack.c.l.b16 %v329
      %v370 = vunpack.c.h.b16 %v329
      %v371 = vunpack.c.l.b16 %v330
      %v372 = vpack.c.b16 %v369, %v366
      %v373 = vpack.c.b16 %v370, %v367
      %v374 = vpack.c.b16 %v371, %v368
      %378 = vmatprep.subr.bf16.mxu0 0
      %379 = vmatpush1.bf16.msra.mxu0 %v331
      %380 = vmatprep.subr.bf16.mxu0 0
      %381 = vmatpush1.bf16.msra.mxu0 %v332
      %382 = vmatprep.subr.bf16.mxu0 0
      %383 = vmatpush1.bf16.msra.mxu0 %v333
      %384 = vmatprep.subr.bf16.mxu0 0
      %385 = vmatpush1.bf16.msra.mxu0 %v334
      %386 = vmatprep.subr.bf16.mxu0 0
      %387 = vmatpush1.bf16.msra.mxu0 %v335
      %388 = vmatprep.subr.bf16.mxu0 0
      %389 = vmatpush1.bf16.msra.mxu0 %v336
      %390 = vmatprep.subr.bf16.mxu0 0
      %391 = vmatpush1.bf16.msra.mxu0 %v337
      %392 = vmatprep.subr.bf16.mxu0 0
      %393 = vmatpush1.bf16.msra.mxu0 %v338
      %394 = vmatprep.subr.bf16.mxu0 0
      %395 = vmatpush1.bf16.msra.mxu0 %v339
      %396 = vmatprep.subr.bf16.mxu0 0
      %397 = vmatpush1.bf16.msra.mxu0 %v340
      %398 = vmatprep.subr.bf16.mxu0 0
      %399 = vmatpush1.bf16.msra.mxu0 %v341
      %400 = vmatprep.subr.bf16.mxu0 0
      %401 = vmatpush1.bf16.msra.mxu0 %v342
      %402 = vmatprep.subr.bf16.mxu0 0
      %403 = vmatpush1.bf16.msra.mxu0 %v343
      %404 = vmatprep.subr.bf16.mxu0 0
      %405 = vmatpush1.bf16.msra.mxu0 %v344
      %406 = vmatprep.subr.bf16.mxu0 0
      %407 = vmatpush1.bf16.msra.mxu0 %v345
      %408 = vmatprep.subr.bf16.mxu0 0
      %409 = vmatpush1.bf16.msra.mxu0 %v346
      %410 = vmatprep.mubr.bf16.mxu0 %v373
      %411 = vmatmul.mubr.bf16.gmra.mrb[0].mxu0 %v372
      %v412 = vpop.f32.mrb[0].mxu0
      %v413 = vadd.f32 %v360, %v412
      %v414 = vpop.f32.mrb[0].mxu0
      %v415 = vpop.f32.mrb[0].mxu0
      %v416 = vadd.f32 %v360, %v415
      %v417 = vpop.f32.mrb[0].mxu0
      %418 = vdwg.mxu0
      %419 = vmatprep.subr.bf16.mxu0 0
      %420 = vmatpush1.bf16.msra.mxu0 %v347
      %421 = vmatprep.subr.bf16.mxu0 0
      %422 = vmatpush1.bf16.msra.mxu0 %v348
      %423 = vmatprep.subr.bf16.mxu0 0
      %424 = vmatpush1.bf16.msra.mxu0 %v349
      %425 = vmatprep.subr.bf16.mxu0 0
      %426 = vmatpush1.bf16.msra.mxu0 %v350
      %427 = vmatprep.subr.bf16.mxu0 0
      %428 = vmatpush1.bf16.msra.mxu0 %v351
      %429 = vmatprep.subr.bf16.mxu0 0
      %430 = vmatpush1.bf16.msra.mxu0 %v352
      %431 = vmatprep.subr.bf16.mxu0 0
      %432 = vmatpush1.bf16.msra.mxu0 %v353
      %433 = vmatprep.subr.bf16.mxu0 0
      %434 = vmatpush1.bf16.msra.mxu0 %v354
      %435 = vmatprep.subr.bf16.mxu0 0
      %436 = vmatpush1.bf16.msra.mxu0 0
      %437 = vmatprep.subr.bf16.mxu0 0
      %438 = vmatpush1.bf16.msra.mxu0 0
      %439 = vmatprep.subr.bf16.mxu0 0
      %440 = vmatpush1.bf16.msra.mxu0 0
      %441 = vmatprep.subr.bf16.mxu0 0
      %442 = vmatpush1.bf16.msra.mxu0 0
      %443 = vmatprep.subr.bf16.mxu0 0
      %444 = vmatpush1.bf16.msra.mxu0 0
      %445 = vmatprep.subr.bf16.mxu0 0
      %446 = vmatpush1.bf16.msra.mxu0 0
      %447 = vmatprep.subr.bf16.mxu0 0
      %448 = vmatpush1.bf16.msra.mxu0 0
      %449 = vmatprep.subr.bf16.mxu0 0
      %450 = vmatpush1.bf16.msra.mxu0 0
      %451 = vmatprep.mubr.bf16.mxu0 0
      %452 = vmatmul.mubr.bf16.gmra.mrb[0].mxu0 %v374
      %v453 = vpop.f32.mrb[0].mxu0
      %v454 = vadd.f32 %v413, %v453
      %v455 = vpop.f32.mrb[0].mxu0
      %v456 = vpop.f32.mrb[0].mxu0
      %v457 = vadd.f32 %v416, %v456
      %v458 = vpop.f32.mrb[0].mxu0
      %459 = vdwg.mxu0
      %v460 = vld [vmem:[%s224] sm:$0xf]
      %v461 = vld [vmem:[%s224 + $0x4] sm:$0xf]
      %v462 = vunpack.c.l.bf16 %v460
      %v463 = vunpack.c.l.bf16 %v461
      %v464 = vadd.f32 %v454, %v462
      %v465 = vadd.f32 %v457, %v463
      %v466 = vmax.f32 %v464, 0.0
      %v467 = vmax.f32 %v465, 0.0
      %v468 = vpack.c.bf16 %v467, %v466
      %v470 = vunpack.c.l.b16 %v468
      %v471 = vunpack.c.h.b16 %v468
      %v472 = vpack.c.b16 %v470, %v470
      %v473 = vpack.c.b16 %v471, %v471
      %476 = vst [vmem:[%s230] sm:$0xf] %v472
      %477 = vst [vmem:[%s230 + $0x4] sm:$0xf] %v473
      %s478 = smul.u32 2, %s21
      %p479 = scmp.lt.s32.totalorder %s478, 3
      %s480 = scalar_select %p479, %s478, 3
      %s481 = smul.addr %s480, 4
      %s482 = scalar_lea.vmem %s5, %s481
      // Predicated region
      $region37: #{_lambda_.25} parent=35 // pred_check
        %p483 = pneg %p133
      $region38: #{_lambda_.25} parent=35 // pred_check_branch
        %485 = sbr.rel (%p483) target = $region40
      $region39: #{_lambda_.25} parent=35 // pred_region
        %s486 = smul.u32 2, %s21
      $region40: #{_lambda_.25} parent=35 // pred_fallthru
        _
    $region36: #{_lambda_.25} parent=5 // pred_fallthru
      _
    %p487 = scmp.le.s32.totalorder 2, %s16
    // Predicated region
    $region41: #{_lambda_.25} parent=5 // pred_check
      %p488 = pneg %p487
    $region42: #{_lambda_.25} parent=5 // pred_check_branch
      %490 = sbr.rel (%p488) target = $region44
    $region43: #{_lambda_.25} parent=5 // pred_region
      %s491 = ssub.s32 %s16, 2
      // Predicated region
      $region45: #{_lambda_.25} parent=43 // pred_check
        %p492 = pneg %p139
      $region46: #{_lambda_.25} parent=43 // pred_check_branch
        %494 = sbr.rel (%p492) target = $region48
      $region47: #{_lambda_.25} parent=43 // pred_region
        %s495 = smul.u32 2, %s22
        %p496 = scmp.lt.s32.totalorder %s495, 3
        %s497 = scalar_select %p496, %s495, 3
        %s498 = smul.addr %s497, 4
        %s499 = scalar_lea.vmem %s5, %s498
      $region48: #{_lambda_.25} parent=43 // pred_fallthru
        _
    $region44: #{_lambda_.25} parent=5 // pred_fallthru
      _
  $region6: #{_lambda_.25} parent=0 // loop_footer
    %s20 = sadd.s32 1, %s16
  $region7: #{_lambda_.25} parent=0 // loop_footer_branch
    %15 = sbr.rel target = $region3
  $region8: #{_lambda_.25} parent=0 // loop_exit
    _

// kernel: _lambda_.24
$region0: #{_lambda_.24}
  #allocation0 [shape = 'u32[]', space=smem, size = 0x4, offset = 0x4, fixed_abs, tag = 'smem constant byte address 0x4 - core index']
  #allocation1 [shape = 'u32[144,128]{1,0:T(1,128)}', space=vmem, size = 0x12000, scoped, tag = 'internal scratch']
  #allocation2 [shape = 'u32[2048]{0}', space=vmem, size = 0x2000, scoped, tag = 'scoped memory for _lambda_.24']
  #allocation3 [shape = 'u32[2048]{0}', space=vmem, size = 0x2000, scoped, tag = 'scoped memory for _lambda_.24']
  #allocation4 [shape = 'u32[2048]{0}', space=vmem, size = 0x2000, scoped, tag = 'scoped memory for _lambda_.24']
  #allocation5 [shape = 'u32[2048]{0}', space=vmem, size = 0x2000, scoped, tag = 'scoped memory for _lambda_.24']
  #allocation6 [shape = 'u32[2048]{0}', space=vmem, size = 0x2000, scoped, tag = 'scoped memory for _lambda_.24']
  %s0 = inlined_call_operand.vmem [shape: bf16[384,256], index: 0, kind: input, shape index: {}]
  %s1 = inlined_call_operand.vmem [shape: f32[1,256], index: 1, kind: input, shape index: {}]
  %s2 = inlined_call_operand.vmem [shape: bf16[32,288], index: 2, kind: input, shape index: {}]
  %s3 = inlined_call_operand.<no memory space> [shape: bf16[], index: 3, kind: input, shape index: {}]
  %s4 = inlined_call_operand.vmem [shape: bf16[32,256], index: 4, kind: output, shape index: {}]
  %s5 = sld [smem:[#allocation0]]
  $region45: #{_lambda_.24} parent=0
    _
  %s7 = ssub.s32 1, %s5
  %s8 = scalar_select 0, %s7, %s5
  %v9 = vstv %s3
  %v10 = vunpack.i.l.bf16 %v9
  %v12 = vunpack.i.h.bf16 %v9
  loop: start=0, step=1, limit=4
  $region2: #{_lambda_.24} parent=0 // loop_pre_header
    _
  $region3: #{_lambda_.24} parent=0 // loop_header
    %s15 = sphi 0, %s19
    %p16 = scmp.ge.s32.totalorder %s15, 4
    %s25 = sphi 0, %s27
    %s28 = sphi 0, %s25
    %s29 = sphi 0, %s28
    %s45 = sphi 0, %s29
    %s49 = sphi 0, %s49
    %s51 = sphi 0, %s49
    %s52 = sphi 0, %s51
    %s66 = sphi 0, %s52
    %s70 = sphi 0, %s70
    %s72 = sphi 0, %s70
    %s73 = sphi 0, %s72
    %s87 = sphi 0, %s73
    %s93 = sphi 0, %s95
    %s96 = sphi 0, %s93
    %s97 = sphi 0, %s96
    %s113 = sphi 0, %s97
  $region4: #{_lambda_.24} parent=0 // loop_header_branch
    %18 = sbr.rel (%p16) target = $region8
  $region5: #{_lambda_.24} parent=0 // loop_body
    %s20 = ssub.s32 %s15, 1
    %s21 = ssub.s32 %s15, 2
    %s22 = sadd.s32 %s15, 1
    %s23 = ssub.s32 %s15, %s22
    %p24 = scmp.eq.s32.totalorder %s23, 0
    %s26 = sadd.s32 %s25, 1
    %s27 = scalar_select %p24, %s25, %s26
    %p30 = pneg %p24
    %p31 = scmp.eq.s32.totalorder %s15, 1
    %p32 = por %p30, %p31
    %p33 = scmp.ne.s32.totalorder %s25, %s28
    %p34 = scmp.eq.s32.totalorder %s15, 0
    %p35 = por %p33, %p34
    %p36 = scmp.ne.s32.totalorder %s25, %s28
    %p37 = scmp.eq.s32.totalorder %s20, 1
    %p38 = por %p36, %p37
    %p39 = scmp.ne.s32.totalorder %s28, %s29
    %p40 = scmp.eq.s32.totalorder %s20, 0
    %p41 = por %p39, %p40
    %p42 = scmp.ne.s32.totalorder %s28, %s29
    %p43 = scmp.eq.s32.totalorder %s21, 1
    %p44 = por %p42, %p43
    %p46 = scmp.ne.s32.totalorder %s29, %s45
    %p47 = scmp.eq.s32.totalorder %s21, 0
    %p48 = por %p46, %p47
    %s50 = sadd.s32 %s49, 1
    %p53 = scmp.eq.s32.totalorder %s15, 1
    %p54 = scmp.ne.s32.totalorder %s49, %s51
    %p55 = scmp.eq.s32.totalorder %s15, 0
    %p56 = por %p54, %p55
    %p57 = scmp.ne.s32.totalorder %s49, %s51
    %p58 = scmp.eq.s32.totalorder %s20, 1
    %p59 = por %p57, %p58
    %p60 = scmp.ne.s32.totalorder %s51, %s52
    %p61 = scmp.eq.s32.totalorder %s20, 0
    %p62 = por %p60, %p61
    %p63 = scmp.ne.s32.totalorder %s51, %s52
    %p64 = scmp.eq.s32.totalorder %s21, 1
    %p65 = por %p63, %p64
    %p67 = scmp.ne.s32.totalorder %s52, %s66
    %p68 = scmp.eq.s32.totalorder %s21, 0
    %p69 = por %p67, %p68
    %s71 = sadd.s32 %s70, 1
    %p74 = scmp.eq.s32.totalorder %s15, 1
    %p75 = scmp.ne.s32.totalorder %s70, %s72
    %p76 = scmp.eq.s32.totalorder %s15, 0
    %p77 = por %p75, %p76
    %p78 = scmp.ne.s32.totalorder %s70, %s72
    %p79 = scmp.eq.s32.totalorder %s20, 1
    %p80 = por %p78, %p79
    %p81 = scmp.ne.s32.totalorder %s72, %s73
    %p82 = scmp.eq.s32.totalorder %s20, 0
    %p83 = por %p81, %p82
    %p84 = scmp.ne.s32.totalorder %s72, %s73
    %p85 = scmp.eq.s32.totalorder %s21, 1
    %p86 = por %p84, %p85
    %p88 = scmp.ne.s32.totalorder %s73, %s87
    %p89 = scmp.eq.s32.totalorder %s21, 0
    %p90 = por %p88, %p89
    %s91 = ssub.s32 %s15, %s22
    %p92 = scmp.eq.s32.totalorder %s91, 0
    %s94 = sadd.s32 %s93, 1
    %s95 = scalar_select %p92, %s93, %s94
    %p98 = pneg %p92
    %p99 = scmp.eq.s32.totalorder %s15, 1
    %p100 = por %p98, %p99
    %p101 = scmp.ne.s32.totalorder %s93, %s96
    %p102 = scmp.eq.s32.totalorder %s15, 0
    %p103 = por %p101, %p102
    %p104 = scmp.ne.s32.totalorder %s93, %s96
    %p105 = scmp.eq.s32.totalorder %s20, 1
    %p106 = por %p104, %p105
    %p107 = scmp.ne.s32.totalorder %s96, %s97
    %p108 = scmp.eq.s32.totalorder %s20, 0
    %p109 = por %p107, %p108
    %p110 = scmp.ne.s32.totalorder %s96, %s97
    %p111 = scmp.eq.s32.totalorder %s21, 1
    %p112 = por %p110, %p111
    %p114 = scmp.ne.s32.totalorder %s97, %s113
    %p115 = scmp.eq.s32.totalorder %s21, 0
    %p116 = por %p114, %p115
    %p117 = scmp.le.s32.totalorder 1, %s15
    %p118 = scmp.lt.s32.totalorder %s15, 3
    %p119 = pnand %p117, %p118
    %p120 = pneg %p119
    // Predicated region
    $region9: #{_lambda_.24} parent=5 // pred_check
      _
    $region10: #{_lambda_.24} parent=5 // pred_check_branch
      %122 = sbr.rel (%p119) target = $region12
    $region11: #{_lambda_.24} parent=5 // pred_region
      %s123 = ssub.s32 %s15, 1
      // Predicated region
      $region13: #{_lambda_.24} parent=11 // pred_check
        %p124 = pneg %p62
      $region14: #{_lambda_.24} parent=11 // pred_check_branch
        %126 = sbr.rel (%p124) target = $region16
      $region15: #{_lambda_.24} parent=11 // pred_region
        _
      $region16: #{_lambda_.24} parent=11 // pred_fallthru
        _
      // Predicated region
      $region17: #{_lambda_.24} parent=11 // pred_check
        %p127 = pneg %p83
      $region18: #{_lambda_.24} parent=11 // pred_check_branch
        %129 = sbr.rel (%p127) target = $region20
      $region19: #{_lambda_.24} parent=11 // pred_region
        _
      $region20: #{_lambda_.24} parent=11 // pred_fallthru
        _
    $region12: #{_lambda_.24} parent=5 // pred_fallthru
      _
    %p130 = scmp.lt.s32.totalorder %s15, 2
    // Predicated region
    $region21: #{_lambda_.24} parent=5 // pred_check
      %p131 = pneg %p130
    $region22: #{_lambda_.24} parent=5 // pred_check_branch
      %133 = sbr.rel (%p131) target = $region24
    $region23: #{_lambda_.24} parent=5 // pred_region
      // Predicated region
      $region25: #{_lambda_.24} parent=23 // pred_check
        %p134 = pneg %p35
      $region26: #{_lambda_.24} parent=23 // pred_check_branch
        %136 = sbr.rel (%p134) target = $region28
      $region27: #{_lambda_.24} parent=23 // pred_region
        %s137 = smul.u32 2, %s15
        %p138 = scmp.lt.s32.totalorder %s137, 3
        %s139 = scalar_select %p138, %s137, 3
        %s140 = smul.addr %s139, 3
        %s141 = smul.addr %s140, 4
        %s142 = scalar_lea.vmem %s2, %s141
        %s143 = smul.u32 2, %s15
      $region28: #{_lambda_.24} parent=23 // pred_fallthru
        _
    $region24: #{_lambda_.24} parent=5 // pred_fallthru
      _
    %p144 = scmp.le.s32.totalorder 1, %s15
    %p145 = scmp.lt.s32.totalorder %s15, 3
    %p146 = pnand %p144, %p145
    %p147 = pneg %p146
    // Predicated region
    $region29: #{_lambda_.24} parent=5 // pred_check
      _
    $region30: #{_lambda_.24} parent=5 // pred_check_branch
      %149 = sbr.rel (%p146) target = $region32
    $region31: #{_lambda_.24} parent=5 // pred_region
      #allocation7 [shape = 'u8[12288]{0}', space=vmem, size = 0x3000, dematerialized = true, scoped, tag = 'FusionAdapter Buffer %fusion.9 = bf16[32,384]{1,0:T(8,128)(2,1)} fusion(%param_2.9, %param_3.6), kind=kLoop, calls=%fused_computation.57.clone, metadata={op_name="jit(<lambda>)/jit(_pad)/pad" stack_frame_id=160}']
      %s150 = ssub.s32 %s15, 1
      %s151 = smul.u32 2, %s20
      %p152 = scmp.lt.s32.totalorder %s151, 3
      %s153 = scalar_select %p152, %s151, 3
      %s154 = smul.addr %s153, 3
      %s155 = smul.addr %s154, 4
      %s156 = scalar_lea.vmem %s2, %s155
      %p157 = pneg %p41
      %p158 = pneg %p38
      %p159 = pneg %p62
      %p160 = pneg %p59
      %p161 = pneg %p83
      %p162 = pneg %p80
      %p163 = pneg %p109
      %p164 = pneg %p106
      %s165 = smul.u32 2, %s20
      %p166 = scmp.lt.s32.totalorder %s165, 3
      %s167 = scalar_select %p166, %s165, 3
      %s168 = smul.addr %s167, 2
      %s169 = smul.addr %s168, 4
      %s170 = scalar_lea.vmem %s4, %s169
      %s171 = smul.u32 2, %s20
      %p172 = scmp.lt.s32.totalorder %s171, 3
      %s173 = scalar_select %p172, %s171, 3
      %s174 = smul.addr %s173, 3
      %s175 = smul.addr %s174, 4
      %s176 = scalar_lea.vmem %s2, %s175
      %s177 = smul.u32 2, %s20
      %s178 = smul.u32 2, %s20
      %p179 = scmp.lt.s32.totalorder %s178, 3
      %s180 = scalar_select %p179, %s178, 3
      %s181 = smul.addr %s180, 2
      %s182 = smul.addr %s181, 4
      %s183 = scalar_lea.vmem %s4, %s182
      %s184 = smul.u32 2, %s20
      %v185 = vld [vmem:[%s176] sm:$0xf]
      %v186 = vunpack.c.l.bf16 %v185
      %v187 = vunpack.c.h.bf16 %v185
      %v188 = vlaneseq
      %v189 = vand.u32 %v188, 127
      %vm191 = vcmp.lt.s32.totalorder %v189, 288
      %v192 = vsel %vm191, %v186, %v10
      %v193 = vpack.c.bf16 0.0, %v192
      %195 = vst [vmem:[#allocation7] sm:$0xf] %v193
      %s196 = scalar_lea.vmem %s176, 4
      %v197 = vld [vmem:[%s196] sm:$0xf]
      %v198 = vunpack.c.l.bf16 %v197
      %v199 = vunpack.c.h.bf16 %v197
      %v200 = vlaneseq
      %v201 = vand.u32 %v200, 127
      %v202 = vadd.s32 %v201, 128
      %vm203 = vcmp.lt.s32.totalorder %v202, 288
      %v204 = vsel %vm203, %v198, %v10
      %s205 = scalar_lea.vmem [#allocation7], 4
      %v206 = vpack.c.bf16 0.0, %v204
      %208 = vst [vmem:[%s205] sm:$0xf] %v206
      %s209 = scalar_lea.vmem %s176, 8
      %s211 = sor.u32 255, 127
      %s212 = sand.u32 %s211, 85
      %s213 = sshrl.u32 %s212, 1
      %s214 = sor.u32 %s212, %s213
      %s215 = sand.u32 51, %s214
      %s216 = sshrl.u32 %s215, 2
      %s217 = sor.u32 %s215, %s216
      %s218 = sand.u32 15, %s217
      %v219 = vld [vmem:[%s209] sm:%s218]
      %v220 = vunpack.c.l.bf16 %v219
      %v221 = vunpack.c.h.bf16 %v219
      %v222 = vlaneseq
      %v223 = vand.u32 %v222, 127
      %v224 = vadd.s32 %v223, 256
      %vm225 = vcmp.lt.s32.totalorder %v224, 288
      %v226 = vsel %vm225, %v220, %v10
      %s227 = scalar_lea.vmem [#allocation7], 8
      %v228 = vpack.c.bf16 0.0, %v226
      %230 = vst [vmem:[%s227] sm:$0xf] %v228
      %s231 = scalar_lea.vmem %s176, 12
      %v232 = vld [vmem:[%s231] sm:$0xf]
      %v233 = vunpack.c.l.bf16 %v232
      %v234 = vunpack.c.h.bf16 %v232
      %v235 = vlaneseq
      %v236 = vand.u32 %v235, 127
      %vm238 = vcmp.lt.s32.totalorder %v236, 288
      %v239 = vsel %vm238, %v233, %v10
      %s240 = scalar_lea.vmem [#allocation7], 12
      %v241 = vpack.c.bf16 0.0, %v239
      %243 = vst [vmem:[%s240] sm:$0xf] %v241
      %s244 = scalar_lea.vmem %s176, 16
      %v245 = vld [vmem:[%s244] sm:$0xf]
      %v246 = vunpack.c.l.bf16 %v245
      %v247 = vunpack.c.h.bf16 %v245
      %v248 = vlaneseq
      %v249 = vand.u32 %v248, 127
      %v250 = vadd.s32 %v249, 128
      %vm251 = vcmp.lt.s32.totalorder %v250, 288
      %v252 = vsel %vm251, %v246, %v10
      %s253 = scalar_lea.vmem [#allocation7], 16
      %v254 = vpack.c.bf16 0.0, %v252
      %256 = vst [vmem:[%s253] sm:$0xf] %v254
      %s257 = scalar_lea.vmem %s176, 20
      %s259 = sor.u32 255, 127
      %s260 = sand.u32 %s259, 85
      %s261 = sshrl.u32 %s260, 1
      %s262 = sor.u32 %s260, %s261
      %s263 = sand.u32 51, %s262
      %s264 = sshrl.u32 %s263, 2
      %s265 = sor.u32 %s263, %s264
      %s266 = sand.u32 15, %s265
      %v267 = vld [vmem:[%s257] sm:%s266]
      %v268 = vunpack.c.l.bf16 %v267
      %v269 = vunpack.c.h.bf16 %v267
      %v270 = vlaneseq
      %v271 = vand.u32 %v270, 127
      %v272 = vadd.s32 %v271, 256
      %vm273 = vcmp.lt.s32.totalorder %v272, 288
      %v274 = vsel %vm273, %v268, %v10
      %s275 = scalar_lea.vmem [#allocation7], 20
      %v276 = vpack.c.bf16 0.0, %v274
      %278 = vst [vmem:[%s275] sm:$0xf] %v276
      %v280 = vld [vmem:[#allocation7] sm:$0xff]
      %v281 = vld [vmem:[#allocation7 + $0x8] sm:$0xf]
      %v282 = vld [vmem:[#allocation7 + $0xc] sm:$0xff]
      %v283 = vld [vmem:[#allocation7 + $0x14] sm:$0xf]
      %v284 = vld [vmem:[%s0] sm:$0xff]
      %v285 = vld [vmem:[%s0 + $0x8] sm:$0xff]
      %v286 = vld [vmem:[%s0 + $0x10] sm:$0xff]
      %v287 = vld [vmem:[%s0 + $0x18] sm:$0xff]
      %v288 = vld [vmem:[%s0 + $0x20] sm:$0xff]
      %v289 = vld [vmem:[%s0 + $0x28] sm:$0xff]
      %v290 = vld [vmem:[%s0 + $0x30] sm:$0xff]
      %v291 = vld [vmem:[%s0 + $0x38] sm:$0xff]
      %v292 = vld [vmem:[%s0 + $0x40] sm:$0xff]
      %v293 = vld [vmem:[%s0 + $0x48] sm:$0xff]
      %v294 = vld [vmem:[%s0 + $0x50] sm:$0xff]
      %v295 = vld [vmem:[%s0 + $0x58] sm:$0xff]
      %v296 = vld [vmem:[%s0 + $0x60] sm:$0xff]
      %v297 = vld [vmem:[%s0 + $0x68] sm:$0xff]
      %v298 = vld [vmem:[%s0 + $0x70] sm:$0xff]
      %v299 = vld [vmem:[%s0 + $0x78] sm:$0xff]
      %v300 = vld [vmem:[%s0 + $0x80] sm:$0xff]
      %v301 = vld [vmem:[%s0 + $0x88] sm:$0xff]
      %v302 = vld [vmem:[%s0 + $0x90] sm:$0xff]
      %v303 = vld [vmem:[%s0 + $0x98] sm:$0xff]
      %v304 = vld [vmem:[%s0 + $0xa0] sm:$0xff]
      %v305 = vld [vmem:[%s0 + $0xa8] sm:$0xff]
      %v306 = vld [vmem:[%s0 + $0xb0] sm:$0xff]
      %v307 = vld [vmem:[%s0 + $0xb8] sm:$0xff]
      %v308 = vld [vmem:[%s0 + $0xc0] sm:$0xff]
      %v309 = vld [vmem:[%s0 + $0xc8] sm:$0xff]
      %v310 = vld [vmem:[%s0 + $0xd0] sm:$0xff]
      %v311 = vld [vmem:[%s0 + $0xd8] sm:$0xff]
      %v312 = vld [vmem:[%s0 + $0xe0] sm:$0xff]
      %v313 = vld [vmem:[%s0 + $0xe8] sm:$0xff]
      %v314 = vld [vmem:[%s0 + $0xf0] sm:$0xff]
      %v315 = vld [vmem:[%s0 + $0xf8] sm:$0xff]
      %v316 = vld [vmem:[%s0 + $0x100] sm:$0xff]
      %v317 = vld [vmem:[%s0 + $0x108] sm:$0xff]
      %v318 = vld [vmem:[%s0 + $0x110] sm:$0xff]
      %v319 = vld [vmem:[%s0 + $0x118] sm:$0xff]
      %v320 = vld [vmem:[%s0 + $0x120] sm:$0xff]
      %v321 = vld [vmem:[%s0 + $0x128] sm:$0xff]
      %v322 = vld [vmem:[%s0 + $0x130] sm:$0xff]
      %v323 = vld [vmem:[%s0 + $0x138] sm:$0xff]
      %v324 = vld [vmem:[%s0 + $0x140] sm:$0xff]
      %v325 = vld [vmem:[%s0 + $0x148] sm:$0xff]
      %v326 = vld [vmem:[%s0 + $0x150] sm:$0xff]
      %v327 = vld [vmem:[%s0 + $0x158] sm:$0xff]
      %v328 = vld [vmem:[%s0 + $0x160] sm:$0xff]
      %v329 = vld [vmem:[%s0 + $0x168] sm:$0xff]
      %v330 = vld [vmem:[%s0 + $0x170] sm:$0xff]
      %v331 = vld [vmem:[%s0 + $0x178] sm:$0xff]
      %v332 = vld [vmem:[%s1] sm:$0x3]
      %v334 = vlaneseq
      %v335 = vshrl.u32 %v334, 7
      %v336 = vsub.s32 0, %v335
      %v337 = vrot.slane %v332, %v336
      %v338 = vlaneseq
      %v339 = vshrl.u32 %v338, 7
      %v340 = vsub.s32 1, %v339
      %v341 = vrot.slane %v332, %v340
      %v348 = vunpack.c.l.b16 %v280
      %v349 = vunpack.c.h.b16 %v280
      %v350 = vunpack.c.l.b16 %v281
      %v351 = vunpack.c.l.b16 %v282
      %v352 = vunpack.c.h.b16 %v282
      %v353 = vunpack.c.l.b16 %v283
      %v354 = vpack.c.b16 %v351, %v348
      %v355 = vpack.c.b16 %v352, %v349
      %v356 = vpack.c.b16 %v353, %v350
      %360 = vmatprep.subr.bf16.mxu0 %v285
      %361 = vmatpush1.bf16.msra.mxu0 %v284
      %362 = vmatprep.subr.bf16.mxu0 %v287
      %363 = vmatpush1.bf16.msra.mxu0 %v286
      %364 = vmatprep.subr.bf16.mxu0 %v289
      %365 = vmatpush1.bf16.msra.mxu0 %v288
      %366 = vmatprep.subr.bf16.mxu0 %v291
      %367 = vmatpush1.bf16.msra.mxu0 %v290
      %368 = vmatprep.subr.bf16.mxu0 %v293
      %369 = vmatpush1.bf16.msra.mxu0 %v292
      %370 = vmatprep.subr.bf16.mxu0 %v295
      %371 = vmatpush1.bf16.msra.mxu0 %v294
      %372 = vmatprep.subr.bf16.mxu0 %v297
      %373 = vmatpush1.bf16.msra.mxu0 %v296
      %374 = vmatprep.subr.bf16.mxu0 %v299
      %375 = vmatpush1.bf16.msra.mxu0 %v298
      %376 = vmatprep.subr.bf16.mxu0 %v301
      %377 = vmatpush1.bf16.msra.mxu0 %v300
      %378 = vmatprep.subr.bf16.mxu0 %v303
      %379 = vmatpush1.bf16.msra.mxu0 %v302
      %380 = vmatprep.subr.bf16.mxu0 %v305
      %381 = vmatpush1.bf16.msra.mxu0 %v304
      %382 = vmatprep.subr.bf16.mxu0 %v307
      %383 = vmatpush1.bf16.msra.mxu0 %v306
      %384 = vmatprep.subr.bf16.mxu0 %v309
      %385 = vmatpush1.bf16.msra.mxu0 %v308
      %386 = vmatprep.subr.bf16.mxu0 %v311
      %387 = vmatpush1.bf16.msra.mxu0 %v310
      %388 = vmatprep.subr.bf16.mxu0 %v313
      %389 = vmatpush1.bf16.msra.mxu0 %v312
      %390 = vmatprep.subr.bf16.mxu0 %v315
      %391 = vmatpush1.bf16.msra.mxu0 %v314
      %392 = vmatprep.mubr.bf16.mxu0 %v355
      %393 = vmatmul.mubr.bf16.gmra.mrb[0].mxu0 %v354
      %v394 = vpop.f32.mrb[0].mxu0
      %v395 = vadd.f32 %v337, %v394
      %v396 = vpop.f32.mrb[0].mxu0
      %v397 = vadd.f32 %v341, %v396
      %v398 = vpop.f32.mrb[0].mxu0
      %v399 = vadd.f32 %v337, %v398
      %v400 = vpop.f32.mrb[0].mxu0
      %v401 = vadd.f32 %v341, %v400
      %402 = vdwg.mxu0
      %403 = vmatprep.subr.bf16.mxu0 %v317
      %404 = vmatpush1.bf16.msra.mxu0 %v316
      %405 = vmatprep.subr.bf16.mxu0 %v319
      %406 = vmatpush1.bf16.msra.mxu0 %v318
      %407 = vmatprep.subr.bf16.mxu0 %v321
      %408 = vmatpush1.bf16.msra.mxu0 %v320
      %409 = vmatprep.subr.bf16.mxu0 %v323
      %410 = vmatpush1.bf16.msra.mxu0 %v322
      %411 = vmatprep.subr.bf16.mxu0 %v325
      %412 = vmatpush1.bf16.msra.mxu0 %v324
      %413 = vmatprep.subr.bf16.mxu0 %v327
      %414 = vmatpush1.bf16.msra.mxu0 %v326
      %415 = vmatprep.subr.bf16.mxu0 %v329
      %416 = vmatpush1.bf16.msra.mxu0 %v328
      %417 = vmatprep.subr.bf16.mxu0 %v331
      %418 = vmatpush1.bf16.msra.mxu0 %v330
      %419 = vmatprep.subr.bf16.mxu0 0
      %420 = vmatpush1.bf16.msra.mxu0 0
      %421 = vmatprep.subr.bf16.mxu0 0
      %422 = vmatpush1.bf16.msra.mxu0 0
      %423 = vmatprep.subr.bf16.mxu0 0
      %424 = vmatpush1.bf16.msra.mxu0 0
      %425 = vmatprep.subr.bf16.mxu0 0
      %426 = vmatpush1.bf16.msra.mxu0 0
      %427 = vmatprep.subr.bf16.mxu0 0
      %428 = vmatpush1.bf16.msra.mxu0 0
      %429 = vmatprep.subr.bf16.mxu0 0
      %430 = vmatpush1.bf16.msra.mxu0 0
      %431 = vmatprep.subr.bf16.mxu0 0
      %432 = vmatpush1.bf16.msra.mxu0 0
      %433 = vmatprep.subr.bf16.mxu0 0
      %434 = vmatpush1.bf16.msra.mxu0 0
      %435 = vmatprep.mubr.bf16.mxu0 0
      %436 = vmatmul.mubr.bf16.gmra.mrb[0].mxu0 %v356
      %v437 = vpop.f32.mrb[0].mxu0
      %v438 = vadd.f32 %v395, %v437
      %v439 = vpop.f32.mrb[0].mxu0
      %v440 = vadd.f32 %v397, %v439
      %v441 = vpop.f32.mrb[0].mxu0
      %v442 = vadd.f32 %v399, %v441
      %v443 = vpop.f32.mrb[0].mxu0
      %v444 = vadd.f32 %v401, %v443
      %445 = vdwg.mxu0
      %v446 = vlaneseq
      %v447 = vand.u32 %v446, 127
      %v448 = vadd.s32 %v447, 128
      %vm449 = vcmp.lt.s32.totalorder %v447, 128
      %vm450 = vcmp.lt.s32.totalorder %v448, 128
      %v451 = vmax.f32 %v438, 0.0
      %v452 = vmax.f32 %v440, 0.0
      %v453 = vmax.f32 %v442, 0.0
      %v454 = vmax.f32 %v444, 0.0
      %v455 = vsel %vm449, %v451, %v438
      %v456 = vsel %vm450, %v452, %v440
      %v457 = vsel %vm449, %v453, %v442
      %v458 = vsel %vm450, %v454, %v444
      %v459 = vpack.c.bf16 %v457, %v455
      %v460 = vpack.c.bf16 %v458, %v456
      %v463 = vunpack.c.l.b16 %v459
      %v464 = vunpack.c.l.b16 %v460
      %v465 = vunpack.c.h.b16 %v459
      %v466 = vunpack.c.h.b16 %v460
      %v467 = vpack.c.b16 %v464, %v463
      %v468 = vpack.c.b16 %v466, %v465
      %471 = vst [vmem:[%s183] sm:$0xff] %v467
      %472 = vst [vmem:[%s183 + $0x8] sm:$0xff] %v468
      %s473 = smul.u32 2, %s20
      %p474 = scmp.lt.s32.totalorder %s473, 3
      %s475 = scalar_select %p474, %s473, 3
      %s476 = smul.addr %s475, 2
      %s477 = smul.addr %s476, 4
      %s478 = scalar_lea.vmem %s4, %s477
      // Predicated region
      $region33: #{_lambda_.24} parent=31 // pred_check
        %p479 = pneg %p106
      $region34: #{_lambda_.24} parent=31 // pred_check_branch
        %481 = sbr.rel (%p479) target = $region36
      $region35: #{_lambda_.24} parent=31 // pred_region
        %s482 = smul.u32 2, %s20
      $region36: #{_lambda_.24} parent=31 // pred_fallthru
        _
    $region32: #{_lambda_.24} parent=5 // pred_fallthru
      _
    %p483 = scmp.le.s32.totalorder 2, %s15
    // Predicated region
    $region37: #{_lambda_.24} parent=5 // pred_check
      %p484 = pneg %p483
    $region38: #{_lambda_.24} parent=5 // pred_check_branch
      %486 = sbr.rel (%p484) target = $region40
    $region39: #{_lambda_.24} parent=5 // pred_region
      %s487 = ssub.s32 %s15, 2
      // Predicated region
      $region41: #{_lambda_.24} parent=39 // pred_check
        %p488 = pneg %p112
      $region42: #{_lambda_.24} parent=39 // pred_check_branch
        %490 = sbr.rel (%p488) target = $region44
      $region43: #{_lambda_.24} parent=39 // pred_region
        %s491 = smul.u32 2, %s21
        %p492 = scmp.lt.s32.totalorder %s491, 3
        %s493 = scalar_select %p492, %s491, 3
        %s494 = smul.addr %s493, 2
        %s495 = smul.addr %s494, 4
        %s496 = scalar_lea.vmem %s4, %s495
      $region44: #{_lambda_.24} parent=39 // pred_fallthru
        _
    $region40: #{_lambda_.24} parent=5 // pred_fallthru
      _
  $region6: #{_lambda_.24} parent=0 // loop_footer
    %s19 = sadd.s32 1, %s15
  $region7: #{_lambda_.24} parent=0 // loop_footer_branch
    %14 = sbr.rel target = $region3
  $region8: #{_lambda_.24} parent=0 // loop_exit
    _

// kernel: _lambda_.21
$region0: #{_lambda_.21}
  #allocation0 [shape = 'u32[]', space=smem, size = 0x4, offset = 0x4, fixed_abs, tag = 'smem constant byte address 0x4 - core index']
  #allocation1 [shape = 'u32[144,128]{1,0:T(1,128)}', space=vmem, size = 0x12000, scoped, tag = 'internal scratch']
  #allocation2 [shape = 'u32[2048]{0}', space=vmem, size = 0x2000, scoped, tag = 'scoped memory for _lambda_.21']
  #allocation3 [shape = 'u32[2048]{0}', space=vmem, size = 0x2000, scoped, tag = 'scoped memory for _lambda_.21']
  #allocation4 [shape = 'u32[2048]{0}', space=vmem, size = 0x2000, scoped, tag = 'scoped memory for _lambda_.21']
  #allocation5 [shape = 'u32[2048]{0}', space=vmem, size = 0x2000, scoped, tag = 'scoped memory for _lambda_.21']
  #allocation6 [shape = 'u32[2048]{0}', space=vmem, size = 0x2000, scoped, tag = 'scoped memory for _lambda_.21']
  %s0 = inlined_call_operand.vmem [shape: bf16[640,128], index: 0, kind: input, shape index: {}]
  %s1 = inlined_call_operand.vmem [shape: f32[1,128], index: 1, kind: input, shape index: {}]
  %s2 = inlined_call_operand.vmem [shape: bf16[32,128], index: 2, kind: input, shape index: {}]
  %s3 = inlined_call_operand.vmem [shape: bf16[32,576], index: 3, kind: input, shape index: {}]
  %s4 = inlined_call_operand.<no memory space> [shape: bf16[], index: 4, kind: input, shape index: {}]
  %s5 = inlined_call_operand.vmem [shape: bf16[32,128], index: 5, kind: output, shape index: {}]
  %s6 = sld [smem:[#allocation0]]
  $region49: #{_lambda_.21} parent=0
    _
  %s8 = ssub.s32 1, %s6
  %s9 = scalar_select 0, %s8, %s6
  %v10 = vstv %s4
  %v11 = vunpack.i.l.bf16 %v10
  %v13 = vunpack.i.h.bf16 %v10
  loop: start=0, step=1, limit=4
  $region2: #{_lambda_.21} parent=0 // loop_pre_header
    _
  $region3: #{_lambda_.21} parent=0 // loop_header
    %s16 = sphi 0, %s20
    %p17 = scmp.ge.s32.totalorder %s16, 4
    %s26 = sphi 0, %s28
    %s29 = sphi 0, %s26
    %s30 = sphi 0, %s29
    %s46 = sphi 0, %s30
    %s50 = sphi 0, %s50
    %s52 = sphi 0, %s50
    %s53 = sphi 0, %s52
    %s67 = sphi 0, %s53
    %s71 = sphi 0, %s71
    %s73 = sphi 0, %s71
    %s74 = sphi 0, %s73
    %s88 = sphi 0, %s74
    %s94 = sphi 0, %s96
    %s97 = sphi 0, %s94
    %s98 = sphi 0, %s97
    %s114 = sphi 0, %s98
    %s120 = sphi 0, %s122
    %s123 = sphi 0, %s120
    %s124 = sphi 0, %s123
    %s140 = sphi 0, %s124
  $region4: #{_lambda_.21} parent=0 // loop_header_branch
    %19 = sbr.rel (%p17) target = $region8
  $region5: #{_lambda_.21} parent=0 // loop_body
    %s21 = ssub.s32 %s16, 1
    %s22 = ssub.s32 %s16, 2
    %s23 = sadd.s32 %s16, 1
    %s24 = ssub.s32 %s16, %s23
    %p25 = scmp.eq.s32.totalorder %s24, 0
    %s27 = sadd.s32 %s26, 1
    %s28 = scalar_select %p25, %s26, %s27
    %p31 = pneg %p25
    %p32 = scmp.eq.s32.totalorder %s16, 1
    %p33 = por %p31, %p32
    %p34 = scmp.ne.s32.totalorder %s26, %s29
    %p35 = scmp.eq.s32.totalorder %s16, 0
    %p36 = por %p34, %p35
    %p37 = scmp.ne.s32.totalorder %s26, %s29
    %p38 = scmp.eq.s32.totalorder %s21, 1
    %p39 = por %p37, %p38
    %p40 = scmp.ne.s32.totalorder %s29, %s30
    %p41 = scmp.eq.s32.totalorder %s21, 0
    %p42 = por %p40, %p41
    %p43 = scmp.ne.s32.totalorder %s29, %s30
    %p44 = scmp.eq.s32.totalorder %s22, 1
    %p45 = por %p43, %p44
    %p47 = scmp.ne.s32.totalorder %s30, %s46
    %p48 = scmp.eq.s32.totalorder %s22, 0
    %p49 = por %p47, %p48
    %s51 = sadd.s32 %s50, 1
    %p54 = scmp.eq.s32.totalorder %s16, 1
    %p55 = scmp.ne.s32.totalorder %s50, %s52
    %p56 = scmp.eq.s32.totalorder %s16, 0
    %p57 = por %p55, %p56
    %p58 = scmp.ne.s32.totalorder %s50, %s52
    %p59 = scmp.eq.s32.totalorder %s21, 1
    %p60 = por %p58, %p59
    %p61 = scmp.ne.s32.totalorder %s52, %s53
    %p62 = scmp.eq.s32.totalorder %s21, 0
    %p63 = por %p61, %p62
    %p64 = scmp.ne.s32.totalorder %s52, %s53
    %p65 = scmp.eq.s32.totalorder %s22, 1
    %p66 = por %p64, %p65
    %p68 = scmp.ne.s32.totalorder %s53, %s67
    %p69 = scmp.eq.s32.totalorder %s22, 0
    %p70 = por %p68, %p69
    %s72 = sadd.s32 %s71, 1
    %p75 = scmp.eq.s32.totalorder %s16, 1
    %p76 = scmp.ne.s32.totalorder %s71, %s73
    %p77 = scmp.eq.s32.totalorder %s16, 0
    %p78 = por %p76, %p77
    %p79 = scmp.ne.s32.totalorder %s71, %s73
    %p80 = scmp.eq.s32.totalorder %s21, 1
    %p81 = por %p79, %p80
    %p82 = scmp.ne.s32.totalorder %s73, %s74
    %p83 = scmp.eq.s32.totalorder %s21, 0
    %p84 = por %p82, %p83
    %p85 = scmp.ne.s32.totalorder %s73, %s74
    %p86 = scmp.eq.s32.totalorder %s22, 1
    %p87 = por %p85, %p86
    %p89 = scmp.ne.s32.totalorder %s74, %s88
    %p90 = scmp.eq.s32.totalorder %s22, 0
    %p91 = por %p89, %p90
    %s92 = ssub.s32 %s16, %s23
    %p93 = scmp.eq.s32.totalorder %s92, 0
    %s95 = sadd.s32 %s94, 1
    %s96 = scalar_select %p93, %s94, %s95
    %p99 = pneg %p93
    %p100 = scmp.eq.s32.totalorder %s16, 1
    %p101 = por %p99, %p100
    %p102 = scmp.ne.s32.totalorder %s94, %s97
    %p103 = scmp.eq.s32.totalorder %s16, 0
    %p104 = por %p102, %p103
    %p105 = scmp.ne.s32.totalorder %s94, %s97
    %p106 = scmp.eq.s32.totalorder %s21, 1
    %p107 = por %p105, %p106
    %p108 = scmp.ne.s32.totalorder %s97, %s98
    %p109 = scmp.eq.s32.totalorder %s21, 0
    %p110 = por %p108, %p109
    %p111 = scmp.ne.s32.totalorder %s97, %s98
    %p112 = scmp.eq.s32.totalorder %s22, 1
    %p113 = por %p111, %p112
    %p115 = scmp.ne.s32.totalorder %s98, %s114
    %p116 = scmp.eq.s32.totalorder %s22, 0
    %p117 = por %p115, %p116
    %s118 = ssub.s32 %s16, %s23
    %p119 = scmp.eq.s32.totalorder %s118, 0
    %s121 = sadd.s32 %s120, 1
    %s122 = scalar_select %p119, %s120, %s121
    %p125 = pneg %p119
    %p126 = scmp.eq.s32.totalorder %s16, 1
    %p127 = por %p125, %p126
    %p128 = scmp.ne.s32.totalorder %s120, %s123
    %p129 = scmp.eq.s32.totalorder %s16, 0
    %p130 = por %p128, %p129
    %p131 = scmp.ne.s32.totalorder %s120, %s123
    %p132 = scmp.eq.s32.totalorder %s21, 1
    %p133 = por %p131, %p132
    %p134 = scmp.ne.s32.totalorder %s123, %s124
    %p135 = scmp.eq.s32.totalorder %s21, 0
    %p136 = por %p134, %p135
    %p137 = scmp.ne.s32.totalorder %s123, %s124
    %p138 = scmp.eq.s32.totalorder %s22, 1
    %p139 = por %p137, %p138
    %p141 = scmp.ne.s32.totalorder %s124, %s140
    %p142 = scmp.eq.s32.totalorder %s22, 0
    %p143 = por %p141, %p142
    %p144 = scmp.le.s32.totalorder 1, %s16
    %p145 = scmp.lt.s32.totalorder %s16, 3
    %p146 = pnand %p144, %p145
    %p147 = pneg %p146
    // Predicated region
    $region9: #{_lambda_.21} parent=5 // pred_check
      _
    $region10: #{_lambda_.21} parent=5 // pred_check_branch
      %149 = sbr.rel (%p146) target = $region12
    $region11: #{_lambda_.21} parent=5 // pred_region
      %s150 = ssub.s32 %s16, 1
      // Predicated region
      $region13: #{_lambda_.21} parent=11 // pred_check
        %p151 = pneg %p63
      $region14: #{_lambda_.21} parent=11 // pred_check_branch
        %153 = sbr.rel (%p151) target = $region16
      $region15: #{_lambda_.21} parent=11 // pred_region
        _
      $region16: #{_lambda_.21} parent=11 // pred_fallthru
        _
      // Predicated region
      $region17: #{_lambda_.21} parent=11 // pred_check
        %p154 = pneg %p84
      $region18: #{_lambda_.21} parent=11 // pred_check_branch
        %156 = sbr.rel (%p154) target = $region20
      $region19: #{_lambda_.21} parent=11 // pred_region
        _
      $region20: #{_lambda_.21} parent=11 // pred_fallthru
        _
    $region12: #{_lambda_.21} parent=5 // pred_fallthru
      _
    %p157 = scmp.lt.s32.totalorder %s16, 2
    // Predicated region
    $region21: #{_lambda_.21} parent=5 // pred_check
      %p158 = pneg %p157
    $region22: #{_lambda_.21} parent=5 // pred_check_branch
      %160 = sbr.rel (%p158) target = $region24
    $region23: #{_lambda_.21} parent=5 // pred_region
      // Predicated region
      $region25: #{_lambda_.21} parent=23 // pred_check
        %p161 = pneg %p36
      $region26: #{_lambda_.21} parent=23 // pred_check_branch
        %163 = sbr.rel (%p161) target = $region28
      $region27: #{_lambda_.21} parent=23 // pred_region
        %s164 = smul.u32 2, %s16
        %p165 = scmp.lt.s32.totalorder %s164, 3
        %s166 = scalar_select %p165, %s164, 3
        %s167 = smul.addr %s166, 5
        %s168 = smul.addr %s167, 4
        %s169 = scalar_lea.vmem %s3, %s168
        %s170 = smul.u32 2, %s16
      $region28: #{_lambda_.21} parent=23 // pred_fallthru
        _
      // Predicated region
      $region29: #{_lambda_.21} parent=23 // pred_check
        %p171 = pneg %p104
      $region30: #{_lambda_.21} parent=23 // pred_check_branch
        %173 = sbr.rel (%p171) target = $region32
      $region31: #{_lambda_.21} parent=23 // pred_region
        %s174 = smul.u32 2, %s16
        %p175 = scmp.lt.s32.totalorder %s174, 3
        %s176 = scalar_select %p175, %s174, 3
        %s177 = smul.addr %s176, 4
        %s178 = scalar_lea.vmem %s2, %s177
        %s179 = smul.u32 2, %s16
      $region32: #{_lambda_.21} parent=23 // pred_fallthru
        _
    $region24: #{_lambda_.21} parent=5 // pred_fallthru
      _
    %p180 = scmp.le.s32.totalorder 1, %s16
    %p181 = scmp.lt.s32.totalorder %s16, 3
    %p182 = pnand %p180, %p181
    %p183 = pneg %p182
    // Predicated region
    $region33: #{_lambda_.21} parent=5 // pred_check
      _
    $region34: #{_lambda_.21} parent=5 // pred_check_branch
      %185 = sbr.rel (%p182) target = $region36
    $region35: #{_lambda_.21} parent=5 // pred_region
      #allocation7 [shape = 'u8[20480]{0}', space=vmem, size = 0x5000, dematerialized = true, scoped, tag = 'FusionAdapter Buffer %fusion.3 = bf16[32,640]{1,0:T(8,128)(2,1)} fusion(%param_3.2, %param_4), kind=kLoop, calls=%fused_computation.51.clone, metadata={op_name="jit(<lambda>)/jit(_pad)/pad" stack_frame_id=180}']
      %s186 = ssub.s32 %s16, 1
      %s187 = smul.u32 2, %s21
      %p188 = scmp.lt.s32.totalorder %s187, 3
      %s189 = scalar_select %p188, %s187, 3
      %s190 = smul.addr %s189, 5
      %s191 = smul.addr %s190, 4
      %s192 = scalar_lea.vmem %s3, %s191
      %p193 = pneg %p42
      %p194 = pneg %p39
      %p195 = pneg %p63
      %p196 = pneg %p60
      %p197 = pneg %p84
      %p198 = pneg %p81
      %s199 = smul.u32 2, %s21
      %p200 = scmp.lt.s32.totalorder %s199, 3
      %s201 = scalar_select %p200, %s199, 3
      %s202 = smul.addr %s201, 4
      %s203 = scalar_lea.vmem %s2, %s202
      %p204 = pneg %p110
      %p205 = pneg %p107
      %p206 = pneg %p136
      %p207 = pneg %p133
      %s208 = smul.u32 2, %s21
      %p209 = scmp.lt.s32.totalorder %s208, 3
      %s210 = scalar_select %p209, %s208, 3
      %s211 = smul.addr %s210, 4
      %s212 = scalar_lea.vmem %s5, %s211
      %s213 = smul.u32 2, %s21
      %p214 = scmp.lt.s32.totalorder %s213, 3
      %s215 = scalar_select %p214, %s213, 3
      %s216 = smul.addr %s215, 5
      %s217 = smul.addr %s216, 4
      %s218 = scalar_lea.vmem %s3, %s217
      %s219 = smul.u32 2, %s21
      %s220 = smul.u32 2, %s21
      %p221 = scmp.lt.s32.totalorder %s220, 3
      %s222 = scalar_select %p221, %s220, 3
      %s223 = smul.addr %s222, 4
      %s224 = scalar_lea.vmem %s2, %s223
      %s225 = smul.u32 2, %s21
      %s226 = smul.u32 2, %s21
      %p227 = scmp.lt.s32.totalorder %s226, 3
      %s228 = scalar_select %p227, %s226, 3
      %s229 = smul.addr %s228, 4
      %s230 = scalar_lea.vmem %s5, %s229
      %s231 = smul.u32 2, %s21
      %v232 = vld [vmem:[%s218] sm:$0xf]
      %v233 = vunpack.c.l.bf16 %v232
      %v234 = vunpack.c.h.bf16 %v232
      %v235 = vlaneseq
      %v236 = vand.u32 %v235, 127
      %vm238 = vcmp.lt.s32.totalorder %v236, 576
      %v239 = vsel %vm238, %v233, %v11
      %v240 = vpack.c.bf16 0.0, %v239
      %242 = vst [vmem:[#allocation7] sm:$0xf] %v240
      %s243 = scalar_lea.vmem %s218, 4
      %v244 = vld [vmem:[%s243] sm:$0xf]
      %v245 = vunpack.c.l.bf16 %v244
      %v246 = vunpack.c.h.bf16 %v244
      %v247 = vlaneseq
      %v248 = vand.u32 %v247, 127
      %v249 = vadd.s32 %v248, 128
      %vm250 = vcmp.lt.s32.totalorder %v249, 576
      %v251 = vsel %vm250, %v245, %v11
      %s252 = scalar_lea.vmem [#allocation7], 4
      %v253 = vpack.c.bf16 0.0, %v251
      %255 = vst [vmem:[%s252] sm:$0xf] %v253
      %s256 = scalar_lea.vmem %s218, 8
      %v257 = vld [vmem:[%s256] sm:$0xf]
      %v258 = vunpack.c.l.bf16 %v257
      %v259 = vunpack.c.h.bf16 %v257
      %v260 = vlaneseq
      %v261 = vand.u32 %v260, 127
      %v262 = vadd.s32 %v261, 256
      %vm263 = vcmp.lt.s32.totalorder %v262, 576
      %v264 = vsel %vm263, %v258, %v11
      %s265 = scalar_lea.vmem [#allocation7], 8
      %v266 = vpack.c.bf16 0.0, %v264
      %268 = vst [vmem:[%s265] sm:$0xf] %v266
      %s269 = scalar_lea.vmem %s218, 12
      %v270 = vld [vmem:[%s269] sm:$0xf]
      %v271 = vunpack.c.l.bf16 %v270
      %v272 = vunpack.c.h.bf16 %v270
      %v273 = vlaneseq
      %v274 = vand.u32 %v273, 127
      %v275 = vadd.s32 %v274, 384
      %vm276 = vcmp.lt.s32.totalorder %v275, 576
      %v277 = vsel %vm276, %v271, %v11
      %s278 = scalar_lea.vmem [#allocation7], 12
      %v279 = vpack.c.bf16 0.0, %v277
      %281 = vst [vmem:[%s278] sm:$0xf] %v279
      %s282 = scalar_lea.vmem %s218, 16
      %s284 = sor.u32 255, 127
      %s285 = sand.u32 %s284, 85
      %s286 = sshrl.u32 %s285, 1
      %s287 = sor.u32 %s285, %s286
      %s288 = sand.u32 51, %s287
      %s289 = sshrl.u32 %s288, 2
      %s290 = sor.u32 %s288, %s289
      %s291 = sand.u32 15, %s290
      %v292 = vld [vmem:[%s282] sm:%s291]
      %v293 = vunpack.c.l.bf16 %v292
      %v294 = vunpack.c.h.bf16 %v292
      %v295 = vlaneseq
      %v296 = vand.u32 %v295, 127
      %v297 = vadd.s32 %v296, 512
      %vm298 = vcmp.lt.s32.totalorder %v297, 576
      %v299 = vsel %vm298, %v293, %v11
      %s300 = scalar_lea.vmem [#allocation7], 16
      %v301 = vpack.c.bf16 0.0, %v299
      %303 = vst [vmem:[%s300] sm:$0xf] %v301
      %s304 = scalar_lea.vmem %s218, 20
      %v305 = vld [vmem:[%s304] sm:$0xf]
      %v306 = vunpack.c.l.bf16 %v305
      %v307 = vunpack.c.h.bf16 %v305
      %v308 = vlaneseq
      %v309 = vand.u32 %v308, 127
      %vm311 = vcmp.lt.s32.totalorder %v309, 576
      %v312 = vsel %vm311, %v306, %v11
      %s313 = scalar_lea.vmem [#allocation7], 20
      %v314 = vpack.c.bf16 0.0, %v312
      %316 = vst [vmem:[%s313] sm:$0xf] %v314
      %s317 = scalar_lea.vmem %s218, 24
      %v318 = vld [vmem:[%s317] sm:$0xf]
      %v319 = vunpack.c.l.bf16 %v318
      %v320 = vunpack.c.h.bf16 %v318
      %v321 = vlaneseq
      %v322 = vand.u32 %v321, 127
      %v323 = vadd.s32 %v322, 128
      %vm324 = vcmp.lt.s32.totalorder %v323, 576
      %v325 = vsel %vm324, %v319, %v11
      %s326 = scalar_lea.vmem [#allocation7], 24
      %v327 = vpack.c.bf16 0.0, %v325
      %329 = vst [vmem:[%s326] sm:$0xf] %v327
      %s330 = scalar_lea.vmem %s218, 28
      %v331 = vld [vmem:[%s330] sm:$0xf]
      %v332 = vunpack.c.l.bf16 %v331
      %v333 = vunpack.c.h.bf16 %v331
      %v334 = vlaneseq
      %v335 = vand.u32 %v334, 127
      %v336 = vadd.s32 %v335, 256
      %vm337 = vcmp.lt.s32.totalorder %v336, 576
      %v338 = vsel %vm337, %v332, %v11
      %s339 = scalar_lea.vmem [#allocation7], 28
      %v340 = vpack.c.bf16 0.0, %v338
      %342 = vst [vmem:[%s339] sm:$0xf] %v340
      %s343 = scalar_lea.vmem %s218, 32
      %v344 = vld [vmem:[%s343] sm:$0xf]
      %v345 = vunpack.c.l.bf16 %v344
      %v346 = vunpack.c.h.bf16 %v344
      %v347 = vlaneseq
      %v348 = vand.u32 %v347, 127
      %v349 = vadd.s32 %v348, 384
      %vm350 = vcmp.lt.s32.totalorder %v349, 576
      %v351 = vsel %vm350, %v345, %v11
      %s352 = scalar_lea.vmem [#allocation7], 32
      %v353 = vpack.c.bf16 0.0, %v351
      %355 = vst [vmem:[%s352] sm:$0xf] %v353
      %s356 = scalar_lea.vmem %s218, 36
      %s358 = sor.u32 255, 127
      %s359 = sand.u32 %s358, 85
      %s360 = sshrl.u32 %s359, 1
      %s361 = sor.u32 %s359, %s360
      %s362 = sand.u32 51, %s361
      %s363 = sshrl.u32 %s362, 2
      %s364 = sor.u32 %s362, %s363
      %s365 = sand.u32 15, %s364
      %v366 = vld [vmem:[%s356] sm:%s365]
      %v367 = vunpack.c.l.bf16 %v366
      %v368 = vunpack.c.h.bf16 %v366
      %v369 = vlaneseq
      %v370 = vand.u32 %v369, 127
      %v371 = vadd.s32 %v370, 512
      %vm372 = vcmp.lt.s32.totalorder %v371, 576
      %v373 = vsel %vm372, %v367, %v11
      %s374 = scalar_lea.vmem [#allocation7], 36
      %v375 = vpack.c.bf16 0.0, %v373
      %377 = vst [vmem:[%s374] sm:$0xf] %v375
      %v379 = vld [vmem:[#allocation7] sm:$0xff]
      %v380 = vld [vmem:[#allocation7 + $0x8] sm:$0xff]
      %v381 = vld [vmem:[#allocation7 + $0x10] sm:$0xf]
      %v382 = vld [vmem:[#allocation7 + $0x14] sm:$0xff]
      %v383 = vld [vmem:[#allocation7 + $0x1c] sm:$0xff]
      %v384 = vld [vmem:[#allocation7 + $0x24] sm:$0xf]
      %v385 = vld [vmem:[%s0] sm:$0xff]
      %v386 = vld [vmem:[%s0 + $0x8] sm:$0xff]
      %v387 = vld [vmem:[%s0 + $0x10] sm:$0xff]
      %v388 = vld [vmem:[%s0 + $0x18] sm:$0xff]
      %v389 = vld [vmem:[%s0 + $0x20] sm:$0xff]
      %v390 = vld [vmem:[%s0 + $0x28] sm:$0xff]
      %v391 = vld [vmem:[%s0 + $0x30] sm:$0xff]
      %v392 = vld [vmem:[%s0 + $0x38] sm:$0xff]
      %v393 = vld [vmem:[%s0 + $0x40] sm:$0xff]
      %v394 = vld [vmem:[%s0 + $0x48] sm:$0xff]
      %v395 = vld [vmem:[%s0 + $0x50] sm:$0xff]
      %v396 = vld [vmem:[%s0 + $0x58] sm:$0xff]
      %v397 = vld [vmem:[%s0 + $0x60] sm:$0xff]
      %v398 = vld [vmem:[%s0 + $0x68] sm:$0xff]
      %v399 = vld [vmem:[%s0 + $0x70] sm:$0xff]
      %v400 = vld [vmem:[%s0 + $0x78] sm:$0xff]
      %v401 = vld [vmem:[%s0 + $0x80] sm:$0xff]
      %v402 = vld [vmem:[%s0 + $0x88] sm:$0xff]
      %v403 = vld [vmem:[%s0 + $0x90] sm:$0xff]
      %v404 = vld [vmem:[%s0 + $0x98] sm:$0xff]
      %v405 = vld [vmem:[%s0 + $0xa0] sm:$0xff]
      %v406 = vld [vmem:[%s0 + $0xa8] sm:$0xff]
      %v407 = vld [vmem:[%s0 + $0xb0] sm:$0xff]
      %v408 = vld [vmem:[%s0 + $0xb8] sm:$0xff]
      %v409 = vld [vmem:[%s0 + $0xc0] sm:$0xff]
      %v410 = vld [vmem:[%s0 + $0xc8] sm:$0xff]
      %v411 = vld [vmem:[%s0 + $0xd0] sm:$0xff]
      %v412 = vld [vmem:[%s0 + $0xd8] sm:$0xff]
      %v413 = vld [vmem:[%s0 + $0xe0] sm:$0xff]
      %v414 = vld [vmem:[%s0 + $0xe8] sm:$0xff]
      %v415 = vld [vmem:[%s0 + $0xf0] sm:$0xff]
      %v416 = vld [vmem:[%s0 + $0xf8] sm:$0xff]
      %v417 = vld [vmem:[%s0 + $0x100] sm:$0xff]
      %v418 = vld [vmem:[%s0 + $0x108] sm:$0xff]
      %v419 = vld [vmem:[%s0 + $0x110] sm:$0xff]
      %v420 = vld [vmem:[%s0 + $0x118] sm:$0xff]
      %v421 = vld [vmem:[%s0 + $0x120] sm:$0xff]
      %v422 = vld [vmem:[%s0 + $0x128] sm:$0xff]
      %v423 = vld [vmem:[%s0 + $0x130] sm:$0xff]
      %v424 = vld [vmem:[%s0 + $0x138] sm:$0xff]
      %v425 = vld [vmem:[%s1] sm:$0x1]
      %v427 = vlaneseq
      %v428 = vshrl.u32 %v427, 7
      %v429 = vsub.s32 0, %v428
      %v430 = vrot.slane %v425, %v429
      %v438 = vunpack.c.l.b16 %v379
      %v439 = vunpack.c.h.b16 %v379
      %v440 = vunpack.c.l.b16 %v380
      %v441 = vunpack.c.h.b16 %v380
      %v442 = vunpack.c.l.b16 %v381
      %v443 = vunpack.c.l.b16 %v382
      %v444 = vunpack.c.h.b16 %v382
      %v445 = vunpack.c.l.b16 %v383
      %v446 = vunpack.c.h.b16 %v383
      %v447 = vunpack.c.l.b16 %v384
      %v448 = vpack.c.b16 %v443, %v438
      %v449 = vpack.c.b16 %v444, %v439
      %v450 = vpack.c.b16 %v445, %v440
      %v451 = vpack.c.b16 %v446, %v441
      %v452 = vpack.c.b16 %v447, %v442
      %458 = vmatprep.subr.bf16.mxu0 0
      %459 = vmatpush1.bf16.msra.mxu0 %v385
      %460 = vmatprep.subr.bf16.mxu0 0
      %461 = vmatpush1.bf16.msra.mxu0 %v386
      %462 = vmatprep.subr.bf16.mxu0 0
      %463 = vmatpush1.bf16.msra.mxu0 %v387
      %464 = vmatprep.subr.bf16.mxu0 0
      %465 = vmatpush1.bf16.msra.mxu0 %v388
      %466 = vmatprep.subr.bf16.mxu0 0
      %467 = vmatpush1.bf16.msra.mxu0 %v389
      %468 = vmatprep.subr.bf16.mxu0 0
      %469 = vmatpush1.bf16.msra.mxu0 %v390
      %470 = vmatprep.subr.bf16.mxu0 0
      %471 = vmatpush1.bf16.msra.mxu0 %v391
      %472 = vmatprep.subr.bf16.mxu0 0
      %473 = vmatpush1.bf16.msra.mxu0 %v392
      %474 = vmatprep.subr.bf16.mxu0 0
      %475 = vmatpush1.bf16.msra.mxu0 %v393
      %476 = vmatprep.subr.bf16.mxu0 0
      %477 = vmatpush1.bf16.msra.mxu0 %v394
      %478 = vmatprep.subr.bf16.mxu0 0
      %479 = vmatpush1.bf16.msra.mxu0 %v395
      %480 = vmatprep.subr.bf16.mxu0 0
      %481 = vmatpush1.bf16.msra.mxu0 %v396
      %482 = vmatprep.subr.bf16.mxu0 0
      %483 = vmatpush1.bf16.msra.mxu0 %v397
      %484 = vmatprep.subr.bf16.mxu0 0
      %485 = vmatpush1.bf16.msra.mxu0 %v398
      %486 = vmatprep.subr.bf16.mxu0 0
      %487 = vmatpush1.bf16.msra.mxu0 %v399
      %488 = vmatprep.subr.bf16.mxu0 0
      %489 = vmatpush1.bf16.msra.mxu0 %v400
      %490 = vmatprep.mubr.bf16.mxu0 %v449
      %491 = vmatmul.mubr.bf16.gmra.mrb[0].mxu0 %v448
      %v492 = vpop.f32.mrb[0].mxu0
      %v493 = vadd.f32 %v430, %v492
      %v494 = vpop.f32.mrb[0].mxu0
      %v495 = vpop.f32.mrb[0].mxu0
      %v496 = vadd.f32 %v430, %v495
      %v497 = vpop.f32.mrb[0].mxu0
      %498 = vdwg.mxu0
      %499 = vmatprep.subr.bf16.mxu0 0
      %500 = vmatpush1.bf16.msra.mxu0 %v401
      %501 = vmatprep.subr.bf16.mxu0 0
      %502 = vmatpush1.bf16.msra.mxu0 %v402
      %503 = vmatprep.subr.bf16.mxu0 0
      %504 = vmatpush1.bf16.msra.mxu0 %v403
      %505 = vmatprep.subr.bf16.mxu0 0
      %506 = vmatpush1.bf16.msra.mxu0 %v404
      %507 = vmatprep.subr.bf16.mxu0 0
      %508 = vmatpush1.bf16.msra.mxu0 %v405
      %509 = vmatprep.subr.bf16.mxu0 0
      %510 = vmatpush1.bf16.msra.mxu0 %v406
      %511 = vmatprep.subr.bf16.mxu0 0
      %512 = vmatpush1.bf16.msra.mxu0 %v407
      %513 = vmatprep.subr.bf16.mxu0 0
      %514 = vmatpush1.bf16.msra.mxu0 %v408
      %515 = vmatprep.subr.bf16.mxu0 0
      %516 = vmatpush1.bf16.msra.mxu0 %v409
      %517 = vmatprep.subr.bf16.mxu0 0
      %518 = vmatpush1.bf16.msra.mxu0 %v410
      %519 = vmatprep.subr.bf16.mxu0 0
      %520 = vmatpush1.bf16.msra.mxu0 %v411
      %521 = vmatprep.subr.bf16.mxu0 0
      %522 = vmatpush1.bf16.msra.mxu0 %v412
      %523 = vmatprep.subr.bf16.mxu0 0
      %524 = vmatpush1.bf16.msra.mxu0 %v413
      %525 = vmatprep.subr.bf16.mxu0 0
      %526 = vmatpush1.bf16.msra.mxu0 %v414
      %527 = vmatprep.subr.bf16.mxu0 0
      %528 = vmatpush1.bf16.msra.mxu0 %v415
      %529 = vmatprep.subr.bf16.mxu0 0
      %530 = vmatpush1.bf16.msra.mxu0 %v416
      %531 = vmatprep.mubr.bf16.mxu0 %v451
      %532 = vmatmul.mubr.bf16.gmra.mrb[0].mxu0 %v450
      %v533 = vpop.f32.mrb[0].mxu0
      %v534 = vadd.f32 %v493, %v533
      %v535 = vpop.f32.mrb[0].mxu0
      %v536 = vpop.f32.mrb[0].mxu0
      %v537 = vadd.f32 %v496, %v536
      %v538 = vpop.f32.mrb[0].mxu0
      %539 = vdwg.mxu0
      %540 = vmatprep.subr.bf16.mxu0 0
      %541 = vmatpush1.bf16.msra.mxu0 %v417
      %542 = vmatprep.subr.bf16.mxu0 0
      %543 = vmatpush1.bf16.msra.mxu0 %v418
      %544 = vmatprep.subr.bf16.mxu0 0
      %545 = vmatpush1.bf16.msra.mxu0 %v419
      %546 = vmatprep.subr.bf16.mxu0 0
      %547 = vmatpush1.bf16.msra.mxu0 %v420
      %548 = vmatprep.subr.bf16.mxu0 0
      %549 = vmatpush1.bf16.msra.mxu0 %v421
      %550 = vmatprep.subr.bf16.mxu0 0
      %551 = vmatpush1.bf16.msra.mxu0 %v422
      %552 = vmatprep.subr.bf16.mxu0 0
      %553 = vmatpush1.bf16.msra.mxu0 %v423
      %554 = vmatprep.subr.bf16.mxu0 0
      %555 = vmatpush1.bf16.msra.mxu0 %v424
      %556 = vmatprep.subr.bf16.mxu0 0
      %557 = vmatpush1.bf16.msra.mxu0 0
      %558 = vmatprep.subr.bf16.mxu0 0
      %559 = vmatpush1.bf16.msra.mxu0 0
      %560 = vmatprep.subr.bf16.mxu0 0
      %561 = vmatpush1.bf16.msra.mxu0 0
      %562 = vmatprep.subr.bf16.mxu0 0
      %563 = vmatpush1.bf16.msra.mxu0 0
      %564 = vmatprep.subr.bf16.mxu0 0
      %565 = vmatpush1.bf16.msra.mxu0 0
      %566 = vmatprep.subr.bf16.mxu0 0
      %567 = vmatpush1.bf16.msra.mxu0 0
      %568 = vmatprep.subr.bf16.mxu0 0
      %569 = vmatpush1.bf16.msra.mxu0 0
      %570 = vmatprep.subr.bf16.mxu0 0
      %571 = vmatpush1.bf16.msra.mxu0 0
      %572 = vmatprep.mubr.bf16.mxu0 0
      %573 = vmatmul.mubr.bf16.gmra.mrb[0].mxu0 %v452
      %v574 = vpop.f32.mrb[0].mxu0
      %v575 = vadd.f32 %v534, %v574
      %v576 = vpop.f32.mrb[0].mxu0
      %v577 = vpop.f32.mrb[0].mxu0
      %v578 = vadd.f32 %v537, %v577
      %v579 = vpop.f32.mrb[0].mxu0
      %580 = vdwg.mxu0
      %v581 = vld [vmem:[%s224] sm:$0xf]
      %v582 = vld [vmem:[%s224 + $0x4] sm:$0xf]
      %v583 = vunpack.c.l.bf16 %v581
      %v584 = vunpack.c.l.bf16 %v582
      %v585 = vadd.f32 %v575, %v583
      %v586 = vadd.f32 %v578, %v584
      %v587 = vmax.f32 %v585, 0.0
      %v588 = vmax.f32 %v586, 0.0
      %v589 = vpack.c.bf16 %v588, %v587
      %v591 = vunpack.c.l.b16 %v589
      %v592 = vunpack.c.h.b16 %v589
      %v593 = vpack.c.b16 %v591, %v591
      %v594 = vpack.c.b16 %v592, %v592
      %597 = vst [vmem:[%s230] sm:$0xf] %v593
      %598 = vst [vmem:[%s230 + $0x4] sm:$0xf] %v594
      %s599 = smul.u32 2, %s21
      %p600 = scmp.lt.s32.totalorder %s599, 3
      %s601 = scalar_select %p600, %s599, 3
      %s602 = smul.addr %s601, 4
      %s603 = scalar_lea.vmem %s5, %s602
      // Predicated region
      $region37: #{_lambda_.21} parent=35 // pred_check
        %p604 = pneg %p133
      $region38: #{_lambda_.21} parent=35 // pred_check_branch
        %606 = sbr.rel (%p604) target = $region40
      $region39: #{_lambda_.21} parent=35 // pred_region
        %s607 = smul.u32 2, %s21
      $region40: #{_lambda_.21} parent=35 // pred_fallthru
        _
    $region36: #{_lambda_.21} parent=5 // pred_fallthru
      _
    %p608 = scmp.le.s32.totalorder 2, %s16
    // Predicated region
    $region41: #{_lambda_.21} parent=5 // pred_check
      %p609 = pneg %p608
    $region42: #{_lambda_.21} parent=5 // pred_check_branch
      %611 = sbr.rel (%p609) target = $region44
    $region43: #{_lambda_.21} parent=5 // pred_region
      %s612 = ssub.s32 %s16, 2
      // Predicated region
      $region45: #{_lambda_.21} parent=43 // pred_check
        %p613 = pneg %p139
      $region46: #{_lambda_.21} parent=43 // pred_check_branch
        %615 = sbr.rel (%p613) target = $region48
      $region47: #{_lambda_.21} parent=43 // pred_region
        %s616 = smul.u32 2, %s22
        %p617 = scmp.lt.s32.totalorder %s616, 3
        %s618 = scalar_select %p617, %s616, 3
        %s619 = smul.addr %s618, 4
        %s620 = scalar_lea.vmem %s5, %s619
      $region48: #{_lambda_.21} parent=43 // pred_fallthru
        _
    $region44: #{_lambda_.21} parent=5 // pred_fallthru
      _
  $region6: #{_lambda_.21} parent=0 // loop_footer
    %s20 = sadd.s32 1, %s16
  $region7: #{_lambda_.21} parent=0 // loop_footer_branch
    %15 = sbr.rel target = $region3
  $region8: #{_lambda_.21} parent=0 // loop_exit
    _

</llo_original>
